<compile_context>
chip_gen: v7x
topology: tpu7x:2x2x1
jax: 0.10.0
libtpu: 0.0.40
codegen_flags: <defaults>
</compile_context>

<pallas_src>
import functools

import numpy as np
import jax
import jax.numpy as jnp
from jax import lax
from jax.experimental import pallas as pl
from jax.experimental.pallas import tpu as pltpu


# ----------------------------- Pallas kernel ----------------------------------
def _conv_tile_kernel(x_ref, w_ref, b_ref, o_ref, *, k, stride, tile_rows, w_out, col_starts):
    """One grid step = one (image n, output-row tile t).

    x_ref: (1, Cin, 1, R, Wk)            gathered input rows for this tile (upsample+reflect
                                          already folded into the gather indices)
    w_ref: (k, k, Cout, Cin)              conv weights
    b_ref: (Cout, 1)                      bias
    o_ref: (1, Cout, tile_rows, w_out)    output rows, already in NCHW block layout
    """
    bias = b_ref[...]                                        # (Cout, 1)
    for y in range(tile_rows):                               # static unroll (tile_rows <= 16)
        base = y * stride
        acc = None
        for kh in range(k):
            row = x_ref[0, :, 0, base + kh, :]               # (Cin, Wk) -- one haloed input row
            for kw in range(k):
                cs = col_starts[kw]
                part = jnp.dot(w_ref[kh, kw, :, :], row[:, cs:cs + w_out],
                               preferred_element_type=jnp.float32)   # (Cout, w_out) on MXU
                acc = part if acc is None else acc + part
        o_ref[0, :, y, :] = (acc + bias).astype(o_ref.dtype)


def _pick_tile_rows(h_out):
    """8..16 output rows per tile, aiming for >=4 row tiles per image (keeps the unrolled
    kernel small while giving the grid enough steps to pipeline / use both v7x cores)."""
    if h_out <= 8:
        return max(1, h_out)
    tr = (h_out // 4) // 8 * 8
    tr = max(8, min(16, tr))
    return min(tr, h_out)


# ------------------------------ Wrapper ----------------------------------------
@functools.partial(jax.jit, static_argnames=("k", "stride", "upsample", "tile_rows"))
def upsample_conv_layer(x, weight, bias, *, k, stride=1, upsample=None, tile_rows=None):
    """Forward pass of UpsampleConvLayer.

    x:      (N, Cin, H, W)      float32  (NCHW)
    weight: (Cout, Cin, k, k)   float32  (PyTorch Conv2d layout)
    bias:   (Cout,)             float32
    """
    N, Cin, H, W = x.shape
    Cout = weight.shape[0]
    f = int(upsample) if upsample else 1
    pad = k // 2

    h_up, w_up = H * f, W * f
    hp, wp = h_up + 2 * pad, w_up + 2 * pad
    h_out = (hp - k) // stride + 1
    w_out = (wp - k) // stride + 1

    tr = tile_rows if tile_rows is not None else _pick_tile_rows(h_out)
    num_tiles = pl.cdiv(h_out, tr)                 # row tiles per image
    rows_per_tile = (tr - 1) * stride + k          # input rows a tile needs (incl. halo)

    # ---- Static (numpy) index maps folding nearest-upsample + reflection-pad. These are a
    # ---- few KB of constants; the only HBM-level prep left is one gather (~f^2 x input bytes),
    # ---- instead of repeat(4x) + pad + im2col(9x) + transposes.
    def src_index(padded_pos, n_up):
        u = padded_pos - pad
        u = np.abs(u)                               # left reflection (exclude border)
        u = np.where(u >= n_up, 2 * (n_up - 1) - u, u)   # right reflection
        return u // f                               # nearest upsample: up coord -> src coord

    prow = np.minimum(
        np.arange(num_tiles)[:, None] * (tr * stride) + np.arange(rows_per_tile)[None, :],
        hp - 1)
    rows_src = src_index(prow, h_up).astype(np.int32)          # (num_tiles, rows_per_tile)

    if stride == 1:
        pcol = np.arange(wp)
        col_starts = tuple(range(k))                            # contiguous lane slices
    else:
        # group needed columns per kw so in-kernel slices stay contiguous for any stride
        pcol = (np.arange(w_out)[None, :] * stride + np.arange(k)[:, None]).reshape(-1)
        col_starts = tuple(kw * w_out for kw in range(k))
    cols_src = src_index(pcol, w_up).astype(np.int32)           # (Wk,)
    wk = int(cols_src.shape[0])

    # Single cheap gather: (N, Cin, num_tiles, rows_per_tile, Wk)
    xt = x[:, :, rows_src, :][..., cols_src]

    w_t = jnp.transpose(weight, (2, 3, 0, 1))                   # (k, k, Cout, Cin)
    b2 = bias.reshape(Cout, 1).astype(jnp.float32)

    kernel = functools.partial(
        _conv_tile_kernel, k=k, stride=stride, tile_rows=tr, w_out=w_out,
        col_starts=col_starts)

    out_full = pl.pallas_call(
        kernel,
        out_shape=jax.ShapeDtypeStruct((N, Cout, num_tiles * tr, w_out), x.dtype),
        grid_spec=pltpu.PrefetchScalarGridSpec(
            num_scalar_prefetch=0,
            grid=(N, num_tiles),
            in_specs=[
                # haloed input row-strip for (n, t); last two dims are full-extent
                pl.BlockSpec((1, Cin, 1, rows_per_tile, wk), lambda n, t: (n, 0, t, 0, 0)),
                # full weights / bias, resident across the grid
                pl.BlockSpec((k, k, Cout, Cin), lambda n, t: (0, 0, 0, 0)),
                pl.BlockSpec((Cout, 1), lambda n, t: (0, 0)),
            ],
            # output lands directly in NCHW; width (large in real configs) is the lane dim
            out_specs=pl.BlockSpec((1, Cout, tr, w_out), lambda n, t: (n, 0, t, 0)),
        ),
        compiler_params=pltpu.CompilerParams(
            dimension_semantics=("parallel", "parallel"),
            # matches v6e/v7x defaults, raises v5e's 16 MiB; tiles here are tiny anyway.
            vmem_limit_bytes=32 * 1024 * 1024,
        ),
    )(xt, w_t, b2)

    if num_tiles * tr != h_out:
        out_full = out_full[:, :, :h_out, :]
    return out_full


# ------------------------------ Demo / check -----------------------------------
if __name__ == "__main__":
    # Module config: UpsampleConvLayer(in_c=4, out_c=8, k=3, stride=1, upsample=2)
    in_c, out_c, k, stride, upsample = 4, 8, 3, 1, 2

    key = jax.random.PRNGKey(0)
    kx, kw_, kb = jax.random.split(key, 3)

    x = jax.random.normal(kx, (2, in_c, 16, 16), dtype=jnp.float32)
    weight = jax.random.normal(kw_, (out_c, in_c, k, k), dtype=jnp.float32) * 0.1
    bias = jax.random.normal(kb, (out_c,), dtype=jnp.float32) * 0.1

    y = upsample_conv_layer(x, weight, bias, k=k, stride=stride, upsample=upsample)
    y = jax.block_until_ready(y)

    # Reference: XLA conv on (nearest-upsample + reflection-pad) input.
    f = int(upsample)
    x_up = jnp.repeat(jnp.repeat(x, f, axis=2), f, axis=3)
    xp = jnp.pad(x_up, ((0, 0), (0, 0), (k // 2, k // 2), (k // 2, k // 2)), mode="reflect")
    y_ref = lax.conv_general_dilated(
        xp, weight, window_strides=(stride, stride), padding="VALID",
        dimension_numbers=("NCHW", "OIHW", "NCHW"),
    ) + bias[None, :, None, None]

    assert y.shape == y_ref.shape, (y.shape, y_ref.shape)
    assert jnp.allclose(y, y_ref, atol=1e-4, rtol=1e-4), float(jnp.max(jnp.abs(y - y_ref)))

    print("KERNEL_OK")
</pallas_src>

<mosaic_0001>
module attributes {stable_mosaic.version = 11 : i64} {
  func.func @_conv_tile_kernel(%arg0: i32, %arg1: i32, %arg2: memref<1x4x1x10x34xf32, #tpu.memory_space<vmem>>, %arg3: memref<3x3x8x4xf32, #tpu.memory_space<vmem>>, %arg4: memref<8x1xf32, #tpu.memory_space<vmem>>, %arg5: memref<1x8x8x32xf32, #tpu.memory_space<vmem>>) attributes {dimension_semantics = [#tpu.dimension_semantics<parallel>, #tpu.dimension_semantics<parallel>], iteration_bounds = array<i64: 2, 4>, scalar_prefetch = 0 : i64, scratch_operands = 0 : i64, tpu.core_type = #tpu.core_type<tc>, window_params = [{transform_indices = @transform_0, window_bounds = array<i64: 1, 4, 1, 10, 34>}, {pipeline_mode = #tpu.pipeline_mode<synchronous>, transform_indices = @transform_1, window_bounds = array<i64: 3, 3, 8, 4>}, {pipeline_mode = #tpu.pipeline_mode<synchronous>, transform_indices = @transform_2, window_bounds = array<i64: 8, 1>}, {transform_indices = @transform_3, window_bounds = array<i64: 1, 8, 8, 32>}]} {
    %c0 = arith.constant 0 : index
    %c0_0 = arith.constant 0 : index
    %0 = vector.load %arg4[%c0, %c0_0] : memref<8x1xf32, #tpu.memory_space<vmem>>, vector<8x1xf32>
    %c0_1 = arith.constant 0 : index
    %c0_2 = arith.constant 0 : index
    %c0_3 = arith.constant 0 : index
    %c0_4 = arith.constant 0 : index
    %c0_5 = arith.constant 0 : index
    %1 = vector.load %arg2[%c0_1, %c0_2, %c0_3, %c0_4, %c0_5] : memref<1x4x1x10x34xf32, #tpu.memory_space<vmem>>, vector<1x4x1x1x34xf32>
    %2 = vector.shape_cast %1 : vector<1x4x1x1x34xf32> to vector<4x34xf32>
    %c0_6 = arith.constant 0 : index
    %c0_7 = arith.constant 0 : index
    %c0_8 = arith.constant 0 : index
    %c0_9 = arith.constant 0 : index
    %3 = vector.load %arg3[%c0_6, %c0_7, %c0_8, %c0_9] : memref<3x3x8x4xf32, #tpu.memory_space<vmem>>, vector<1x1x8x4xf32>
    %4 = vector.shape_cast %3 : vector<1x1x8x4xf32> to vector<8x4xf32>
    %5 = vector.extract_strided_slice %2 {offsets = [0, 0], sizes = [4, 32], strides = [1, 1]} : vector<4x34xf32> to vector<4x32xf32>
    %cst = arith.constant dense<0.000000e+00> : vector<8x32xf32>
    %6 = tpu.matmul %4, %5, %cst {dimension_numbers = #tpu.dot_dimension_numbers<[1], [0], [0], [1], [0, 0, 1, 1], [], []>} : vector<8x4xf32>, vector<4x32xf32>, vector<8x32xf32> -> vector<8x32xf32>
    %c0_10 = arith.constant 0 : index
    %c1 = arith.constant 1 : index
    %c0_11 = arith.constant 0 : index
    %c0_12 = arith.constant 0 : index
    %7 = vector.load %arg3[%c0_10, %c1, %c0_11, %c0_12] : memref<3x3x8x4xf32, #tpu.memory_space<vmem>>, vector<1x1x8x4xf32>
    %8 = vector.shape_cast %7 : vector<1x1x8x4xf32> to vector<8x4xf32>
    %9 = vector.extract_strided_slice %2 {offsets = [0, 1], sizes = [4, 32], strides = [1, 1]} : vector<4x34xf32> to vector<4x32xf32>
    %cst_13 = arith.constant dense<0.000000e+00> : vector<8x32xf32>
    %10 = tpu.matmul %8, %9, %cst_13 {dimension_numbers = #tpu.dot_dimension_numbers<[1], [0], [0], [1], [0, 0, 1, 1], [], []>} : vector<8x4xf32>, vector<4x32xf32>, vector<8x32xf32> -> vector<8x32xf32>
    %11 = arith.addf %6, %10 : vector<8x32xf32>
    %c0_14 = arith.constant 0 : index
    %c2 = arith.constant 2 : index
    %c0_15 = arith.constant 0 : index
    %c0_16 = arith.constant 0 : index
    %12 = vector.load %arg3[%c0_14, %c2, %c0_15, %c0_16] : memref<3x3x8x4xf32, #tpu.memory_space<vmem>>, vector<1x1x8x4xf32>
    %13 = vector.shape_cast %12 : vector<1x1x8x4xf32> to vector<8x4xf32>
    %14 = vector.extract_strided_slice %2 {offsets = [0, 2], sizes = [4, 32], strides = [1, 1]} : vector<4x34xf32> to vector<4x32xf32>
    %cst_17 = arith.constant dense<0.000000e+00> : vector<8x32xf32>
    %15 = tpu.matmul %13, %14, %cst_17 {dimension_numbers = #tpu.dot_dimension_numbers<[1], [0], [0], [1], [0, 0, 1, 1], [], []>} : vector<8x4xf32>, vector<4x32xf32>, vector<8x32xf32> -> vector<8x32xf32>
    %16 = arith.addf %11, %15 : vector<8x32xf32>
    %c0_18 = arith.constant 0 : index
    %c0_19 = arith.constant 0 : index
    %c0_20 = arith.constant 0 : index
    %c1_21 = arith.constant 1 : index
    %c0_22 = arith.constant 0 : index
    %17 = vector.load %arg2[%c0_18, %c0_19, %c0_20, %c1_21, %c0_22] : memref<1x4x1x10x34xf32, #tpu.memory_space<vmem>>, vector<1x4x1x1x34xf32>
    %18 = vector.shape_cast %17 : vector<1x4x1x1x34xf32> to vector<4x34xf32>
    %c1_23 = arith.constant 1 : index
    %c0_24 = arith.constant 0 : index
    %c0_25 = arith.constant 0 : index
    %c0_26 = arith.constant 0 : index
    %19 = vector.load %arg3[%c1_23, %c0_24, %c0_25, %c0_26] : memref<3x3x8x4xf32, #tpu.memory_space<vmem>>, vector<1x1x8x4xf32>
    %20 = vector.shape_cast %19 : vector<1x1x8x4xf32> to vector<8x4xf32>
    %21 = vector.extract_strided_slice %18 {offsets = [0, 0], sizes = [4, 32], strides = [1, 1]} : vector<4x34xf32> to vector<4x32xf32>
    %cst_27 = arith.constant dense<0.000000e+00> : vector<8x32xf32>
    %22 = tpu.matmul %20, %21, %cst_27 {dimension_numbers = #tpu.dot_dimension_numbers<[1], [0], [0], [1], [0, 0, 1, 1], [], []>} : vector<8x4xf32>, vector<4x32xf32>, vector<8x32xf32> -> vector<8x32xf32>
    %23 = arith.addf %16, %22 : vector<8x32xf32>
    %c1_28 = arith.constant 1 : index
    %c1_29 = arith.constant 1 : index
    %c0_30 = arith.constant 0 : index
    %c0_31 = arith.constant 0 : index
    %24 = vector.load %arg3[%c1_28, %c1_29, %c0_30, %c0_31] : memref<3x3x8x4xf32, #tpu.memory_space<vmem>>, vector<1x1x8x4xf32>
    %25 = vector.shape_cast %24 : vector<1x1x8x4xf32> to vector<8x4xf32>
    %26 = vector.extract_strided_slice %18 {offsets = [0, 1], sizes = [4, 32], strides = [1, 1]} : vector<4x34xf32> to vector<4x32xf32>
    %cst_32 = arith.constant dense<0.000000e+00> : vector<8x32xf32>
    %27 = tpu.matmul %25, %26, %cst_32 {dimension_numbers = #tpu.dot_dimension_numbers<[1], [0], [0], [1], [0, 0, 1, 1], [], []>} : vector<8x4xf32>, vector<4x32xf32>, vector<8x32xf32> -> vector<8x32xf32>
    %28 = arith.addf %23, %27 : vector<8x32xf32>
    %c1_33 = arith.constant 1 : index
    %c2_34 = arith.constant 2 : index
    %c0_35 = arith.constant 0 : index
    %c0_36 = arith.constant 0 : index
    %29 = vector.load %arg3[%c1_33, %c2_34, %c0_35, %c0_36] : memref<3x3x8x4xf32, #tpu.memory_space<vmem>>, vector<1x1x8x4xf32>
    %30 = vector.shape_cast %29 : vector<1x1x8x4xf32> to vector<8x4xf32>
    %31 = vector.extract_strided_slice %18 {offsets = [0, 2], sizes = [4, 32], strides = [1, 1]} : vector<4x34xf32> to vector<4x32xf32>
    %cst_37 = arith.constant dense<0.000000e+00> : vector<8x32xf32>
    %32 = tpu.matmul %30, %31, %cst_37 {dimension_numbers = #tpu.dot_dimension_numbers<[1], [0], [0], [1], [0, 0, 1, 1], [], []>} : vector<8x4xf32>, vector<4x32xf32>, vector<8x32xf32> -> vector<8x32xf32>
    %33 = arith.addf %28, %32 : vector<8x32xf32>
    %c0_38 = arith.constant 0 : index
    %c0_39 = arith.constant 0 : index
    %c0_40 = arith.constant 0 : index
    %c2_41 = arith.constant 2 : index
    %c0_42 = arith.constant 0 : index
    %34 = vector.load %arg2[%c0_38, %c0_39, %c0_40, %c2_41, %c0_42] : memref<1x4x1x10x34xf32, #tpu.memory_space<vmem>>, vector<1x4x1x1x34xf32>
    %35 = vector.shape_cast %34 : vector<1x4x1x1x34xf32> to vector<4x34xf32>
    %c2_43 = arith.constant 2 : index
    %c0_44 = arith.constant 0 : index
    %c0_45 = arith.constant 0 : index
    %c0_46 = arith.constant 0 : index
    %36 = vector.load %arg3[%c2_43, %c0_44, %c0_45, %c0_46] : memref<3x3x8x4xf32, #tpu.memory_space<vmem>>, vector<1x1x8x4xf32>
    %37 = vector.shape_cast %36 : vector<1x1x8x4xf32> to vector<8x4xf32>
    %38 = vector.extract_strided_slice %35 {offsets = [0, 0], sizes = [4, 32], strides = [1, 1]} : vector<4x34xf32> to vector<4x32xf32>
    %cst_47 = arith.constant dense<0.000000e+00> : vector<8x32xf32>
    %39 = tpu.matmul %37, %38, %cst_47 {dimension_numbers = #tpu.dot_dimension_numbers<[1], [0], [0], [1], [0, 0, 1, 1], [], []>} : vector<8x4xf32>, vector<4x32xf32>, vector<8x32xf32> -> vector<8x32xf32>
    %40 = arith.addf %33, %39 : vector<8x32xf32>
    %c2_48 = arith.constant 2 : index
    %c1_49 = arith.constant 1 : index
    %c0_50 = arith.constant 0 : index
    %c0_51 = arith.constant 0 : index
    %41 = vector.load %arg3[%c2_48, %c1_49, %c0_50, %c0_51] : memref<3x3x8x4xf32, #tpu.memory_space<vmem>>, vector<1x1x8x4xf32>
    %42 = vector.shape_cast %41 : vector<1x1x8x4xf32> to vector<8x4xf32>
    %43 = vector.extract_strided_slice %35 {offsets = [0, 1], sizes = [4, 32], strides = [1, 1]} : vector<4x34xf32> to vector<4x32xf32>
    %cst_52 = arith.constant dense<0.000000e+00> : vector<8x32xf32>
    %44 = tpu.matmul %42, %43, %cst_52 {dimension_numbers = #tpu.dot_dimension_numbers<[1], [0], [0], [1], [0, 0, 1, 1], [], []>} : vector<8x4xf32>, vector<4x32xf32>, vector<8x32xf32> -> vector<8x32xf32>
    %45 = arith.addf %40, %44 : vector<8x32xf32>
    %c2_53 = arith.constant 2 : index
    %c2_54 = arith.constant 2 : index
    %c0_55 = arith.constant 0 : index
    %c0_56 = arith.constant 0 : index
    %46 = vector.load %arg3[%c2_53, %c2_54, %c0_55, %c0_56] : memref<3x3x8x4xf32, #tpu.memory_space<vmem>>, vector<1x1x8x4xf32>
    %47 = vector.shape_cast %46 : vector<1x1x8x4xf32> to vector<8x4xf32>
    %48 = vector.extract_strided_slice %35 {offsets = [0, 2], sizes = [4, 32], strides = [1, 1]} : vector<4x34xf32> to vector<4x32xf32>
    %cst_57 = arith.constant dense<0.000000e+00> : vector<8x32xf32>
    %49 = tpu.matmul %47, %48, %cst_57 {dimension_numbers = #tpu.dot_dimension_numbers<[1], [0], [0], [1], [0, 0, 1, 1], [], []>} : vector<8x4xf32>, vector<4x32xf32>, vector<8x32xf32> -> vector<8x32xf32>
    %50 = arith.addf %45, %49 : vector<8x32xf32>
    %51 = vector.broadcast %0 : vector<8x1xf32> to vector<8x32xf32>
    %52 = arith.addf %50, %51 : vector<8x32xf32>
    %c0_58 = arith.constant 0 : index
    %c0_59 = arith.constant 0 : index
    %c0_60 = arith.constant 0 : index
    %c0_61 = arith.constant 0 : index
    %53 = vector.load %arg5[%c0_58, %c0_59, %c0_60, %c0_61] : memref<1x8x8x32xf32, #tpu.memory_space<vmem>>, vector<1x8x1x32xf32>
    %54 = vector.shape_cast %53 : vector<1x8x1x32xf32> to vector<8x32xf32>
    %55 = vector.shape_cast %52 : vector<8x32xf32> to vector<1x8x1x32xf32>
    tpu.vector_store %arg5[%c0_58, %c0_59, %c0_60, %c0_61], %55 {strides = array<i32>} : memref<1x8x8x32xf32, #tpu.memory_space<vmem>>, vector<1x8x1x32xf32>,
    %c0_62 = arith.constant 0 : index
    %c0_63 = arith.constant 0 : index
    %c0_64 = arith.constant 0 : index
    %c1_65 = arith.constant 1 : index
    %c0_66 = arith.constant 0 : index
    %56 = vector.load %arg2[%c0_62, %c0_63, %c0_64, %c1_65, %c0_66] : memref<1x4x1x10x34xf32, #tpu.memory_space<vmem>>, vector<1x4x1x1x34xf32>
    %57 = vector.shape_cast %56 : vector<1x4x1x1x34xf32> to vector<4x34xf32>
    %c0_67 = arith.constant 0 : index
    %c0_68 = arith.constant 0 : index
    %c0_69 = arith.constant 0 : index
    %c0_70 = arith.constant 0 : index
    %58 = vector.load %arg3[%c0_67, %c0_68, %c0_69, %c0_70] : memref<3x3x8x4xf32, #tpu.memory_space<vmem>>, vector<1x1x8x4xf32>
    %59 = vector.shape_cast %58 : vector<1x1x8x4xf32> to vector<8x4xf32>
    %60 = vector.extract_strided_slice %57 {offsets = [0, 0], sizes = [4, 32], strides = [1, 1]} : vector<4x34xf32> to vector<4x32xf32>
    %cst_71 = arith.constant dense<0.000000e+00> : vector<8x32xf32>
    %61 = tpu.matmul %59, %60, %cst_71 {dimension_numbers = #tpu.dot_dimension_numbers<[1], [0], [0], [1], [0, 0, 1, 1], [], []>} : vector<8x4xf32>, vector<4x32xf32>, vector<8x32xf32> -> vector<8x32xf32>
    %c0_72 = arith.constant 0 : index
    %c1_73 = arith.constant 1 : index
    %c0_74 = arith.constant 0 : index
    %c0_75 = arith.constant 0 : index
    %62 = vector.load %arg3[%c0_72, %c1_73, %c0_74, %c0_75] : memref<3x3x8x4xf32, #tpu.memory_space<vmem>>, vector<1x1x8x4xf32>
    %63 = vector.shape_cast %62 : vector<1x1x8x4xf32> to vector<8x4xf32>
    %64 = vector.extract_strided_slice %57 {offsets = [0, 1], sizes = [4, 32], strides = [1, 1]} : vector<4x34xf32> to vector<4x32xf32>
    %cst_76 = arith.constant dense<0.000000e+00> : vector<8x32xf32>
    %65 = tpu.matmul %63, %64, %cst_76 {dimension_numbers = #tpu.dot_dimension_numbers<[1], [0], [0], [1], [0, 0, 1, 1], [], []>} : vector<8x4xf32>, vector<4x32xf32>, vector<8x32xf32> -> vector<8x32xf32>
    %66 = arith.addf %61, %65 : vector<8x32xf32>
    %c0_77 = arith.constant 0 : index
    %c2_78 = arith.constant 2 : index
    %c0_79 = arith.constant 0 : index
    %c0_80 = arith.constant 0 : index
    %67 = vector.load %arg3[%c0_77, %c2_78, %c0_79, %c0_80] : memref<3x3x8x4xf32, #tpu.memory_space<vmem>>, vector<1x1x8x4xf32>
    %68 = vector.shape_cast %67 : vector<1x1x8x4xf32> to vector<8x4xf32>
    %69 = vector.extract_strided_slice %57 {offsets = [0, 2], sizes = [4, 32], strides = [1, 1]} : vector<4x34xf32> to vector<4x32xf32>
    %cst_81 = arith.constant dense<0.000000e+00> : vector<8x32xf32>
    %70 = tpu.matmul %68, %69, %cst_81 {dimension_numbers = #tpu.dot_dimension_numbers<[1], [0], [0], [1], [0, 0, 1, 1], [], []>} : vector<8x4xf32>, vector<4x32xf32>, vector<8x32xf32> -> vector<8x32xf32>
    %71 = arith.addf %66, %70 : vector<8x32xf32>
    %c0_82 = arith.constant 0 : index
    %c0_83 = arith.constant 0 : index
    %c0_84 = arith.constant 0 : index
    %c2_85 = arith.constant 2 : index
    %c0_86 = arith.constant 0 : index
    %72 = vector.load %arg2[%c0_82, %c0_83, %c0_84, %c2_85, %c0_86] : memref<1x4x1x10x34xf32, #tpu.memory_space<vmem>>, vector<1x4x1x1x34xf32>
    %73 = vector.shape_cast %72 : vector<1x4x1x1x34xf32> to vector<4x34xf32>
    %c1_87 = arith.constant 1 : index
    %c0_88 = arith.constant 0 : index
    %c0_89 = arith.constant 0 : index
    %c0_90 = arith.constant 0 : index
    %74 = vector.load %arg3[%c1_87, %c0_88, %c0_89, %c0_90] : memref<3x3x8x4xf32, #tpu.memory_space<vmem>>, vector<1x1x8x4xf32>
    %75 = vector.shape_cast %74 : vector<1x1x8x4xf32> to vector<8x4xf32>
    %76 = vector.extract_strided_slice %73 {offsets = [0, 0], sizes = [4, 32], strides = [1, 1]} : vector<4x34xf32> to vector<4x32xf32>
    %cst_91 = arith.constant dense<0.000000e+00> : vector<8x32xf32>
    %77 = tpu.matmul %75, %76, %cst_91 {dimension_numbers = #tpu.dot_dimension_numbers<[1], [0], [0], [1], [0, 0, 1, 1], [], []>} : vector<8x4xf32>, vector<4x32xf32>, vector<8x32xf32> -> vector<8x32xf32>
    %78 = arith.addf %71, %77 : vector<8x32xf32>
    %c1_92 = arith.constant 1 : index
    %c1_93 = arith.constant 1 : index
    %c0_94 = arith.constant 0 : index
    %c0_95 = arith.constant 0 : index
    %79 = vector.load %arg3[%c1_92, %c1_93, %c0_94, %c0_95] : memref<3x3x8x4xf32, #tpu.memory_space<vmem>>, vector<1x1x8x4xf32>
    %80 = vector.shape_cast %79 : vector<1x1x8x4xf32> to vector<8x4xf32>
    %81 = vector.extract_strided_slice %73 {offsets = [0, 1], sizes = [4, 32], strides = [1, 1]} : vector<4x34xf32> to vector<4x32xf32>
    %cst_96 = arith.constant dense<0.000000e+00> : vector<8x32xf32>
    %82 = tpu.matmul %80, %81, %cst_96 {dimension_numbers = #tpu.dot_dimension_numbers<[1], [0], [0], [1], [0, 0, 1, 1], [], []>} : vector<8x4xf32>, vector<4x32xf32>, vector<8x32xf32> -> vector<8x32xf32>
    %83 = arith.addf %78, %82 : vector<8x32xf32>
    %c1_97 = arith.constant 1 : index
    %c2_98 = arith.constant 2 : index
    %c0_99 = arith.constant 0 : index
    %c0_100 = arith.constant 0 : index
    %84 = vector.load %arg3[%c1_97, %c2_98, %c0_99, %c0_100] : memref<3x3x8x4xf32, #tpu.memory_space<vmem>>, vector<1x1x8x4xf32>
    %85 = vector.shape_cast %84 : vector<1x1x8x4xf32> to vector<8x4xf32>
    %86 = vector.extract_strided_slice %73 {offsets = [0, 2], sizes = [4, 32], strides = [1, 1]} : vector<4x34xf32> to vector<4x32xf32>
    %cst_101 = arith.constant dense<0.000000e+00> : vector<8x32xf32>
    %87 = tpu.matmul %85, %86, %cst_101 {dimension_numbers = #tpu.dot_dimension_numbers<[1], [0], [0], [1], [0, 0, 1, 1], [], []>} : vector<8x4xf32>, vector<4x32xf32>, vector<8x32xf32> -> vector<8x32xf32>
    %88 = arith.addf %83, %87 : vector<8x32xf32>
    %c0_102 = arith.constant 0 : index
    %c0_103 = arith.constant 0 : index
    %c0_104 = arith.constant 0 : index
    %c3 = arith.constant 3 : index
    %c0_105 = arith.constant 0 : index
    %89 = vector.load %arg2[%c0_102, %c0_103, %c0_104, %c3, %c0_105] : memref<1x4x1x10x34xf32, #tpu.memory_space<vmem>>, vector<1x4x1x1x34xf32>
    %90 = vector.shape_cast %89 : vector<1x4x1x1x34xf32> to vector<4x34xf32>
    %c2_106 = arith.constant 2 : index
    %c0_107 = arith.constant 0 : index
    %c0_108 = arith.constant 0 : index
    %c0_109 = arith.constant 0 : index
    %91 = vector.load %arg3[%c2_106, %c0_107, %c0_108, %c0_109] : memref<3x3x8x4xf32, #tpu.memory_space<vmem>>, vector<1x1x8x4xf32>
    %92 = vector.shape_cast %91 : vector<1x1x8x4xf32> to vector<8x4xf32>
    %93 = vector.extract_strided_slice %90 {offsets = [0, 0], sizes = [4, 32], strides = [1, 1]} : vector<4x34xf32> to vector<4x32xf32>
    %cst_110 = arith.constant dense<0.000000e+00> : vector<8x32xf32>
    %94 = tpu.matmul %92, %93, %cst_110 {dimension_numbers = #tpu.dot_dimension_numbers<[1], [0], [0], [1], [0, 0, 1, 1], [], []>} : vector<8x4xf32>, vector<4x32xf32>, vector<8x32xf32> -> vector<8x32xf32>
    %95 = arith.addf %88, %94 : vector<8x32xf32>
    %c2_111 = arith.constant 2 : index
    %c1_112 = arith.constant 1 : index
    %c0_113 = arith.constant 0 : index
    %c0_114 = arith.constant 0 : index
    %96 = vector.load %arg3[%c2_111, %c1_112, %c0_113, %c0_114] : memref<3x3x8x4xf32, #tpu.memory_space<vmem>>, vector<1x1x8x4xf32>
    %97 = vector.shape_cast %96 : vector<1x1x8x4xf32> to vector<8x4xf32>
    %98 = vector.extract_strided_slice %90 {offsets = [0, 1], sizes = [4, 32], strides = [1, 1]} : vector<4x34xf32> to vector<4x32xf32>
    %cst_115 = arith.constant dense<0.000000e+00> : vector<8x32xf32>
    %99 = tpu.matmul %97, %98, %cst_115 {dimension_numbers = #tpu.dot_dimension_numbers<[1], [0], [0], [1], [0, 0, 1, 1], [], []>} : vector<8x4xf32>, vector<4x32xf32>, vector<8x32xf32> -> vector<8x32xf32>
    %100 = arith.addf %95, %99 : vector<8x32xf32>
    %c2_116 = arith.constant 2 : index
    %c2_117 = arith.constant 2 : index
    %c0_118 = arith.constant 0 : index
    %c0_119 = arith.constant 0 : index
    %101 = vector.load %arg3[%c2_116, %c2_117, %c0_118, %c0_119] : memref<3x3x8x4xf32, #tpu.memory_space<vmem>>, vector<1x1x8x4xf32>
    %102 = vector.shape_cast %101 : vector<1x1x8x4xf32> to vector<8x4xf32>
    %103 = vector.extract_strided_slice %90 {offsets = [0, 2], sizes = [4, 32], strides = [1, 1]} : vector<4x34xf32> to vector<4x32xf32>
    %cst_120 = arith.constant dense<0.000000e+00> : vector<8x32xf32>
    %104 = tpu.matmul %102, %103, %cst_120 {dimension_numbers = #tpu.dot_dimension_numbers<[1], [0], [0], [1], [0, 0, 1, 1], [], []>} : vector<8x4xf32>, vector<4x32xf32>, vector<8x32xf32> -> vector<8x32xf32>
    %105 = arith.addf %100, %104 : vector<8x32xf32>
    %106 = vector.broadcast %0 : vector<8x1xf32> to vector<8x32xf32>
    %107 = arith.addf %105, %106 : vector<8x32xf32>
    %c0_121 = arith.constant 0 : index
    %c0_122 = arith.constant 0 : index
    %c1_123 = arith.constant 1 : index
    %c0_124 = arith.constant 0 : index
    %108 = vector.load %arg5[%c0_121, %c0_122, %c1_123, %c0_124] : memref<1x8x8x32xf32, #tpu.memory_space<vmem>>, vector<1x8x1x32xf32>
    %109 = vector.shape_cast %108 : vector<1x8x1x32xf32> to vector<8x32xf32>
    %110 = vector.shape_cast %107 : vector<8x32xf32> to vector<1x8x1x32xf32>
    tpu.vector_store %arg5[%c0_121, %c0_122, %c1_123, %c0_124], %110 {strides = array<i32>} : memref<1x8x8x32xf32, #tpu.memory_space<vmem>>, vector<1x8x1x32xf32>,
    %c0_125 = arith.constant 0 : index
    %c0_126 = arith.constant 0 : index
    %c0_127 = arith.constant 0 : index
    %c2_128 = arith.constant 2 : index
    %c0_129 = arith.constant 0 : index
    %111 = vector.load %arg2[%c0_125, %c0_126, %c0_127, %c2_128, %c0_129] : memref<1x4x1x10x34xf32, #tpu.memory_space<vmem>>, vector<1x4x1x1x34xf32>
    %112 = vector.shape_cast %111 : vector<1x4x1x1x34xf32> to vector<4x34xf32>
    %c0_130 = arith.constant 0 : index
    %c0_131 = arith.constant 0 : index
    %c0_132 = arith.constant 0 : index
    %c0_133 = arith.constant 0 : index
    %113 = vector.load %arg3[%c0_130, %c0_131, %c0_132, %c0_133] : memref<3x3x8x4xf32, #tpu.memory_space<vmem>>, vector<1x1x8x4xf32>
    %114 = vector.shape_cast %113 : vector<1x1x8x4xf32> to vector<8x4xf32>
    %115 = vector.extract_strided_slice %112 {offsets = [0, 0], sizes = [4, 32], strides = [1, 1]} : vector<4x34xf32> to vector<4x32xf32>
    %cst_134 = arith.constant dense<0.000000e+00> : vector<8x32xf32>
    %116 = tpu.matmul %114, %115, %cst_134 {dimension_numbers = #tpu.dot_dimension_numbers<[1], [0], [0], [1], [0, 0, 1, 1], [], []>} : vector<8x4xf32>, vector<4x32xf32>, vector<8x32xf32> -> vector<8x32xf32>
    %c0_135 = arith.constant 0 : index
    %c1_136 = arith.constant 1 : index
    %c0_137 = arith.constant 0 : index
    %c0_138 = arith.constant 0 : index
    %117 = vector.load %arg3[%c0_135, %c1_136, %c0_137, %c0_138] : memref<3x3x8x4xf32, #tpu.memory_space<vmem>>, vector<1x1x8x4xf32>
    %118 = vector.shape_cast %117 : vector<1x1x8x4xf32> to vector<8x4xf32>
    %119 = vector.extract_strided_slice %112 {offsets = [0, 1], sizes = [4, 32], strides = [1, 1]} : vector<4x34xf32> to vector<4x32xf32>
    %cst_139 = arith.constant dense<0.000000e+00> : vector<8x32xf32>
    %120 = tpu.matmul %118, %119, %cst_139 {dimension_numbers = #tpu.dot_dimension_numbers<[1], [0], [0], [1], [0, 0, 1, 1], [], []>} : vector<8x4xf32>, vector<4x32xf32>, vector<8x32xf32> -> vector<8x32xf32>
    %121 = arith.addf %116, %120 : vector<8x32xf32>
    %c0_140 = arith.constant 0 : index
    %c2_141 = arith.constant 2 : index
    %c0_142 = arith.constant 0 : index
    %c0_143 = arith.constant 0 : index
    %122 = vector.load %arg3[%c0_140, %c2_141, %c0_142, %c0_143] : memref<3x3x8x4xf32, #tpu.memory_space<vmem>>, vector<1x1x8x4xf32>
    %123 = vector.shape_cast %122 : vector<1x1x8x4xf32> to vector<8x4xf32>
    %124 = vector.extract_strided_slice %112 {offsets = [0, 2], sizes = [4, 32], strides = [1, 1]} : vector<4x34xf32> to vector<4x32xf32>
    %cst_144 = arith.constant dense<0.000000e+00> : vector<8x32xf32>
    %125 = tpu.matmul %123, %124, %cst_144 {dimension_numbers = #tpu.dot_dimension_numbers<[1], [0], [0], [1], [0, 0, 1, 1], [], []>} : vector<8x4xf32>, vector<4x32xf32>, vector<8x32xf32> -> vector<8x32xf32>
    %126 = arith.addf %121, %125 : vector<8x32xf32>
    %c0_145 = arith.constant 0 : index
    %c0_146 = arith.constant 0 : index
    %c0_147 = arith.constant 0 : index
    %c3_148 = arith.constant 3 : index
    %c0_149 = arith.constant 0 : index
    %127 = vector.load %arg2[%c0_145, %c0_146, %c0_147, %c3_148, %c0_149] : memref<1x4x1x10x34xf32, #tpu.memory_space<vmem>>, vector<1x4x1x1x34xf32>
    %128 = vector.shape_cast %127 : vector<1x4x1x1x34xf32> to vector<4x34xf32>
    %c1_150 = arith.constant 1 : index
    %c0_151 = arith.constant 0 : index
    %c0_152 = arith.constant 0 : index
    %c0_153 = arith.constant 0 : index
    %129 = vector.load %arg3[%c1_150, %c0_151, %c0_152, %c0_153] : memref<3x3x8x4xf32, #tpu.memory_space<vmem>>, vector<1x1x8x4xf32>
    %130 = vector.shape_cast %129 : vector<1x1x8x4xf32> to vector<8x4xf32>
    %131 = vector.extract_strided_slice %128 {offsets = [0, 0], sizes = [4, 32], strides = [1, 1]} : vector<4x34xf32> to vector<4x32xf32>
    %cst_154 = arith.constant dense<0.000000e+00> : vector<8x32xf32>
    %132 = tpu.matmul %130, %131, %cst_154 {dimension_numbers = #tpu.dot_dimension_numbers<[1], [0], [0], [1], [0, 0, 1, 1], [], []>} : vector<8x4xf32>, vector<4x32xf32>, vector<8x32xf32> -> vector<8x32xf32>
    %133 = arith.addf %126, %132 : vector<8x32xf32>
    %c1_155 = arith.constant 1 : index
    %c1_156 = arith.constant 1 : index
    %c0_157 = arith.constant 0 : index
    %c0_158 = arith.constant 0 : index
    %134 = vector.load %arg3[%c1_155, %c1_156, %c0_157, %c0_158] : memref<3x3x8x4xf32, #tpu.memory_space<vmem>>, vector<1x1x8x4xf32>
    %135 = vector.shape_cast %134 : vector<1x1x8x4xf32> to vector<8x4xf32>
    %136 = vector.extract_strided_slice %128 {offsets = [0, 1], sizes = [4, 32], strides = [1, 1]} : vector<4x34xf32> to vector<4x32xf32>
    %cst_159 = arith.constant dense<0.000000e+00> : vector<8x32xf32>
    %137 = tpu.matmul %135, %136, %cst_159 {dimension_numbers = #tpu.dot_dimension_numbers<[1], [0], [0], [1], [0, 0, 1, 1], [], []>} : vector<8x4xf32>, vector<4x32xf32>, vector<8x32xf32> -> vector<8x32xf32>
    %138 = arith.addf %133, %137 : vector<8x32xf32>
    %c1_160 = arith.constant 1 : index
    %c2_161 = arith.constant 2 : index
    %c0_162 = arith.constant 0 : index
    %c0_163 = arith.constant 0 : index
    %139 = vector.load %arg3[%c1_160, %c2_161, %c0_162, %c0_163] : memref<3x3x8x4xf32, #tpu.memory_space<vmem>>, vector<1x1x8x4xf32>
    %140 = vector.shape_cast %139 : vector<1x1x8x4xf32> to vector<8x4xf32>
    %141 = vector.extract_strided_slice %128 {offsets = [0, 2], sizes = [4, 32], strides = [1, 1]} : vector<4x34xf32> to vector<4x32xf32>
    %cst_164 = arith.constant dense<0.000000e+00> : vector<8x32xf32>
    %142 = tpu.matmul %140, %141, %cst_164 {dimension_numbers = #tpu.dot_dimension_numbers<[1], [0], [0], [1], [0, 0, 1, 1], [], []>} : vector<8x4xf32>, vector<4x32xf32>, vector<8x32xf32> -> vector<8x32xf32>
    %143 = arith.addf %138, %142 : vector<8x32xf32>
    %c0_165 = arith.constant 0 : index
    %c0_166 = arith.constant 0 : index
    %c0_167 = arith.constant 0 : index
    %c4 = arith.constant 4 : index
    %c0_168 = arith.constant 0 : index
    %144 = vector.load %arg2[%c0_165, %c0_166, %c0_167, %c4, %c0_168] : memref<1x4x1x10x34xf32, #tpu.memory_space<vmem>>, vector<1x4x1x1x34xf32>
    %145 = vector.shape_cast %144 : vector<1x4x1x1x34xf32> to vector<4x34xf32>
    %c2_169 = arith.constant 2 : index
    %c0_170 = arith.constant 0 : index
    %c0_171 = arith.constant 0 : index
    %c0_172 = arith.constant 0 : index
    %146 = vector.load %arg3[%c2_169, %c0_170, %c0_171, %c0_172] : memref<3x3x8x4xf32, #tpu.memory_space<vmem>>, vector<1x1x8x4xf32>
    %147 = vector.shape_cast %146 : vector<1x1x8x4xf32> to vector<8x4xf32>
    %148 = vector.extract_strided_slice %145 {offsets = [0, 0], sizes = [4, 32], strides = [1, 1]} : vector<4x34xf32> to vector<4x32xf32>
    %cst_173 = arith.constant dense<0.000000e+00> : vector<8x32xf32>
    %149 = tpu.matmul %147, %148, %cst_173 {dimension_numbers = #tpu.dot_dimension_numbers<[1], [0], [0], [1], [0, 0, 1, 1], [], []>} : vector<8x4xf32>, vector<4x32xf32>, vector<8x32xf32> -> vector<8x32xf32>
    %150 = arith.addf %143, %149 : vector<8x32xf32>
    %c2_174 = arith.constant 2 : index
    %c1_175 = arith.constant 1 : index
    %c0_176 = arith.constant 0 : index
    %c0_177 = arith.constant 0 : index
    %151 = vector.load %arg3[%c2_174, %c1_175, %c0_176, %c0_177] : memref<3x3x8x4xf32, #tpu.memory_space<vmem>>, vector<1x1x8x4xf32>
    %152 = vector.shape_cast %151 : vector<1x1x8x4xf32> to vector<8x4xf32>
    %153 = vector.extract_strided_slice %145 {offsets = [0, 1], sizes = [4, 32], strides = [1, 1]} : vector<4x34xf32> to vector<4x32xf32>
    %cst_178 = arith.constant dense<0.000000e+00> : vector<8x32xf32>
    %154 = tpu.matmul %152, %153, %cst_178 {dimension_numbers = #tpu.dot_dimension_numbers<[1], [0], [0], [1], [0, 0, 1, 1], [], []>} : vector<8x4xf32>, vector<4x32xf32>, vector<8x32xf32> -> vector<8x32xf32>
    %155 = arith.addf %150, %154 : vector<8x32xf32>
    %c2_179 = arith.constant 2 : index
    %c2_180 = arith.constant 2 : index
    %c0_181 = arith.constant 0 : index
    %c0_182 = arith.constant 0 : index
    %156 = vector.load %arg3[%c2_179, %c2_180, %c0_181, %c0_182] : memref<3x3x8x4xf32, #tpu.memory_space<vmem>>, vector<1x1x8x4xf32>
    %157 = vector.shape_cast %156 : vector<1x1x8x4xf32> to vector<8x4xf32>
    %158 = vector.extract_strided_slice %145 {offsets = [0, 2], sizes = [4, 32], strides = [1, 1]} : vector<4x34xf32> to vector<4x32xf32>
    %cst_183 = arith.constant dense<0.000000e+00> : vector<8x32xf32>
    %159 = tpu.matmul %157, %158, %cst_183 {dimension_numbers = #tpu.dot_dimension_numbers<[1], [0], [0], [1], [0, 0, 1, 1], [], []>} : vector<8x4xf32>, vector<4x32xf32>, vector<8x32xf32> -> vector<8x32xf32>
    %160 = arith.addf %155, %159 : vector<8x32xf32>
    %161 = vector.broadcast %0 : vector<8x1xf32> to vector<8x32xf32>
    %162 = arith.addf %160, %161 : vector<8x32xf32>
    %c0_184 = arith.constant 0 : index
    %c0_185 = arith.constant 0 : index
    %c2_186 = arith.constant 2 : index
    %c0_187 = arith.constant 0 : index
    %163 = vector.load %arg5[%c0_184, %c0_185, %c2_186, %c0_187] : memref<1x8x8x32xf32, #tpu.memory_space<vmem>>, vector<1x8x1x32xf32>
    %164 = vector.shape_cast %163 : vector<1x8x1x32xf32> to vector<8x32xf32>
    %165 = vector.shape_cast %162 : vector<8x32xf32> to vector<1x8x1x32xf32>
    tpu.vector_store %arg5[%c0_184, %c0_185, %c2_186, %c0_187], %165 {strides = array<i32>} : memref<1x8x8x32xf32, #tpu.memory_space<vmem>>, vector<1x8x1x32xf32>,
    %c0_188 = arith.constant 0 : index
    %c0_189 = arith.constant 0 : index
    %c0_190 = arith.constant 0 : index
    %c3_191 = arith.constant 3 : index
    %c0_192 = arith.constant 0 : index
    %166 = vector.load %arg2[%c0_188, %c0_189, %c0_190, %c3_191, %c0_192] : memref<1x4x1x10x34xf32, #tpu.memory_space<vmem>>, vector<1x4x1x1x34xf32>
    %167 = vector.shape_cast %166 : vector<1x4x1x1x34xf32> to vector<4x34xf32>
    %c0_193 = arith.constant 0 : index
    %c0_194 = arith.constant 0 : index
    %c0_195 = arith.constant 0 : index
    %c0_196 = arith.constant 0 : index
    %168 = vector.load %arg3[%c0_193, %c0_194, %c0_195, %c0_196] : memref<3x3x8x4xf32, #tpu.memory_space<vmem>>, vector<1x1x8x4xf32>
    %169 = vector.shape_cast %168 : vector<1x1x8x4xf32> to vector<8x4xf32>
    %170 = vector.extract_strided_slice %167 {offsets = [0, 0], sizes = [4, 32], strides = [1, 1]} : vector<4x34xf32> to vector<4x32xf32>
    %cst_197 = arith.constant dense<0.000000e+00> : vector<8x32xf32>
    %171 = tpu.matmul %169, %170, %cst_197 {dimension_numbers = #tpu.dot_dimension_numbers<[1], [0], [0], [1], [0, 0, 1, 1], [], []>} : vector<8x4xf32>, vector<4x32xf32>, vector<8x32xf32> -> vector<8x32xf32>
    %c0_198 = arith.constant 0 : index
    %c1_199 = arith.constant 1 : index
    %c0_200 = arith.constant 0 : index
    %c0_201 = arith.constant 0 : index
    %172 = vector.load %arg3[%c0_198, %c1_199, %c0_200, %c0_201] : memref<3x3x8x4xf32, #tpu.memory_space<vmem>>, vector<1x1x8x4xf32>
    %173 = vector.shape_cast %172 : vector<1x1x8x4xf32> to vector<8x4xf32>
    %174 = vector.extract_strided_slice %167 {offsets = [0, 1], sizes = [4, 32], strides = [1, 1]} : vector<4x34xf32> to vector<4x32xf32>
    %cst_202 = arith.constant dense<0.000000e+00> : vector<8x32xf32>
    %175 = tpu.matmul %173, %174, %cst_202 {dimension_numbers = #tpu.dot_dimension_numbers<[1], [0], [0], [1], [0, 0, 1, 1], [], []>} : vector<8x4xf32>, vector<4x32xf32>, vector<8x32xf32> -> vector<8x32xf32>
    %176 = arith.addf %171, %175 : vector<8x32xf32>
    %c0_203 = arith.constant 0 : index
    %c2_204 = arith.constant 2 : index
    %c0_205 = arith.constant 0 : index
    %c0_206 = arith.constant 0 : index
    %177 = vector.load %arg3[%c0_203, %c2_204, %c0_205, %c0_206] : memref<3x3x8x4xf32, #tpu.memory_space<vmem>>, vector<1x1x8x4xf32>
    %178 = vector.shape_cast %177 : vector<1x1x8x4xf32> to vector<8x4xf32>
    %179 = vector.extract_strided_slice %167 {offsets = [0, 2], sizes = [4, 32], strides = [1, 1]} : vector<4x34xf32> to vector<4x32xf32>
    %cst_207 = arith.constant dense<0.000000e+00> : vector<8x32xf32>
    %180 = tpu.matmul %178, %179, %cst_207 {dimension_numbers = #tpu.dot_dimension_numbers<[1], [0], [0], [1], [0, 0, 1, 1], [], []>} : vector<8x4xf32>, vector<4x32xf32>, vector<8x32xf32> -> vector<8x32xf32>
    %181 = arith.addf %176, %180 : vector<8x32xf32>
    %c0_208 = arith.constant 0 : index
    %c0_209 = arith.constant 0 : index
    %c0_210 = arith.constant 0 : index
    %c4_211 = arith.constant 4 : index
    %c0_212 = arith.constant 0 : index
    %182 = vector.load %arg2[%c0_208, %c0_209, %c0_210, %c4_211, %c0_212] : memref<1x4x1x10x34xf32, #tpu.memory_space<vmem>>, vector<1x4x1x1x34xf32>
    %183 = vector.shape_cast %182 : vector<1x4x1x1x34xf32> to vector<4x34xf32>
    %c1_213 = arith.constant 1 : index
    %c0_214 = arith.constant 0 : index
    %c0_215 = arith.constant 0 : index
    %c0_216 = arith.constant 0 : index
    %184 = vector.load %arg3[%c1_213, %c0_214, %c0_215, %c0_216] : memref<3x3x8x4xf32, #tpu.memory_space<vmem>>, vector<1x1x8x4xf32>
    %185 = vector.shape_cast %184 : vector<1x1x8x4xf32> to vector<8x4xf32>
    %186 = vector.extract_strided_slice %183 {offsets = [0, 0], sizes = [4, 32], strides = [1, 1]} : vector<4x34xf32> to vector<4x32xf32>
    %cst_217 = arith.constant dense<0.000000e+00> : vector<8x32xf32>
    %187 = tpu.matmul %185, %186, %cst_217 {dimension_numbers = #tpu.dot_dimension_numbers<[1], [0], [0], [1], [0, 0, 1, 1], [], []>} : vector<8x4xf32>, vector<4x32xf32>, vector<8x32xf32> -> vector<8x32xf32>
    %188 = arith.addf %181, %187 : vector<8x32xf32>
    %c1_218 = arith.constant 1 : index
    %c1_219 = arith.constant 1 : index
    %c0_220 = arith.constant 0 : index
    %c0_221 = arith.constant 0 : index
    %189 = vector.load %arg3[%c1_218, %c1_219, %c0_220, %c0_221] : memref<3x3x8x4xf32, #tpu.memory_space<vmem>>, vector<1x1x8x4xf32>
    %190 = vector.shape_cast %189 : vector<1x1x8x4xf32> to vector<8x4xf32>
    %191 = vector.extract_strided_slice %183 {offsets = [0, 1], sizes = [4, 32], strides = [1, 1]} : vector<4x34xf32> to vector<4x32xf32>
    %cst_222 = arith.constant dense<0.000000e+00> : vector<8x32xf32>
    %192 = tpu.matmul %190, %191, %cst_222 {dimension_numbers = #tpu.dot_dimension_numbers<[1], [0], [0], [1], [0, 0, 1, 1], [], []>} : vector<8x4xf32>, vector<4x32xf32>, vector<8x32xf32> -> vector<8x32xf32>
    %193 = arith.addf %188, %192 : vector<8x32xf32>
    %c1_223 = arith.constant 1 : index
    %c2_224 = arith.constant 2 : index
    %c0_225 = arith.constant 0 : index
    %c0_226 = arith.constant 0 : index
    %194 = vector.load %arg3[%c1_223, %c2_224, %c0_225, %c0_226] : memref<3x3x8x4xf32, #tpu.memory_space<vmem>>, vector<1x1x8x4xf32>
    %195 = vector.shape_cast %194 : vector<1x1x8x4xf32> to vector<8x4xf32>
    %196 = vector.extract_strided_slice %183 {offsets = [0, 2], sizes = [4, 32], strides = [1, 1]} : vector<4x34xf32> to vector<4x32xf32>
    %cst_227 = arith.constant dense<0.000000e+00> : vector<8x32xf32>
    %197 = tpu.matmul %195, %196, %cst_227 {dimension_numbers = #tpu.dot_dimension_numbers<[1], [0], [0], [1], [0, 0, 1, 1], [], []>} : vector<8x4xf32>, vector<4x32xf32>, vector<8x32xf32> -> vector<8x32xf32>
    %198 = arith.addf %193, %197 : vector<8x32xf32>
    %c0_228 = arith.constant 0 : index
    %c0_229 = arith.constant 0 : index
    %c0_230 = arith.constant 0 : index
    %c5 = arith.constant 5 : index
    %c0_231 = arith.constant 0 : index
    %199 = vector.load %arg2[%c0_228, %c0_229, %c0_230, %c5, %c0_231] : memref<1x4x1x10x34xf32, #tpu.memory_space<vmem>>, vector<1x4x1x1x34xf32>
    %200 = vector.shape_cast %199 : vector<1x4x1x1x34xf32> to vector<4x34xf32>
    %c2_232 = arith.constant 2 : index
    %c0_233 = arith.constant 0 : index
    %c0_234 = arith.constant 0 : index
    %c0_235 = arith.constant 0 : index
    %201 = vector.load %arg3[%c2_232, %c0_233, %c0_234, %c0_235] : memref<3x3x8x4xf32, #tpu.memory_space<vmem>>, vector<1x1x8x4xf32>
    %202 = vector.shape_cast %201 : vector<1x1x8x4xf32> to vector<8x4xf32>
    %203 = vector.extract_strided_slice %200 {offsets = [0, 0], sizes = [4, 32], strides = [1, 1]} : vector<4x34xf32> to vector<4x32xf32>
    %cst_236 = arith.constant dense<0.000000e+00> : vector<8x32xf32>
    %204 = tpu.matmul %202, %203, %cst_236 {dimension_numbers = #tpu.dot_dimension_numbers<[1], [0], [0], [1], [0, 0, 1, 1], [], []>} : vector<8x4xf32>, vector<4x32xf32>, vector<8x32xf32> -> vector<8x32xf32>
    %205 = arith.addf %198, %204 : vector<8x32xf32>
    %c2_237 = arith.constant 2 : index
    %c1_238 = arith.constant 1 : index
    %c0_239 = arith.constant 0 : index
    %c0_240 = arith.constant 0 : index
    %206 = vector.load %arg3[%c2_237, %c1_238, %c0_239, %c0_240] : memref<3x3x8x4xf32, #tpu.memory_space<vmem>>, vector<1x1x8x4xf32>
    %207 = vector.shape_cast %206 : vector<1x1x8x4xf32> to vector<8x4xf32>
    %208 = vector.extract_strided_slice %200 {offsets = [0, 1], sizes = [4, 32], strides = [1, 1]} : vector<4x34xf32> to vector<4x32xf32>
    %cst_241 = arith.constant dense<0.000000e+00> : vector<8x32xf32>
    %209 = tpu.matmul %207, %208, %cst_241 {dimension_numbers = #tpu.dot_dimension_numbers<[1], [0], [0], [1], [0, 0, 1, 1], [], []>} : vector<8x4xf32>, vector<4x32xf32>, vector<8x32xf32> -> vector<8x32xf32>
    %210 = arith.addf %205, %209 : vector<8x32xf32>
    %c2_242 = arith.constant 2 : index
    %c2_243 = arith.constant 2 : index
    %c0_244 = arith.constant 0 : index
    %c0_245 = arith.constant 0 : index
    %211 = vector.load %arg3[%c2_242, %c2_243, %c0_244, %c0_245] : memref<3x3x8x4xf32, #tpu.memory_space<vmem>>, vector<1x1x8x4xf32>
    %212 = vector.shape_cast %211 : vector<1x1x8x4xf32> to vector<8x4xf32>
    %213 = vector.extract_strided_slice %200 {offsets = [0, 2], sizes = [4, 32], strides = [1, 1]} : vector<4x34xf32> to vector<4x32xf32>
    %cst_246 = arith.constant dense<0.000000e+00> : vector<8x32xf32>
    %214 = tpu.matmul %212, %213, %cst_246 {dimension_numbers = #tpu.dot_dimension_numbers<[1], [0], [0], [1], [0, 0, 1, 1], [], []>} : vector<8x4xf32>, vector<4x32xf32>, vector<8x32xf32> -> vector<8x32xf32>
    %215 = arith.addf %210, %214 : vector<8x32xf32>
    %216 = vector.broadcast %0 : vector<8x1xf32> to vector<8x32xf32>
    %217 = arith.addf %215, %216 : vector<8x32xf32>
    %c0_247 = arith.constant 0 : index
    %c0_248 = arith.constant 0 : index
    %c3_249 = arith.constant 3 : index
    %c0_250 = arith.constant 0 : index
    %218 = vector.load %arg5[%c0_247, %c0_248, %c3_249, %c0_250] : memref<1x8x8x32xf32, #tpu.memory_space<vmem>>, vector<1x8x1x32xf32>
    %219 = vector.shape_cast %218 : vector<1x8x1x32xf32> to vector<8x32xf32>
    %220 = vector.shape_cast %217 : vector<8x32xf32> to vector<1x8x1x32xf32>
    tpu.vector_store %arg5[%c0_247, %c0_248, %c3_249, %c0_250], %220 {strides = array<i32>} : memref<1x8x8x32xf32, #tpu.memory_space<vmem>>, vector<1x8x1x32xf32>,
    %c0_251 = arith.constant 0 : index
    %c0_252 = arith.constant 0 : index
    %c0_253 = arith.constant 0 : index
    %c4_254 = arith.constant 4 : index
    %c0_255 = arith.constant 0 : index
    %221 = vector.load %arg2[%c0_251, %c0_252, %c0_253, %c4_254, %c0_255] : memref<1x4x1x10x34xf32, #tpu.memory_space<vmem>>, vector<1x4x1x1x34xf32>
    %222 = vector.shape_cast %221 : vector<1x4x1x1x34xf32> to vector<4x34xf32>
    %c0_256 = arith.constant 0 : index
    %c0_257 = arith.constant 0 : index
    %c0_258 = arith.constant 0 : index
    %c0_259 = arith.constant 0 : index
    %223 = vector.load %arg3[%c0_256, %c0_257, %c0_258, %c0_259] : memref<3x3x8x4xf32, #tpu.memory_space<vmem>>, vector<1x1x8x4xf32>
    %224 = vector.shape_cast %223 : vector<1x1x8x4xf32> to vector<8x4xf32>
    %225 = vector.extract_strided_slice %222 {offsets = [0, 0], sizes = [4, 32], strides = [1, 1]} : vector<4x34xf32> to vector<4x32xf32>
    %cst_260 = arith.constant dense<0.000000e+00> : vector<8x32xf32>
    %226 = tpu.matmul %224, %225, %cst_260 {dimension_numbers = #tpu.dot_dimension_numbers<[1], [0], [0], [1], [0, 0, 1, 1], [], []>} : vector<8x4xf32>, vector<4x32xf32>, vector<8x32xf32> -> vector<8x32xf32>
    %c0_261 = arith.constant 0 : index
    %c1_262 = arith.constant 1 : index
    %c0_263 = arith.constant 0 : index
    %c0_264 = arith.constant 0 : index
    %227 = vector.load %arg3[%c0_261, %c1_262, %c0_263, %c0_264] : memref<3x3x8x4xf32, #tpu.memory_space<vmem>>, vector<1x1x8x4xf32>
    %228 = vector.shape_cast %227 : vector<1x1x8x4xf32> to vector<8x4xf32>
    %229 = vector.extract_strided_slice %222 {offsets = [0, 1], sizes = [4, 32], strides = [1, 1]} : vector<4x34xf32> to vector<4x32xf32>
    %cst_265 = arith.constant dense<0.000000e+00> : vector<8x32xf32>
    %230 = tpu.matmul %228, %229, %cst_265 {dimension_numbers = #tpu.dot_dimension_numbers<[1], [0], [0], [1], [0, 0, 1, 1], [], []>} : vector<8x4xf32>, vector<4x32xf32>, vector<8x32xf32> -> vector<8x32xf32>
    %231 = arith.addf %226, %230 : vector<8x32xf32>
    %c0_266 = arith.constant 0 : index
    %c2_267 = arith.constant 2 : index
    %c0_268 = arith.constant 0 : index
    %c0_269 = arith.constant 0 : index
    %232 = vector.load %arg3[%c0_266, %c2_267, %c0_268, %c0_269] : memref<3x3x8x4xf32, #tpu.memory_space<vmem>>, vector<1x1x8x4xf32>
    %233 = vector.shape_cast %232 : vector<1x1x8x4xf32> to vector<8x4xf32>
    %234 = vector.extract_strided_slice %222 {offsets = [0, 2], sizes = [4, 32], strides = [1, 1]} : vector<4x34xf32> to vector<4x32xf32>
    %cst_270 = arith.constant dense<0.000000e+00> : vector<8x32xf32>
    %235 = tpu.matmul %233, %234, %cst_270 {dimension_numbers = #tpu.dot_dimension_numbers<[1], [0], [0], [1], [0, 0, 1, 1], [], []>} : vector<8x4xf32>, vector<4x32xf32>, vector<8x32xf32> -> vector<8x32xf32>
    %236 = arith.addf %231, %235 : vector<8x32xf32>
    %c0_271 = arith.constant 0 : index
    %c0_272 = arith.constant 0 : index
    %c0_273 = arith.constant 0 : index
    %c5_274 = arith.constant 5 : index
    %c0_275 = arith.constant 0 : index
    %237 = vector.load %arg2[%c0_271, %c0_272, %c0_273, %c5_274, %c0_275] : memref<1x4x1x10x34xf32, #tpu.memory_space<vmem>>, vector<1x4x1x1x34xf32>
    %238 = vector.shape_cast %237 : vector<1x4x1x1x34xf32> to vector<4x34xf32>
    %c1_276 = arith.constant 1 : index
    %c0_277 = arith.constant 0 : index
    %c0_278 = arith.constant 0 : index
    %c0_279 = arith.constant 0 : index
    %239 = vector.load %arg3[%c1_276, %c0_277, %c0_278, %c0_279] : memref<3x3x8x4xf32, #tpu.memory_space<vmem>>, vector<1x1x8x4xf32>
    %240 = vector.shape_cast %239 : vector<1x1x8x4xf32> to vector<8x4xf32>
    %241 = vector.extract_strided_slice %238 {offsets = [0, 0], sizes = [4, 32], strides = [1, 1]} : vector<4x34xf32> to vector<4x32xf32>
    %cst_280 = arith.constant dense<0.000000e+00> : vector<8x32xf32>
    %242 = tpu.matmul %240, %241, %cst_280 {dimension_numbers = #tpu.dot_dimension_numbers<[1], [0], [0], [1], [0, 0, 1, 1], [], []>} : vector<8x4xf32>, vector<4x32xf32>, vector<8x32xf32> -> vector<8x32xf32>
    %243 = arith.addf %236, %242 : vector<8x32xf32>
    %c1_281 = arith.constant 1 : index
    %c1_282 = arith.constant 1 : index
    %c0_283 = arith.constant 0 : index
    %c0_284 = arith.constant 0 : index
    %244 = vector.load %arg3[%c1_281, %c1_282, %c0_283, %c0_284] : memref<3x3x8x4xf32, #tpu.memory_space<vmem>>, vector<1x1x8x4xf32>
    %245 = vector.shape_cast %244 : vector<1x1x8x4xf32> to vector<8x4xf32>
    %246 = vector.extract_strided_slice %238 {offsets = [0, 1], sizes = [4, 32], strides = [1, 1]} : vector<4x34xf32> to vector<4x32xf32>
    %cst_285 = arith.constant dense<0.000000e+00> : vector<8x32xf32>
    %247 = tpu.matmul %245, %246, %cst_285 {dimension_numbers = #tpu.dot_dimension_numbers<[1], [0], [0], [1], [0, 0, 1, 1], [], []>} : vector<8x4xf32>, vector<4x32xf32>, vector<8x32xf32> -> vector<8x32xf32>
    %248 = arith.addf %243, %247 : vector<8x32xf32>
    %c1_286 = arith.constant 1 : index
    %c2_287 = arith.constant 2 : index
    %c0_288 = arith.constant 0 : index
    %c0_289 = arith.constant 0 : index
    %249 = vector.load %arg3[%c1_286, %c2_287, %c0_288, %c0_289] : memref<3x3x8x4xf32, #tpu.memory_space<vmem>>, vector<1x1x8x4xf32>
    %250 = vector.shape_cast %249 : vector<1x1x8x4xf32> to vector<8x4xf32>
    %251 = vector.extract_strided_slice %238 {offsets = [0, 2], sizes = [4, 32], strides = [1, 1]} : vector<4x34xf32> to vector<4x32xf32>
    %cst_290 = arith.constant dense<0.000000e+00> : vector<8x32xf32>
    %252 = tpu.matmul %250, %251, %cst_290 {dimension_numbers = #tpu.dot_dimension_numbers<[1], [0], [0], [1], [0, 0, 1, 1], [], []>} : vector<8x4xf32>, vector<4x32xf32>, vector<8x32xf32> -> vector<8x32xf32>
    %253 = arith.addf %248, %252 : vector<8x32xf32>
    %c0_291 = arith.constant 0 : index
    %c0_292 = arith.constant 0 : index
    %c0_293 = arith.constant 0 : index
    %c6 = arith.constant 6 : index
    %c0_294 = arith.constant 0 : index
    %254 = vector.load %arg2[%c0_291, %c0_292, %c0_293, %c6, %c0_294] : memref<1x4x1x10x34xf32, #tpu.memory_space<vmem>>, vector<1x4x1x1x34xf32>
    %255 = vector.shape_cast %254 : vector<1x4x1x1x34xf32> to vector<4x34xf32>
    %c2_295 = arith.constant 2 : index
    %c0_296 = arith.constant 0 : index
    %c0_297 = arith.constant 0 : index
    %c0_298 = arith.constant 0 : index
    %256 = vector.load %arg3[%c2_295, %c0_296, %c0_297, %c0_298] : memref<3x3x8x4xf32, #tpu.memory_space<vmem>>, vector<1x1x8x4xf32>
    %257 = vector.shape_cast %256 : vector<1x1x8x4xf32> to vector<8x4xf32>
    %258 = vector.extract_strided_slice %255 {offsets = [0, 0], sizes = [4, 32], strides = [1, 1]} : vector<4x34xf32> to vector<4x32xf32>
    %cst_299 = arith.constant dense<0.000000e+00> : vector<8x32xf32>
    %259 = tpu.matmul %257, %258, %cst_299 {dimension_numbers = #tpu.dot_dimension_numbers<[1], [0], [0], [1], [0, 0, 1, 1], [], []>} : vector<8x4xf32>, vector<4x32xf32>, vector<8x32xf32> -> vector<8x32xf32>
    %260 = arith.addf %253, %259 : vector<8x32xf32>
    %c2_300 = arith.constant 2 : index
    %c1_301 = arith.constant 1 : index
    %c0_302 = arith.constant 0 : index
    %c0_303 = arith.constant 0 : index
    %261 = vector.load %arg3[%c2_300, %c1_301, %c0_302, %c0_303] : memref<3x3x8x4xf32, #tpu.memory_space<vmem>>, vector<1x1x8x4xf32>
    %262 = vector.shape_cast %261 : vector<1x1x8x4xf32> to vector<8x4xf32>
    %263 = vector.extract_strided_slice %255 {offsets = [0, 1], sizes = [4, 32], strides = [1, 1]} : vector<4x34xf32> to vector<4x32xf32>
    %cst_304 = arith.constant dense<0.000000e+00> : vector<8x32xf32>
    %264 = tpu.matmul %262, %263, %cst_304 {dimension_numbers = #tpu.dot_dimension_numbers<[1], [0], [0], [1], [0, 0, 1, 1], [], []>} : vector<8x4xf32>, vector<4x32xf32>, vector<8x32xf32> -> vector<8x32xf32>
    %265 = arith.addf %260, %264 : vector<8x32xf32>
    %c2_305 = arith.constant 2 : index
    %c2_306 = arith.constant 2 : index
    %c0_307 = arith.constant 0 : index
    %c0_308 = arith.constant 0 : index
    %266 = vector.load %arg3[%c2_305, %c2_306, %c0_307, %c0_308] : memref<3x3x8x4xf32, #tpu.memory_space<vmem>>, vector<1x1x8x4xf32>
    %267 = vector.shape_cast %266 : vector<1x1x8x4xf32> to vector<8x4xf32>
    %268 = vector.extract_strided_slice %255 {offsets = [0, 2], sizes = [4, 32], strides = [1, 1]} : vector<4x34xf32> to vector<4x32xf32>
    %cst_309 = arith.constant dense<0.000000e+00> : vector<8x32xf32>
    %269 = tpu.matmul %267, %268, %cst_309 {dimension_numbers = #tpu.dot_dimension_numbers<[1], [0], [0], [1], [0, 0, 1, 1], [], []>} : vector<8x4xf32>, vector<4x32xf32>, vector<8x32xf32> -> vector<8x32xf32>
    %270 = arith.addf %265, %269 : vector<8x32xf32>
    %271 = vector.broadcast %0 : vector<8x1xf32> to vector<8x32xf32>
    %272 = arith.addf %270, %271 : vector<8x32xf32>
    %c0_310 = arith.constant 0 : index
    %c0_311 = arith.constant 0 : index
    %c4_312 = arith.constant 4 : index
    %c0_313 = arith.constant 0 : index
    %273 = vector.load %arg5[%c0_310, %c0_311, %c4_312, %c0_313] : memref<1x8x8x32xf32, #tpu.memory_space<vmem>>, vector<1x8x1x32xf32>
    %274 = vector.shape_cast %273 : vector<1x8x1x32xf32> to vector<8x32xf32>
    %275 = vector.shape_cast %272 : vector<8x32xf32> to vector<1x8x1x32xf32>
    tpu.vector_store %arg5[%c0_310, %c0_311, %c4_312, %c0_313], %275 {strides = array<i32>} : memref<1x8x8x32xf32, #tpu.memory_space<vmem>>, vector<1x8x1x32xf32>,
    %c0_314 = arith.constant 0 : index
    %c0_315 = arith.constant 0 : index
    %c0_316 = arith.constant 0 : index
    %c5_317 = arith.constant 5 : index
    %c0_318 = arith.constant 0 : index
    %276 = vector.load %arg2[%c0_314, %c0_315, %c0_316, %c5_317, %c0_318] : memref<1x4x1x10x34xf32, #tpu.memory_space<vmem>>, vector<1x4x1x1x34xf32>
    %277 = vector.shape_cast %276 : vector<1x4x1x1x34xf32> to vector<4x34xf32>
    %c0_319 = arith.constant 0 : index
    %c0_320 = arith.constant 0 : index
    %c0_321 = arith.constant 0 : index
    %c0_322 = arith.constant 0 : index
    %278 = vector.load %arg3[%c0_319, %c0_320, %c0_321, %c0_322] : memref<3x3x8x4xf32, #tpu.memory_space<vmem>>, vector<1x1x8x4xf32>
    %279 = vector.shape_cast %278 : vector<1x1x8x4xf32> to vector<8x4xf32>
    %280 = vector.extract_strided_slice %277 {offsets = [0, 0], sizes = [4, 32], strides = [1, 1]} : vector<4x34xf32> to vector<4x32xf32>
    %cst_323 = arith.constant dense<0.000000e+00> : vector<8x32xf32>
    %281 = tpu.matmul %279, %280, %cst_323 {dimension_numbers = #tpu.dot_dimension_numbers<[1], [0], [0], [1], [0, 0, 1, 1], [], []>} : vector<8x4xf32>, vector<4x32xf32>, vector<8x32xf32> -> vector<8x32xf32>
    %c0_324 = arith.constant 0 : index
    %c1_325 = arith.constant 1 : index
    %c0_326 = arith.constant 0 : index
    %c0_327 = arith.constant 0 : index
    %282 = vector.load %arg3[%c0_324, %c1_325, %c0_326, %c0_327] : memref<3x3x8x4xf32, #tpu.memory_space<vmem>>, vector<1x1x8x4xf32>
    %283 = vector.shape_cast %282 : vector<1x1x8x4xf32> to vector<8x4xf32>
    %284 = vector.extract_strided_slice %277 {offsets = [0, 1], sizes = [4, 32], strides = [1, 1]} : vector<4x34xf32> to vector<4x32xf32>
    %cst_328 = arith.constant dense<0.000000e+00> : vector<8x32xf32>
    %285 = tpu.matmul %283, %284, %cst_328 {dimension_numbers = #tpu.dot_dimension_numbers<[1], [0], [0], [1], [0, 0, 1, 1], [], []>} : vector<8x4xf32>, vector<4x32xf32>, vector<8x32xf32> -> vector<8x32xf32>
    %286 = arith.addf %281, %285 : vector<8x32xf32>
    %c0_329 = arith.constant 0 : index
    %c2_330 = arith.constant 2 : index
    %c0_331 = arith.constant 0 : index
    %c0_332 = arith.constant 0 : index
    %287 = vector.load %arg3[%c0_329, %c2_330, %c0_331, %c0_332] : memref<3x3x8x4xf32, #tpu.memory_space<vmem>>, vector<1x1x8x4xf32>
    %288 = vector.shape_cast %287 : vector<1x1x8x4xf32> to vector<8x4xf32>
    %289 = vector.extract_strided_slice %277 {offsets = [0, 2], sizes = [4, 32], strides = [1, 1]} : vector<4x34xf32> to vector<4x32xf32>
    %cst_333 = arith.constant dense<0.000000e+00> : vector<8x32xf32>
    %290 = tpu.matmul %288, %289, %cst_333 {dimension_numbers = #tpu.dot_dimension_numbers<[1], [0], [0], [1], [0, 0, 1, 1], [], []>} : vector<8x4xf32>, vector<4x32xf32>, vector<8x32xf32> -> vector<8x32xf32>
    %291 = arith.addf %286, %290 : vector<8x32xf32>
    %c0_334 = arith.constant 0 : index
    %c0_335 = arith.constant 0 : index
    %c0_336 = arith.constant 0 : index
    %c6_337 = arith.constant 6 : index
    %c0_338 = arith.constant 0 : index
    %292 = vector.load %arg2[%c0_334, %c0_335, %c0_336, %c6_337, %c0_338] : memref<1x4x1x10x34xf32, #tpu.memory_space<vmem>>, vector<1x4x1x1x34xf32>
    %293 = vector.shape_cast %292 : vector<1x4x1x1x34xf32> to vector<4x34xf32>
    %c1_339 = arith.constant 1 : index
    %c0_340 = arith.constant 0 : index
    %c0_341 = arith.constant 0 : index
    %c0_342 = arith.constant 0 : index
    %294 = vector.load %arg3[%c1_339, %c0_340, %c0_341, %c0_342] : memref<3x3x8x4xf32, #tpu.memory_space<vmem>>, vector<1x1x8x4xf32>
    %295 = vector.shape_cast %294 : vector<1x1x8x4xf32> to vector<8x4xf32>
    %296 = vector.extract_strided_slice %293 {offsets = [0, 0], sizes = [4, 32], strides = [1, 1]} : vector<4x34xf32> to vector<4x32xf32>
    %cst_343 = arith.constant dense<0.000000e+00> : vector<8x32xf32>
    %297 = tpu.matmul %295, %296, %cst_343 {dimension_numbers = #tpu.dot_dimension_numbers<[1], [0], [0], [1], [0, 0, 1, 1], [], []>} : vector<8x4xf32>, vector<4x32xf32>, vector<8x32xf32> -> vector<8x32xf32>
    %298 = arith.addf %291, %297 : vector<8x32xf32>
    %c1_344 = arith.constant 1 : index
    %c1_345 = arith.constant 1 : index
    %c0_346 = arith.constant 0 : index
    %c0_347 = arith.constant 0 : index
    %299 = vector.load %arg3[%c1_344, %c1_345, %c0_346, %c0_347] : memref<3x3x8x4xf32, #tpu.memory_space<vmem>>, vector<1x1x8x4xf32>
    %300 = vector.shape_cast %299 : vector<1x1x8x4xf32> to vector<8x4xf32>
    %301 = vector.extract_strided_slice %293 {offsets = [0, 1], sizes = [4, 32], strides = [1, 1]} : vector<4x34xf32> to vector<4x32xf32>
    %cst_348 = arith.constant dense<0.000000e+00> : vector<8x32xf32>
    %302 = tpu.matmul %300, %301, %cst_348 {dimension_numbers = #tpu.dot_dimension_numbers<[1], [0], [0], [1], [0, 0, 1, 1], [], []>} : vector<8x4xf32>, vector<4x32xf32>, vector<8x32xf32> -> vector<8x32xf32>
    %303 = arith.addf %298, %302 : vector<8x32xf32>
    %c1_349 = arith.constant 1 : index
    %c2_350 = arith.constant 2 : index
    %c0_351 = arith.constant 0 : index
    %c0_352 = arith.constant 0 : index
    %304 = vector.load %arg3[%c1_349, %c2_350, %c0_351, %c0_352] : memref<3x3x8x4xf32, #tpu.memory_space<vmem>>, vector<1x1x8x4xf32>
    %305 = vector.shape_cast %304 : vector<1x1x8x4xf32> to vector<8x4xf32>
    %306 = vector.extract_strided_slice %293 {offsets = [0, 2], sizes = [4, 32], strides = [1, 1]} : vector<4x34xf32> to vector<4x32xf32>
    %cst_353 = arith.constant dense<0.000000e+00> : vector<8x32xf32>
    %307 = tpu.matmul %305, %306, %cst_353 {dimension_numbers = #tpu.dot_dimension_numbers<[1], [0], [0], [1], [0, 0, 1, 1], [], []>} : vector<8x4xf32>, vector<4x32xf32>, vector<8x32xf32> -> vector<8x32xf32>
    %308 = arith.addf %303, %307 : vector<8x32xf32>
    %c0_354 = arith.constant 0 : index
    %c0_355 = arith.constant 0 : index
    %c0_356 = arith.constant 0 : index
    %c7 = arith.constant 7 : index
    %c0_357 = arith.constant 0 : index
    %309 = vector.load %arg2[%c0_354, %c0_355, %c0_356, %c7, %c0_357] : memref<1x4x1x10x34xf32, #tpu.memory_space<vmem>>, vector<1x4x1x1x34xf32>
    %310 = vector.shape_cast %309 : vector<1x4x1x1x34xf32> to vector<4x34xf32>
    %c2_358 = arith.constant 2 : index
    %c0_359 = arith.constant 0 : index
    %c0_360 = arith.constant 0 : index
    %c0_361 = arith.constant 0 : index
    %311 = vector.load %arg3[%c2_358, %c0_359, %c0_360, %c0_361] : memref<3x3x8x4xf32, #tpu.memory_space<vmem>>, vector<1x1x8x4xf32>
    %312 = vector.shape_cast %311 : vector<1x1x8x4xf32> to vector<8x4xf32>
    %313 = vector.extract_strided_slice %310 {offsets = [0, 0], sizes = [4, 32], strides = [1, 1]} : vector<4x34xf32> to vector<4x32xf32>
    %cst_362 = arith.constant dense<0.000000e+00> : vector<8x32xf32>
    %314 = tpu.matmul %312, %313, %cst_362 {dimension_numbers = #tpu.dot_dimension_numbers<[1], [0], [0], [1], [0, 0, 1, 1], [], []>} : vector<8x4xf32>, vector<4x32xf32>, vector<8x32xf32> -> vector<8x32xf32>
    %315 = arith.addf %308, %314 : vector<8x32xf32>
    %c2_363 = arith.constant 2 : index
    %c1_364 = arith.constant 1 : index
    %c0_365 = arith.constant 0 : index
    %c0_366 = arith.constant 0 : index
    %316 = vector.load %arg3[%c2_363, %c1_364, %c0_365, %c0_366] : memref<3x3x8x4xf32, #tpu.memory_space<vmem>>, vector<1x1x8x4xf32>
    %317 = vector.shape_cast %316 : vector<1x1x8x4xf32> to vector<8x4xf32>
    %318 = vector.extract_strided_slice %310 {offsets = [0, 1], sizes = [4, 32], strides = [1, 1]} : vector<4x34xf32> to vector<4x32xf32>
    %cst_367 = arith.constant dense<0.000000e+00> : vector<8x32xf32>
    %319 = tpu.matmul %317, %318, %cst_367 {dimension_numbers = #tpu.dot_dimension_numbers<[1], [0], [0], [1], [0, 0, 1, 1], [], []>} : vector<8x4xf32>, vector<4x32xf32>, vector<8x32xf32> -> vector<8x32xf32>
    %320 = arith.addf %315, %319 : vector<8x32xf32>
    %c2_368 = arith.constant 2 : index
    %c2_369 = arith.constant 2 : index
    %c0_370 = arith.constant 0 : index
    %c0_371 = arith.constant 0 : index
    %321 = vector.load %arg3[%c2_368, %c2_369, %c0_370, %c0_371] : memref<3x3x8x4xf32, #tpu.memory_space<vmem>>, vector<1x1x8x4xf32>
    %322 = vector.shape_cast %321 : vector<1x1x8x4xf32> to vector<8x4xf32>
    %323 = vector.extract_strided_slice %310 {offsets = [0, 2], sizes = [4, 32], strides = [1, 1]} : vector<4x34xf32> to vector<4x32xf32>
    %cst_372 = arith.constant dense<0.000000e+00> : vector<8x32xf32>
    %324 = tpu.matmul %322, %323, %cst_372 {dimension_numbers = #tpu.dot_dimension_numbers<[1], [0], [0], [1], [0, 0, 1, 1], [], []>} : vector<8x4xf32>, vector<4x32xf32>, vector<8x32xf32> -> vector<8x32xf32>
    %325 = arith.addf %320, %324 : vector<8x32xf32>
    %326 = vector.broadcast %0 : vector<8x1xf32> to vector<8x32xf32>
    %327 = arith.addf %325, %326 : vector<8x32xf32>
    %c0_373 = arith.constant 0 : index
    %c0_374 = arith.constant 0 : index
    %c5_375 = arith.constant 5 : index
    %c0_376 = arith.constant 0 : index
    %328 = vector.load %arg5[%c0_373, %c0_374, %c5_375, %c0_376] : memref<1x8x8x32xf32, #tpu.memory_space<vmem>>, vector<1x8x1x32xf32>
    %329 = vector.shape_cast %328 : vector<1x8x1x32xf32> to vector<8x32xf32>
    %330 = vector.shape_cast %327 : vector<8x32xf32> to vector<1x8x1x32xf32>
    tpu.vector_store %arg5[%c0_373, %c0_374, %c5_375, %c0_376], %330 {strides = array<i32>} : memref<1x8x8x32xf32, #tpu.memory_space<vmem>>, vector<1x8x1x32xf32>,
    %c0_377 = arith.constant 0 : index
    %c0_378 = arith.constant 0 : index
    %c0_379 = arith.constant 0 : index
    %c6_380 = arith.constant 6 : index
    %c0_381 = arith.constant 0 : index
    %331 = vector.load %arg2[%c0_377, %c0_378, %c0_379, %c6_380, %c0_381] : memref<1x4x1x10x34xf32, #tpu.memory_space<vmem>>, vector<1x4x1x1x34xf32>
    %332 = vector.shape_cast %331 : vector<1x4x1x1x34xf32> to vector<4x34xf32>
    %c0_382 = arith.constant 0 : index
    %c0_383 = arith.constant 0 : index
    %c0_384 = arith.constant 0 : index
    %c0_385 = arith.constant 0 : index
    %333 = vector.load %arg3[%c0_382, %c0_383, %c0_384, %c0_385] : memref<3x3x8x4xf32, #tpu.memory_space<vmem>>, vector<1x1x8x4xf32>
    %334 = vector.shape_cast %333 : vector<1x1x8x4xf32> to vector<8x4xf32>
    %335 = vector.extract_strided_slice %332 {offsets = [0, 0], sizes = [4, 32], strides = [1, 1]} : vector<4x34xf32> to vector<4x32xf32>
    %cst_386 = arith.constant dense<0.000000e+00> : vector<8x32xf32>
    %336 = tpu.matmul %334, %335, %cst_386 {dimension_numbers = #tpu.dot_dimension_numbers<[1], [0], [0], [1], [0, 0, 1, 1], [], []>} : vector<8x4xf32>, vector<4x32xf32>, vector<8x32xf32> -> vector<8x32xf32>
    %c0_387 = arith.constant 0 : index
    %c1_388 = arith.constant 1 : index
    %c0_389 = arith.constant 0 : index
    %c0_390 = arith.constant 0 : index
    %337 = vector.load %arg3[%c0_387, %c1_388, %c0_389, %c0_390] : memref<3x3x8x4xf32, #tpu.memory_space<vmem>>, vector<1x1x8x4xf32>
    %338 = vector.shape_cast %337 : vector<1x1x8x4xf32> to vector<8x4xf32>
    %339 = vector.extract_strided_slice %332 {offsets = [0, 1], sizes = [4, 32], strides = [1, 1]} : vector<4x34xf32> to vector<4x32xf32>
    %cst_391 = arith.constant dense<0.000000e+00> : vector<8x32xf32>
    %340 = tpu.matmul %338, %339, %cst_391 {dimension_numbers = #tpu.dot_dimension_numbers<[1], [0], [0], [1], [0, 0, 1, 1], [], []>} : vector<8x4xf32>, vector<4x32xf32>, vector<8x32xf32> -> vector<8x32xf32>
    %341 = arith.addf %336, %340 : vector<8x32xf32>
    %c0_392 = arith.constant 0 : index
    %c2_393 = arith.constant 2 : index
    %c0_394 = arith.constant 0 : index
    %c0_395 = arith.constant 0 : index
    %342 = vector.load %arg3[%c0_392, %c2_393, %c0_394, %c0_395] : memref<3x3x8x4xf32, #tpu.memory_space<vmem>>, vector<1x1x8x4xf32>
    %343 = vector.shape_cast %342 : vector<1x1x8x4xf32> to vector<8x4xf32>
    %344 = vector.extract_strided_slice %332 {offsets = [0, 2], sizes = [4, 32], strides = [1, 1]} : vector<4x34xf32> to vector<4x32xf32>
    %cst_396 = arith.constant dense<0.000000e+00> : vector<8x32xf32>
    %345 = tpu.matmul %343, %344, %cst_396 {dimension_numbers = #tpu.dot_dimension_numbers<[1], [0], [0], [1], [0, 0, 1, 1], [], []>} : vector<8x4xf32>, vector<4x32xf32>, vector<8x32xf32> -> vector<8x32xf32>
    %346 = arith.addf %341, %345 : vector<8x32xf32>
    %c0_397 = arith.constant 0 : index
    %c0_398 = arith.constant 0 : index
    %c0_399 = arith.constant 0 : index
    %c7_400 = arith.constant 7 : index
    %c0_401 = arith.constant 0 : index
    %347 = vector.load %arg2[%c0_397, %c0_398, %c0_399, %c7_400, %c0_401] : memref<1x4x1x10x34xf32, #tpu.memory_space<vmem>>, vector<1x4x1x1x34xf32>
    %348 = vector.shape_cast %347 : vector<1x4x1x1x34xf32> to vector<4x34xf32>
    %c1_402 = arith.constant 1 : index
    %c0_403 = arith.constant 0 : index
    %c0_404 = arith.constant 0 : index
    %c0_405 = arith.constant 0 : index
    %349 = vector.load %arg3[%c1_402, %c0_403, %c0_404, %c0_405] : memref<3x3x8x4xf32, #tpu.memory_space<vmem>>, vector<1x1x8x4xf32>
    %350 = vector.shape_cast %349 : vector<1x1x8x4xf32> to vector<8x4xf32>
    %351 = vector.extract_strided_slice %348 {offsets = [0, 0], sizes = [4, 32], strides = [1, 1]} : vector<4x34xf32> to vector<4x32xf32>
    %cst_406 = arith.constant dense<0.000000e+00> : vector<8x32xf32>
    %352 = tpu.matmul %350, %351, %cst_406 {dimension_numbers = #tpu.dot_dimension_numbers<[1], [0], [0], [1], [0, 0, 1, 1], [], []>} : vector<8x4xf32>, vector<4x32xf32>, vector<8x32xf32> -> vector<8x32xf32>
    %353 = arith.addf %346, %352 : vector<8x32xf32>
    %c1_407 = arith.constant 1 : index
    %c1_408 = arith.constant 1 : index
    %c0_409 = arith.constant 0 : index
    %c0_410 = arith.constant 0 : index
    %354 = vector.load %arg3[%c1_407, %c1_408, %c0_409, %c0_410] : memref<3x3x8x4xf32, #tpu.memory_space<vmem>>, vector<1x1x8x4xf32>
    %355 = vector.shape_cast %354 : vector<1x1x8x4xf32> to vector<8x4xf32>
    %356 = vector.extract_strided_slice %348 {offsets = [0, 1], sizes = [4, 32], strides = [1, 1]} : vector<4x34xf32> to vector<4x32xf32>
    %cst_411 = arith.constant dense<0.000000e+00> : vector<8x32xf32>
    %357 = tpu.matmul %355, %356, %cst_411 {dimension_numbers = #tpu.dot_dimension_numbers<[1], [0], [0], [1], [0, 0, 1, 1], [], []>} : vector<8x4xf32>, vector<4x32xf32>, vector<8x32xf32> -> vector<8x32xf32>
    %358 = arith.addf %353, %357 : vector<8x32xf32>
    %c1_412 = arith.constant 1 : index
    %c2_413 = arith.constant 2 : index
    %c0_414 = arith.constant 0 : index
    %c0_415 = arith.constant 0 : index
    %359 = vector.load %arg3[%c1_412, %c2_413, %c0_414, %c0_415] : memref<3x3x8x4xf32, #tpu.memory_space<vmem>>, vector<1x1x8x4xf32>
    %360 = vector.shape_cast %359 : vector<1x1x8x4xf32> to vector<8x4xf32>
    %361 = vector.extract_strided_slice %348 {offsets = [0, 2], sizes = [4, 32], strides = [1, 1]} : vector<4x34xf32> to vector<4x32xf32>
    %cst_416 = arith.constant dense<0.000000e+00> : vector<8x32xf32>
    %362 = tpu.matmul %360, %361, %cst_416 {dimension_numbers = #tpu.dot_dimension_numbers<[1], [0], [0], [1], [0, 0, 1, 1], [], []>} : vector<8x4xf32>, vector<4x32xf32>, vector<8x32xf32> -> vector<8x32xf32>
    %363 = arith.addf %358, %362 : vector<8x32xf32>
    %c0_417 = arith.constant 0 : index
    %c0_418 = arith.constant 0 : index
    %c0_419 = arith.constant 0 : index
    %c8 = arith.constant 8 : index
    %c0_420 = arith.constant 0 : index
    %364 = vector.load %arg2[%c0_417, %c0_418, %c0_419, %c8, %c0_420] : memref<1x4x1x10x34xf32, #tpu.memory_space<vmem>>, vector<1x4x1x1x34xf32>
    %365 = vector.shape_cast %364 : vector<1x4x1x1x34xf32> to vector<4x34xf32>
    %c2_421 = arith.constant 2 : index
    %c0_422 = arith.constant 0 : index
    %c0_423 = arith.constant 0 : index
    %c0_424 = arith.constant 0 : index
    %366 = vector.load %arg3[%c2_421, %c0_422, %c0_423, %c0_424] : memref<3x3x8x4xf32, #tpu.memory_space<vmem>>, vector<1x1x8x4xf32>
    %367 = vector.shape_cast %366 : vector<1x1x8x4xf32> to vector<8x4xf32>
    %368 = vector.extract_strided_slice %365 {offsets = [0, 0], sizes = [4, 32], strides = [1, 1]} : vector<4x34xf32> to vector<4x32xf32>
    %cst_425 = arith.constant dense<0.000000e+00> : vector<8x32xf32>
    %369 = tpu.matmul %367, %368, %cst_425 {dimension_numbers = #tpu.dot_dimension_numbers<[1], [0], [0], [1], [0, 0, 1, 1], [], []>} : vector<8x4xf32>, vector<4x32xf32>, vector<8x32xf32> -> vector<8x32xf32>
    %370 = arith.addf %363, %369 : vector<8x32xf32>
    %c2_426 = arith.constant 2 : index
    %c1_427 = arith.constant 1 : index
    %c0_428 = arith.constant 0 : index
    %c0_429 = arith.constant 0 : index
    %371 = vector.load %arg3[%c2_426, %c1_427, %c0_428, %c0_429] : memref<3x3x8x4xf32, #tpu.memory_space<vmem>>, vector<1x1x8x4xf32>
    %372 = vector.shape_cast %371 : vector<1x1x8x4xf32> to vector<8x4xf32>
    %373 = vector.extract_strided_slice %365 {offsets = [0, 1], sizes = [4, 32], strides = [1, 1]} : vector<4x34xf32> to vector<4x32xf32>
    %cst_430 = arith.constant dense<0.000000e+00> : vector<8x32xf32>
    %374 = tpu.matmul %372, %373, %cst_430 {dimension_numbers = #tpu.dot_dimension_numbers<[1], [0], [0], [1], [0, 0, 1, 1], [], []>} : vector<8x4xf32>, vector<4x32xf32>, vector<8x32xf32> -> vector<8x32xf32>
    %375 = arith.addf %370, %374 : vector<8x32xf32>
    %c2_431 = arith.constant 2 : index
    %c2_432 = arith.constant 2 : index
    %c0_433 = arith.constant 0 : index
    %c0_434 = arith.constant 0 : index
    %376 = vector.load %arg3[%c2_431, %c2_432, %c0_433, %c0_434] : memref<3x3x8x4xf32, #tpu.memory_space<vmem>>, vector<1x1x8x4xf32>
    %377 = vector.shape_cast %376 : vector<1x1x8x4xf32> to vector<8x4xf32>
    %378 = vector.extract_strided_slice %365 {offsets = [0, 2], sizes = [4, 32], strides = [1, 1]} : vector<4x34xf32> to vector<4x32xf32>
    %cst_435 = arith.constant dense<0.000000e+00> : vector<8x32xf32>
    %379 = tpu.matmul %377, %378, %cst_435 {dimension_numbers = #tpu.dot_dimension_numbers<[1], [0], [0], [1], [0, 0, 1, 1], [], []>} : vector<8x4xf32>, vector<4x32xf32>, vector<8x32xf32> -> vector<8x32xf32>
    %380 = arith.addf %375, %379 : vector<8x32xf32>
    %381 = vector.broadcast %0 : vector<8x1xf32> to vector<8x32xf32>
    %382 = arith.addf %380, %381 : vector<8x32xf32>
    %c0_436 = arith.constant 0 : index
    %c0_437 = arith.constant 0 : index
    %c6_438 = arith.constant 6 : index
    %c0_439 = arith.constant 0 : index
    %383 = vector.load %arg5[%c0_436, %c0_437, %c6_438, %c0_439] : memref<1x8x8x32xf32, #tpu.memory_space<vmem>>, vector<1x8x1x32xf32>
    %384 = vector.shape_cast %383 : vector<1x8x1x32xf32> to vector<8x32xf32>
    %385 = vector.shape_cast %382 : vector<8x32xf32> to vector<1x8x1x32xf32>
    tpu.vector_store %arg5[%c0_436, %c0_437, %c6_438, %c0_439], %385 {strides = array<i32>} : memref<1x8x8x32xf32, #tpu.memory_space<vmem>>, vector<1x8x1x32xf32>,
    %c0_440 = arith.constant 0 : index
    %c0_441 = arith.constant 0 : index
    %c0_442 = arith.constant 0 : index
    %c7_443 = arith.constant 7 : index
    %c0_444 = arith.constant 0 : index
    %386 = vector.load %arg2[%c0_440, %c0_441, %c0_442, %c7_443, %c0_444] : memref<1x4x1x10x34xf32, #tpu.memory_space<vmem>>, vector<1x4x1x1x34xf32>
    %387 = vector.shape_cast %386 : vector<1x4x1x1x34xf32> to vector<4x34xf32>
    %c0_445 = arith.constant 0 : index
    %c0_446 = arith.constant 0 : index
    %c0_447 = arith.constant 0 : index
    %c0_448 = arith.constant 0 : index
    %388 = vector.load %arg3[%c0_445, %c0_446, %c0_447, %c0_448] : memref<3x3x8x4xf32, #tpu.memory_space<vmem>>, vector<1x1x8x4xf32>
    %389 = vector.shape_cast %388 : vector<1x1x8x4xf32> to vector<8x4xf32>
    %390 = vector.extract_strided_slice %387 {offsets = [0, 0], sizes = [4, 32], strides = [1, 1]} : vector<4x34xf32> to vector<4x32xf32>
    %cst_449 = arith.constant dense<0.000000e+00> : vector<8x32xf32>
    %391 = tpu.matmul %389, %390, %cst_449 {dimension_numbers = #tpu.dot_dimension_numbers<[1], [0], [0], [1], [0, 0, 1, 1], [], []>} : vector<8x4xf32>, vector<4x32xf32>, vector<8x32xf32> -> vector<8x32xf32>
    %c0_450 = arith.constant 0 : index
    %c1_451 = arith.constant 1 : index
    %c0_452 = arith.constant 0 : index
    %c0_453 = arith.constant 0 : index
    %392 = vector.load %arg3[%c0_450, %c1_451, %c0_452, %c0_453] : memref<3x3x8x4xf32, #tpu.memory_space<vmem>>, vector<1x1x8x4xf32>
    %393 = vector.shape_cast %392 : vector<1x1x8x4xf32> to vector<8x4xf32>
    %394 = vector.extract_strided_slice %387 {offsets = [0, 1], sizes = [4, 32], strides = [1, 1]} : vector<4x34xf32> to vector<4x32xf32>
    %cst_454 = arith.constant dense<0.000000e+00> : vector<8x32xf32>
    %395 = tpu.matmul %393, %394, %cst_454 {dimension_numbers = #tpu.dot_dimension_numbers<[1], [0], [0], [1], [0, 0, 1, 1], [], []>} : vector<8x4xf32>, vector<4x32xf32>, vector<8x32xf32> -> vector<8x32xf32>
    %396 = arith.addf %391, %395 : vector<8x32xf32>
    %c0_455 = arith.constant 0 : index
    %c2_456 = arith.constant 2 : index
    %c0_457 = arith.constant 0 : index
    %c0_458 = arith.constant 0 : index
    %397 = vector.load %arg3[%c0_455, %c2_456, %c0_457, %c0_458] : memref<3x3x8x4xf32, #tpu.memory_space<vmem>>, vector<1x1x8x4xf32>
    %398 = vector.shape_cast %397 : vector<1x1x8x4xf32> to vector<8x4xf32>
    %399 = vector.extract_strided_slice %387 {offsets = [0, 2], sizes = [4, 32], strides = [1, 1]} : vector<4x34xf32> to vector<4x32xf32>
    %cst_459 = arith.constant dense<0.000000e+00> : vector<8x32xf32>
    %400 = tpu.matmul %398, %399, %cst_459 {dimension_numbers = #tpu.dot_dimension_numbers<[1], [0], [0], [1], [0, 0, 1, 1], [], []>} : vector<8x4xf32>, vector<4x32xf32>, vector<8x32xf32> -> vector<8x32xf32>
    %401 = arith.addf %396, %400 : vector<8x32xf32>
    %c0_460 = arith.constant 0 : index
    %c0_461 = arith.constant 0 : index
    %c0_462 = arith.constant 0 : index
    %c8_463 = arith.constant 8 : index
    %c0_464 = arith.constant 0 : index
    %402 = vector.load %arg2[%c0_460, %c0_461, %c0_462, %c8_463, %c0_464] : memref<1x4x1x10x34xf32, #tpu.memory_space<vmem>>, vector<1x4x1x1x34xf32>
    %403 = vector.shape_cast %402 : vector<1x4x1x1x34xf32> to vector<4x34xf32>
    %c1_465 = arith.constant 1 : index
    %c0_466 = arith.constant 0 : index
    %c0_467 = arith.constant 0 : index
    %c0_468 = arith.constant 0 : index
    %404 = vector.load %arg3[%c1_465, %c0_466, %c0_467, %c0_468] : memref<3x3x8x4xf32, #tpu.memory_space<vmem>>, vector<1x1x8x4xf32>
    %405 = vector.shape_cast %404 : vector<1x1x8x4xf32> to vector<8x4xf32>
    %406 = vector.extract_strided_slice %403 {offsets = [0, 0], sizes = [4, 32], strides = [1, 1]} : vector<4x34xf32> to vector<4x32xf32>
    %cst_469 = arith.constant dense<0.000000e+00> : vector<8x32xf32>
    %407 = tpu.matmul %405, %406, %cst_469 {dimension_numbers = #tpu.dot_dimension_numbers<[1], [0], [0], [1], [0, 0, 1, 1], [], []>} : vector<8x4xf32>, vector<4x32xf32>, vector<8x32xf32> -> vector<8x32xf32>
    %408 = arith.addf %401, %407 : vector<8x32xf32>
    %c1_470 = arith.constant 1 : index
    %c1_471 = arith.constant 1 : index
    %c0_472 = arith.constant 0 : index
    %c0_473 = arith.constant 0 : index
    %409 = vector.load %arg3[%c1_470, %c1_471, %c0_472, %c0_473] : memref<3x3x8x4xf32, #tpu.memory_space<vmem>>, vector<1x1x8x4xf32>
    %410 = vector.shape_cast %409 : vector<1x1x8x4xf32> to vector<8x4xf32>
    %411 = vector.extract_strided_slice %403 {offsets = [0, 1], sizes = [4, 32], strides = [1, 1]} : vector<4x34xf32> to vector<4x32xf32>
    %cst_474 = arith.constant dense<0.000000e+00> : vector<8x32xf32>
    %412 = tpu.matmul %410, %411, %cst_474 {dimension_numbers = #tpu.dot_dimension_numbers<[1], [0], [0], [1], [0, 0, 1, 1], [], []>} : vector<8x4xf32>, vector<4x32xf32>, vector<8x32xf32> -> vector<8x32xf32>
    %413 = arith.addf %408, %412 : vector<8x32xf32>
    %c1_475 = arith.constant 1 : index
    %c2_476 = arith.constant 2 : index
    %c0_477 = arith.constant 0 : index
    %c0_478 = arith.constant 0 : index
    %414 = vector.load %arg3[%c1_475, %c2_476, %c0_477, %c0_478] : memref<3x3x8x4xf32, #tpu.memory_space<vmem>>, vector<1x1x8x4xf32>
    %415 = vector.shape_cast %414 : vector<1x1x8x4xf32> to vector<8x4xf32>
    %416 = vector.extract_strided_slice %403 {offsets = [0, 2], sizes = [4, 32], strides = [1, 1]} : vector<4x34xf32> to vector<4x32xf32>
    %cst_479 = arith.constant dense<0.000000e+00> : vector<8x32xf32>
    %417 = tpu.matmul %415, %416, %cst_479 {dimension_numbers = #tpu.dot_dimension_numbers<[1], [0], [0], [1], [0, 0, 1, 1], [], []>} : vector<8x4xf32>, vector<4x32xf32>, vector<8x32xf32> -> vector<8x32xf32>
    %418 = arith.addf %413, %417 : vector<8x32xf32>
    %c0_480 = arith.constant 0 : index
    %c0_481 = arith.constant 0 : index
    %c0_482 = arith.constant 0 : index
    %c9 = arith.constant 9 : index
    %c0_483 = arith.constant 0 : index
    %419 = vector.load %arg2[%c0_480, %c0_481, %c0_482, %c9, %c0_483] : memref<1x4x1x10x34xf32, #tpu.memory_space<vmem>>, vector<1x4x1x1x34xf32>
    %420 = vector.shape_cast %419 : vector<1x4x1x1x34xf32> to vector<4x34xf32>
    %c2_484 = arith.constant 2 : index
    %c0_485 = arith.constant 0 : index
    %c0_486 = arith.constant 0 : index
    %c0_487 = arith.constant 0 : index
    %421 = vector.load %arg3[%c2_484, %c0_485, %c0_486, %c0_487] : memref<3x3x8x4xf32, #tpu.memory_space<vmem>>, vector<1x1x8x4xf32>
    %422 = vector.shape_cast %421 : vector<1x1x8x4xf32> to vector<8x4xf32>
    %423 = vector.extract_strided_slice %420 {offsets = [0, 0], sizes = [4, 32], strides = [1, 1]} : vector<4x34xf32> to vector<4x32xf32>
    %cst_488 = arith.constant dense<0.000000e+00> : vector<8x32xf32>
    %424 = tpu.matmul %422, %423, %cst_488 {dimension_numbers = #tpu.dot_dimension_numbers<[1], [0], [0], [1], [0, 0, 1, 1], [], []>} : vector<8x4xf32>, vector<4x32xf32>, vector<8x32xf32> -> vector<8x32xf32>
    %425 = arith.addf %418, %424 : vector<8x32xf32>
    %c2_489 = arith.constant 2 : index
    %c1_490 = arith.constant 1 : index
    %c0_491 = arith.constant 0 : index
    %c0_492 = arith.constant 0 : index
    %426 = vector.load %arg3[%c2_489, %c1_490, %c0_491, %c0_492] : memref<3x3x8x4xf32, #tpu.memory_space<vmem>>, vector<1x1x8x4xf32>
    %427 = vector.shape_cast %426 : vector<1x1x8x4xf32> to vector<8x4xf32>
    %428 = vector.extract_strided_slice %420 {offsets = [0, 1], sizes = [4, 32], strides = [1, 1]} : vector<4x34xf32> to vector<4x32xf32>
    %cst_493 = arith.constant dense<0.000000e+00> : vector<8x32xf32>
    %429 = tpu.matmul %427, %428, %cst_493 {dimension_numbers = #tpu.dot_dimension_numbers<[1], [0], [0], [1], [0, 0, 1, 1], [], []>} : vector<8x4xf32>, vector<4x32xf32>, vector<8x32xf32> -> vector<8x32xf32>
    %430 = arith.addf %425, %429 : vector<8x32xf32>
    %c2_494 = arith.constant 2 : index
    %c2_495 = arith.constant 2 : index
    %c0_496 = arith.constant 0 : index
    %c0_497 = arith.constant 0 : index
    %431 = vector.load %arg3[%c2_494, %c2_495, %c0_496, %c0_497] : memref<3x3x8x4xf32, #tpu.memory_space<vmem>>, vector<1x1x8x4xf32>
    %432 = vector.shape_cast %431 : vector<1x1x8x4xf32> to vector<8x4xf32>
    %433 = vector.extract_strided_slice %420 {offsets = [0, 2], sizes = [4, 32], strides = [1, 1]} : vector<4x34xf32> to vector<4x32xf32>
    %cst_498 = arith.constant dense<0.000000e+00> : vector<8x32xf32>
    %434 = tpu.matmul %432, %433, %cst_498 {dimension_numbers = #tpu.dot_dimension_numbers<[1], [0], [0], [1], [0, 0, 1, 1], [], []>} : vector<8x4xf32>, vector<4x32xf32>, vector<8x32xf32> -> vector<8x32xf32>
    %435 = arith.addf %430, %434 : vector<8x32xf32>
    %436 = vector.broadcast %0 : vector<8x1xf32> to vector<8x32xf32>
    %437 = arith.addf %435, %436 : vector<8x32xf32>
    %c0_499 = arith.constant 0 : index
    %c0_500 = arith.constant 0 : index
    %c7_501 = arith.constant 7 : index
    %c0_502 = arith.constant 0 : index
    %438 = vector.load %arg5[%c0_499, %c0_500, %c7_501, %c0_502] : memref<1x8x8x32xf32, #tpu.memory_space<vmem>>, vector<1x8x1x32xf32>
    %439 = vector.shape_cast %438 : vector<1x8x1x32xf32> to vector<8x32xf32>
    %440 = vector.shape_cast %437 : vector<8x32xf32> to vector<1x8x1x32xf32>
    tpu.vector_store %arg5[%c0_499, %c0_500, %c7_501, %c0_502], %440 {strides = array<i32>} : memref<1x8x8x32xf32, #tpu.memory_space<vmem>>, vector<1x8x1x32xf32>,
    return
  }
  func.func @transform_0(%arg0: i32, %arg1: i32) -> (i32, i32, i32, i32, i32) {
    %c0_i32 = arith.constant 0 : i32
    %c0_i32_0 = arith.constant 0 : i32
    %c0_i32_1 = arith.constant 0 : i32
    %c0_i32_2 = arith.constant 0 : i32
    return %arg0, %c0_i32, %arg1, %c0_i32_0, %c0_i32_1 : i32, i32, i32, i32, i32
  }
  func.func @transform_1(%arg0: i32, %arg1: i32) -> (i32, i32, i32, i32) {
    %c0_i32 = arith.constant 0 : i32
    %c0_i32_0 = arith.constant 0 : i32
    %c0_i32_1 = arith.constant 0 : i32
    %c0_i32_2 = arith.constant 0 : i32
    %c0_i32_3 = arith.constant 0 : i32
    return %c0_i32, %c0_i32_0, %c0_i32_1, %c0_i32_2 : i32, i32, i32, i32
  }
  func.func @transform_2(%arg0: i32, %arg1: i32) -> (i32, i32) {
    %c0_i32 = arith.constant 0 : i32
    %c0_i32_0 = arith.constant 0 : i32
    %c0_i32_1 = arith.constant 0 : i32
    return %c0_i32, %c0_i32_0 : i32, i32
  }
  func.func @transform_3(%arg0: i32, %arg1: i32) -> (i32, i32, i32, i32) {
    %c0_i32 = arith.constant 0 : i32
    %c0_i32_0 = arith.constant 0 : i32
    %c0_i32_1 = arith.constant 0 : i32
    return %arg0, %c0_i32, %arg1, %c0_i32_0 : i32, i32, i32, i32
  }
}

</mosaic_0001>

<llo_original>
// kernel: upsample_conv_layer.1
$region0: #{upsample_conv_layer.1}
  #allocation0 [shape = 'u32[]', space=smem, size = 0x4, offset = 0x4, fixed_abs, tag = 'smem constant byte address 0x4 - core index']
  #allocation1 [shape = 'u32[144,128]{1,0:T(1,128)}', space=vmem, size = 0x12000, scoped, tag = 'internal scratch']
  %s0 = inlined_call_operand.vmem [shape: f32[2,4,4,10,34], index: 0, kind: input, shape index: {}]
  %s1 = inlined_call_operand.vmem [shape: f32[3,3,8,4], index: 1, kind: input, shape index: {}]
  %s2 = inlined_call_operand.vmem [shape: f32[8,1], index: 2, kind: input, shape index: {}]
  %s3 = inlined_call_operand.hbm [shape: f32[2,8,32,32], index: 3, kind: output, shape index: {}]
  %s4 = sld [smem:[#allocation0]]
  $region83: #{upsample_conv_layer.1} parent=0
    _
  %s6 = ssub.s32 1, %s4
  %s7 = scalar_select 0, %s6, %s4
  $region1: #{upsample_conv_layer.1} parent=0
    #allocation2 [shape = 'u8[65536]{0}', space=vmem, size = 0x10000, scoped, tag = 'input window, operand 0']
    #allocation3 [shape = 'u8[65536]{0}', space=vmem, size = 0x10000, scoped, tag = 'output window, operand 0']
    #allocation4 [shape = 's32[2]{0}', space=sflag, size = 0x8, scoped, tag = 'scoped memory for upsample_conv_layer.1']
    %8 = vsyncpa [#allocation4], 0
    %s9 = scalar_lea.sflag [#allocation4], 1
    %10 = vsyncpa %s9, 0
    loop: start=0, step=1, limit=10
    $region2: #{upsample_conv_layer.1} parent=1 // loop_pre_header
      _
    $region3: #{upsample_conv_layer.1} parent=1 // loop_header
      %s12 = sphi 0, %s16
      %p13 = scmp.ge.s32.totalorder %s12, 10
      %s19 = sphi 0, %s31
      %s20 = sphi 0, %s27
      %s21 = sphi 0, %s19
      %s22 = sphi 0, %s20
      %s23 = sphi 0, %s21
      %s24 = sphi 0, %s22
      %s36 = sphi 0, %s38
      %s39 = sphi 0, %s36
      %s40 = sphi 0, %s39
      %s56 = sphi 0, %s40
      %s60 = sphi 0, %s60
      %s62 = sphi 0, %s60
      %s63 = sphi 0, %s62
      %s77 = sphi 0, %s63
      %s81 = sphi 0, %s81
      %s83 = sphi 0, %s81
      %s84 = sphi 0, %s83
      %s98 = sphi 0, %s84
      %s106 = sphi 0, %s108
      %s109 = sphi 0, %s106
      %s110 = sphi 0, %s109
      %s126 = sphi 0, %s110
    $region4: #{upsample_conv_layer.1} parent=1 // loop_header_branch
      %15 = sbr.rel (%p13) target = $region8
    $region5: #{upsample_conv_layer.1} parent=1 // loop_body
      %s17 = ssub.s32 %s12, 1
      %s18 = ssub.s32 %s12, 2
      %s25 = sadd.s32 1, %s20
      %p26 = scmp.ge.s32.totalorder %s25, 4
      %s27 = scalar_select %p26, 0, %s25
      %s28 = sadd.s32 1, %s19
      %s29 = scalar_select %p26, %s28, %s19
      %p30 = scmp.ge.s32.totalorder %s29, 2
      %s31 = scalar_select %p30, 0, %s29
      %s32 = ssub.s32 %s19, %s31
      %s33 = ssub.s32 %s20, %s27
      %s34 = sor.u32 %s32, %s33
      %p35 = scmp.eq.s32.totalorder %s34, 0
      %s37 = sadd.s32 %s36, 1
      %s38 = scalar_select %p35, %s36, %s37
      %p41 = pneg %p35
      %p42 = scmp.eq.s32.totalorder %s12, 7
      %p43 = por %p41, %p42
      %p44 = scmp.ne.s32.totalorder %s36, %s39
      %p45 = scmp.eq.s32.totalorder %s12, 0
      %p46 = por %p44, %p45
      %p47 = scmp.ne.s32.totalorder %s36, %s39
      %p48 = scmp.eq.s32.totalorder %s17, 7
      %p49 = por %p47, %p48
      %p50 = scmp.ne.s32.totalorder %s39, %s40
      %p51 = scmp.eq.s32.totalorder %s17, 0
      %p52 = por %p50, %p51
      %p53 = scmp.ne.s32.totalorder %s39, %s40
      %p54 = scmp.eq.s32.totalorder %s18, 7
      %p55 = por %p53, %p54
      %p57 = scmp.ne.s32.totalorder %s40, %s56
      %p58 = scmp.eq.s32.totalorder %s18, 0
      %p59 = por %p57, %p58
      %s61 = sadd.s32 %s60, 1
      %p64 = scmp.eq.s32.totalorder %s12, 7
      %p65 = scmp.ne.s32.totalorder %s60, %s62
      %p66 = scmp.eq.s32.totalorder %s12, 0
      %p67 = por %p65, %p66
      %p68 = scmp.ne.s32.totalorder %s60, %s62
      %p69 = scmp.eq.s32.totalorder %s17, 7
      %p70 = por %p68, %p69
      %p71 = scmp.ne.s32.totalorder %s62, %s63
      %p72 = scmp.eq.s32.totalorder %s17, 0
      %p73 = por %p71, %p72
      %p74 = scmp.ne.s32.totalorder %s62, %s63
      %p75 = scmp.eq.s32.totalorder %s18, 7
      %p76 = por %p74, %p75
      %p78 = scmp.ne.s32.totalorder %s63, %s77
      %p79 = scmp.eq.s32.totalorder %s18, 0
      %p80 = por %p78, %p79
      %s82 = sadd.s32 %s81, 1
      %p85 = scmp.eq.s32.totalorder %s12, 7
      %p86 = scmp.ne.s32.totalorder %s81, %s83
      %p87 = scmp.eq.s32.totalorder %s12, 0
      %p88 = por %p86, %p87
      %p89 = scmp.ne.s32.totalorder %s81, %s83
      %p90 = scmp.eq.s32.totalorder %s17, 7
      %p91 = por %p89, %p90
      %p92 = scmp.ne.s32.totalorder %s83, %s84
      %p93 = scmp.eq.s32.totalorder %s17, 0
      %p94 = por %p92, %p93
      %p95 = scmp.ne.s32.totalorder %s83, %s84
      %p96 = scmp.eq.s32.totalorder %s18, 7
      %p97 = por %p95, %p96
      %p99 = scmp.ne.s32.totalorder %s84, %s98
      %p100 = scmp.eq.s32.totalorder %s18, 0
      %p101 = por %p99, %p100
      %s102 = ssub.s32 %s19, %s31
      %s103 = ssub.s32 %s20, %s27
      %s104 = sor.u32 %s102, %s103
      %p105 = scmp.eq.s32.totalorder %s104, 0
      %s107 = sadd.s32 %s106, 1
      %s108 = scalar_select %p105, %s106, %s107
      %p111 = pneg %p105
      %p112 = scmp.eq.s32.totalorder %s12, 7
      %p113 = por %p111, %p112
      %p114 = scmp.ne.s32.totalorder %s106, %s109
      %p115 = scmp.eq.s32.totalorder %s12, 0
      %p116 = por %p114, %p115
      %p117 = scmp.ne.s32.totalorder %s106, %s109
      %p118 = scmp.eq.s32.totalorder %s17, 7
      %p119 = por %p117, %p118
      %p120 = scmp.ne.s32.totalorder %s109, %s110
      %p121 = scmp.eq.s32.totalorder %s17, 0
      %p122 = por %p120, %p121
      %p123 = scmp.ne.s32.totalorder %s109, %s110
      %p124 = scmp.eq.s32.totalorder %s18, 7
      %p125 = por %p123, %p124
      %p127 = scmp.ne.s32.totalorder %s110, %s126
      %p128 = scmp.eq.s32.totalorder %s18, 0
      %p129 = por %p127, %p128
      %p130 = scmp.le.s32.totalorder 1, %s12
      %p131 = scmp.lt.s32.totalorder %s12, 9
      %p132 = pnand %p130, %p131
      %p133 = pneg %p132
      // Predicated region
      $region9: #{upsample_conv_layer.1} parent=5 // pred_check
        _
      $region10: #{upsample_conv_layer.1} parent=5 // pred_check_branch
        %135 = sbr.rel (%p132) target = $region12
      $region11: #{upsample_conv_layer.1} parent=5 // pred_region
        %s136 = ssub.s32 %s12, 1
        // Predicated region
        $region13: #{upsample_conv_layer.1} parent=11 // pred_check
          %p137 = pneg %p73
        $region14: #{upsample_conv_layer.1} parent=11 // pred_check_branch
          %139 = sbr.rel (%p137) target = $region16
        $region15: #{upsample_conv_layer.1} parent=11 // pred_region
          _
        $region16: #{upsample_conv_layer.1} parent=11 // pred_fallthru
          _
        // Predicated region
        $region17: #{upsample_conv_layer.1} parent=11 // pred_check
          %p140 = pneg %p94
        $region18: #{upsample_conv_layer.1} parent=11 // pred_check_branch
          %142 = sbr.rel (%p140) target = $region20
        $region19: #{upsample_conv_layer.1} parent=11 // pred_region
          _
        $region20: #{upsample_conv_layer.1} parent=11 // pred_fallthru
          _
      $region12: #{upsample_conv_layer.1} parent=5 // pred_fallthru
        _
      %p143 = scmp.lt.s32.totalorder %s12, 8
      // Predicated region
      $region21: #{upsample_conv_layer.1} parent=5 // pred_check
        %p144 = pneg %p143
      $region22: #{upsample_conv_layer.1} parent=5 // pred_check_branch
        %146 = sbr.rel (%p144) target = $region24
      $region23: #{upsample_conv_layer.1} parent=5 // pred_region
        // Predicated region
        $region25: #{upsample_conv_layer.1} parent=23 // pred_check
          %p147 = pneg %p46
        $region26: #{upsample_conv_layer.1} parent=23 // pred_check_branch
          %149 = sbr.rel (%p147) target = $region28
        $region27: #{upsample_conv_layer.1} parent=23 // pred_region
          %s150 = sand.u32 %s36, 1
          %s151 = sand.u32 %s36, 1
          %s152 = smul.addr %s151, 64
          %s153 = scalar_lea.vmem [#allocation2], %s152
          %s154 = smul.addr %s20, 2
          %s155 = smul.addr %s19, 32
          %s156 = sadd.s32 %s154, %s155
          %s157 = smul.addr %s156, 8
          %s158 = scalar_lea.vmem %s0, %s157
          // Predicated region
          $region29: #{upsample_conv_layer.1} parent=27 // pred_check
            _
          $region30: #{upsample_conv_layer.1} parent=27 // pred_check_branch
            %160 = sbr.rel (0) target = $region32
          $region31: #{upsample_conv_layer.1} parent=27 // pred_region
            // Predicated region
            $region33: #{upsample_conv_layer.1} parent=31 // pred_check
              _
            $region34: #{upsample_conv_layer.1} parent=31 // pred_check_branch
              %162 = sbr.rel (0) target = $region36
            $region35: #{upsample_conv_layer.1} parent=31 // pred_region
              // Predicated region
              $region48: #{upsample_conv_layer.1} parent=35 // pred_check
                _
              $region49: #{upsample_conv_layer.1} parent=35 // pred_check_branch
                %191 = sbr.rel (0) target = $region51
              $region50: #{upsample_conv_layer.1} parent=35 // pred_region
                loop: start=0, step=1, limit=1
                $region52: #{upsample_conv_layer.1} parent=50 // loop_pre_header
                  _
                $region53: #{upsample_conv_layer.1} parent=50 // loop_header
                  %s193 = sphi 0, %s197
                  %p194 = scmp.ge.s32.totalorder %s193, 1
                  %s198 = sphi %s158, %s158
                  %s199 = sphi %s153, %s153
                $region54: #{upsample_conv_layer.1} parent=50 // loop_header_branch
                  %196 = sbr.rel (%p194) target = $region58
                $region55: #{upsample_conv_layer.1} parent=50 // loop_body
                  %v200 = vld [vmem:[%s198] sm:$0xff]
                  %201 = vst [vmem:[%s199] sm:$0xff] %v200
                  %v202 = vld [vmem:[%s198 + $0x8] sm:$0xff]
                  %203 = vst [vmem:[%s199 + $0x8] sm:$0xff] %v202
                  %v204 = vld [vmem:[%s198 + $0x40] sm:$0xff]
                  %205 = vst [vmem:[%s199 + $0x10] sm:$0xff] %v204
                  %v206 = vld [vmem:[%s198 + $0x48] sm:$0xff]
                  %207 = vst [vmem:[%s199 + $0x18] sm:$0xff] %v206
                  %v208 = vld [vmem:[%s198 + $0x80] sm:$0xff]
                  %209 = vst [vmem:[%s199 + $0x20] sm:$0xff] %v208
                  %v210 = vld [vmem:[%s198 + $0x88] sm:$0xff]
                  %211 = vst [vmem:[%s199 + $0x28] sm:$0xff] %v210
                  %v212 = vld [vmem:[%s198 + $0xc0] sm:$0xff]
                  %213 = vst [vmem:[%s199 + $0x30] sm:$0xff] %v212
                  %v214 = vld [vmem:[%s198 + $0xc8] sm:$0xff]
                  %215 = vst [vmem:[%s199 + $0x38] sm:$0xff] %v214
                $region56: #{upsample_conv_layer.1} parent=50 // loop_footer
                  %s197 = sadd.s32 1, %s193
                $region57: #{upsample_conv_layer.1} parent=50 // loop_footer_branch
                  %192 = sbr.rel target = $region53
                $region58: #{upsample_conv_layer.1} parent=50 // loop_exit
                  _
              $region51: #{upsample_conv_layer.1} parent=35 // pred_fallthru
                _
              // Predicated region
              $region59: #{upsample_conv_layer.1} parent=35 // pred_check
                _
              $region60: #{upsample_conv_layer.1} parent=35 // pred_check_branch
                %217 = sbr.rel target = $region62
              $region61: #{upsample_conv_layer.1} parent=35 // pred_region
                _
              $region62: #{upsample_conv_layer.1} parent=35 // pred_fallthru
                _
            $region36: #{upsample_conv_layer.1} parent=31 // pred_fallthru
              _
            // Predicated region
            $region37: #{upsample_conv_layer.1} parent=31 // pred_check
              _
            $region38: #{upsample_conv_layer.1} parent=31 // pred_check_branch
              %164 = sbr.rel target = $region40
            $region39: #{upsample_conv_layer.1} parent=31 // pred_region
              loop: start=0, step=1, limit=1
              $region41: #{upsample_conv_layer.1} parent=39 // loop_pre_header
                _
              $region42: #{upsample_conv_layer.1} parent=39 // loop_header
                %s167 = sphi 0, %s171
                %p168 = scmp.ge.s32.totalorder %s167, 1
                %s172 = sphi %s158, %s158
                %s173 = sphi %s153, %s153
              $region43: #{upsample_conv_layer.1} parent=39 // loop_header_branch
                %170 = sbr.rel (%p168) target = $region47
              $region44: #{upsample_conv_layer.1} parent=39 // loop_body
                %v174 = vld [vmem:[%s172] sm:$0xff]
                %175 = vst [vmem:[%s173] sm:$0xff] %v174
                %v176 = vld [vmem:[%s172 + $0x8] sm:$0xff]
                %177 = vst [vmem:[%s173 + $0x8] sm:$0xff] %v176
                %v178 = vld [vmem:[%s172 + $0x40] sm:$0xff]
                %179 = vst [vmem:[%s173 + $0x10] sm:$0xff] %v178
                %v180 = vld [vmem:[%s172 + $0x48] sm:$0xff]
                %181 = vst [vmem:[%s173 + $0x18] sm:$0xff] %v180
                %v182 = vld [vmem:[%s172 + $0x80] sm:$0xff]
                %183 = vst [vmem:[%s173 + $0x20] sm:$0xff] %v182
                %v184 = vld [vmem:[%s172 + $0x88] sm:$0xff]
                %185 = vst [vmem:[%s173 + $0x28] sm:$0xff] %v184
                %v186 = vld [vmem:[%s172 + $0xc0] sm:$0xff]
                %187 = vst [vmem:[%s173 + $0x30] sm:$0xff] %v186
                %v188 = vld [vmem:[%s172 + $0xc8] sm:$0xff]
                %189 = vst [vmem:[%s173 + $0x38] sm:$0xff] %v188
              $region45: #{upsample_conv_layer.1} parent=39 // loop_footer
                %s171 = sadd.s32 1, %s167
              $region46: #{upsample_conv_layer.1} parent=39 // loop_footer_branch
                %166 = sbr.rel target = $region42
              $region47: #{upsample_conv_layer.1} parent=39 // loop_exit
                _
            $region40: #{upsample_conv_layer.1} parent=31 // pred_fallthru
              _
          $region32: #{upsample_conv_layer.1} parent=27 // pred_fallthru
            _
          %218 = vnop
        $region28: #{upsample_conv_layer.1} parent=23 // pred_fallthru
          _
      $region24: #{upsample_conv_layer.1} parent=5 // pred_fallthru
        _
      %p219 = scmp.le.s32.totalorder 1, %s12
      %p220 = scmp.lt.s32.totalorder %s12, 9
      %p221 = pnand %p219, %p220
      %p222 = pneg %p221
      // Predicated region
      $region63: #{upsample_conv_layer.1} parent=5 // pred_check
        _
      $region64: #{upsample_conv_layer.1} parent=5 // pred_check_branch
        %224 = sbr.rel (%p221) target = $region66
      $region65: #{upsample_conv_layer.1} parent=5 // pred_region
        %s225 = ssub.s32 %s12, 1
        %s226 = sand.u32 %s39, 1
        %s227 = sand.u32 %s39, 1
        %s228 = smul.addr %s227, 64
        %s229 = scalar_lea.vmem [#allocation2], %s228
        // Predicated region
        $region67: #{upsample_conv_layer.1} parent=65 // pred_check
          %p230 = pneg %p52
        $region68: #{upsample_conv_layer.1} parent=65 // pred_check_branch
          %232 = sbr.rel (%p230) target = $region70
        $region69: #{upsample_conv_layer.1} parent=65 // pred_region
          _
        $region70: #{upsample_conv_layer.1} parent=65 // pred_fallthru
          _
        %s233 = sand.u32 %s39, 1
        %s234 = sand.u32 %s39, 1
        %s235 = smul.addr %s234, 64
        %s236 = scalar_lea.vmem [#allocation2], %s235
        %p237 = pneg %p52
        %p238 = pneg %p49
        %p239 = pneg %p73
        %p240 = pneg %p70
        %p241 = pneg %p94
        %p242 = pneg %p91
        %p243 = pneg %p122
        %p244 = pneg %p119
        %s245 = sand.u32 %s109, 1
        %s246 = scalar_lea.sflag [#allocation4], %s245
        %s247 = sand.u32 %s109, 1
        %s248 = smul.addr %s247, 64
        %s249 = scalar_lea.vmem [#allocation3], %s248
        %v250 = vld [vmem:[%s2] sm:$0xff]
        %v251 = vld [vmem:[%s229] sm:$0x1]
        %v252 = vld [vmem:[%s229 + $0x10] sm:$0x1]
        %v253 = vld [vmem:[%s229 + $0x20] sm:$0x1]
        %v254 = vld [vmem:[%s229 + $0x30] sm:$0x1]
        %v255 = vld [vmem:[%s1] sm:$0xff]
        %s256 = scalar_lea.vmem %s1, 8
        %v257 = vld [vmem:[%s256] sm:$0xff]
        %v262 = vrot.slane %v252, 7
        %vm263 = vcmask 1041409
        %v264 = vsel %vm263, %v262, %v251
        %v265 = vrot.slane %v253, 6
        %vm266 = vcmask 1042434
        %v267 = vsel %vm266, %v265, %v264
        %v268 = vrot.slane %v254, 5
        %vm269 = vcmask 1043459
        %v270 = vsel %vm269, %v268, %v267
        %271 = vrot.lane.b32.xlu0 %v270, 127
        %v272 = vpop.permute.xlu0 %271
        %vm273 = vcmask 31744
        %v275 = vsel %vm273, %v257, 0
        %vm277 = vcmask 1043456
        %v278 = vsel %vm277, %v272, 0
        %280 = vmatprep.subr.mxu0 0.0
        %281 = vmatpush1.msra.mxu0 %v278
        %282 = vmatprep.subr.mxu0 0.0
        %283 = vmatpush1.msra.mxu0 0.0
        %284 = vmatprep.subr.mxu0 0.0
        %285 = vmatpush1.msra.mxu0 0.0
        %286 = vmatprep.subr.mxu0 0.0
        %287 = vmatpush1.msra.mxu0 0.0
        %288 = vmatprep.subr.mxu0 0.0
        %289 = vmatpush1.msra.mxu0 0.0
        %290 = vmatprep.subr.mxu0 0.0
        %291 = vmatpush1.msra.mxu0 0.0
        %292 = vmatprep.subr.mxu0 0.0
        %293 = vmatpush1.msra.mxu0 0.0
        %294 = vmatprep.subr.mxu0 0.0
        %295 = vmatpush1.msra.mxu0 0.0
        %296 = vmatprep.subr.mxu0 0.0
        %297 = vmatpush1.msra.mxu0 0.0
        %298 = vmatprep.subr.mxu0 0.0
        %299 = vmatpush1.msra.mxu0 0.0
        %300 = vmatprep.subr.mxu0 0.0
        %301 = vmatpush1.msra.mxu0 0.0
        %302 = vmatprep.subr.mxu0 0.0
        %303 = vmatpush1.msra.mxu0 0.0
        %304 = vmatprep.subr.mxu0 0.0
        %305 = vmatpush1.msra.mxu0 0.0
        %306 = vmatprep.subr.mxu0 0.0
        %307 = vmatpush1.msra.mxu0 0.0
        %308 = vmatprep.subr.mxu0 0.0
        %309 = vmatpush1.msra.mxu0 0.0
        %310 = vmatprep.subr.mxu0 0.0
        %311 = vmatpush1.msra.mxu0 0.0
        %312 = vmatprep.subr.mxu0 0.0
        %313 = vmatpush1.msra.mxu0 0.0
        %314 = vmatprep.subr.mxu0 0.0
        %315 = vmatpush1.msra.mxu0 0.0
        %316 = vmatprep.subr.mxu0 0.0
        %317 = vmatpush1.msra.mxu0 0.0
        %318 = vmatprep.subr.mxu0 0.0
        %319 = vmatpush1.msra.mxu0 0.0
        %320 = vmatprep.subr.mxu0 0.0
        %321 = vmatpush1.msra.mxu0 0.0
        %322 = vmatprep.subr.mxu0 0.0
        %323 = vmatpush1.msra.mxu0 0.0
        %324 = vmatprep.subr.mxu0 0.0
        %325 = vmatpush1.msra.mxu0 0.0
        %326 = vmatprep.subr.mxu0 0.0
        %327 = vmatpush1.msra.mxu0 0.0
        %328 = vmatprep.subr.mxu0 0.0
        %329 = vmatpush1.msra.mxu0 0.0
        %330 = vmatprep.subr.mxu0 0.0
        %331 = vmatpush1.msra.mxu0 0.0
        %332 = vmatprep.subr.mxu0 0.0
        %333 = vmatpush1.msra.mxu0 0.0
        %334 = vmatprep.subr.mxu0 0.0
        %335 = vmatpush1.msra.mxu0 0.0
        %336 = vmatprep.subr.mxu0 0.0
        %337 = vmatpush1.msra.mxu0 0.0
        %338 = vmatprep.subr.mxu0 0.0
        %339 = vmatpush1.msra.mxu0 0.0
        %340 = vmatprep.subr.mxu0 0.0
        %341 = vmatpush1.msra.mxu0 0.0
        %342 = vmatprep.subr.mxu0 0.0
        %343 = vmatpush1.msra.mxu0 0.0
        %344 = vmatprep.mubr.f32.mxu0 0.0
        %345 = vmatmul.mubr.f32.gmra.mrb[0].mxu0 %v275
        %v346 = vpop.f32.mrb[0].mxu0
        %v347 = vadd.f32 0.0, %v346
        %v348 = vpop.f32.mrb[0].mxu0
        %349 = vdwg.mxu0
        %v351 = vsel %vm273, %v255, 0
        %v353 = vsel %vm277, %v270, 0
        %355 = vmatprep.subr.mxu0 0.0
        %356 = vmatpush1.msra.mxu0 %v353
        %357 = vmatprep.subr.mxu0 0.0
        %358 = vmatpush1.msra.mxu0 0.0
        %359 = vmatprep.subr.mxu0 0.0
        %360 = vmatpush1.msra.mxu0 0.0
        %361 = vmatprep.subr.mxu0 0.0
        %362 = vmatpush1.msra.mxu0 0.0
        %363 = vmatprep.subr.mxu0 0.0
        %364 = vmatpush1.msra.mxu0 0.0
        %365 = vmatprep.subr.mxu0 0.0
        %366 = vmatpush1.msra.mxu0 0.0
        %367 = vmatprep.subr.mxu0 0.0
        %368 = vmatpush1.msra.mxu0 0.0
        %369 = vmatprep.subr.mxu0 0.0
        %370 = vmatpush1.msra.mxu0 0.0
        %371 = vmatprep.subr.mxu0 0.0
        %372 = vmatpush1.msra.mxu0 0.0
        %373 = vmatprep.subr.mxu0 0.0
        %374 = vmatpush1.msra.mxu0 0.0
        %375 = vmatprep.subr.mxu0 0.0
        %376 = vmatpush1.msra.mxu0 0.0
        %377 = vmatprep.subr.mxu0 0.0
        %378 = vmatpush1.msra.mxu0 0.0
        %379 = vmatprep.subr.mxu0 0.0
        %380 = vmatpush1.msra.mxu0 0.0
        %381 = vmatprep.subr.mxu0 0.0
        %382 = vmatpush1.msra.mxu0 0.0
        %383 = vmatprep.subr.mxu0 0.0
        %384 = vmatpush1.msra.mxu0 0.0
        %385 = vmatprep.subr.mxu0 0.0
        %386 = vmatpush1.msra.mxu0 0.0
        %387 = vmatprep.subr.mxu0 0.0
        %388 = vmatpush1.msra.mxu0 0.0
        %389 = vmatprep.subr.mxu0 0.0
        %390 = vmatpush1.msra.mxu0 0.0
        %391 = vmatprep.subr.mxu0 0.0
        %392 = vmatpush1.msra.mxu0 0.0
        %393 = vmatprep.subr.mxu0 0.0
        %394 = vmatpush1.msra.mxu0 0.0
        %395 = vmatprep.subr.mxu0 0.0
        %396 = vmatpush1.msra.mxu0 0.0
        %397 = vmatprep.subr.mxu0 0.0
        %398 = vmatpush1.msra.mxu0 0.0
        %399 = vmatprep.subr.mxu0 0.0
        %400 = vmatpush1.msra.mxu0 0.0
        %401 = vmatprep.subr.mxu0 0.0
        %402 = vmatpush1.msra.mxu0 0.0
        %403 = vmatprep.subr.mxu0 0.0
        %404 = vmatpush1.msra.mxu0 0.0
        %405 = vmatprep.subr.mxu0 0.0
        %406 = vmatpush1.msra.mxu0 0.0
        %407 = vmatprep.subr.mxu0 0.0
        %408 = vmatpush1.msra.mxu0 0.0
        %409 = vmatprep.subr.mxu0 0.0
        %410 = vmatpush1.msra.mxu0 0.0
        %411 = vmatprep.subr.mxu0 0.0
        %412 = vmatpush1.msra.mxu0 0.0
        %413 = vmatprep.subr.mxu0 0.0
        %414 = vmatpush1.msra.mxu0 0.0
        %415 = vmatprep.subr.mxu0 0.0
        %416 = vmatpush1.msra.mxu0 0.0
        %417 = vmatprep.subr.mxu0 0.0
        %418 = vmatpush1.msra.mxu0 0.0
        %419 = vmatprep.mubr.f32.mxu0 0.0
        %420 = vmatmul.mubr.f32.gmra.mrb[0].mxu0 %v351
        %v421 = vpop.f32.mrb[0].mxu0
        %v422 = vadd.f32 %v347, %v421
        %v423 = vpop.f32.mrb[0].mxu0
        %424 = vdwg.mxu0
        %s425 = scalar_lea.vmem %s1, 16
        %v426 = vld [vmem:[%s425] sm:$0xff]
        %427 = vrot.lane.b32.xlu0 %v270, 126
        %v428 = vpop.permute.xlu0 %427
        %v430 = vsel %vm273, %v426, 0
        %v432 = vsel %vm277, %v428, 0
        %434 = vmatprep.subr.mxu0 0.0
        %435 = vmatpush1.msra.mxu0 %v432
        %436 = vmatprep.subr.mxu0 0.0
        %437 = vmatpush1.msra.mxu0 0.0
        %438 = vmatprep.subr.mxu0 0.0
        %439 = vmatpush1.msra.mxu0 0.0
        %440 = vmatprep.subr.mxu0 0.0
        %441 = vmatpush1.msra.mxu0 0.0
        %442 = vmatprep.subr.mxu0 0.0
        %443 = vmatpush1.msra.mxu0 0.0
        %444 = vmatprep.subr.mxu0 0.0
        %445 = vmatpush1.msra.mxu0 0.0
        %446 = vmatprep.subr.mxu0 0.0
        %447 = vmatpush1.msra.mxu0 0.0
        %448 = vmatprep.subr.mxu0 0.0
        %449 = vmatpush1.msra.mxu0 0.0
        %450 = vmatprep.subr.mxu0 0.0
        %451 = vmatpush1.msra.mxu0 0.0
        %452 = vmatprep.subr.mxu0 0.0
        %453 = vmatpush1.msra.mxu0 0.0
        %454 = vmatprep.subr.mxu0 0.0
        %455 = vmatpush1.msra.mxu0 0.0
        %456 = vmatprep.subr.mxu0 0.0
        %457 = vmatpush1.msra.mxu0 0.0
        %458 = vmatprep.subr.mxu0 0.0
        %459 = vmatpush1.msra.mxu0 0.0
        %460 = vmatprep.subr.mxu0 0.0
        %461 = vmatpush1.msra.mxu0 0.0
        %462 = vmatprep.subr.mxu0 0.0
        %463 = vmatpush1.msra.mxu0 0.0
        %464 = vmatprep.subr.mxu0 0.0
        %465 = vmatpush1.msra.mxu0 0.0
        %466 = vmatprep.subr.mxu0 0.0
        %467 = vmatpush1.msra.mxu0 0.0
        %468 = vmatprep.subr.mxu0 0.0
        %469 = vmatpush1.msra.mxu0 0.0
        %470 = vmatprep.subr.mxu0 0.0
        %471 = vmatpush1.msra.mxu0 0.0
        %472 = vmatprep.subr.mxu0 0.0
        %473 = vmatpush1.msra.mxu0 0.0
        %474 = vmatprep.subr.mxu0 0.0
        %475 = vmatpush1.msra.mxu0 0.0
        %476 = vmatprep.subr.mxu0 0.0
        %477 = vmatpush1.msra.mxu0 0.0
        %478 = vmatprep.subr.mxu0 0.0
        %479 = vmatpush1.msra.mxu0 0.0
        %480 = vmatprep.subr.mxu0 0.0
        %481 = vmatpush1.msra.mxu0 0.0
        %482 = vmatprep.subr.mxu0 0.0
        %483 = vmatpush1.msra.mxu0 0.0
        %484 = vmatprep.subr.mxu0 0.0
        %485 = vmatpush1.msra.mxu0 0.0
        %486 = vmatprep.subr.mxu0 0.0
        %487 = vmatpush1.msra.mxu0 0.0
        %488 = vmatprep.subr.mxu0 0.0
        %489 = vmatpush1.msra.mxu0 0.0
        %490 = vmatprep.subr.mxu0 0.0
        %491 = vmatpush1.msra.mxu0 0.0
        %492 = vmatprep.subr.mxu0 0.0
        %493 = vmatpush1.msra.mxu0 0.0
        %494 = vmatprep.subr.mxu0 0.0
        %495 = vmatpush1.msra.mxu0 0.0
        %496 = vmatprep.subr.mxu0 0.0
        %497 = vmatpush1.msra.mxu0 0.0
        %498 = vmatprep.mubr.f32.mxu0 0.0
        %499 = vmatmul.mubr.f32.gmra.mrb[0].mxu0 %v430
        %v500 = vpop.f32.mrb[0].mxu0
        %v501 = vadd.f32 0.0, %v500
        %v502 = vpop.f32.mrb[0].mxu0
        %503 = vdwg.mxu0
        %v504 = vadd.f32 %v422, %v501
        %v505 = vld [vmem:[%s229 + $0x1] sm:$0x1]
        %v506 = vld [vmem:[%s229 + $0x11] sm:$0x1]
        %v507 = vld [vmem:[%s229 + $0x21] sm:$0x1]
        %v508 = vld [vmem:[%s229 + $0x31] sm:$0x1]
        %s509 = scalar_lea.vmem %s1, 24
        %v510 = vld [vmem:[%s509] sm:$0xff]
        %v515 = vrot.slane %v506, 7
        %v516 = vsel %vm263, %v515, %v505
        %v517 = vrot.slane %v507, 6
        %v518 = vsel %vm266, %v517, %v516
        %v519 = vrot.slane %v508, 5
        %v520 = vsel %vm269, %v519, %v518
        %v522 = vsel %vm273, %v510, 0
        %v524 = vsel %vm277, %v520, 0
        %526 = vmatprep.subr.mxu0 0.0
        %527 = vmatpush1.msra.mxu0 %v524
        %528 = vmatprep.subr.mxu0 0.0
        %529 = vmatpush1.msra.mxu0 0.0
        %530 = vmatprep.subr.mxu0 0.0
        %531 = vmatpush1.msra.mxu0 0.0
        %532 = vmatprep.subr.mxu0 0.0
        %533 = vmatpush1.msra.mxu0 0.0
        %534 = vmatprep.subr.mxu0 0.0
        %535 = vmatpush1.msra.mxu0 0.0
        %536 = vmatprep.subr.mxu0 0.0
        %537 = vmatpush1.msra.mxu0 0.0
        %538 = vmatprep.subr.mxu0 0.0
        %539 = vmatpush1.msra.mxu0 0.0
        %540 = vmatprep.subr.mxu0 0.0
        %541 = vmatpush1.msra.mxu0 0.0
        %542 = vmatprep.subr.mxu0 0.0
        %543 = vmatpush1.msra.mxu0 0.0
        %544 = vmatprep.subr.mxu0 0.0
        %545 = vmatpush1.msra.mxu0 0.0
        %546 = vmatprep.subr.mxu0 0.0
        %547 = vmatpush1.msra.mxu0 0.0
        %548 = vmatprep.subr.mxu0 0.0
        %549 = vmatpush1.msra.mxu0 0.0
        %550 = vmatprep.subr.mxu0 0.0
        %551 = vmatpush1.msra.mxu0 0.0
        %552 = vmatprep.subr.mxu0 0.0
        %553 = vmatpush1.msra.mxu0 0.0
        %554 = vmatprep.subr.mxu0 0.0
        %555 = vmatpush1.msra.mxu0 0.0
        %556 = vmatprep.subr.mxu0 0.0
        %557 = vmatpush1.msra.mxu0 0.0
        %558 = vmatprep.subr.mxu0 0.0
        %559 = vmatpush1.msra.mxu0 0.0
        %560 = vmatprep.subr.mxu0 0.0
        %561 = vmatpush1.msra.mxu0 0.0
        %562 = vmatprep.subr.mxu0 0.0
        %563 = vmatpush1.msra.mxu0 0.0
        %564 = vmatprep.subr.mxu0 0.0
        %565 = vmatpush1.msra.mxu0 0.0
        %566 = vmatprep.subr.mxu0 0.0
        %567 = vmatpush1.msra.mxu0 0.0
        %568 = vmatprep.subr.mxu0 0.0
        %569 = vmatpush1.msra.mxu0 0.0
        %570 = vmatprep.subr.mxu0 0.0
        %571 = vmatpush1.msra.mxu0 0.0
        %572 = vmatprep.subr.mxu0 0.0
        %573 = vmatpush1.msra.mxu0 0.0
        %574 = vmatprep.subr.mxu0 0.0
        %575 = vmatpush1.msra.mxu0 0.0
        %576 = vmatprep.subr.mxu0 0.0
        %577 = vmatpush1.msra.mxu0 0.0
        %578 = vmatprep.subr.mxu0 0.0
        %579 = vmatpush1.msra.mxu0 0.0
        %580 = vmatprep.subr.mxu0 0.0
        %581 = vmatpush1.msra.mxu0 0.0
        %582 = vmatprep.subr.mxu0 0.0
        %583 = vmatpush1.msra.mxu0 0.0
        %584 = vmatprep.subr.mxu0 0.0
        %585 = vmatpush1.msra.mxu0 0.0
        %586 = vmatprep.subr.mxu0 0.0
        %587 = vmatpush1.msra.mxu0 0.0
        %588 = vmatprep.subr.mxu0 0.0
        %589 = vmatpush1.msra.mxu0 0.0
        %590 = vmatprep.mubr.f32.mxu0 0.0
        %591 = vmatmul.mubr.f32.gmra.mrb[0].mxu0 %v522
        %v592 = vpop.f32.mrb[0].mxu0
        %v593 = vadd.f32 0.0, %v592
        %v594 = vpop.f32.mrb[0].mxu0
        %595 = vdwg.mxu0
        %v596 = vadd.f32 %v504, %v593
        %s597 = scalar_lea.vmem %s1, 32
        %v598 = vld [vmem:[%s597] sm:$0xff]
        %599 = vrot.lane.b32.xlu0 %v520, 127
        %v600 = vpop.permute.xlu0 %599
        %v602 = vsel %vm273, %v598, 0
        %v604 = vsel %vm277, %v600, 0
        %606 = vmatprep.subr.mxu0 0.0
        %607 = vmatpush1.msra.mxu0 %v604
        %608 = vmatprep.subr.mxu0 0.0
        %609 = vmatpush1.msra.mxu0 0.0
        %610 = vmatprep.subr.mxu0 0.0
        %611 = vmatpush1.msra.mxu0 0.0
        %612 = vmatprep.subr.mxu0 0.0
        %613 = vmatpush1.msra.mxu0 0.0
        %614 = vmatprep.subr.mxu0 0.0
        %615 = vmatpush1.msra.mxu0 0.0
        %616 = vmatprep.subr.mxu0 0.0
        %617 = vmatpush1.msra.mxu0 0.0
        %618 = vmatprep.subr.mxu0 0.0
        %619 = vmatpush1.msra.mxu0 0.0
        %620 = vmatprep.subr.mxu0 0.0
        %621 = vmatpush1.msra.mxu0 0.0
        %622 = vmatprep.subr.mxu0 0.0
        %623 = vmatpush1.msra.mxu0 0.0
        %624 = vmatprep.subr.mxu0 0.0
        %625 = vmatpush1.msra.mxu0 0.0
        %626 = vmatprep.subr.mxu0 0.0
        %627 = vmatpush1.msra.mxu0 0.0
        %628 = vmatprep.subr.mxu0 0.0
        %629 = vmatpush1.msra.mxu0 0.0
        %630 = vmatprep.subr.mxu0 0.0
        %631 = vmatpush1.msra.mxu0 0.0
        %632 = vmatprep.subr.mxu0 0.0
        %633 = vmatpush1.msra.mxu0 0.0
        %634 = vmatprep.subr.mxu0 0.0
        %635 = vmatpush1.msra.mxu0 0.0
        %636 = vmatprep.subr.mxu0 0.0
        %637 = vmatpush1.msra.mxu0 0.0
        %638 = vmatprep.subr.mxu0 0.0
        %639 = vmatpush1.msra.mxu0 0.0
        %640 = vmatprep.subr.mxu0 0.0
        %641 = vmatpush1.msra.mxu0 0.0
        %642 = vmatprep.subr.mxu0 0.0
        %643 = vmatpush1.msra.mxu0 0.0
        %644 = vmatprep.subr.mxu0 0.0
        %645 = vmatpush1.msra.mxu0 0.0
        %646 = vmatprep.subr.mxu0 0.0
        %647 = vmatpush1.msra.mxu0 0.0
        %648 = vmatprep.subr.mxu0 0.0
        %649 = vmatpush1.msra.mxu0 0.0
        %650 = vmatprep.subr.mxu0 0.0
        %651 = vmatpush1.msra.mxu0 0.0
        %652 = vmatprep.subr.mxu0 0.0
        %653 = vmatpush1.msra.mxu0 0.0
        %654 = vmatprep.subr.mxu0 0.0
        %655 = vmatpush1.msra.mxu0 0.0
        %656 = vmatprep.subr.mxu0 0.0
        %657 = vmatpush1.msra.mxu0 0.0
        %658 = vmatprep.subr.mxu0 0.0
        %659 = vmatpush1.msra.mxu0 0.0
        %660 = vmatprep.subr.mxu0 0.0
        %661 = vmatpush1.msra.mxu0 0.0
        %662 = vmatprep.subr.mxu0 0.0
        %663 = vmatpush1.msra.mxu0 0.0
        %664 = vmatprep.subr.mxu0 0.0
        %665 = vmatpush1.msra.mxu0 0.0
        %666 = vmatprep.subr.mxu0 0.0
        %667 = vmatpush1.msra.mxu0 0.0
        %668 = vmatprep.subr.mxu0 0.0
        %669 = vmatpush1.msra.mxu0 0.0
        %670 = vmatprep.mubr.f32.mxu0 0.0
        %671 = vmatmul.mubr.f32.gmra.mrb[0].mxu0 %v602
        %v672 = vpop.f32.mrb[0].mxu0
        %v673 = vadd.f32 0.0, %v672
        %v674 = vpop.f32.mrb[0].mxu0
        %675 = vdwg.mxu0
        %v676 = vadd.f32 %v596, %v673
        %s677 = scalar_lea.vmem %s1, 40
        %v678 = vld [vmem:[%s677] sm:$0xff]
        %679 = vrot.lane.b32.xlu0 %v520, 126
        %v680 = vpop.permute.xlu0 %679
        %v682 = vsel %vm273, %v678, 0
        %v684 = vsel %vm277, %v680, 0
        %686 = vmatprep.subr.mxu0 0.0
        %687 = vmatpush1.msra.mxu0 %v684
        %688 = vmatprep.subr.mxu0 0.0
        %689 = vmatpush1.msra.mxu0 0.0
        %690 = vmatprep.subr.mxu0 0.0
        %691 = vmatpush1.msra.mxu0 0.0
        %692 = vmatprep.subr.mxu0 0.0
        %693 = vmatpush1.msra.mxu0 0.0
        %694 = vmatprep.subr.mxu0 0.0
        %695 = vmatpush1.msra.mxu0 0.0
        %696 = vmatprep.subr.mxu0 0.0
        %697 = vmatpush1.msra.mxu0 0.0
        %698 = vmatprep.subr.mxu0 0.0
        %699 = vmatpush1.msra.mxu0 0.0
        %700 = vmatprep.subr.mxu0 0.0
        %701 = vmatpush1.msra.mxu0 0.0
        %702 = vmatprep.subr.mxu0 0.0
        %703 = vmatpush1.msra.mxu0 0.0
        %704 = vmatprep.subr.mxu0 0.0
        %705 = vmatpush1.msra.mxu0 0.0
        %706 = vmatprep.subr.mxu0 0.0
        %707 = vmatpush1.msra.mxu0 0.0
        %708 = vmatprep.subr.mxu0 0.0
        %709 = vmatpush1.msra.mxu0 0.0
        %710 = vmatprep.subr.mxu0 0.0
        %711 = vmatpush1.msra.mxu0 0.0
        %712 = vmatprep.subr.mxu0 0.0
        %713 = vmatpush1.msra.mxu0 0.0
        %714 = vmatprep.subr.mxu0 0.0
        %715 = vmatpush1.msra.mxu0 0.0
        %716 = vmatprep.subr.mxu0 0.0
        %717 = vmatpush1.msra.mxu0 0.0
        %718 = vmatprep.subr.mxu0 0.0
        %719 = vmatpush1.msra.mxu0 0.0
        %720 = vmatprep.subr.mxu0 0.0
        %721 = vmatpush1.msra.mxu0 0.0
        %722 = vmatprep.subr.mxu0 0.0
        %723 = vmatpush1.msra.mxu0 0.0
        %724 = vmatprep.subr.mxu0 0.0
        %725 = vmatpush1.msra.mxu0 0.0
        %726 = vmatprep.subr.mxu0 0.0
        %727 = vmatpush1.msra.mxu0 0.0
        %728 = vmatprep.subr.mxu0 0.0
        %729 = vmatpush1.msra.mxu0 0.0
        %730 = vmatprep.subr.mxu0 0.0
        %731 = vmatpush1.msra.mxu0 0.0
        %732 = vmatprep.subr.mxu0 0.0
        %733 = vmatpush1.msra.mxu0 0.0
        %734 = vmatprep.subr.mxu0 0.0
        %735 = vmatpush1.msra.mxu0 0.0
        %736 = vmatprep.subr.mxu0 0.0
        %737 = vmatpush1.msra.mxu0 0.0
        %738 = vmatprep.subr.mxu0 0.0
        %739 = vmatpush1.msra.mxu0 0.0
        %740 = vmatprep.subr.mxu0 0.0
        %741 = vmatpush1.msra.mxu0 0.0
        %742 = vmatprep.subr.mxu0 0.0
        %743 = vmatpush1.msra.mxu0 0.0
        %744 = vmatprep.subr.mxu0 0.0
        %745 = vmatpush1.msra.mxu0 0.0
        %746 = vmatprep.subr.mxu0 0.0
        %747 = vmatpush1.msra.mxu0 0.0
        %748 = vmatprep.subr.mxu0 0.0
        %749 = vmatpush1.msra.mxu0 0.0
        %750 = vmatprep.mubr.f32.mxu0 0.0
        %751 = vmatmul.mubr.f32.gmra.mrb[0].mxu0 %v682
        %v752 = vpop.f32.mrb[0].mxu0
        %v753 = vadd.f32 0.0, %v752
        %v754 = vpop.f32.mrb[0].mxu0
        %755 = vdwg.mxu0
        %v756 = vadd.f32 %v676, %v753
        %v757 = vld [vmem:[%s229 + $0x2] sm:$0x1]
        %v758 = vld [vmem:[%s229 + $0x12] sm:$0x1]
        %v759 = vld [vmem:[%s229 + $0x22] sm:$0x1]
        %v760 = vld [vmem:[%s229 + $0x32] sm:$0x1]
        %s761 = scalar_lea.vmem %s1, 48
        %v762 = vld [vmem:[%s761] sm:$0xff]
        %v767 = vrot.slane %v758, 7
        %v768 = vsel %vm263, %v767, %v757
        %v769 = vrot.slane %v759, 6
        %v770 = vsel %vm266, %v769, %v768
        %v771 = vrot.slane %v760, 5
        %v772 = vsel %vm269, %v771, %v770
        %v774 = vsel %vm273, %v762, 0
        %v776 = vsel %vm277, %v772, 0
        %778 = vmatprep.subr.mxu0 0.0
        %779 = vmatpush1.msra.mxu0 %v776
        %780 = vmatprep.subr.mxu0 0.0
        %781 = vmatpush1.msra.mxu0 0.0
        %782 = vmatprep.subr.mxu0 0.0
        %783 = vmatpush1.msra.mxu0 0.0
        %784 = vmatprep.subr.mxu0 0.0
        %785 = vmatpush1.msra.mxu0 0.0
        %786 = vmatprep.subr.mxu0 0.0
        %787 = vmatpush1.msra.mxu0 0.0
        %788 = vmatprep.subr.mxu0 0.0
        %789 = vmatpush1.msra.mxu0 0.0
        %790 = vmatprep.subr.mxu0 0.0
        %791 = vmatpush1.msra.mxu0 0.0
        %792 = vmatprep.subr.mxu0 0.0
        %793 = vmatpush1.msra.mxu0 0.0
        %794 = vmatprep.subr.mxu0 0.0
        %795 = vmatpush1.msra.mxu0 0.0
        %796 = vmatprep.subr.mxu0 0.0
        %797 = vmatpush1.msra.mxu0 0.0
        %798 = vmatprep.subr.mxu0 0.0
        %799 = vmatpush1.msra.mxu0 0.0
        %800 = vmatprep.subr.mxu0 0.0
        %801 = vmatpush1.msra.mxu0 0.0
        %802 = vmatprep.subr.mxu0 0.0
        %803 = vmatpush1.msra.mxu0 0.0
        %804 = vmatprep.subr.mxu0 0.0
        %805 = vmatpush1.msra.mxu0 0.0
        %806 = vmatprep.subr.mxu0 0.0
        %807 = vmatpush1.msra.mxu0 0.0
        %808 = vmatprep.subr.mxu0 0.0
        %809 = vmatpush1.msra.mxu0 0.0
        %810 = vmatprep.subr.mxu0 0.0
        %811 = vmatpush1.msra.mxu0 0.0
        %812 = vmatprep.subr.mxu0 0.0
        %813 = vmatpush1.msra.mxu0 0.0
        %814 = vmatprep.subr.mxu0 0.0
        %815 = vmatpush1.msra.mxu0 0.0
        %816 = vmatprep.subr.mxu0 0.0
        %817 = vmatpush1.msra.mxu0 0.0
        %818 = vmatprep.subr.mxu0 0.0
        %819 = vmatpush1.msra.mxu0 0.0
        %820 = vmatprep.subr.mxu0 0.0
        %821 = vmatpush1.msra.mxu0 0.0
        %822 = vmatprep.subr.mxu0 0.0
        %823 = vmatpush1.msra.mxu0 0.0
        %824 = vmatprep.subr.mxu0 0.0
        %825 = vmatpush1.msra.mxu0 0.0
        %826 = vmatprep.subr.mxu0 0.0
        %827 = vmatpush1.msra.mxu0 0.0
        %828 = vmatprep.subr.mxu0 0.0
        %829 = vmatpush1.msra.mxu0 0.0
        %830 = vmatprep.subr.mxu0 0.0
        %831 = vmatpush1.msra.mxu0 0.0
        %832 = vmatprep.subr.mxu0 0.0
        %833 = vmatpush1.msra.mxu0 0.0
        %834 = vmatprep.subr.mxu0 0.0
        %835 = vmatpush1.msra.mxu0 0.0
        %836 = vmatprep.subr.mxu0 0.0
        %837 = vmatpush1.msra.mxu0 0.0
        %838 = vmatprep.subr.mxu0 0.0
        %839 = vmatpush1.msra.mxu0 0.0
        %840 = vmatprep.subr.mxu0 0.0
        %841 = vmatpush1.msra.mxu0 0.0
        %842 = vmatprep.mubr.f32.mxu0 0.0
        %843 = vmatmul.mubr.f32.gmra.mrb[0].mxu0 %v774
        %v844 = vpop.f32.mrb[0].mxu0
        %v845 = vadd.f32 0.0, %v844
        %v846 = vpop.f32.mrb[0].mxu0
        %847 = vdwg.mxu0
        %v848 = vadd.f32 %v756, %v845
        %s849 = scalar_lea.vmem %s1, 56
        %v850 = vld [vmem:[%s849] sm:$0xff]
        %851 = vrot.lane.b32.xlu0 %v772, 127
        %v852 = vpop.permute.xlu0 %851
        %v854 = vsel %vm273, %v850, 0
        %v856 = vsel %vm277, %v852, 0
        %858 = vmatprep.subr.mxu0 0.0
        %859 = vmatpush1.msra.mxu0 %v856
        %860 = vmatprep.subr.mxu0 0.0
        %861 = vmatpush1.msra.mxu0 0.0
        %862 = vmatprep.subr.mxu0 0.0
        %863 = vmatpush1.msra.mxu0 0.0
        %864 = vmatprep.subr.mxu0 0.0
        %865 = vmatpush1.msra.mxu0 0.0
        %866 = vmatprep.subr.mxu0 0.0
        %867 = vmatpush1.msra.mxu0 0.0
        %868 = vmatprep.subr.mxu0 0.0
        %869 = vmatpush1.msra.mxu0 0.0
        %870 = vmatprep.subr.mxu0 0.0
        %871 = vmatpush1.msra.mxu0 0.0
        %872 = vmatprep.subr.mxu0 0.0
        %873 = vmatpush1.msra.mxu0 0.0
        %874 = vmatprep.subr.mxu0 0.0
        %875 = vmatpush1.msra.mxu0 0.0
        %876 = vmatprep.subr.mxu0 0.0
        %877 = vmatpush1.msra.mxu0 0.0
        %878 = vmatprep.subr.mxu0 0.0
        %879 = vmatpush1.msra.mxu0 0.0
        %880 = vmatprep.subr.mxu0 0.0
        %881 = vmatpush1.msra.mxu0 0.0
        %882 = vmatprep.subr.mxu0 0.0
        %883 = vmatpush1.msra.mxu0 0.0
        %884 = vmatprep.subr.mxu0 0.0
        %885 = vmatpush1.msra.mxu0 0.0
        %886 = vmatprep.subr.mxu0 0.0
        %887 = vmatpush1.msra.mxu0 0.0
        %888 = vmatprep.subr.mxu0 0.0
        %889 = vmatpush1.msra.mxu0 0.0
        %890 = vmatprep.subr.mxu0 0.0
        %891 = vmatpush1.msra.mxu0 0.0
        %892 = vmatprep.subr.mxu0 0.0
        %893 = vmatpush1.msra.mxu0 0.0
        %894 = vmatprep.subr.mxu0 0.0
        %895 = vmatpush1.msra.mxu0 0.0
        %896 = vmatprep.subr.mxu0 0.0
        %897 = vmatpush1.msra.mxu0 0.0
        %898 = vmatprep.subr.mxu0 0.0
        %899 = vmatpush1.msra.mxu0 0.0
        %900 = vmatprep.subr.mxu0 0.0
        %901 = vmatpush1.msra.mxu0 0.0
        %902 = vmatprep.subr.mxu0 0.0
        %903 = vmatpush1.msra.mxu0 0.0
        %904 = vmatprep.subr.mxu0 0.0
        %905 = vmatpush1.msra.mxu0 0.0
        %906 = vmatprep.subr.mxu0 0.0
        %907 = vmatpush1.msra.mxu0 0.0
        %908 = vmatprep.subr.mxu0 0.0
        %909 = vmatpush1.msra.mxu0 0.0
        %910 = vmatprep.subr.mxu0 0.0
        %911 = vmatpush1.msra.mxu0 0.0
        %912 = vmatprep.subr.mxu0 0.0
        %913 = vmatpush1.msra.mxu0 0.0
        %914 = vmatprep.subr.mxu0 0.0
        %915 = vmatpush1.msra.mxu0 0.0
        %916 = vmatprep.subr.mxu0 0.0
        %917 = vmatpush1.msra.mxu0 0.0
        %918 = vmatprep.subr.mxu0 0.0
        %919 = vmatpush1.msra.mxu0 0.0
        %920 = vmatprep.subr.mxu0 0.0
        %921 = vmatpush1.msra.mxu0 0.0
        %922 = vmatprep.mubr.f32.mxu0 0.0
        %923 = vmatmul.mubr.f32.gmra.mrb[0].mxu0 %v854
        %v924 = vpop.f32.mrb[0].mxu0
        %v925 = vadd.f32 0.0, %v924
        %v926 = vpop.f32.mrb[0].mxu0
        %927 = vdwg.mxu0
        %v928 = vadd.f32 %v848, %v925
        %s929 = scalar_lea.vmem %s1, 64
        %v930 = vld [vmem:[%s929] sm:$0xff]
        %931 = vrot.lane.b32.xlu0 %v772, 126
        %v932 = vpop.permute.xlu0 %931
        %v934 = vsel %vm273, %v930, 0
        %v936 = vsel %vm277, %v932, 0
        %938 = vmatprep.subr.mxu0 0.0
        %939 = vmatpush1.msra.mxu0 %v936
        %940 = vmatprep.subr.mxu0 0.0
        %941 = vmatpush1.msra.mxu0 0.0
        %942 = vmatprep.subr.mxu0 0.0
        %943 = vmatpush1.msra.mxu0 0.0
        %944 = vmatprep.subr.mxu0 0.0
        %945 = vmatpush1.msra.mxu0 0.0
        %946 = vmatprep.subr.mxu0 0.0
        %947 = vmatpush1.msra.mxu0 0.0
        %948 = vmatprep.subr.mxu0 0.0
        %949 = vmatpush1.msra.mxu0 0.0
        %950 = vmatprep.subr.mxu0 0.0
        %951 = vmatpush1.msra.mxu0 0.0
        %952 = vmatprep.subr.mxu0 0.0
        %953 = vmatpush1.msra.mxu0 0.0
        %954 = vmatprep.subr.mxu0 0.0
        %955 = vmatpush1.msra.mxu0 0.0
        %956 = vmatprep.subr.mxu0 0.0
        %957 = vmatpush1.msra.mxu0 0.0
        %958 = vmatprep.subr.mxu0 0.0
        %959 = vmatpush1.msra.mxu0 0.0
        %960 = vmatprep.subr.mxu0 0.0
        %961 = vmatpush1.msra.mxu0 0.0
        %962 = vmatprep.subr.mxu0 0.0
        %963 = vmatpush1.msra.mxu0 0.0
        %964 = vmatprep.subr.mxu0 0.0
        %965 = vmatpush1.msra.mxu0 0.0
        %966 = vmatprep.subr.mxu0 0.0
        %967 = vmatpush1.msra.mxu0 0.0
        %968 = vmatprep.subr.mxu0 0.0
        %969 = vmatpush1.msra.mxu0 0.0
        %970 = vmatprep.subr.mxu0 0.0
        %971 = vmatpush1.msra.mxu0 0.0
        %972 = vmatprep.subr.mxu0 0.0
        %973 = vmatpush1.msra.mxu0 0.0
        %974 = vmatprep.subr.mxu0 0.0
        %975 = vmatpush1.msra.mxu0 0.0
        %976 = vmatprep.subr.mxu0 0.0
        %977 = vmatpush1.msra.mxu0 0.0
        %978 = vmatprep.subr.mxu0 0.0
        %979 = vmatpush1.msra.mxu0 0.0
        %980 = vmatprep.subr.mxu0 0.0
        %981 = vmatpush1.msra.mxu0 0.0
        %982 = vmatprep.subr.mxu0 0.0
        %983 = vmatpush1.msra.mxu0 0.0
        %984 = vmatprep.subr.mxu0 0.0
        %985 = vmatpush1.msra.mxu0 0.0
        %986 = vmatprep.subr.mxu0 0.0
        %987 = vmatpush1.msra.mxu0 0.0
        %988 = vmatprep.subr.mxu0 0.0
        %989 = vmatpush1.msra.mxu0 0.0
        %990 = vmatprep.subr.mxu0 0.0
        %991 = vmatpush1.msra.mxu0 0.0
        %992 = vmatprep.subr.mxu0 0.0
        %993 = vmatpush1.msra.mxu0 0.0
        %994 = vmatprep.subr.mxu0 0.0
        %995 = vmatpush1.msra.mxu0 0.0
        %996 = vmatprep.subr.mxu0 0.0
        %997 = vmatpush1.msra.mxu0 0.0
        %998 = vmatprep.subr.mxu0 0.0
        %999 = vmatpush1.msra.mxu0 0.0
        %1000 = vmatprep.subr.mxu0 0.0
        %1001 = vmatpush1.msra.mxu0 0.0
        %1002 = vmatprep.mubr.f32.mxu0 0.0
        %1003 = vmatmul.mubr.f32.gmra.mrb[0].mxu0 %v934
        %v1004 = vpop.f32.mrb[0].mxu0
        %v1005 = vadd.f32 0.0, %v1004
        %v1006 = vpop.f32.mrb[0].mxu0
        %1007 = vdwg.mxu0
        %v1008 = vadd.f32 %v928, %v1005
        %1010 = vset.pattern.permute.xlu0 0
        %1011 = vperm.xlu0 %1010, %v250
        %v1012 = vpop.permute.xlu0 %1011
        %v1014 = vadd.f32 %v1008, %v1012
        %v1016 = vcombine.high %v1014, %v1014
        %v1018 = vunpack.c.l.s4 1966171168
        %v1019 = vunpack.c.0.s8 %v1018
        %v1020 = vlaneseq
        %v1021 = vshrl.u32 %v1020, 7
        %v1022 = vsub.s32 %v1019, %v1021
        %v1023 = vrot.slane %v1014, %v1022
        %v1025 = vunpack.c.l.s4 1966171168
        %v1026 = vunpack.c.0.s8 %v1025
        %v1027 = vlaneseq
        %v1028 = vshrl.u32 %v1027, 7
        %v1029 = vsub.s32 %v1026, %v1028
        %v1030 = vrot.slane %v1016, %v1029
        %v1031 = vcombine.high %v1023, %v1023
        %v1032 = vcombine.high %v1030, %v1030
        %v1034 = vunpack.c.l.s4 1966171168
        %v1035 = vunpack.c.0.s8 %v1034
        %v1036 = vlaneseq
        %v1037 = vshrl.u32 %v1036, 7
        %v1038 = vsub.s32 %v1035, %v1037
        %v1039 = vrot.slane %v1023, %v1038
        %v1041 = vunpack.c.l.s4 1966171168
        %v1042 = vunpack.c.0.s8 %v1041
        %v1043 = vlaneseq
        %v1044 = vshrl.u32 %v1043, 7
        %v1045 = vsub.s32 %v1042, %v1044
        %v1046 = vrot.slane %v1030, %v1045
        %v1048 = vunpack.c.l.s4 1966171168
        %v1049 = vunpack.c.0.s8 %v1048
        %v1050 = vlaneseq
        %v1051 = vshrl.u32 %v1050, 7
        %v1052 = vsub.s32 %v1049, %v1051
        %v1053 = vrot.slane %v1031, %v1052
        %v1055 = vunpack.c.l.s4 1966171168
        %v1056 = vunpack.c.0.s8 %v1055
        %v1057 = vlaneseq
        %v1058 = vshrl.u32 %v1057, 7
        %v1059 = vsub.s32 %v1056, %v1058
        %v1060 = vrot.slane %v1032, %v1059
        %v1061 = vcombine.high %v1039, %v1039
        %v1062 = vcombine.high %v1046, %v1046
        %v1063 = vcombine.high %v1053, %v1053
        %v1064 = vcombine.high %v1060, %v1060
        %vm1073 = vcmask 253952
        %1074 = vst.msk [vmem:[%s249] sm:$0x1] %vm1073, %v1039
        %1075 = vst.msk [vmem:[%s249 + $0x8] sm:$0x1] %vm1073, %v1053
        %1076 = vst.msk [vmem:[%s249 + $0x10] sm:$0x1] %vm1073, %v1061
        %1077 = vst.msk [vmem:[%s249 + $0x18] sm:$0x1] %vm1073, %v1063
        %1078 = vst.msk [vmem:[%s249 + $0x20] sm:$0x1] %vm1073, %v1046
        %1079 = vst.msk [vmem:[%s249 + $0x28] sm:$0x1] %vm1073, %v1060
        %1080 = vst.msk [vmem:[%s249 + $0x30] sm:$0x1] %vm1073, %v1062
        %1081 = vst.msk [vmem:[%s249 + $0x38] sm:$0x1] %vm1073, %v1064
        %v1082 = vld [vmem:[%s229 + $0x1] sm:$0x1]
        %v1083 = vld [vmem:[%s229 + $0x11] sm:$0x1]
        %v1084 = vld [vmem:[%s229 + $0x21] sm:$0x1]
        %v1085 = vld [vmem:[%s229 + $0x31] sm:$0x1]
        %v1086 = vld [vmem:[%s1] sm:$0xff]
        %v1087 = vld [vmem:[%s256] sm:$0xff]
        %v1092 = vrot.slane %v1083, 7
        %v1093 = vsel %vm263, %v1092, %v1082
        %v1094 = vrot.slane %v1084, 6
        %v1095 = vsel %vm266, %v1094, %v1093
        %v1096 = vrot.slane %v1085, 5
        %v1097 = vsel %vm269, %v1096, %v1095
        %1098 = vrot.lane.b32.xlu0 %v1097, 127
        %v1099 = vpop.permute.xlu0 %1098
        %v1101 = vsel %vm273, %v1087, 0
        %v1103 = vsel %vm277, %v1099, 0
        %1105 = vmatprep.subr.mxu0 0.0
        %1106 = vmatpush1.msra.mxu0 %v1103
        %1107 = vmatprep.subr.mxu0 0.0
        %1108 = vmatpush1.msra.mxu0 0.0
        %1109 = vmatprep.subr.mxu0 0.0
        %1110 = vmatpush1.msra.mxu0 0.0
        %1111 = vmatprep.subr.mxu0 0.0
        %1112 = vmatpush1.msra.mxu0 0.0
        %1113 = vmatprep.subr.mxu0 0.0
        %1114 = vmatpush1.msra.mxu0 0.0
        %1115 = vmatprep.subr.mxu0 0.0
        %1116 = vmatpush1.msra.mxu0 0.0
        %1117 = vmatprep.subr.mxu0 0.0
        %1118 = vmatpush1.msra.mxu0 0.0
        %1119 = vmatprep.subr.mxu0 0.0
        %1120 = vmatpush1.msra.mxu0 0.0
        %1121 = vmatprep.subr.mxu0 0.0
        %1122 = vmatpush1.msra.mxu0 0.0
        %1123 = vmatprep.subr.mxu0 0.0
        %1124 = vmatpush1.msra.mxu0 0.0
        %1125 = vmatprep.subr.mxu0 0.0
        %1126 = vmatpush1.msra.mxu0 0.0
        %1127 = vmatprep.subr.mxu0 0.0
        %1128 = vmatpush1.msra.mxu0 0.0
        %1129 = vmatprep.subr.mxu0 0.0
        %1130 = vmatpush1.msra.mxu0 0.0
        %1131 = vmatprep.subr.mxu0 0.0
        %1132 = vmatpush1.msra.mxu0 0.0
        %1133 = vmatprep.subr.mxu0 0.0
        %1134 = vmatpush1.msra.mxu0 0.0
        %1135 = vmatprep.subr.mxu0 0.0
        %1136 = vmatpush1.msra.mxu0 0.0
        %1137 = vmatprep.subr.mxu0 0.0
        %1138 = vmatpush1.msra.mxu0 0.0
        %1139 = vmatprep.subr.mxu0 0.0
        %1140 = vmatpush1.msra.mxu0 0.0
        %1141 = vmatprep.subr.mxu0 0.0
        %1142 = vmatpush1.msra.mxu0 0.0
        %1143 = vmatprep.subr.mxu0 0.0
        %1144 = vmatpush1.msra.mxu0 0.0
        %1145 = vmatprep.subr.mxu0 0.0
        %1146 = vmatpush1.msra.mxu0 0.0
        %1147 = vmatprep.subr.mxu0 0.0
        %1148 = vmatpush1.msra.mxu0 0.0
        %1149 = vmatprep.subr.mxu0 0.0
        %1150 = vmatpush1.msra.mxu0 0.0
        %1151 = vmatprep.subr.mxu0 0.0
        %1152 = vmatpush1.msra.mxu0 0.0
        %1153 = vmatprep.subr.mxu0 0.0
        %1154 = vmatpush1.msra.mxu0 0.0
        %1155 = vmatprep.subr.mxu0 0.0
        %1156 = vmatpush1.msra.mxu0 0.0
        %1157 = vmatprep.subr.mxu0 0.0
        %1158 = vmatpush1.msra.mxu0 0.0
        %1159 = vmatprep.subr.mxu0 0.0
        %1160 = vmatpush1.msra.mxu0 0.0
        %1161 = vmatprep.subr.mxu0 0.0
        %1162 = vmatpush1.msra.mxu0 0.0
        %1163 = vmatprep.subr.mxu0 0.0
        %1164 = vmatpush1.msra.mxu0 0.0
        %1165 = vmatprep.subr.mxu0 0.0
        %1166 = vmatpush1.msra.mxu0 0.0
        %1167 = vmatprep.subr.mxu0 0.0
        %1168 = vmatpush1.msra.mxu0 0.0
        %1169 = vmatprep.mubr.f32.mxu0 0.0
        %1170 = vmatmul.mubr.f32.gmra.mrb[0].mxu0 %v1101
        %v1171 = vpop.f32.mrb[0].mxu0
        %v1172 = vadd.f32 0.0, %v1171
        %v1173 = vpop.f32.mrb[0].mxu0
        %1174 = vdwg.mxu0
        %v1176 = vsel %vm273, %v1086, 0
        %v1178 = vsel %vm277, %v1097, 0
        %1180 = vmatprep.subr.mxu0 0.0
        %1181 = vmatpush1.msra.mxu0 %v1178
        %1182 = vmatprep.subr.mxu0 0.0
        %1183 = vmatpush1.msra.mxu0 0.0
        %1184 = vmatprep.subr.mxu0 0.0
        %1185 = vmatpush1.msra.mxu0 0.0
        %1186 = vmatprep.subr.mxu0 0.0
        %1187 = vmatpush1.msra.mxu0 0.0
        %1188 = vmatprep.subr.mxu0 0.0
        %1189 = vmatpush1.msra.mxu0 0.0
        %1190 = vmatprep.subr.mxu0 0.0
        %1191 = vmatpush1.msra.mxu0 0.0
        %1192 = vmatprep.subr.mxu0 0.0
        %1193 = vmatpush1.msra.mxu0 0.0
        %1194 = vmatprep.subr.mxu0 0.0
        %1195 = vmatpush1.msra.mxu0 0.0
        %1196 = vmatprep.subr.mxu0 0.0
        %1197 = vmatpush1.msra.mxu0 0.0
        %1198 = vmatprep.subr.mxu0 0.0
        %1199 = vmatpush1.msra.mxu0 0.0
        %1200 = vmatprep.subr.mxu0 0.0
        %1201 = vmatpush1.msra.mxu0 0.0
        %1202 = vmatprep.subr.mxu0 0.0
        %1203 = vmatpush1.msra.mxu0 0.0
        %1204 = vmatprep.subr.mxu0 0.0
        %1205 = vmatpush1.msra.mxu0 0.0
        %1206 = vmatprep.subr.mxu0 0.0
        %1207 = vmatpush1.msra.mxu0 0.0
        %1208 = vmatprep.subr.mxu0 0.0
        %1209 = vmatpush1.msra.mxu0 0.0
        %1210 = vmatprep.subr.mxu0 0.0
        %1211 = vmatpush1.msra.mxu0 0.0
        %1212 = vmatprep.subr.mxu0 0.0
        %1213 = vmatpush1.msra.mxu0 0.0
        %1214 = vmatprep.subr.mxu0 0.0
        %1215 = vmatpush1.msra.mxu0 0.0
        %1216 = vmatprep.subr.mxu0 0.0
        %1217 = vmatpush1.msra.mxu0 0.0
        %1218 = vmatprep.subr.mxu0 0.0
        %1219 = vmatpush1.msra.mxu0 0.0
        %1220 = vmatprep.subr.mxu0 0.0
        %1221 = vmatpush1.msra.mxu0 0.0
        %1222 = vmatprep.subr.mxu0 0.0
        %1223 = vmatpush1.msra.mxu0 0.0
        %1224 = vmatprep.subr.mxu0 0.0
        %1225 = vmatpush1.msra.mxu0 0.0
        %1226 = vmatprep.subr.mxu0 0.0
        %1227 = vmatpush1.msra.mxu0 0.0
        %1228 = vmatprep.subr.mxu0 0.0
        %1229 = vmatpush1.msra.mxu0 0.0
        %1230 = vmatprep.subr.mxu0 0.0
        %1231 = vmatpush1.msra.mxu0 0.0
        %1232 = vmatprep.subr.mxu0 0.0
        %1233 = vmatpush1.msra.mxu0 0.0
        %1234 = vmatprep.subr.mxu0 0.0
        %1235 = vmatpush1.msra.mxu0 0.0
        %1236 = vmatprep.subr.mxu0 0.0
        %1237 = vmatpush1.msra.mxu0 0.0
        %1238 = vmatprep.subr.mxu0 0.0
        %1239 = vmatpush1.msra.mxu0 0.0
        %1240 = vmatprep.subr.mxu0 0.0
        %1241 = vmatpush1.msra.mxu0 0.0
        %1242 = vmatprep.subr.mxu0 0.0
        %1243 = vmatpush1.msra.mxu0 0.0
        %1244 = vmatprep.mubr.f32.mxu0 0.0
        %1245 = vmatmul.mubr.f32.gmra.mrb[0].mxu0 %v1176
        %v1246 = vpop.f32.mrb[0].mxu0
        %v1247 = vadd.f32 %v1172, %v1246
        %v1248 = vpop.f32.mrb[0].mxu0
        %1249 = vdwg.mxu0
        %v1250 = vld [vmem:[%s425] sm:$0xff]
        %1251 = vrot.lane.b32.xlu0 %v1097, 126
        %v1252 = vpop.permute.xlu0 %1251
        %v1254 = vsel %vm273, %v1250, 0
        %v1256 = vsel %vm277, %v1252, 0
        %1258 = vmatprep.subr.mxu0 0.0
        %1259 = vmatpush1.msra.mxu0 %v1256
        %1260 = vmatprep.subr.mxu0 0.0
        %1261 = vmatpush1.msra.mxu0 0.0
        %1262 = vmatprep.subr.mxu0 0.0
        %1263 = vmatpush1.msra.mxu0 0.0
        %1264 = vmatprep.subr.mxu0 0.0
        %1265 = vmatpush1.msra.mxu0 0.0
        %1266 = vmatprep.subr.mxu0 0.0
        %1267 = vmatpush1.msra.mxu0 0.0
        %1268 = vmatprep.subr.mxu0 0.0
        %1269 = vmatpush1.msra.mxu0 0.0
        %1270 = vmatprep.subr.mxu0 0.0
        %1271 = vmatpush1.msra.mxu0 0.0
        %1272 = vmatprep.subr.mxu0 0.0
        %1273 = vmatpush1.msra.mxu0 0.0
        %1274 = vmatprep.subr.mxu0 0.0
        %1275 = vmatpush1.msra.mxu0 0.0
        %1276 = vmatprep.subr.mxu0 0.0
        %1277 = vmatpush1.msra.mxu0 0.0
        %1278 = vmatprep.subr.mxu0 0.0
        %1279 = vmatpush1.msra.mxu0 0.0
        %1280 = vmatprep.subr.mxu0 0.0
        %1281 = vmatpush1.msra.mxu0 0.0
        %1282 = vmatprep.subr.mxu0 0.0
        %1283 = vmatpush1.msra.mxu0 0.0
        %1284 = vmatprep.subr.mxu0 0.0
        %1285 = vmatpush1.msra.mxu0 0.0
        %1286 = vmatprep.subr.mxu0 0.0
        %1287 = vmatpush1.msra.mxu0 0.0
        %1288 = vmatprep.subr.mxu0 0.0
        %1289 = vmatpush1.msra.mxu0 0.0
        %1290 = vmatprep.subr.mxu0 0.0
        %1291 = vmatpush1.msra.mxu0 0.0
        %1292 = vmatprep.subr.mxu0 0.0
        %1293 = vmatpush1.msra.mxu0 0.0
        %1294 = vmatprep.subr.mxu0 0.0
        %1295 = vmatpush1.msra.mxu0 0.0
        %1296 = vmatprep.subr.mxu0 0.0
        %1297 = vmatpush1.msra.mxu0 0.0
        %1298 = vmatprep.subr.mxu0 0.0
        %1299 = vmatpush1.msra.mxu0 0.0
        %1300 = vmatprep.subr.mxu0 0.0
        %1301 = vmatpush1.msra.mxu0 0.0
        %1302 = vmatprep.subr.mxu0 0.0
        %1303 = vmatpush1.msra.mxu0 0.0
        %1304 = vmatprep.subr.mxu0 0.0
        %1305 = vmatpush1.msra.mxu0 0.0
        %1306 = vmatprep.subr.mxu0 0.0
        %1307 = vmatpush1.msra.mxu0 0.0
        %1308 = vmatprep.subr.mxu0 0.0
        %1309 = vmatpush1.msra.mxu0 0.0
        %1310 = vmatprep.subr.mxu0 0.0
        %1311 = vmatpush1.msra.mxu0 0.0
        %1312 = vmatprep.subr.mxu0 0.0
        %1313 = vmatpush1.msra.mxu0 0.0
        %1314 = vmatprep.subr.mxu0 0.0
        %1315 = vmatpush1.msra.mxu0 0.0
        %1316 = vmatprep.subr.mxu0 0.0
        %1317 = vmatpush1.msra.mxu0 0.0
        %1318 = vmatprep.subr.mxu0 0.0
        %1319 = vmatpush1.msra.mxu0 0.0
        %1320 = vmatprep.subr.mxu0 0.0
        %1321 = vmatpush1.msra.mxu0 0.0
        %1322 = vmatprep.mubr.f32.mxu0 0.0
        %1323 = vmatmul.mubr.f32.gmra.mrb[0].mxu0 %v1254
        %v1324 = vpop.f32.mrb[0].mxu0
        %v1325 = vadd.f32 0.0, %v1324
        %v1326 = vpop.f32.mrb[0].mxu0
        %1327 = vdwg.mxu0
        %v1328 = vadd.f32 %v1247, %v1325
        %v1329 = vld [vmem:[%s229 + $0x2] sm:$0x1]
        %v1330 = vld [vmem:[%s229 + $0x12] sm:$0x1]
        %v1331 = vld [vmem:[%s229 + $0x22] sm:$0x1]
        %v1332 = vld [vmem:[%s229 + $0x32] sm:$0x1]
        %v1333 = vld [vmem:[%s509] sm:$0xff]
        %v1338 = vrot.slane %v1330, 7
        %v1339 = vsel %vm263, %v1338, %v1329
        %v1340 = vrot.slane %v1331, 6
        %v1341 = vsel %vm266, %v1340, %v1339
        %v1342 = vrot.slane %v1332, 5
        %v1343 = vsel %vm269, %v1342, %v1341
        %v1345 = vsel %vm273, %v1333, 0
        %v1347 = vsel %vm277, %v1343, 0
        %1349 = vmatprep.subr.mxu0 0.0
        %1350 = vmatpush1.msra.mxu0 %v1347
        %1351 = vmatprep.subr.mxu0 0.0
        %1352 = vmatpush1.msra.mxu0 0.0
        %1353 = vmatprep.subr.mxu0 0.0
        %1354 = vmatpush1.msra.mxu0 0.0
        %1355 = vmatprep.subr.mxu0 0.0
        %1356 = vmatpush1.msra.mxu0 0.0
        %1357 = vmatprep.subr.mxu0 0.0
        %1358 = vmatpush1.msra.mxu0 0.0
        %1359 = vmatprep.subr.mxu0 0.0
        %1360 = vmatpush1.msra.mxu0 0.0
        %1361 = vmatprep.subr.mxu0 0.0
        %1362 = vmatpush1.msra.mxu0 0.0
        %1363 = vmatprep.subr.mxu0 0.0
        %1364 = vmatpush1.msra.mxu0 0.0
        %1365 = vmatprep.subr.mxu0 0.0
        %1366 = vmatpush1.msra.mxu0 0.0
        %1367 = vmatprep.subr.mxu0 0.0
        %1368 = vmatpush1.msra.mxu0 0.0
        %1369 = vmatprep.subr.mxu0 0.0
        %1370 = vmatpush1.msra.mxu0 0.0
        %1371 = vmatprep.subr.mxu0 0.0
        %1372 = vmatpush1.msra.mxu0 0.0
        %1373 = vmatprep.subr.mxu0 0.0
        %1374 = vmatpush1.msra.mxu0 0.0
        %1375 = vmatprep.subr.mxu0 0.0
        %1376 = vmatpush1.msra.mxu0 0.0
        %1377 = vmatprep.subr.mxu0 0.0
        %1378 = vmatpush1.msra.mxu0 0.0
        %1379 = vmatprep.subr.mxu0 0.0
        %1380 = vmatpush1.msra.mxu0 0.0
        %1381 = vmatprep.subr.mxu0 0.0
        %1382 = vmatpush1.msra.mxu0 0.0
        %1383 = vmatprep.subr.mxu0 0.0
        %1384 = vmatpush1.msra.mxu0 0.0
        %1385 = vmatprep.subr.mxu0 0.0
        %1386 = vmatpush1.msra.mxu0 0.0
        %1387 = vmatprep.subr.mxu0 0.0
        %1388 = vmatpush1.msra.mxu0 0.0
        %1389 = vmatprep.subr.mxu0 0.0
        %1390 = vmatpush1.msra.mxu0 0.0
        %1391 = vmatprep.subr.mxu0 0.0
        %1392 = vmatpush1.msra.mxu0 0.0
        %1393 = vmatprep.subr.mxu0 0.0
        %1394 = vmatpush1.msra.mxu0 0.0
        %1395 = vmatprep.subr.mxu0 0.0
        %1396 = vmatpush1.msra.mxu0 0.0
        %1397 = vmatprep.subr.mxu0 0.0
        %1398 = vmatpush1.msra.mxu0 0.0
        %1399 = vmatprep.subr.mxu0 0.0
        %1400 = vmatpush1.msra.mxu0 0.0
        %1401 = vmatprep.subr.mxu0 0.0
        %1402 = vmatpush1.msra.mxu0 0.0
        %1403 = vmatprep.subr.mxu0 0.0
        %1404 = vmatpush1.msra.mxu0 0.0
        %1405 = vmatprep.subr.mxu0 0.0
        %1406 = vmatpush1.msra.mxu0 0.0
        %1407 = vmatprep.subr.mxu0 0.0
        %1408 = vmatpush1.msra.mxu0 0.0
        %1409 = vmatprep.subr.mxu0 0.0
        %1410 = vmatpush1.msra.mxu0 0.0
        %1411 = vmatprep.subr.mxu0 0.0
        %1412 = vmatpush1.msra.mxu0 0.0
        %1413 = vmatprep.mubr.f32.mxu0 0.0
        %1414 = vmatmul.mubr.f32.gmra.mrb[0].mxu0 %v1345
        %v1415 = vpop.f32.mrb[0].mxu0
        %v1416 = vadd.f32 0.0, %v1415
        %v1417 = vpop.f32.mrb[0].mxu0
        %1418 = vdwg.mxu0
        %v1419 = vadd.f32 %v1328, %v1416
        %v1420 = vld [vmem:[%s597] sm:$0xff]
        %1421 = vrot.lane.b32.xlu0 %v1343, 127
        %v1422 = vpop.permute.xlu0 %1421
        %v1424 = vsel %vm273, %v1420, 0
        %v1426 = vsel %vm277, %v1422, 0
        %1428 = vmatprep.subr.mxu0 0.0
        %1429 = vmatpush1.msra.mxu0 %v1426
        %1430 = vmatprep.subr.mxu0 0.0
        %1431 = vmatpush1.msra.mxu0 0.0
        %1432 = vmatprep.subr.mxu0 0.0
        %1433 = vmatpush1.msra.mxu0 0.0
        %1434 = vmatprep.subr.mxu0 0.0
        %1435 = vmatpush1.msra.mxu0 0.0
        %1436 = vmatprep.subr.mxu0 0.0
        %1437 = vmatpush1.msra.mxu0 0.0
        %1438 = vmatprep.subr.mxu0 0.0
        %1439 = vmatpush1.msra.mxu0 0.0
        %1440 = vmatprep.subr.mxu0 0.0
        %1441 = vmatpush1.msra.mxu0 0.0
        %1442 = vmatprep.subr.mxu0 0.0
        %1443 = vmatpush1.msra.mxu0 0.0
        %1444 = vmatprep.subr.mxu0 0.0
        %1445 = vmatpush1.msra.mxu0 0.0
        %1446 = vmatprep.subr.mxu0 0.0
        %1447 = vmatpush1.msra.mxu0 0.0
        %1448 = vmatprep.subr.mxu0 0.0
        %1449 = vmatpush1.msra.mxu0 0.0
        %1450 = vmatprep.subr.mxu0 0.0
        %1451 = vmatpush1.msra.mxu0 0.0
        %1452 = vmatprep.subr.mxu0 0.0
        %1453 = vmatpush1.msra.mxu0 0.0
        %1454 = vmatprep.subr.mxu0 0.0
        %1455 = vmatpush1.msra.mxu0 0.0
        %1456 = vmatprep.subr.mxu0 0.0
        %1457 = vmatpush1.msra.mxu0 0.0
        %1458 = vmatprep.subr.mxu0 0.0
        %1459 = vmatpush1.msra.mxu0 0.0
        %1460 = vmatprep.subr.mxu0 0.0
        %1461 = vmatpush1.msra.mxu0 0.0
        %1462 = vmatprep.subr.mxu0 0.0
        %1463 = vmatpush1.msra.mxu0 0.0
        %1464 = vmatprep.subr.mxu0 0.0
        %1465 = vmatpush1.msra.mxu0 0.0
        %1466 = vmatprep.subr.mxu0 0.0
        %1467 = vmatpush1.msra.mxu0 0.0
        %1468 = vmatprep.subr.mxu0 0.0
        %1469 = vmatpush1.msra.mxu0 0.0
        %1470 = vmatprep.subr.mxu0 0.0
        %1471 = vmatpush1.msra.mxu0 0.0
        %1472 = vmatprep.subr.mxu0 0.0
        %1473 = vmatpush1.msra.mxu0 0.0
        %1474 = vmatprep.subr.mxu0 0.0
        %1475 = vmatpush1.msra.mxu0 0.0
        %1476 = vmatprep.subr.mxu0 0.0
        %1477 = vmatpush1.msra.mxu0 0.0
        %1478 = vmatprep.subr.mxu0 0.0
        %1479 = vmatpush1.msra.mxu0 0.0
        %1480 = vmatprep.subr.mxu0 0.0
        %1481 = vmatpush1.msra.mxu0 0.0
        %1482 = vmatprep.subr.mxu0 0.0
        %1483 = vmatpush1.msra.mxu0 0.0
        %1484 = vmatprep.subr.mxu0 0.0
        %1485 = vmatpush1.msra.mxu0 0.0
        %1486 = vmatprep.subr.mxu0 0.0
        %1487 = vmatpush1.msra.mxu0 0.0
        %1488 = vmatprep.subr.mxu0 0.0
        %1489 = vmatpush1.msra.mxu0 0.0
        %1490 = vmatprep.subr.mxu0 0.0
        %1491 = vmatpush1.msra.mxu0 0.0
        %1492 = vmatprep.mubr.f32.mxu0 0.0
        %1493 = vmatmul.mubr.f32.gmra.mrb[0].mxu0 %v1424
        %v1494 = vpop.f32.mrb[0].mxu0
        %v1495 = vadd.f32 0.0, %v1494
        %v1496 = vpop.f32.mrb[0].mxu0
        %1497 = vdwg.mxu0
        %v1498 = vadd.f32 %v1419, %v1495
        %v1499 = vld [vmem:[%s677] sm:$0xff]
        %1500 = vrot.lane.b32.xlu0 %v1343, 126
        %v1501 = vpop.permute.xlu0 %1500
        %v1503 = vsel %vm273, %v1499, 0
        %v1505 = vsel %vm277, %v1501, 0
        %1507 = vmatprep.subr.mxu0 0.0
        %1508 = vmatpush1.msra.mxu0 %v1505
        %1509 = vmatprep.subr.mxu0 0.0
        %1510 = vmatpush1.msra.mxu0 0.0
        %1511 = vmatprep.subr.mxu0 0.0
        %1512 = vmatpush1.msra.mxu0 0.0
        %1513 = vmatprep.subr.mxu0 0.0
        %1514 = vmatpush1.msra.mxu0 0.0
        %1515 = vmatprep.subr.mxu0 0.0
        %1516 = vmatpush1.msra.mxu0 0.0
        %1517 = vmatprep.subr.mxu0 0.0
        %1518 = vmatpush1.msra.mxu0 0.0
        %1519 = vmatprep.subr.mxu0 0.0
        %1520 = vmatpush1.msra.mxu0 0.0
        %1521 = vmatprep.subr.mxu0 0.0
        %1522 = vmatpush1.msra.mxu0 0.0
        %1523 = vmatprep.subr.mxu0 0.0
        %1524 = vmatpush1.msra.mxu0 0.0
        %1525 = vmatprep.subr.mxu0 0.0
        %1526 = vmatpush1.msra.mxu0 0.0
        %1527 = vmatprep.subr.mxu0 0.0
        %1528 = vmatpush1.msra.mxu0 0.0
        %1529 = vmatprep.subr.mxu0 0.0
        %1530 = vmatpush1.msra.mxu0 0.0
        %1531 = vmatprep.subr.mxu0 0.0
        %1532 = vmatpush1.msra.mxu0 0.0
        %1533 = vmatprep.subr.mxu0 0.0
        %1534 = vmatpush1.msra.mxu0 0.0
        %1535 = vmatprep.subr.mxu0 0.0
        %1536 = vmatpush1.msra.mxu0 0.0
        %1537 = vmatprep.subr.mxu0 0.0
        %1538 = vmatpush1.msra.mxu0 0.0
        %1539 = vmatprep.subr.mxu0 0.0
        %1540 = vmatpush1.msra.mxu0 0.0
        %1541 = vmatprep.subr.mxu0 0.0
        %1542 = vmatpush1.msra.mxu0 0.0
        %1543 = vmatprep.subr.mxu0 0.0
        %1544 = vmatpush1.msra.mxu0 0.0
        %1545 = vmatprep.subr.mxu0 0.0
        %1546 = vmatpush1.msra.mxu0 0.0
        %1547 = vmatprep.subr.mxu0 0.0
        %1548 = vmatpush1.msra.mxu0 0.0
        %1549 = vmatprep.subr.mxu0 0.0
        %1550 = vmatpush1.msra.mxu0 0.0
        %1551 = vmatprep.subr.mxu0 0.0
        %1552 = vmatpush1.msra.mxu0 0.0
        %1553 = vmatprep.subr.mxu0 0.0
        %1554 = vmatpush1.msra.mxu0 0.0
        %1555 = vmatprep.subr.mxu0 0.0
        %1556 = vmatpush1.msra.mxu0 0.0
        %1557 = vmatprep.subr.mxu0 0.0
        %1558 = vmatpush1.msra.mxu0 0.0
        %1559 = vmatprep.subr.mxu0 0.0
        %1560 = vmatpush1.msra.mxu0 0.0
        %1561 = vmatprep.subr.mxu0 0.0
        %1562 = vmatpush1.msra.mxu0 0.0
        %1563 = vmatprep.subr.mxu0 0.0
        %1564 = vmatpush1.msra.mxu0 0.0
        %1565 = vmatprep.subr.mxu0 0.0
        %1566 = vmatpush1.msra.mxu0 0.0
        %1567 = vmatprep.subr.mxu0 0.0
        %1568 = vmatpush1.msra.mxu0 0.0
        %1569 = vmatprep.subr.mxu0 0.0
        %1570 = vmatpush1.msra.mxu0 0.0
        %1571 = vmatprep.mubr.f32.mxu0 0.0
        %1572 = vmatmul.mubr.f32.gmra.mrb[0].mxu0 %v1503
        %v1573 = vpop.f32.mrb[0].mxu0
        %v1574 = vadd.f32 0.0, %v1573
        %v1575 = vpop.f32.mrb[0].mxu0
        %1576 = vdwg.mxu0
        %v1577 = vadd.f32 %v1498, %v1574
        %v1578 = vld [vmem:[%s229 + $0x3] sm:$0x1]
        %v1579 = vld [vmem:[%s229 + $0x13] sm:$0x1]
        %v1580 = vld [vmem:[%s229 + $0x23] sm:$0x1]
        %v1581 = vld [vmem:[%s229 + $0x33] sm:$0x1]
        %v1582 = vld [vmem:[%s761] sm:$0xff]
        %v1587 = vrot.slane %v1579, 7
        %v1588 = vsel %vm263, %v1587, %v1578
        %v1589 = vrot.slane %v1580, 6
        %v1590 = vsel %vm266, %v1589, %v1588
        %v1591 = vrot.slane %v1581, 5
        %v1592 = vsel %vm269, %v1591, %v1590
        %v1594 = vsel %vm273, %v1582, 0
        %v1596 = vsel %vm277, %v1592, 0
        %1598 = vmatprep.subr.mxu0 0.0
        %1599 = vmatpush1.msra.mxu0 %v1596
        %1600 = vmatprep.subr.mxu0 0.0
        %1601 = vmatpush1.msra.mxu0 0.0
        %1602 = vmatprep.subr.mxu0 0.0
        %1603 = vmatpush1.msra.mxu0 0.0
        %1604 = vmatprep.subr.mxu0 0.0
        %1605 = vmatpush1.msra.mxu0 0.0
        %1606 = vmatprep.subr.mxu0 0.0
        %1607 = vmatpush1.msra.mxu0 0.0
        %1608 = vmatprep.subr.mxu0 0.0
        %1609 = vmatpush1.msra.mxu0 0.0
        %1610 = vmatprep.subr.mxu0 0.0
        %1611 = vmatpush1.msra.mxu0 0.0
        %1612 = vmatprep.subr.mxu0 0.0
        %1613 = vmatpush1.msra.mxu0 0.0
        %1614 = vmatprep.subr.mxu0 0.0
        %1615 = vmatpush1.msra.mxu0 0.0
        %1616 = vmatprep.subr.mxu0 0.0
        %1617 = vmatpush1.msra.mxu0 0.0
        %1618 = vmatprep.subr.mxu0 0.0
        %1619 = vmatpush1.msra.mxu0 0.0
        %1620 = vmatprep.subr.mxu0 0.0
        %1621 = vmatpush1.msra.mxu0 0.0
        %1622 = vmatprep.subr.mxu0 0.0
        %1623 = vmatpush1.msra.mxu0 0.0
        %1624 = vmatprep.subr.mxu0 0.0
        %1625 = vmatpush1.msra.mxu0 0.0
        %1626 = vmatprep.subr.mxu0 0.0
        %1627 = vmatpush1.msra.mxu0 0.0
        %1628 = vmatprep.subr.mxu0 0.0
        %1629 = vmatpush1.msra.mxu0 0.0
        %1630 = vmatprep.subr.mxu0 0.0
        %1631 = vmatpush1.msra.mxu0 0.0
        %1632 = vmatprep.subr.mxu0 0.0
        %1633 = vmatpush1.msra.mxu0 0.0
        %1634 = vmatprep.subr.mxu0 0.0
        %1635 = vmatpush1.msra.mxu0 0.0
        %1636 = vmatprep.subr.mxu0 0.0
        %1637 = vmatpush1.msra.mxu0 0.0
        %1638 = vmatprep.subr.mxu0 0.0
        %1639 = vmatpush1.msra.mxu0 0.0
        %1640 = vmatprep.subr.mxu0 0.0
        %1641 = vmatpush1.msra.mxu0 0.0
        %1642 = vmatprep.subr.mxu0 0.0
        %1643 = vmatpush1.msra.mxu0 0.0
        %1644 = vmatprep.subr.mxu0 0.0
        %1645 = vmatpush1.msra.mxu0 0.0
        %1646 = vmatprep.subr.mxu0 0.0
        %1647 = vmatpush1.msra.mxu0 0.0
        %1648 = vmatprep.subr.mxu0 0.0
        %1649 = vmatpush1.msra.mxu0 0.0
        %1650 = vmatprep.subr.mxu0 0.0
        %1651 = vmatpush1.msra.mxu0 0.0
        %1652 = vmatprep.subr.mxu0 0.0
        %1653 = vmatpush1.msra.mxu0 0.0
        %1654 = vmatprep.subr.mxu0 0.0
        %1655 = vmatpush1.msra.mxu0 0.0
        %1656 = vmatprep.subr.mxu0 0.0
        %1657 = vmatpush1.msra.mxu0 0.0
        %1658 = vmatprep.subr.mxu0 0.0
        %1659 = vmatpush1.msra.mxu0 0.0
        %1660 = vmatprep.subr.mxu0 0.0
        %1661 = vmatpush1.msra.mxu0 0.0
        %1662 = vmatprep.mubr.f32.mxu0 0.0
        %1663 = vmatmul.mubr.f32.gmra.mrb[0].mxu0 %v1594
        %v1664 = vpop.f32.mrb[0].mxu0
        %v1665 = vadd.f32 0.0, %v1664
        %v1666 = vpop.f32.mrb[0].mxu0
        %1667 = vdwg.mxu0
        %v1668 = vadd.f32 %v1577, %v1665
        %v1669 = vld [vmem:[%s849] sm:$0xff]
        %1670 = vrot.lane.b32.xlu0 %v1592, 127
        %v1671 = vpop.permute.xlu0 %1670
        %v1673 = vsel %vm273, %v1669, 0
        %v1675 = vsel %vm277, %v1671, 0
        %1677 = vmatprep.subr.mxu0 0.0
        %1678 = vmatpush1.msra.mxu0 %v1675
        %1679 = vmatprep.subr.mxu0 0.0
        %1680 = vmatpush1.msra.mxu0 0.0
        %1681 = vmatprep.subr.mxu0 0.0
        %1682 = vmatpush1.msra.mxu0 0.0
        %1683 = vmatprep.subr.mxu0 0.0
        %1684 = vmatpush1.msra.mxu0 0.0
        %1685 = vmatprep.subr.mxu0 0.0
        %1686 = vmatpush1.msra.mxu0 0.0
        %1687 = vmatprep.subr.mxu0 0.0
        %1688 = vmatpush1.msra.mxu0 0.0
        %1689 = vmatprep.subr.mxu0 0.0
        %1690 = vmatpush1.msra.mxu0 0.0
        %1691 = vmatprep.subr.mxu0 0.0
        %1692 = vmatpush1.msra.mxu0 0.0
        %1693 = vmatprep.subr.mxu0 0.0
        %1694 = vmatpush1.msra.mxu0 0.0
        %1695 = vmatprep.subr.mxu0 0.0
        %1696 = vmatpush1.msra.mxu0 0.0
        %1697 = vmatprep.subr.mxu0 0.0
        %1698 = vmatpush1.msra.mxu0 0.0
        %1699 = vmatprep.subr.mxu0 0.0
        %1700 = vmatpush1.msra.mxu0 0.0
        %1701 = vmatprep.subr.mxu0 0.0
        %1702 = vmatpush1.msra.mxu0 0.0
        %1703 = vmatprep.subr.mxu0 0.0
        %1704 = vmatpush1.msra.mxu0 0.0
        %1705 = vmatprep.subr.mxu0 0.0
        %1706 = vmatpush1.msra.mxu0 0.0
        %1707 = vmatprep.subr.mxu0 0.0
        %1708 = vmatpush1.msra.mxu0 0.0
        %1709 = vmatprep.subr.mxu0 0.0
        %1710 = vmatpush1.msra.mxu0 0.0
        %1711 = vmatprep.subr.mxu0 0.0
        %1712 = vmatpush1.msra.mxu0 0.0
        %1713 = vmatprep.subr.mxu0 0.0
        %1714 = vmatpush1.msra.mxu0 0.0
        %1715 = vmatprep.subr.mxu0 0.0
        %1716 = vmatpush1.msra.mxu0 0.0
        %1717 = vmatprep.subr.mxu0 0.0
        %1718 = vmatpush1.msra.mxu0 0.0
        %1719 = vmatprep.subr.mxu0 0.0
        %1720 = vmatpush1.msra.mxu0 0.0
        %1721 = vmatprep.subr.mxu0 0.0
        %1722 = vmatpush1.msra.mxu0 0.0
        %1723 = vmatprep.subr.mxu0 0.0
        %1724 = vmatpush1.msra.mxu0 0.0
        %1725 = vmatprep.subr.mxu0 0.0
        %1726 = vmatpush1.msra.mxu0 0.0
        %1727 = vmatprep.subr.mxu0 0.0
        %1728 = vmatpush1.msra.mxu0 0.0
        %1729 = vmatprep.subr.mxu0 0.0
        %1730 = vmatpush1.msra.mxu0 0.0
        %1731 = vmatprep.subr.mxu0 0.0
        %1732 = vmatpush1.msra.mxu0 0.0
        %1733 = vmatprep.subr.mxu0 0.0
        %1734 = vmatpush1.msra.mxu0 0.0
        %1735 = vmatprep.subr.mxu0 0.0
        %1736 = vmatpush1.msra.mxu0 0.0
        %1737 = vmatprep.subr.mxu0 0.0
        %1738 = vmatpush1.msra.mxu0 0.0
        %1739 = vmatprep.subr.mxu0 0.0
        %1740 = vmatpush1.msra.mxu0 0.0
        %1741 = vmatprep.mubr.f32.mxu0 0.0
        %1742 = vmatmul.mubr.f32.gmra.mrb[0].mxu0 %v1673
        %v1743 = vpop.f32.mrb[0].mxu0
        %v1744 = vadd.f32 0.0, %v1743
        %v1745 = vpop.f32.mrb[0].mxu0
        %1746 = vdwg.mxu0
        %v1747 = vadd.f32 %v1668, %v1744
        %v1748 = vld [vmem:[%s929] sm:$0xff]
        %1749 = vrot.lane.b32.xlu0 %v1592, 126
        %v1750 = vpop.permute.xlu0 %1749
        %v1752 = vsel %vm273, %v1748, 0
        %v1754 = vsel %vm277, %v1750, 0
        %1756 = vmatprep.subr.mxu0 0.0
        %1757 = vmatpush1.msra.mxu0 %v1754
        %1758 = vmatprep.subr.mxu0 0.0
        %1759 = vmatpush1.msra.mxu0 0.0
        %1760 = vmatprep.subr.mxu0 0.0
        %1761 = vmatpush1.msra.mxu0 0.0
        %1762 = vmatprep.subr.mxu0 0.0
        %1763 = vmatpush1.msra.mxu0 0.0
        %1764 = vmatprep.subr.mxu0 0.0
        %1765 = vmatpush1.msra.mxu0 0.0
        %1766 = vmatprep.subr.mxu0 0.0
        %1767 = vmatpush1.msra.mxu0 0.0
        %1768 = vmatprep.subr.mxu0 0.0
        %1769 = vmatpush1.msra.mxu0 0.0
        %1770 = vmatprep.subr.mxu0 0.0
        %1771 = vmatpush1.msra.mxu0 0.0
        %1772 = vmatprep.subr.mxu0 0.0
        %1773 = vmatpush1.msra.mxu0 0.0
        %1774 = vmatprep.subr.mxu0 0.0
        %1775 = vmatpush1.msra.mxu0 0.0
        %1776 = vmatprep.subr.mxu0 0.0
        %1777 = vmatpush1.msra.mxu0 0.0
        %1778 = vmatprep.subr.mxu0 0.0
        %1779 = vmatpush1.msra.mxu0 0.0
        %1780 = vmatprep.subr.mxu0 0.0
        %1781 = vmatpush1.msra.mxu0 0.0
        %1782 = vmatprep.subr.mxu0 0.0
        %1783 = vmatpush1.msra.mxu0 0.0
        %1784 = vmatprep.subr.mxu0 0.0
        %1785 = vmatpush1.msra.mxu0 0.0
        %1786 = vmatprep.subr.mxu0 0.0
        %1787 = vmatpush1.msra.mxu0 0.0
        %1788 = vmatprep.subr.mxu0 0.0
        %1789 = vmatpush1.msra.mxu0 0.0
        %1790 = vmatprep.subr.mxu0 0.0
        %1791 = vmatpush1.msra.mxu0 0.0
        %1792 = vmatprep.subr.mxu0 0.0
        %1793 = vmatpush1.msra.mxu0 0.0
        %1794 = vmatprep.subr.mxu0 0.0
        %1795 = vmatpush1.msra.mxu0 0.0
        %1796 = vmatprep.subr.mxu0 0.0
        %1797 = vmatpush1.msra.mxu0 0.0
        %1798 = vmatprep.subr.mxu0 0.0
        %1799 = vmatpush1.msra.mxu0 0.0
        %1800 = vmatprep.subr.mxu0 0.0
        %1801 = vmatpush1.msra.mxu0 0.0
        %1802 = vmatprep.subr.mxu0 0.0
        %1803 = vmatpush1.msra.mxu0 0.0
        %1804 = vmatprep.subr.mxu0 0.0
        %1805 = vmatpush1.msra.mxu0 0.0
        %1806 = vmatprep.subr.mxu0 0.0
        %1807 = vmatpush1.msra.mxu0 0.0
        %1808 = vmatprep.subr.mxu0 0.0
        %1809 = vmatpush1.msra.mxu0 0.0
        %1810 = vmatprep.subr.mxu0 0.0
        %1811 = vmatpush1.msra.mxu0 0.0
        %1812 = vmatprep.subr.mxu0 0.0
        %1813 = vmatpush1.msra.mxu0 0.0
        %1814 = vmatprep.subr.mxu0 0.0
        %1815 = vmatpush1.msra.mxu0 0.0
        %1816 = vmatprep.subr.mxu0 0.0
        %1817 = vmatpush1.msra.mxu0 0.0
        %1818 = vmatprep.subr.mxu0 0.0
        %1819 = vmatpush1.msra.mxu0 0.0
        %1820 = vmatprep.mubr.f32.mxu0 0.0
        %1821 = vmatmul.mubr.f32.gmra.mrb[0].mxu0 %v1752
        %v1822 = vpop.f32.mrb[0].mxu0
        %v1823 = vadd.f32 0.0, %v1822
        %v1824 = vpop.f32.mrb[0].mxu0
        %1825 = vdwg.mxu0
        %v1826 = vadd.f32 %v1747, %v1823
        %v1827 = vadd.f32 %v1826, %v1012
        %v1829 = vcombine.high %v1827, %v1827
        %v1831 = vunpack.c.l.s4 1966171168
        %v1832 = vunpack.c.0.s8 %v1831
        %v1833 = vlaneseq
        %v1834 = vshrl.u32 %v1833, 7
        %v1835 = vsub.s32 %v1832, %v1834
        %v1836 = vrot.slane %v1827, %v1835
        %v1838 = vunpack.c.l.s4 1966171168
        %v1839 = vunpack.c.0.s8 %v1838
        %v1840 = vlaneseq
        %v1841 = vshrl.u32 %v1840, 7
        %v1842 = vsub.s32 %v1839, %v1841
        %v1843 = vrot.slane %v1829, %v1842
        %v1844 = vcombine.high %v1836, %v1836
        %v1845 = vcombine.high %v1843, %v1843
        %v1847 = vunpack.c.l.s4 1966171168
        %v1848 = vunpack.c.0.s8 %v1847
        %v1849 = vlaneseq
        %v1850 = vshrl.u32 %v1849, 7
        %v1851 = vsub.s32 %v1848, %v1850
        %v1852 = vrot.slane %v1836, %v1851
        %v1854 = vunpack.c.l.s4 1966171168
        %v1855 = vunpack.c.0.s8 %v1854
        %v1856 = vlaneseq
        %v1857 = vshrl.u32 %v1856, 7
        %v1858 = vsub.s32 %v1855, %v1857
        %v1859 = vrot.slane %v1843, %v1858
        %v1861 = vunpack.c.l.s4 1966171168
        %v1862 = vunpack.c.0.s8 %v1861
        %v1863 = vlaneseq
        %v1864 = vshrl.u32 %v1863, 7
        %v1865 = vsub.s32 %v1862, %v1864
        %v1866 = vrot.slane %v1844, %v1865
        %v1868 = vunpack.c.l.s4 1966171168
        %v1869 = vunpack.c.0.s8 %v1868
        %v1870 = vlaneseq
        %v1871 = vshrl.u32 %v1870, 7
        %v1872 = vsub.s32 %v1869, %v1871
        %v1873 = vrot.slane %v1845, %v1872
        %v1874 = vcombine.high %v1852, %v1852
        %v1875 = vcombine.high %v1859, %v1859
        %v1876 = vcombine.high %v1866, %v1866
        %v1877 = vcombine.high %v1873, %v1873
        %1886 = vst.msk [vmem:[%s249 + $0x1] sm:$0x1] %vm1073, %v1852
        %1887 = vst.msk [vmem:[%s249 + $0x9] sm:$0x1] %vm1073, %v1866
        %1888 = vst.msk [vmem:[%s249 + $0x11] sm:$0x1] %vm1073, %v1874
        %1889 = vst.msk [vmem:[%s249 + $0x19] sm:$0x1] %vm1073, %v1876
        %1890 = vst.msk [vmem:[%s249 + $0x21] sm:$0x1] %vm1073, %v1859
        %1891 = vst.msk [vmem:[%s249 + $0x29] sm:$0x1] %vm1073, %v1873
        %1892 = vst.msk [vmem:[%s249 + $0x31] sm:$0x1] %vm1073, %v1875
        %1893 = vst.msk [vmem:[%s249 + $0x39] sm:$0x1] %vm1073, %v1877
        %v1894 = vld [vmem:[%s229 + $0x2] sm:$0x1]
        %v1895 = vld [vmem:[%s229 + $0x12] sm:$0x1]
        %v1896 = vld [vmem:[%s229 + $0x22] sm:$0x1]
        %v1897 = vld [vmem:[%s229 + $0x32] sm:$0x1]
        %v1898 = vld [vmem:[%s1] sm:$0xff]
        %v1899 = vld [vmem:[%s256] sm:$0xff]
        %v1904 = vrot.slane %v1895, 7
        %v1905 = vsel %vm263, %v1904, %v1894
        %v1906 = vrot.slane %v1896, 6
        %v1907 = vsel %vm266, %v1906, %v1905
        %v1908 = vrot.slane %v1897, 5
        %v1909 = vsel %vm269, %v1908, %v1907
        %1910 = vrot.lane.b32.xlu0 %v1909, 127
        %v1911 = vpop.permute.xlu0 %1910
        %v1913 = vsel %vm273, %v1899, 0
        %v1915 = vsel %vm277, %v1911, 0
        %1917 = vmatprep.subr.mxu0 0.0
        %1918 = vmatpush1.msra.mxu0 %v1915
        %1919 = vmatprep.subr.mxu0 0.0
        %1920 = vmatpush1.msra.mxu0 0.0
        %1921 = vmatprep.subr.mxu0 0.0
        %1922 = vmatpush1.msra.mxu0 0.0
        %1923 = vmatprep.subr.mxu0 0.0
        %1924 = vmatpush1.msra.mxu0 0.0
        %1925 = vmatprep.subr.mxu0 0.0
        %1926 = vmatpush1.msra.mxu0 0.0
        %1927 = vmatprep.subr.mxu0 0.0
        %1928 = vmatpush1.msra.mxu0 0.0
        %1929 = vmatprep.subr.mxu0 0.0
        %1930 = vmatpush1.msra.mxu0 0.0
        %1931 = vmatprep.subr.mxu0 0.0
        %1932 = vmatpush1.msra.mxu0 0.0
        %1933 = vmatprep.subr.mxu0 0.0
        %1934 = vmatpush1.msra.mxu0 0.0
        %1935 = vmatprep.subr.mxu0 0.0
        %1936 = vmatpush1.msra.mxu0 0.0
        %1937 = vmatprep.subr.mxu0 0.0
        %1938 = vmatpush1.msra.mxu0 0.0
        %1939 = vmatprep.subr.mxu0 0.0
        %1940 = vmatpush1.msra.mxu0 0.0
        %1941 = vmatprep.subr.mxu0 0.0
        %1942 = vmatpush1.msra.mxu0 0.0
        %1943 = vmatprep.subr.mxu0 0.0
        %1944 = vmatpush1.msra.mxu0 0.0
        %1945 = vmatprep.subr.mxu0 0.0
        %1946 = vmatpush1.msra.mxu0 0.0
        %1947 = vmatprep.subr.mxu0 0.0
        %1948 = vmatpush1.msra.mxu0 0.0
        %1949 = vmatprep.subr.mxu0 0.0
        %1950 = vmatpush1.msra.mxu0 0.0
        %1951 = vmatprep.subr.mxu0 0.0
        %1952 = vmatpush1.msra.mxu0 0.0
        %1953 = vmatprep.subr.mxu0 0.0
        %1954 = vmatpush1.msra.mxu0 0.0
        %1955 = vmatprep.subr.mxu0 0.0
        %1956 = vmatpush1.msra.mxu0 0.0
        %1957 = vmatprep.subr.mxu0 0.0
        %1958 = vmatpush1.msra.mxu0 0.0
        %1959 = vmatprep.subr.mxu0 0.0
        %1960 = vmatpush1.msra.mxu0 0.0
        %1961 = vmatprep.subr.mxu0 0.0
        %1962 = vmatpush1.msra.mxu0 0.0
        %1963 = vmatprep.subr.mxu0 0.0
        %1964 = vmatpush1.msra.mxu0 0.0
        %1965 = vmatprep.subr.mxu0 0.0
        %1966 = vmatpush1.msra.mxu0 0.0
        %1967 = vmatprep.subr.mxu0 0.0
        %1968 = vmatpush1.msra.mxu0 0.0
        %1969 = vmatprep.subr.mxu0 0.0
        %1970 = vmatpush1.msra.mxu0 0.0
        %1971 = vmatprep.subr.mxu0 0.0
        %1972 = vmatpush1.msra.mxu0 0.0
        %1973 = vmatprep.subr.mxu0 0.0
        %1974 = vmatpush1.msra.mxu0 0.0
        %1975 = vmatprep.subr.mxu0 0.0
        %1976 = vmatpush1.msra.mxu0 0.0
        %1977 = vmatprep.subr.mxu0 0.0
        %1978 = vmatpush1.msra.mxu0 0.0
        %1979 = vmatprep.subr.mxu0 0.0
        %1980 = vmatpush1.msra.mxu0 0.0
        %1981 = vmatprep.mubr.f32.mxu0 0.0
        %1982 = vmatmul.mubr.f32.gmra.mrb[0].mxu0 %v1913
        %v1983 = vpop.f32.mrb[0].mxu0
        %v1984 = vadd.f32 0.0, %v1983
        %v1985 = vpop.f32.mrb[0].mxu0
        %1986 = vdwg.mxu0
        %v1988 = vsel %vm273, %v1898, 0
        %v1990 = vsel %vm277, %v1909, 0
        %1992 = vmatprep.subr.mxu0 0.0
        %1993 = vmatpush1.msra.mxu0 %v1990
        %1994 = vmatprep.subr.mxu0 0.0
        %1995 = vmatpush1.msra.mxu0 0.0
        %1996 = vmatprep.subr.mxu0 0.0
        %1997 = vmatpush1.msra.mxu0 0.0
        %1998 = vmatprep.subr.mxu0 0.0
        %1999 = vmatpush1.msra.mxu0 0.0
        %2000 = vmatprep.subr.mxu0 0.0
        %2001 = vmatpush1.msra.mxu0 0.0
        %2002 = vmatprep.subr.mxu0 0.0
        %2003 = vmatpush1.msra.mxu0 0.0
        %2004 = vmatprep.subr.mxu0 0.0
        %2005 = vmatpush1.msra.mxu0 0.0
        %2006 = vmatprep.subr.mxu0 0.0
        %2007 = vmatpush1.msra.mxu0 0.0
        %2008 = vmatprep.subr.mxu0 0.0
        %2009 = vmatpush1.msra.mxu0 0.0
        %2010 = vmatprep.subr.mxu0 0.0
        %2011 = vmatpush1.msra.mxu0 0.0
        %2012 = vmatprep.subr.mxu0 0.0
        %2013 = vmatpush1.msra.mxu0 0.0
        %2014 = vmatprep.subr.mxu0 0.0
        %2015 = vmatpush1.msra.mxu0 0.0
        %2016 = vmatprep.subr.mxu0 0.0
        %2017 = vmatpush1.msra.mxu0 0.0
        %2018 = vmatprep.subr.mxu0 0.0
        %2019 = vmatpush1.msra.mxu0 0.0
        %2020 = vmatprep.subr.mxu0 0.0
        %2021 = vmatpush1.msra.mxu0 0.0
        %2022 = vmatprep.subr.mxu0 0.0
        %2023 = vmatpush1.msra.mxu0 0.0
        %2024 = vmatprep.subr.mxu0 0.0
        %2025 = vmatpush1.msra.mxu0 0.0
        %2026 = vmatprep.subr.mxu0 0.0
        %2027 = vmatpush1.msra.mxu0 0.0
        %2028 = vmatprep.subr.mxu0 0.0
        %2029 = vmatpush1.msra.mxu0 0.0
        %2030 = vmatprep.subr.mxu0 0.0
        %2031 = vmatpush1.msra.mxu0 0.0
        %2032 = vmatprep.subr.mxu0 0.0
        %2033 = vmatpush1.msra.mxu0 0.0
        %2034 = vmatprep.subr.mxu0 0.0
        %2035 = vmatpush1.msra.mxu0 0.0
        %2036 = vmatprep.subr.mxu0 0.0
        %2037 = vmatpush1.msra.mxu0 0.0
        %2038 = vmatprep.subr.mxu0 0.0
        %2039 = vmatpush1.msra.mxu0 0.0
        %2040 = vmatprep.subr.mxu0 0.0
        %2041 = vmatpush1.msra.mxu0 0.0
        %2042 = vmatprep.subr.mxu0 0.0
        %2043 = vmatpush1.msra.mxu0 0.0
        %2044 = vmatprep.subr.mxu0 0.0
        %2045 = vmatpush1.msra.mxu0 0.0
        %2046 = vmatprep.subr.mxu0 0.0
        %2047 = vmatpush1.msra.mxu0 0.0
        %2048 = vmatprep.subr.mxu0 0.0
        %2049 = vmatpush1.msra.mxu0 0.0
        %2050 = vmatprep.subr.mxu0 0.0
        %2051 = vmatpush1.msra.mxu0 0.0
        %2052 = vmatprep.subr.mxu0 0.0
        %2053 = vmatpush1.msra.mxu0 0.0
        %2054 = vmatprep.subr.mxu0 0.0
        %2055 = vmatpush1.msra.mxu0 0.0
        %2056 = vmatprep.mubr.f32.mxu0 0.0
        %2057 = vmatmul.mubr.f32.gmra.mrb[0].mxu0 %v1988
        %v2058 = vpop.f32.mrb[0].mxu0
        %v2059 = vadd.f32 %v1984, %v2058
        %v2060 = vpop.f32.mrb[0].mxu0
        %2061 = vdwg.mxu0
        %v2062 = vld [vmem:[%s425] sm:$0xff]
        %2063 = vrot.lane.b32.xlu0 %v1909, 126
        %v2064 = vpop.permute.xlu0 %2063
        %v2066 = vsel %vm273, %v2062, 0
        %v2068 = vsel %vm277, %v2064, 0
        %2070 = vmatprep.subr.mxu0 0.0
        %2071 = vmatpush1.msra.mxu0 %v2068
        %2072 = vmatprep.subr.mxu0 0.0
        %2073 = vmatpush1.msra.mxu0 0.0
        %2074 = vmatprep.subr.mxu0 0.0
        %2075 = vmatpush1.msra.mxu0 0.0
        %2076 = vmatprep.subr.mxu0 0.0
        %2077 = vmatpush1.msra.mxu0 0.0
        %2078 = vmatprep.subr.mxu0 0.0
        %2079 = vmatpush1.msra.mxu0 0.0
        %2080 = vmatprep.subr.mxu0 0.0
        %2081 = vmatpush1.msra.mxu0 0.0
        %2082 = vmatprep.subr.mxu0 0.0
        %2083 = vmatpush1.msra.mxu0 0.0
        %2084 = vmatprep.subr.mxu0 0.0
        %2085 = vmatpush1.msra.mxu0 0.0
        %2086 = vmatprep.subr.mxu0 0.0
        %2087 = vmatpush1.msra.mxu0 0.0
        %2088 = vmatprep.subr.mxu0 0.0
        %2089 = vmatpush1.msra.mxu0 0.0
        %2090 = vmatprep.subr.mxu0 0.0
        %2091 = vmatpush1.msra.mxu0 0.0
        %2092 = vmatprep.subr.mxu0 0.0
        %2093 = vmatpush1.msra.mxu0 0.0
        %2094 = vmatprep.subr.mxu0 0.0
        %2095 = vmatpush1.msra.mxu0 0.0
        %2096 = vmatprep.subr.mxu0 0.0
        %2097 = vmatpush1.msra.mxu0 0.0
        %2098 = vmatprep.subr.mxu0 0.0
        %2099 = vmatpush1.msra.mxu0 0.0
        %2100 = vmatprep.subr.mxu0 0.0
        %2101 = vmatpush1.msra.mxu0 0.0
        %2102 = vmatprep.subr.mxu0 0.0
        %2103 = vmatpush1.msra.mxu0 0.0
        %2104 = vmatprep.subr.mxu0 0.0
        %2105 = vmatpush1.msra.mxu0 0.0
        %2106 = vmatprep.subr.mxu0 0.0
        %2107 = vmatpush1.msra.mxu0 0.0
        %2108 = vmatprep.subr.mxu0 0.0
        %2109 = vmatpush1.msra.mxu0 0.0
        %2110 = vmatprep.subr.mxu0 0.0
        %2111 = vmatpush1.msra.mxu0 0.0
        %2112 = vmatprep.subr.mxu0 0.0
        %2113 = vmatpush1.msra.mxu0 0.0
        %2114 = vmatprep.subr.mxu0 0.0
        %2115 = vmatpush1.msra.mxu0 0.0
        %2116 = vmatprep.subr.mxu0 0.0
        %2117 = vmatpush1.msra.mxu0 0.0
        %2118 = vmatprep.subr.mxu0 0.0
        %2119 = vmatpush1.msra.mxu0 0.0
        %2120 = vmatprep.subr.mxu0 0.0
        %2121 = vmatpush1.msra.mxu0 0.0
        %2122 = vmatprep.subr.mxu0 0.0
        %2123 = vmatpush1.msra.mxu0 0.0
        %2124 = vmatprep.subr.mxu0 0.0
        %2125 = vmatpush1.msra.mxu0 0.0
        %2126 = vmatprep.subr.mxu0 0.0
        %2127 = vmatpush1.msra.mxu0 0.0
        %2128 = vmatprep.subr.mxu0 0.0
        %2129 = vmatpush1.msra.mxu0 0.0
        %2130 = vmatprep.subr.mxu0 0.0
        %2131 = vmatpush1.msra.mxu0 0.0
        %2132 = vmatprep.subr.mxu0 0.0
        %2133 = vmatpush1.msra.mxu0 0.0
        %2134 = vmatprep.mubr.f32.mxu0 0.0
        %2135 = vmatmul.mubr.f32.gmra.mrb[0].mxu0 %v2066
        %v2136 = vpop.f32.mrb[0].mxu0
        %v2137 = vadd.f32 0.0, %v2136
        %v2138 = vpop.f32.mrb[0].mxu0
        %2139 = vdwg.mxu0
        %v2140 = vadd.f32 %v2059, %v2137
        %v2141 = vld [vmem:[%s229 + $0x3] sm:$0x1]
        %v2142 = vld [vmem:[%s229 + $0x13] sm:$0x1]
        %v2143 = vld [vmem:[%s229 + $0x23] sm:$0x1]
        %v2144 = vld [vmem:[%s229 + $0x33] sm:$0x1]
        %v2145 = vld [vmem:[%s509] sm:$0xff]
        %v2150 = vrot.slane %v2142, 7
        %v2151 = vsel %vm263, %v2150, %v2141
        %v2152 = vrot.slane %v2143, 6
        %v2153 = vsel %vm266, %v2152, %v2151
        %v2154 = vrot.slane %v2144, 5
        %v2155 = vsel %vm269, %v2154, %v2153
        %v2157 = vsel %vm273, %v2145, 0
        %v2159 = vsel %vm277, %v2155, 0
        %2161 = vmatprep.subr.mxu0 0.0
        %2162 = vmatpush1.msra.mxu0 %v2159
        %2163 = vmatprep.subr.mxu0 0.0
        %2164 = vmatpush1.msra.mxu0 0.0
        %2165 = vmatprep.subr.mxu0 0.0
        %2166 = vmatpush1.msra.mxu0 0.0
        %2167 = vmatprep.subr.mxu0 0.0
        %2168 = vmatpush1.msra.mxu0 0.0
        %2169 = vmatprep.subr.mxu0 0.0
        %2170 = vmatpush1.msra.mxu0 0.0
        %2171 = vmatprep.subr.mxu0 0.0
        %2172 = vmatpush1.msra.mxu0 0.0
        %2173 = vmatprep.subr.mxu0 0.0
        %2174 = vmatpush1.msra.mxu0 0.0
        %2175 = vmatprep.subr.mxu0 0.0
        %2176 = vmatpush1.msra.mxu0 0.0
        %2177 = vmatprep.subr.mxu0 0.0
        %2178 = vmatpush1.msra.mxu0 0.0
        %2179 = vmatprep.subr.mxu0 0.0
        %2180 = vmatpush1.msra.mxu0 0.0
        %2181 = vmatprep.subr.mxu0 0.0
        %2182 = vmatpush1.msra.mxu0 0.0
        %2183 = vmatprep.subr.mxu0 0.0
        %2184 = vmatpush1.msra.mxu0 0.0
        %2185 = vmatprep.subr.mxu0 0.0
        %2186 = vmatpush1.msra.mxu0 0.0
        %2187 = vmatprep.subr.mxu0 0.0
        %2188 = vmatpush1.msra.mxu0 0.0
        %2189 = vmatprep.subr.mxu0 0.0
        %2190 = vmatpush1.msra.mxu0 0.0
        %2191 = vmatprep.subr.mxu0 0.0
        %2192 = vmatpush1.msra.mxu0 0.0
        %2193 = vmatprep.subr.mxu0 0.0
        %2194 = vmatpush1.msra.mxu0 0.0
        %2195 = vmatprep.subr.mxu0 0.0
        %2196 = vmatpush1.msra.mxu0 0.0
        %2197 = vmatprep.subr.mxu0 0.0
        %2198 = vmatpush1.msra.mxu0 0.0
        %2199 = vmatprep.subr.mxu0 0.0
        %2200 = vmatpush1.msra.mxu0 0.0
        %2201 = vmatprep.subr.mxu0 0.0
        %2202 = vmatpush1.msra.mxu0 0.0
        %2203 = vmatprep.subr.mxu0 0.0
        %2204 = vmatpush1.msra.mxu0 0.0
        %2205 = vmatprep.subr.mxu0 0.0
        %2206 = vmatpush1.msra.mxu0 0.0
        %2207 = vmatprep.subr.mxu0 0.0
        %2208 = vmatpush1.msra.mxu0 0.0
        %2209 = vmatprep.subr.mxu0 0.0
        %2210 = vmatpush1.msra.mxu0 0.0
        %2211 = vmatprep.subr.mxu0 0.0
        %2212 = vmatpush1.msra.mxu0 0.0
        %2213 = vmatprep.subr.mxu0 0.0
        %2214 = vmatpush1.msra.mxu0 0.0
        %2215 = vmatprep.subr.mxu0 0.0
        %2216 = vmatpush1.msra.mxu0 0.0
        %2217 = vmatprep.subr.mxu0 0.0
        %2218 = vmatpush1.msra.mxu0 0.0
        %2219 = vmatprep.subr.mxu0 0.0
        %2220 = vmatpush1.msra.mxu0 0.0
        %2221 = vmatprep.subr.mxu0 0.0
        %2222 = vmatpush1.msra.mxu0 0.0
        %2223 = vmatprep.subr.mxu0 0.0
        %2224 = vmatpush1.msra.mxu0 0.0
        %2225 = vmatprep.mubr.f32.mxu0 0.0
        %2226 = vmatmul.mubr.f32.gmra.mrb[0].mxu0 %v2157
        %v2227 = vpop.f32.mrb[0].mxu0
        %v2228 = vadd.f32 0.0, %v2227
        %v2229 = vpop.f32.mrb[0].mxu0
        %2230 = vdwg.mxu0
        %v2231 = vadd.f32 %v2140, %v2228
        %v2232 = vld [vmem:[%s597] sm:$0xff]
        %2233 = vrot.lane.b32.xlu0 %v2155, 127
        %v2234 = vpop.permute.xlu0 %2233
        %v2236 = vsel %vm273, %v2232, 0
        %v2238 = vsel %vm277, %v2234, 0
        %2240 = vmatprep.subr.mxu0 0.0
        %2241 = vmatpush1.msra.mxu0 %v2238
        %2242 = vmatprep.subr.mxu0 0.0
        %2243 = vmatpush1.msra.mxu0 0.0
        %2244 = vmatprep.subr.mxu0 0.0
        %2245 = vmatpush1.msra.mxu0 0.0
        %2246 = vmatprep.subr.mxu0 0.0
        %2247 = vmatpush1.msra.mxu0 0.0
        %2248 = vmatprep.subr.mxu0 0.0
        %2249 = vmatpush1.msra.mxu0 0.0
        %2250 = vmatprep.subr.mxu0 0.0
        %2251 = vmatpush1.msra.mxu0 0.0
        %2252 = vmatprep.subr.mxu0 0.0
        %2253 = vmatpush1.msra.mxu0 0.0
        %2254 = vmatprep.subr.mxu0 0.0
        %2255 = vmatpush1.msra.mxu0 0.0
        %2256 = vmatprep.subr.mxu0 0.0
        %2257 = vmatpush1.msra.mxu0 0.0
        %2258 = vmatprep.subr.mxu0 0.0
        %2259 = vmatpush1.msra.mxu0 0.0
        %2260 = vmatprep.subr.mxu0 0.0
        %2261 = vmatpush1.msra.mxu0 0.0
        %2262 = vmatprep.subr.mxu0 0.0
        %2263 = vmatpush1.msra.mxu0 0.0
        %2264 = vmatprep.subr.mxu0 0.0
        %2265 = vmatpush1.msra.mxu0 0.0
        %2266 = vmatprep.subr.mxu0 0.0
        %2267 = vmatpush1.msra.mxu0 0.0
        %2268 = vmatprep.subr.mxu0 0.0
        %2269 = vmatpush1.msra.mxu0 0.0
        %2270 = vmatprep.subr.mxu0 0.0
        %2271 = vmatpush1.msra.mxu0 0.0
        %2272 = vmatprep.subr.mxu0 0.0
        %2273 = vmatpush1.msra.mxu0 0.0
        %2274 = vmatprep.subr.mxu0 0.0
        %2275 = vmatpush1.msra.mxu0 0.0
        %2276 = vmatprep.subr.mxu0 0.0
        %2277 = vmatpush1.msra.mxu0 0.0
        %2278 = vmatprep.subr.mxu0 0.0
        %2279 = vmatpush1.msra.mxu0 0.0
        %2280 = vmatprep.subr.mxu0 0.0
        %2281 = vmatpush1.msra.mxu0 0.0
        %2282 = vmatprep.subr.mxu0 0.0
        %2283 = vmatpush1.msra.mxu0 0.0
        %2284 = vmatprep.subr.mxu0 0.0
        %2285 = vmatpush1.msra.mxu0 0.0
        %2286 = vmatprep.subr.mxu0 0.0
        %2287 = vmatpush1.msra.mxu0 0.0
        %2288 = vmatprep.subr.mxu0 0.0
        %2289 = vmatpush1.msra.mxu0 0.0
        %2290 = vmatprep.subr.mxu0 0.0
        %2291 = vmatpush1.msra.mxu0 0.0
        %2292 = vmatprep.subr.mxu0 0.0
        %2293 = vmatpush1.msra.mxu0 0.0
        %2294 = vmatprep.subr.mxu0 0.0
        %2295 = vmatpush1.msra.mxu0 0.0
        %2296 = vmatprep.subr.mxu0 0.0
        %2297 = vmatpush1.msra.mxu0 0.0
        %2298 = vmatprep.subr.mxu0 0.0
        %2299 = vmatpush1.msra.mxu0 0.0
        %2300 = vmatprep.subr.mxu0 0.0
        %2301 = vmatpush1.msra.mxu0 0.0
        %2302 = vmatprep.subr.mxu0 0.0
        %2303 = vmatpush1.msra.mxu0 0.0
        %2304 = vmatprep.mubr.f32.mxu0 0.0
        %2305 = vmatmul.mubr.f32.gmra.mrb[0].mxu0 %v2236
        %v2306 = vpop.f32.mrb[0].mxu0
        %v2307 = vadd.f32 0.0, %v2306
        %v2308 = vpop.f32.mrb[0].mxu0
        %2309 = vdwg.mxu0
        %v2310 = vadd.f32 %v2231, %v2307
        %v2311 = vld [vmem:[%s677] sm:$0xff]
        %2312 = vrot.lane.b32.xlu0 %v2155, 126
        %v2313 = vpop.permute.xlu0 %2312
        %v2315 = vsel %vm273, %v2311, 0
        %v2317 = vsel %vm277, %v2313, 0
        %2319 = vmatprep.subr.mxu0 0.0
        %2320 = vmatpush1.msra.mxu0 %v2317
        %2321 = vmatprep.subr.mxu0 0.0
        %2322 = vmatpush1.msra.mxu0 0.0
        %2323 = vmatprep.subr.mxu0 0.0
        %2324 = vmatpush1.msra.mxu0 0.0
        %2325 = vmatprep.subr.mxu0 0.0
        %2326 = vmatpush1.msra.mxu0 0.0
        %2327 = vmatprep.subr.mxu0 0.0
        %2328 = vmatpush1.msra.mxu0 0.0
        %2329 = vmatprep.subr.mxu0 0.0
        %2330 = vmatpush1.msra.mxu0 0.0
        %2331 = vmatprep.subr.mxu0 0.0
        %2332 = vmatpush1.msra.mxu0 0.0
        %2333 = vmatprep.subr.mxu0 0.0
        %2334 = vmatpush1.msra.mxu0 0.0
        %2335 = vmatprep.subr.mxu0 0.0
        %2336 = vmatpush1.msra.mxu0 0.0
        %2337 = vmatprep.subr.mxu0 0.0
        %2338 = vmatpush1.msra.mxu0 0.0
        %2339 = vmatprep.subr.mxu0 0.0
        %2340 = vmatpush1.msra.mxu0 0.0
        %2341 = vmatprep.subr.mxu0 0.0
        %2342 = vmatpush1.msra.mxu0 0.0
        %2343 = vmatprep.subr.mxu0 0.0
        %2344 = vmatpush1.msra.mxu0 0.0
        %2345 = vmatprep.subr.mxu0 0.0
        %2346 = vmatpush1.msra.mxu0 0.0
        %2347 = vmatprep.subr.mxu0 0.0
        %2348 = vmatpush1.msra.mxu0 0.0
        %2349 = vmatprep.subr.mxu0 0.0
        %2350 = vmatpush1.msra.mxu0 0.0
        %2351 = vmatprep.subr.mxu0 0.0
        %2352 = vmatpush1.msra.mxu0 0.0
        %2353 = vmatprep.subr.mxu0 0.0
        %2354 = vmatpush1.msra.mxu0 0.0
        %2355 = vmatprep.subr.mxu0 0.0
        %2356 = vmatpush1.msra.mxu0 0.0
        %2357 = vmatprep.subr.mxu0 0.0
        %2358 = vmatpush1.msra.mxu0 0.0
        %2359 = vmatprep.subr.mxu0 0.0
        %2360 = vmatpush1.msra.mxu0 0.0
        %2361 = vmatprep.subr.mxu0 0.0
        %2362 = vmatpush1.msra.mxu0 0.0
        %2363 = vmatprep.subr.mxu0 0.0
        %2364 = vmatpush1.msra.mxu0 0.0
        %2365 = vmatprep.subr.mxu0 0.0
        %2366 = vmatpush1.msra.mxu0 0.0
        %2367 = vmatprep.subr.mxu0 0.0
        %2368 = vmatpush1.msra.mxu0 0.0
        %2369 = vmatprep.subr.mxu0 0.0
        %2370 = vmatpush1.msra.mxu0 0.0
        %2371 = vmatprep.subr.mxu0 0.0
        %2372 = vmatpush1.msra.mxu0 0.0
        %2373 = vmatprep.subr.mxu0 0.0
        %2374 = vmatpush1.msra.mxu0 0.0
        %2375 = vmatprep.subr.mxu0 0.0
        %2376 = vmatpush1.msra.mxu0 0.0
        %2377 = vmatprep.subr.mxu0 0.0
        %2378 = vmatpush1.msra.mxu0 0.0
        %2379 = vmatprep.subr.mxu0 0.0
        %2380 = vmatpush1.msra.mxu0 0.0
        %2381 = vmatprep.subr.mxu0 0.0
        %2382 = vmatpush1.msra.mxu0 0.0
        %2383 = vmatprep.mubr.f32.mxu0 0.0
        %2384 = vmatmul.mubr.f32.gmra.mrb[0].mxu0 %v2315
        %v2385 = vpop.f32.mrb[0].mxu0
        %v2386 = vadd.f32 0.0, %v2385
        %v2387 = vpop.f32.mrb[0].mxu0
        %2388 = vdwg.mxu0
        %v2389 = vadd.f32 %v2310, %v2386
        %v2390 = vld [vmem:[%s229 + $0x4] sm:$0x1]
        %v2391 = vld [vmem:[%s229 + $0x14] sm:$0x1]
        %v2392 = vld [vmem:[%s229 + $0x24] sm:$0x1]
        %v2393 = vld [vmem:[%s229 + $0x34] sm:$0x1]
        %v2394 = vld [vmem:[%s761] sm:$0xff]
        %v2399 = vrot.slane %v2391, 7
        %v2400 = vsel %vm263, %v2399, %v2390
        %v2401 = vrot.slane %v2392, 6
        %v2402 = vsel %vm266, %v2401, %v2400
        %v2403 = vrot.slane %v2393, 5
        %v2404 = vsel %vm269, %v2403, %v2402
        %v2406 = vsel %vm273, %v2394, 0
        %v2408 = vsel %vm277, %v2404, 0
        %2410 = vmatprep.subr.mxu0 0.0
        %2411 = vmatpush1.msra.mxu0 %v2408
        %2412 = vmatprep.subr.mxu0 0.0
        %2413 = vmatpush1.msra.mxu0 0.0
        %2414 = vmatprep.subr.mxu0 0.0
        %2415 = vmatpush1.msra.mxu0 0.0
        %2416 = vmatprep.subr.mxu0 0.0
        %2417 = vmatpush1.msra.mxu0 0.0
        %2418 = vmatprep.subr.mxu0 0.0
        %2419 = vmatpush1.msra.mxu0 0.0
        %2420 = vmatprep.subr.mxu0 0.0
        %2421 = vmatpush1.msra.mxu0 0.0
        %2422 = vmatprep.subr.mxu0 0.0
        %2423 = vmatpush1.msra.mxu0 0.0
        %2424 = vmatprep.subr.mxu0 0.0
        %2425 = vmatpush1.msra.mxu0 0.0
        %2426 = vmatprep.subr.mxu0 0.0
        %2427 = vmatpush1.msra.mxu0 0.0
        %2428 = vmatprep.subr.mxu0 0.0
        %2429 = vmatpush1.msra.mxu0 0.0
        %2430 = vmatprep.subr.mxu0 0.0
        %2431 = vmatpush1.msra.mxu0 0.0
        %2432 = vmatprep.subr.mxu0 0.0
        %2433 = vmatpush1.msra.mxu0 0.0
        %2434 = vmatprep.subr.mxu0 0.0
        %2435 = vmatpush1.msra.mxu0 0.0
        %2436 = vmatprep.subr.mxu0 0.0
        %2437 = vmatpush1.msra.mxu0 0.0
        %2438 = vmatprep.subr.mxu0 0.0
        %2439 = vmatpush1.msra.mxu0 0.0
        %2440 = vmatprep.subr.mxu0 0.0
        %2441 = vmatpush1.msra.mxu0 0.0
        %2442 = vmatprep.subr.mxu0 0.0
        %2443 = vmatpush1.msra.mxu0 0.0
        %2444 = vmatprep.subr.mxu0 0.0
        %2445 = vmatpush1.msra.mxu0 0.0
        %2446 = vmatprep.subr.mxu0 0.0
        %2447 = vmatpush1.msra.mxu0 0.0
        %2448 = vmatprep.subr.mxu0 0.0
        %2449 = vmatpush1.msra.mxu0 0.0
        %2450 = vmatprep.subr.mxu0 0.0
        %2451 = vmatpush1.msra.mxu0 0.0
        %2452 = vmatprep.subr.mxu0 0.0
        %2453 = vmatpush1.msra.mxu0 0.0
        %2454 = vmatprep.subr.mxu0 0.0
        %2455 = vmatpush1.msra.mxu0 0.0
        %2456 = vmatprep.subr.mxu0 0.0
        %2457 = vmatpush1.msra.mxu0 0.0
        %2458 = vmatprep.subr.mxu0 0.0
        %2459 = vmatpush1.msra.mxu0 0.0
        %2460 = vmatprep.subr.mxu0 0.0
        %2461 = vmatpush1.msra.mxu0 0.0
        %2462 = vmatprep.subr.mxu0 0.0
        %2463 = vmatpush1.msra.mxu0 0.0
        %2464 = vmatprep.subr.mxu0 0.0
        %2465 = vmatpush1.msra.mxu0 0.0
        %2466 = vmatprep.subr.mxu0 0.0
        %2467 = vmatpush1.msra.mxu0 0.0
        %2468 = vmatprep.subr.mxu0 0.0
        %2469 = vmatpush1.msra.mxu0 0.0
        %2470 = vmatprep.subr.mxu0 0.0
        %2471 = vmatpush1.msra.mxu0 0.0
        %2472 = vmatprep.subr.mxu0 0.0
        %2473 = vmatpush1.msra.mxu0 0.0
        %2474 = vmatprep.mubr.f32.mxu0 0.0
        %2475 = vmatmul.mubr.f32.gmra.mrb[0].mxu0 %v2406
        %v2476 = vpop.f32.mrb[0].mxu0
        %v2477 = vadd.f32 0.0, %v2476
        %v2478 = vpop.f32.mrb[0].mxu0
        %2479 = vdwg.mxu0
        %v2480 = vadd.f32 %v2389, %v2477
        %v2481 = vld [vmem:[%s849] sm:$0xff]
        %2482 = vrot.lane.b32.xlu0 %v2404, 127
        %v2483 = vpop.permute.xlu0 %2482
        %v2485 = vsel %vm273, %v2481, 0
        %v2487 = vsel %vm277, %v2483, 0
        %2489 = vmatprep.subr.mxu0 0.0
        %2490 = vmatpush1.msra.mxu0 %v2487
        %2491 = vmatprep.subr.mxu0 0.0
        %2492 = vmatpush1.msra.mxu0 0.0
        %2493 = vmatprep.subr.mxu0 0.0
        %2494 = vmatpush1.msra.mxu0 0.0
        %2495 = vmatprep.subr.mxu0 0.0
        %2496 = vmatpush1.msra.mxu0 0.0
        %2497 = vmatprep.subr.mxu0 0.0
        %2498 = vmatpush1.msra.mxu0 0.0
        %2499 = vmatprep.subr.mxu0 0.0
        %2500 = vmatpush1.msra.mxu0 0.0
        %2501 = vmatprep.subr.mxu0 0.0
        %2502 = vmatpush1.msra.mxu0 0.0
        %2503 = vmatprep.subr.mxu0 0.0
        %2504 = vmatpush1.msra.mxu0 0.0
        %2505 = vmatprep.subr.mxu0 0.0
        %2506 = vmatpush1.msra.mxu0 0.0
        %2507 = vmatprep.subr.mxu0 0.0
        %2508 = vmatpush1.msra.mxu0 0.0
        %2509 = vmatprep.subr.mxu0 0.0
        %2510 = vmatpush1.msra.mxu0 0.0
        %2511 = vmatprep.subr.mxu0 0.0
        %2512 = vmatpush1.msra.mxu0 0.0
        %2513 = vmatprep.subr.mxu0 0.0
        %2514 = vmatpush1.msra.mxu0 0.0
        %2515 = vmatprep.subr.mxu0 0.0
        %2516 = vmatpush1.msra.mxu0 0.0
        %2517 = vmatprep.subr.mxu0 0.0
        %2518 = vmatpush1.msra.mxu0 0.0
        %2519 = vmatprep.subr.mxu0 0.0
        %2520 = vmatpush1.msra.mxu0 0.0
        %2521 = vmatprep.subr.mxu0 0.0
        %2522 = vmatpush1.msra.mxu0 0.0
        %2523 = vmatprep.subr.mxu0 0.0
        %2524 = vmatpush1.msra.mxu0 0.0
        %2525 = vmatprep.subr.mxu0 0.0
        %2526 = vmatpush1.msra.mxu0 0.0
        %2527 = vmatprep.subr.mxu0 0.0
        %2528 = vmatpush1.msra.mxu0 0.0
        %2529 = vmatprep.subr.mxu0 0.0
        %2530 = vmatpush1.msra.mxu0 0.0
        %2531 = vmatprep.subr.mxu0 0.0
        %2532 = vmatpush1.msra.mxu0 0.0
        %2533 = vmatprep.subr.mxu0 0.0
        %2534 = vmatpush1.msra.mxu0 0.0
        %2535 = vmatprep.subr.mxu0 0.0
        %2536 = vmatpush1.msra.mxu0 0.0
        %2537 = vmatprep.subr.mxu0 0.0
        %2538 = vmatpush1.msra.mxu0 0.0
        %2539 = vmatprep.subr.mxu0 0.0
        %2540 = vmatpush1.msra.mxu0 0.0
        %2541 = vmatprep.subr.mxu0 0.0
        %2542 = vmatpush1.msra.mxu0 0.0
        %2543 = vmatprep.subr.mxu0 0.0
        %2544 = vmatpush1.msra.mxu0 0.0
        %2545 = vmatprep.subr.mxu0 0.0
        %2546 = vmatpush1.msra.mxu0 0.0
        %2547 = vmatprep.subr.mxu0 0.0
        %2548 = vmatpush1.msra.mxu0 0.0
        %2549 = vmatprep.subr.mxu0 0.0
        %2550 = vmatpush1.msra.mxu0 0.0
        %2551 = vmatprep.subr.mxu0 0.0
        %2552 = vmatpush1.msra.mxu0 0.0
        %2553 = vmatprep.mubr.f32.mxu0 0.0
        %2554 = vmatmul.mubr.f32.gmra.mrb[0].mxu0 %v2485
        %v2555 = vpop.f32.mrb[0].mxu0
        %v2556 = vadd.f32 0.0, %v2555
        %v2557 = vpop.f32.mrb[0].mxu0
        %2558 = vdwg.mxu0
        %v2559 = vadd.f32 %v2480, %v2556
        %v2560 = vld [vmem:[%s929] sm:$0xff]
        %2561 = vrot.lane.b32.xlu0 %v2404, 126
        %v2562 = vpop.permute.xlu0 %2561
        %v2564 = vsel %vm273, %v2560, 0
        %v2566 = vsel %vm277, %v2562, 0
        %2568 = vmatprep.subr.mxu0 0.0
        %2569 = vmatpush1.msra.mxu0 %v2566
        %2570 = vmatprep.subr.mxu0 0.0
        %2571 = vmatpush1.msra.mxu0 0.0
        %2572 = vmatprep.subr.mxu0 0.0
        %2573 = vmatpush1.msra.mxu0 0.0
        %2574 = vmatprep.subr.mxu0 0.0
        %2575 = vmatpush1.msra.mxu0 0.0
        %2576 = vmatprep.subr.mxu0 0.0
        %2577 = vmatpush1.msra.mxu0 0.0
        %2578 = vmatprep.subr.mxu0 0.0
        %2579 = vmatpush1.msra.mxu0 0.0
        %2580 = vmatprep.subr.mxu0 0.0
        %2581 = vmatpush1.msra.mxu0 0.0
        %2582 = vmatprep.subr.mxu0 0.0
        %2583 = vmatpush1.msra.mxu0 0.0
        %2584 = vmatprep.subr.mxu0 0.0
        %2585 = vmatpush1.msra.mxu0 0.0
        %2586 = vmatprep.subr.mxu0 0.0
        %2587 = vmatpush1.msra.mxu0 0.0
        %2588 = vmatprep.subr.mxu0 0.0
        %2589 = vmatpush1.msra.mxu0 0.0
        %2590 = vmatprep.subr.mxu0 0.0
        %2591 = vmatpush1.msra.mxu0 0.0
        %2592 = vmatprep.subr.mxu0 0.0
        %2593 = vmatpush1.msra.mxu0 0.0
        %2594 = vmatprep.subr.mxu0 0.0
        %2595 = vmatpush1.msra.mxu0 0.0
        %2596 = vmatprep.subr.mxu0 0.0
        %2597 = vmatpush1.msra.mxu0 0.0
        %2598 = vmatprep.subr.mxu0 0.0
        %2599 = vmatpush1.msra.mxu0 0.0
        %2600 = vmatprep.subr.mxu0 0.0
        %2601 = vmatpush1.msra.mxu0 0.0
        %2602 = vmatprep.subr.mxu0 0.0
        %2603 = vmatpush1.msra.mxu0 0.0
        %2604 = vmatprep.subr.mxu0 0.0
        %2605 = vmatpush1.msra.mxu0 0.0
        %2606 = vmatprep.subr.mxu0 0.0
        %2607 = vmatpush1.msra.mxu0 0.0
        %2608 = vmatprep.subr.mxu0 0.0
        %2609 = vmatpush1.msra.mxu0 0.0
        %2610 = vmatprep.subr.mxu0 0.0
        %2611 = vmatpush1.msra.mxu0 0.0
        %2612 = vmatprep.subr.mxu0 0.0
        %2613 = vmatpush1.msra.mxu0 0.0
        %2614 = vmatprep.subr.mxu0 0.0
        %2615 = vmatpush1.msra.mxu0 0.0
        %2616 = vmatprep.subr.mxu0 0.0
        %2617 = vmatpush1.msra.mxu0 0.0
        %2618 = vmatprep.subr.mxu0 0.0
        %2619 = vmatpush1.msra.mxu0 0.0
        %2620 = vmatprep.subr.mxu0 0.0
        %2621 = vmatpush1.msra.mxu0 0.0
        %2622 = vmatprep.subr.mxu0 0.0
        %2623 = vmatpush1.msra.mxu0 0.0
        %2624 = vmatprep.subr.mxu0 0.0
        %2625 = vmatpush1.msra.mxu0 0.0
        %2626 = vmatprep.subr.mxu0 0.0
        %2627 = vmatpush1.msra.mxu0 0.0
        %2628 = vmatprep.subr.mxu0 0.0
        %2629 = vmatpush1.msra.mxu0 0.0
        %2630 = vmatprep.subr.mxu0 0.0
        %2631 = vmatpush1.msra.mxu0 0.0
        %2632 = vmatprep.mubr.f32.mxu0 0.0
        %2633 = vmatmul.mubr.f32.gmra.mrb[0].mxu0 %v2564
        %v2634 = vpop.f32.mrb[0].mxu0
        %v2635 = vadd.f32 0.0, %v2634
        %v2636 = vpop.f32.mrb[0].mxu0
        %2637 = vdwg.mxu0
        %v2638 = vadd.f32 %v2559, %v2635
        %v2639 = vadd.f32 %v2638, %v1012
        %v2641 = vcombine.high %v2639, %v2639
        %v2643 = vunpack.c.l.s4 1966171168
        %v2644 = vunpack.c.0.s8 %v2643
        %v2645 = vlaneseq
        %v2646 = vshrl.u32 %v2645, 7
        %v2647 = vsub.s32 %v2644, %v2646
        %v2648 = vrot.slane %v2639, %v2647
        %v2650 = vunpack.c.l.s4 1966171168
        %v2651 = vunpack.c.0.s8 %v2650
        %v2652 = vlaneseq
        %v2653 = vshrl.u32 %v2652, 7
        %v2654 = vsub.s32 %v2651, %v2653
        %v2655 = vrot.slane %v2641, %v2654
        %v2656 = vcombine.high %v2648, %v2648
        %v2657 = vcombine.high %v2655, %v2655
        %v2659 = vunpack.c.l.s4 1966171168
        %v2660 = vunpack.c.0.s8 %v2659
        %v2661 = vlaneseq
        %v2662 = vshrl.u32 %v2661, 7
        %v2663 = vsub.s32 %v2660, %v2662
        %v2664 = vrot.slane %v2648, %v2663
        %v2666 = vunpack.c.l.s4 1966171168
        %v2667 = vunpack.c.0.s8 %v2666
        %v2668 = vlaneseq
        %v2669 = vshrl.u32 %v2668, 7
        %v2670 = vsub.s32 %v2667, %v2669
        %v2671 = vrot.slane %v2655, %v2670
        %v2673 = vunpack.c.l.s4 1966171168
        %v2674 = vunpack.c.0.s8 %v2673
        %v2675 = vlaneseq
        %v2676 = vshrl.u32 %v2675, 7
        %v2677 = vsub.s32 %v2674, %v2676
        %v2678 = vrot.slane %v2656, %v2677
        %v2680 = vunpack.c.l.s4 1966171168
        %v2681 = vunpack.c.0.s8 %v2680
        %v2682 = vlaneseq
        %v2683 = vshrl.u32 %v2682, 7
        %v2684 = vsub.s32 %v2681, %v2683
        %v2685 = vrot.slane %v2657, %v2684
        %v2686 = vcombine.high %v2664, %v2664
        %v2687 = vcombine.high %v2671, %v2671
        %v2688 = vcombine.high %v2678, %v2678
        %v2689 = vcombine.high %v2685, %v2685
        %2698 = vst.msk [vmem:[%s249 + $0x2] sm:$0x1] %vm1073, %v2664
        %2699 = vst.msk [vmem:[%s249 + $0xa] sm:$0x1] %vm1073, %v2678
        %2700 = vst.msk [vmem:[%s249 + $0x12] sm:$0x1] %vm1073, %v2686
        %2701 = vst.msk [vmem:[%s249 + $0x1a] sm:$0x1] %vm1073, %v2688
        %2702 = vst.msk [vmem:[%s249 + $0x22] sm:$0x1] %vm1073, %v2671
        %2703 = vst.msk [vmem:[%s249 + $0x2a] sm:$0x1] %vm1073, %v2685
        %2704 = vst.msk [vmem:[%s249 + $0x32] sm:$0x1] %vm1073, %v2687
        %2705 = vst.msk [vmem:[%s249 + $0x3a] sm:$0x1] %vm1073, %v2689
        %v2706 = vld [vmem:[%s229 + $0x3] sm:$0x1]
        %v2707 = vld [vmem:[%s229 + $0x13] sm:$0x1]
        %v2708 = vld [vmem:[%s229 + $0x23] sm:$0x1]
        %v2709 = vld [vmem:[%s229 + $0x33] sm:$0x1]
        %v2710 = vld [vmem:[%s1] sm:$0xff]
        %v2711 = vld [vmem:[%s256] sm:$0xff]
        %v2716 = vrot.slane %v2707, 7
        %v2717 = vsel %vm263, %v2716, %v2706
        %v2718 = vrot.slane %v2708, 6
        %v2719 = vsel %vm266, %v2718, %v2717
        %v2720 = vrot.slane %v2709, 5
        %v2721 = vsel %vm269, %v2720, %v2719
        %2722 = vrot.lane.b32.xlu0 %v2721, 127
        %v2723 = vpop.permute.xlu0 %2722
        %v2725 = vsel %vm273, %v2711, 0
        %v2727 = vsel %vm277, %v2723, 0
        %2729 = vmatprep.subr.mxu0 0.0
        %2730 = vmatpush1.msra.mxu0 %v2727
        %2731 = vmatprep.subr.mxu0 0.0
        %2732 = vmatpush1.msra.mxu0 0.0
        %2733 = vmatprep.subr.mxu0 0.0
        %2734 = vmatpush1.msra.mxu0 0.0
        %2735 = vmatprep.subr.mxu0 0.0
        %2736 = vmatpush1.msra.mxu0 0.0
        %2737 = vmatprep.subr.mxu0 0.0
        %2738 = vmatpush1.msra.mxu0 0.0
        %2739 = vmatprep.subr.mxu0 0.0
        %2740 = vmatpush1.msra.mxu0 0.0
        %2741 = vmatprep.subr.mxu0 0.0
        %2742 = vmatpush1.msra.mxu0 0.0
        %2743 = vmatprep.subr.mxu0 0.0
        %2744 = vmatpush1.msra.mxu0 0.0
        %2745 = vmatprep.subr.mxu0 0.0
        %2746 = vmatpush1.msra.mxu0 0.0
        %2747 = vmatprep.subr.mxu0 0.0
        %2748 = vmatpush1.msra.mxu0 0.0
        %2749 = vmatprep.subr.mxu0 0.0
        %2750 = vmatpush1.msra.mxu0 0.0
        %2751 = vmatprep.subr.mxu0 0.0
        %2752 = vmatpush1.msra.mxu0 0.0
        %2753 = vmatprep.subr.mxu0 0.0
        %2754 = vmatpush1.msra.mxu0 0.0
        %2755 = vmatprep.subr.mxu0 0.0
        %2756 = vmatpush1.msra.mxu0 0.0
        %2757 = vmatprep.subr.mxu0 0.0
        %2758 = vmatpush1.msra.mxu0 0.0
        %2759 = vmatprep.subr.mxu0 0.0
        %2760 = vmatpush1.msra.mxu0 0.0
        %2761 = vmatprep.subr.mxu0 0.0
        %2762 = vmatpush1.msra.mxu0 0.0
        %2763 = vmatprep.subr.mxu0 0.0
        %2764 = vmatpush1.msra.mxu0 0.0
        %2765 = vmatprep.subr.mxu0 0.0
        %2766 = vmatpush1.msra.mxu0 0.0
        %2767 = vmatprep.subr.mxu0 0.0
        %2768 = vmatpush1.msra.mxu0 0.0
        %2769 = vmatprep.subr.mxu0 0.0
        %2770 = vmatpush1.msra.mxu0 0.0
        %2771 = vmatprep.subr.mxu0 0.0
        %2772 = vmatpush1.msra.mxu0 0.0
        %2773 = vmatprep.subr.mxu0 0.0
        %2774 = vmatpush1.msra.mxu0 0.0
        %2775 = vmatprep.subr.mxu0 0.0
        %2776 = vmatpush1.msra.mxu0 0.0
        %2777 = vmatprep.subr.mxu0 0.0
        %2778 = vmatpush1.msra.mxu0 0.0
        %2779 = vmatprep.subr.mxu0 0.0
        %2780 = vmatpush1.msra.mxu0 0.0
        %2781 = vmatprep.subr.mxu0 0.0
        %2782 = vmatpush1.msra.mxu0 0.0
        %2783 = vmatprep.subr.mxu0 0.0
        %2784 = vmatpush1.msra.mxu0 0.0
        %2785 = vmatprep.subr.mxu0 0.0
        %2786 = vmatpush1.msra.mxu0 0.0
        %2787 = vmatprep.subr.mxu0 0.0
        %2788 = vmatpush1.msra.mxu0 0.0
        %2789 = vmatprep.subr.mxu0 0.0
        %2790 = vmatpush1.msra.mxu0 0.0
        %2791 = vmatprep.subr.mxu0 0.0
        %2792 = vmatpush1.msra.mxu0 0.0
        %2793 = vmatprep.mubr.f32.mxu0 0.0
        %2794 = vmatmul.mubr.f32.gmra.mrb[0].mxu0 %v2725
        %v2795 = vpop.f32.mrb[0].mxu0
        %v2796 = vadd.f32 0.0, %v2795
        %v2797 = vpop.f32.mrb[0].mxu0
        %2798 = vdwg.mxu0
        %v2800 = vsel %vm273, %v2710, 0
        %v2802 = vsel %vm277, %v2721, 0
        %2804 = vmatprep.subr.mxu0 0.0
        %2805 = vmatpush1.msra.mxu0 %v2802
        %2806 = vmatprep.subr.mxu0 0.0
        %2807 = vmatpush1.msra.mxu0 0.0
        %2808 = vmatprep.subr.mxu0 0.0
        %2809 = vmatpush1.msra.mxu0 0.0
        %2810 = vmatprep.subr.mxu0 0.0
        %2811 = vmatpush1.msra.mxu0 0.0
        %2812 = vmatprep.subr.mxu0 0.0
        %2813 = vmatpush1.msra.mxu0 0.0
        %2814 = vmatprep.subr.mxu0 0.0
        %2815 = vmatpush1.msra.mxu0 0.0
        %2816 = vmatprep.subr.mxu0 0.0
        %2817 = vmatpush1.msra.mxu0 0.0
        %2818 = vmatprep.subr.mxu0 0.0
        %2819 = vmatpush1.msra.mxu0 0.0
        %2820 = vmatprep.subr.mxu0 0.0
        %2821 = vmatpush1.msra.mxu0 0.0
        %2822 = vmatprep.subr.mxu0 0.0
        %2823 = vmatpush1.msra.mxu0 0.0
        %2824 = vmatprep.subr.mxu0 0.0
        %2825 = vmatpush1.msra.mxu0 0.0
        %2826 = vmatprep.subr.mxu0 0.0
        %2827 = vmatpush1.msra.mxu0 0.0
        %2828 = vmatprep.subr.mxu0 0.0
        %2829 = vmatpush1.msra.mxu0 0.0
        %2830 = vmatprep.subr.mxu0 0.0
        %2831 = vmatpush1.msra.mxu0 0.0
        %2832 = vmatprep.subr.mxu0 0.0
        %2833 = vmatpush1.msra.mxu0 0.0
        %2834 = vmatprep.subr.mxu0 0.0
        %2835 = vmatpush1.msra.mxu0 0.0
        %2836 = vmatprep.subr.mxu0 0.0
        %2837 = vmatpush1.msra.mxu0 0.0
        %2838 = vmatprep.subr.mxu0 0.0
        %2839 = vmatpush1.msra.mxu0 0.0
        %2840 = vmatprep.subr.mxu0 0.0
        %2841 = vmatpush1.msra.mxu0 0.0
        %2842 = vmatprep.subr.mxu0 0.0
        %2843 = vmatpush1.msra.mxu0 0.0
        %2844 = vmatprep.subr.mxu0 0.0
        %2845 = vmatpush1.msra.mxu0 0.0
        %2846 = vmatprep.subr.mxu0 0.0
        %2847 = vmatpush1.msra.mxu0 0.0
        %2848 = vmatprep.subr.mxu0 0.0
        %2849 = vmatpush1.msra.mxu0 0.0
        %2850 = vmatprep.subr.mxu0 0.0
        %2851 = vmatpush1.msra.mxu0 0.0
        %2852 = vmatprep.subr.mxu0 0.0
        %2853 = vmatpush1.msra.mxu0 0.0
        %2854 = vmatprep.subr.mxu0 0.0
        %2855 = vmatpush1.msra.mxu0 0.0
        %2856 = vmatprep.subr.mxu0 0.0
        %2857 = vmatpush1.msra.mxu0 0.0
        %2858 = vmatprep.subr.mxu0 0.0
        %2859 = vmatpush1.msra.mxu0 0.0
        %2860 = vmatprep.subr.mxu0 0.0
        %2861 = vmatpush1.msra.mxu0 0.0
        %2862 = vmatprep.subr.mxu0 0.0
        %2863 = vmatpush1.msra.mxu0 0.0
        %2864 = vmatprep.subr.mxu0 0.0
        %2865 = vmatpush1.msra.mxu0 0.0
        %2866 = vmatprep.subr.mxu0 0.0
        %2867 = vmatpush1.msra.mxu0 0.0
        %2868 = vmatprep.mubr.f32.mxu0 0.0
        %2869 = vmatmul.mubr.f32.gmra.mrb[0].mxu0 %v2800
        %v2870 = vpop.f32.mrb[0].mxu0
        %v2871 = vadd.f32 %v2796, %v2870
        %v2872 = vpop.f32.mrb[0].mxu0
        %2873 = vdwg.mxu0
        %v2874 = vld [vmem:[%s425] sm:$0xff]
        %2875 = vrot.lane.b32.xlu0 %v2721, 126
        %v2876 = vpop.permute.xlu0 %2875
        %v2878 = vsel %vm273, %v2874, 0
        %v2880 = vsel %vm277, %v2876, 0
        %2882 = vmatprep.subr.mxu0 0.0
        %2883 = vmatpush1.msra.mxu0 %v2880
        %2884 = vmatprep.subr.mxu0 0.0
        %2885 = vmatpush1.msra.mxu0 0.0
        %2886 = vmatprep.subr.mxu0 0.0
        %2887 = vmatpush1.msra.mxu0 0.0
        %2888 = vmatprep.subr.mxu0 0.0
        %2889 = vmatpush1.msra.mxu0 0.0
        %2890 = vmatprep.subr.mxu0 0.0
        %2891 = vmatpush1.msra.mxu0 0.0
        %2892 = vmatprep.subr.mxu0 0.0
        %2893 = vmatpush1.msra.mxu0 0.0
        %2894 = vmatprep.subr.mxu0 0.0
        %2895 = vmatpush1.msra.mxu0 0.0
        %2896 = vmatprep.subr.mxu0 0.0
        %2897 = vmatpush1.msra.mxu0 0.0
        %2898 = vmatprep.subr.mxu0 0.0
        %2899 = vmatpush1.msra.mxu0 0.0
        %2900 = vmatprep.subr.mxu0 0.0
        %2901 = vmatpush1.msra.mxu0 0.0
        %2902 = vmatprep.subr.mxu0 0.0
        %2903 = vmatpush1.msra.mxu0 0.0
        %2904 = vmatprep.subr.mxu0 0.0
        %2905 = vmatpush1.msra.mxu0 0.0
        %2906 = vmatprep.subr.mxu0 0.0
        %2907 = vmatpush1.msra.mxu0 0.0
        %2908 = vmatprep.subr.mxu0 0.0
        %2909 = vmatpush1.msra.mxu0 0.0
        %2910 = vmatprep.subr.mxu0 0.0
        %2911 = vmatpush1.msra.mxu0 0.0
        %2912 = vmatprep.subr.mxu0 0.0
        %2913 = vmatpush1.msra.mxu0 0.0
        %2914 = vmatprep.subr.mxu0 0.0
        %2915 = vmatpush1.msra.mxu0 0.0
        %2916 = vmatprep.subr.mxu0 0.0
        %2917 = vmatpush1.msra.mxu0 0.0
        %2918 = vmatprep.subr.mxu0 0.0
        %2919 = vmatpush1.msra.mxu0 0.0
        %2920 = vmatprep.subr.mxu0 0.0
        %2921 = vmatpush1.msra.mxu0 0.0
        %2922 = vmatprep.subr.mxu0 0.0
        %2923 = vmatpush1.msra.mxu0 0.0
        %2924 = vmatprep.subr.mxu0 0.0
        %2925 = vmatpush1.msra.mxu0 0.0
        %2926 = vmatprep.subr.mxu0 0.0
        %2927 = vmatpush1.msra.mxu0 0.0
        %2928 = vmatprep.subr.mxu0 0.0
        %2929 = vmatpush1.msra.mxu0 0.0
        %2930 = vmatprep.subr.mxu0 0.0
        %2931 = vmatpush1.msra.mxu0 0.0
        %2932 = vmatprep.subr.mxu0 0.0
        %2933 = vmatpush1.msra.mxu0 0.0
        %2934 = vmatprep.subr.mxu0 0.0
        %2935 = vmatpush1.msra.mxu0 0.0
        %2936 = vmatprep.subr.mxu0 0.0
        %2937 = vmatpush1.msra.mxu0 0.0
        %2938 = vmatprep.subr.mxu0 0.0
        %2939 = vmatpush1.msra.mxu0 0.0
        %2940 = vmatprep.subr.mxu0 0.0
        %2941 = vmatpush1.msra.mxu0 0.0
        %2942 = vmatprep.subr.mxu0 0.0
        %2943 = vmatpush1.msra.mxu0 0.0
        %2944 = vmatprep.subr.mxu0 0.0
        %2945 = vmatpush1.msra.mxu0 0.0
        %2946 = vmatprep.mubr.f32.mxu0 0.0
        %2947 = vmatmul.mubr.f32.gmra.mrb[0].mxu0 %v2878
        %v2948 = vpop.f32.mrb[0].mxu0
        %v2949 = vadd.f32 0.0, %v2948
        %v2950 = vpop.f32.mrb[0].mxu0
        %2951 = vdwg.mxu0
        %v2952 = vadd.f32 %v2871, %v2949
        %v2953 = vld [vmem:[%s229 + $0x4] sm:$0x1]
        %v2954 = vld [vmem:[%s229 + $0x14] sm:$0x1]
        %v2955 = vld [vmem:[%s229 + $0x24] sm:$0x1]
        %v2956 = vld [vmem:[%s229 + $0x34] sm:$0x1]
        %v2957 = vld [vmem:[%s509] sm:$0xff]
        %v2962 = vrot.slane %v2954, 7
        %v2963 = vsel %vm263, %v2962, %v2953
        %v2964 = vrot.slane %v2955, 6
        %v2965 = vsel %vm266, %v2964, %v2963
        %v2966 = vrot.slane %v2956, 5
        %v2967 = vsel %vm269, %v2966, %v2965
        %v2969 = vsel %vm273, %v2957, 0
        %v2971 = vsel %vm277, %v2967, 0
        %2973 = vmatprep.subr.mxu0 0.0
        %2974 = vmatpush1.msra.mxu0 %v2971
        %2975 = vmatprep.subr.mxu0 0.0
        %2976 = vmatpush1.msra.mxu0 0.0
        %2977 = vmatprep.subr.mxu0 0.0
        %2978 = vmatpush1.msra.mxu0 0.0
        %2979 = vmatprep.subr.mxu0 0.0
        %2980 = vmatpush1.msra.mxu0 0.0
        %2981 = vmatprep.subr.mxu0 0.0
        %2982 = vmatpush1.msra.mxu0 0.0
        %2983 = vmatprep.subr.mxu0 0.0
        %2984 = vmatpush1.msra.mxu0 0.0
        %2985 = vmatprep.subr.mxu0 0.0
        %2986 = vmatpush1.msra.mxu0 0.0
        %2987 = vmatprep.subr.mxu0 0.0
        %2988 = vmatpush1.msra.mxu0 0.0
        %2989 = vmatprep.subr.mxu0 0.0
        %2990 = vmatpush1.msra.mxu0 0.0
        %2991 = vmatprep.subr.mxu0 0.0
        %2992 = vmatpush1.msra.mxu0 0.0
        %2993 = vmatprep.subr.mxu0 0.0
        %2994 = vmatpush1.msra.mxu0 0.0
        %2995 = vmatprep.subr.mxu0 0.0
        %2996 = vmatpush1.msra.mxu0 0.0
        %2997 = vmatprep.subr.mxu0 0.0
        %2998 = vmatpush1.msra.mxu0 0.0
        %2999 = vmatprep.subr.mxu0 0.0
        %3000 = vmatpush1.msra.mxu0 0.0
        %3001 = vmatprep.subr.mxu0 0.0
        %3002 = vmatpush1.msra.mxu0 0.0
        %3003 = vmatprep.subr.mxu0 0.0
        %3004 = vmatpush1.msra.mxu0 0.0
        %3005 = vmatprep.subr.mxu0 0.0
        %3006 = vmatpush1.msra.mxu0 0.0
        %3007 = vmatprep.subr.mxu0 0.0
        %3008 = vmatpush1.msra.mxu0 0.0
        %3009 = vmatprep.subr.mxu0 0.0
        %3010 = vmatpush1.msra.mxu0 0.0
        %3011 = vmatprep.subr.mxu0 0.0
        %3012 = vmatpush1.msra.mxu0 0.0
        %3013 = vmatprep.subr.mxu0 0.0
        %3014 = vmatpush1.msra.mxu0 0.0
        %3015 = vmatprep.subr.mxu0 0.0
        %3016 = vmatpush1.msra.mxu0 0.0
        %3017 = vmatprep.subr.mxu0 0.0
        %3018 = vmatpush1.msra.mxu0 0.0
        %3019 = vmatprep.subr.mxu0 0.0
        %3020 = vmatpush1.msra.mxu0 0.0
        %3021 = vmatprep.subr.mxu0 0.0
        %3022 = vmatpush1.msra.mxu0 0.0
        %3023 = vmatprep.subr.mxu0 0.0
        %3024 = vmatpush1.msra.mxu0 0.0
        %3025 = vmatprep.subr.mxu0 0.0
        %3026 = vmatpush1.msra.mxu0 0.0
        %3027 = vmatprep.subr.mxu0 0.0
        %3028 = vmatpush1.msra.mxu0 0.0
        %3029 = vmatprep.subr.mxu0 0.0
        %3030 = vmatpush1.msra.mxu0 0.0
        %3031 = vmatprep.subr.mxu0 0.0
        %3032 = vmatpush1.msra.mxu0 0.0
        %3033 = vmatprep.subr.mxu0 0.0
        %3034 = vmatpush1.msra.mxu0 0.0
        %3035 = vmatprep.subr.mxu0 0.0
        %3036 = vmatpush1.msra.mxu0 0.0
        %3037 = vmatprep.mubr.f32.mxu0 0.0
        %3038 = vmatmul.mubr.f32.gmra.mrb[0].mxu0 %v2969
        %v3039 = vpop.f32.mrb[0].mxu0
        %v3040 = vadd.f32 0.0, %v3039
        %v3041 = vpop.f32.mrb[0].mxu0
        %3042 = vdwg.mxu0
        %v3043 = vadd.f32 %v2952, %v3040
        %v3044 = vld [vmem:[%s597] sm:$0xff]
        %3045 = vrot.lane.b32.xlu0 %v2967, 127
        %v3046 = vpop.permute.xlu0 %3045
        %v3048 = vsel %vm273, %v3044, 0
        %v3050 = vsel %vm277, %v3046, 0
        %3052 = vmatprep.subr.mxu0 0.0
        %3053 = vmatpush1.msra.mxu0 %v3050
        %3054 = vmatprep.subr.mxu0 0.0
        %3055 = vmatpush1.msra.mxu0 0.0
        %3056 = vmatprep.subr.mxu0 0.0
        %3057 = vmatpush1.msra.mxu0 0.0
        %3058 = vmatprep.subr.mxu0 0.0
        %3059 = vmatpush1.msra.mxu0 0.0
        %3060 = vmatprep.subr.mxu0 0.0
        %3061 = vmatpush1.msra.mxu0 0.0
        %3062 = vmatprep.subr.mxu0 0.0
        %3063 = vmatpush1.msra.mxu0 0.0
        %3064 = vmatprep.subr.mxu0 0.0
        %3065 = vmatpush1.msra.mxu0 0.0
        %3066 = vmatprep.subr.mxu0 0.0
        %3067 = vmatpush1.msra.mxu0 0.0
        %3068 = vmatprep.subr.mxu0 0.0
        %3069 = vmatpush1.msra.mxu0 0.0
        %3070 = vmatprep.subr.mxu0 0.0
        %3071 = vmatpush1.msra.mxu0 0.0
        %3072 = vmatprep.subr.mxu0 0.0
        %3073 = vmatpush1.msra.mxu0 0.0
        %3074 = vmatprep.subr.mxu0 0.0
        %3075 = vmatpush1.msra.mxu0 0.0
        %3076 = vmatprep.subr.mxu0 0.0
        %3077 = vmatpush1.msra.mxu0 0.0
        %3078 = vmatprep.subr.mxu0 0.0
        %3079 = vmatpush1.msra.mxu0 0.0
        %3080 = vmatprep.subr.mxu0 0.0
        %3081 = vmatpush1.msra.mxu0 0.0
        %3082 = vmatprep.subr.mxu0 0.0
        %3083 = vmatpush1.msra.mxu0 0.0
        %3084 = vmatprep.subr.mxu0 0.0
        %3085 = vmatpush1.msra.mxu0 0.0
        %3086 = vmatprep.subr.mxu0 0.0
        %3087 = vmatpush1.msra.mxu0 0.0
        %3088 = vmatprep.subr.mxu0 0.0
        %3089 = vmatpush1.msra.mxu0 0.0
        %3090 = vmatprep.subr.mxu0 0.0
        %3091 = vmatpush1.msra.mxu0 0.0
        %3092 = vmatprep.subr.mxu0 0.0
        %3093 = vmatpush1.msra.mxu0 0.0
        %3094 = vmatprep.subr.mxu0 0.0
        %3095 = vmatpush1.msra.mxu0 0.0
        %3096 = vmatprep.subr.mxu0 0.0
        %3097 = vmatpush1.msra.mxu0 0.0
        %3098 = vmatprep.subr.mxu0 0.0
        %3099 = vmatpush1.msra.mxu0 0.0
        %3100 = vmatprep.subr.mxu0 0.0
        %3101 = vmatpush1.msra.mxu0 0.0
        %3102 = vmatprep.subr.mxu0 0.0
        %3103 = vmatpush1.msra.mxu0 0.0
        %3104 = vmatprep.subr.mxu0 0.0
        %3105 = vmatpush1.msra.mxu0 0.0
        %3106 = vmatprep.subr.mxu0 0.0
        %3107 = vmatpush1.msra.mxu0 0.0
        %3108 = vmatprep.subr.mxu0 0.0
        %3109 = vmatpush1.msra.mxu0 0.0
        %3110 = vmatprep.subr.mxu0 0.0
        %3111 = vmatpush1.msra.mxu0 0.0
        %3112 = vmatprep.subr.mxu0 0.0
        %3113 = vmatpush1.msra.mxu0 0.0
        %3114 = vmatprep.subr.mxu0 0.0
        %3115 = vmatpush1.msra.mxu0 0.0
        %3116 = vmatprep.mubr.f32.mxu0 0.0
        %3117 = vmatmul.mubr.f32.gmra.mrb[0].mxu0 %v3048
        %v3118 = vpop.f32.mrb[0].mxu0
        %v3119 = vadd.f32 0.0, %v3118
        %v3120 = vpop.f32.mrb[0].mxu0
        %3121 = vdwg.mxu0
        %v3122 = vadd.f32 %v3043, %v3119
        %v3123 = vld [vmem:[%s677] sm:$0xff]
        %3124 = vrot.lane.b32.xlu0 %v2967, 126
        %v3125 = vpop.permute.xlu0 %3124
        %v3127 = vsel %vm273, %v3123, 0
        %v3129 = vsel %vm277, %v3125, 0
        %3131 = vmatprep.subr.mxu0 0.0
        %3132 = vmatpush1.msra.mxu0 %v3129
        %3133 = vmatprep.subr.mxu0 0.0
        %3134 = vmatpush1.msra.mxu0 0.0
        %3135 = vmatprep.subr.mxu0 0.0
        %3136 = vmatpush1.msra.mxu0 0.0
        %3137 = vmatprep.subr.mxu0 0.0
        %3138 = vmatpush1.msra.mxu0 0.0
        %3139 = vmatprep.subr.mxu0 0.0
        %3140 = vmatpush1.msra.mxu0 0.0
        %3141 = vmatprep.subr.mxu0 0.0
        %3142 = vmatpush1.msra.mxu0 0.0
        %3143 = vmatprep.subr.mxu0 0.0
        %3144 = vmatpush1.msra.mxu0 0.0
        %3145 = vmatprep.subr.mxu0 0.0
        %3146 = vmatpush1.msra.mxu0 0.0
        %3147 = vmatprep.subr.mxu0 0.0
        %3148 = vmatpush1.msra.mxu0 0.0
        %3149 = vmatprep.subr.mxu0 0.0
        %3150 = vmatpush1.msra.mxu0 0.0
        %3151 = vmatprep.subr.mxu0 0.0
        %3152 = vmatpush1.msra.mxu0 0.0
        %3153 = vmatprep.subr.mxu0 0.0
        %3154 = vmatpush1.msra.mxu0 0.0
        %3155 = vmatprep.subr.mxu0 0.0
        %3156 = vmatpush1.msra.mxu0 0.0
        %3157 = vmatprep.subr.mxu0 0.0
        %3158 = vmatpush1.msra.mxu0 0.0
        %3159 = vmatprep.subr.mxu0 0.0
        %3160 = vmatpush1.msra.mxu0 0.0
        %3161 = vmatprep.subr.mxu0 0.0
        %3162 = vmatpush1.msra.mxu0 0.0
        %3163 = vmatprep.subr.mxu0 0.0
        %3164 = vmatpush1.msra.mxu0 0.0
        %3165 = vmatprep.subr.mxu0 0.0
        %3166 = vmatpush1.msra.mxu0 0.0
        %3167 = vmatprep.subr.mxu0 0.0
        %3168 = vmatpush1.msra.mxu0 0.0
        %3169 = vmatprep.subr.mxu0 0.0
        %3170 = vmatpush1.msra.mxu0 0.0
        %3171 = vmatprep.subr.mxu0 0.0
        %3172 = vmatpush1.msra.mxu0 0.0
        %3173 = vmatprep.subr.mxu0 0.0
        %3174 = vmatpush1.msra.mxu0 0.0
        %3175 = vmatprep.subr.mxu0 0.0
        %3176 = vmatpush1.msra.mxu0 0.0
        %3177 = vmatprep.subr.mxu0 0.0
        %3178 = vmatpush1.msra.mxu0 0.0
        %3179 = vmatprep.subr.mxu0 0.0
        %3180 = vmatpush1.msra.mxu0 0.0
        %3181 = vmatprep.subr.mxu0 0.0
        %3182 = vmatpush1.msra.mxu0 0.0
        %3183 = vmatprep.subr.mxu0 0.0
        %3184 = vmatpush1.msra.mxu0 0.0
        %3185 = vmatprep.subr.mxu0 0.0
        %3186 = vmatpush1.msra.mxu0 0.0
        %3187 = vmatprep.subr.mxu0 0.0
        %3188 = vmatpush1.msra.mxu0 0.0
        %3189 = vmatprep.subr.mxu0 0.0
        %3190 = vmatpush1.msra.mxu0 0.0
        %3191 = vmatprep.subr.mxu0 0.0
        %3192 = vmatpush1.msra.mxu0 0.0
        %3193 = vmatprep.subr.mxu0 0.0
        %3194 = vmatpush1.msra.mxu0 0.0
        %3195 = vmatprep.mubr.f32.mxu0 0.0
        %3196 = vmatmul.mubr.f32.gmra.mrb[0].mxu0 %v3127
        %v3197 = vpop.f32.mrb[0].mxu0
        %v3198 = vadd.f32 0.0, %v3197
        %v3199 = vpop.f32.mrb[0].mxu0
        %3200 = vdwg.mxu0
        %v3201 = vadd.f32 %v3122, %v3198
        %v3202 = vld [vmem:[%s229 + $0x5] sm:$0x1]
        %v3203 = vld [vmem:[%s229 + $0x15] sm:$0x1]
        %v3204 = vld [vmem:[%s229 + $0x25] sm:$0x1]
        %v3205 = vld [vmem:[%s229 + $0x35] sm:$0x1]
        %v3206 = vld [vmem:[%s761] sm:$0xff]
        %v3211 = vrot.slane %v3203, 7
        %v3212 = vsel %vm263, %v3211, %v3202
        %v3213 = vrot.slane %v3204, 6
        %v3214 = vsel %vm266, %v3213, %v3212
        %v3215 = vrot.slane %v3205, 5
        %v3216 = vsel %vm269, %v3215, %v3214
        %v3218 = vsel %vm273, %v3206, 0
        %v3220 = vsel %vm277, %v3216, 0
        %3222 = vmatprep.subr.mxu0 0.0
        %3223 = vmatpush1.msra.mxu0 %v3220
        %3224 = vmatprep.subr.mxu0 0.0
        %3225 = vmatpush1.msra.mxu0 0.0
        %3226 = vmatprep.subr.mxu0 0.0
        %3227 = vmatpush1.msra.mxu0 0.0
        %3228 = vmatprep.subr.mxu0 0.0
        %3229 = vmatpush1.msra.mxu0 0.0
        %3230 = vmatprep.subr.mxu0 0.0
        %3231 = vmatpush1.msra.mxu0 0.0
        %3232 = vmatprep.subr.mxu0 0.0
        %3233 = vmatpush1.msra.mxu0 0.0
        %3234 = vmatprep.subr.mxu0 0.0
        %3235 = vmatpush1.msra.mxu0 0.0
        %3236 = vmatprep.subr.mxu0 0.0
        %3237 = vmatpush1.msra.mxu0 0.0
        %3238 = vmatprep.subr.mxu0 0.0
        %3239 = vmatpush1.msra.mxu0 0.0
        %3240 = vmatprep.subr.mxu0 0.0
        %3241 = vmatpush1.msra.mxu0 0.0
        %3242 = vmatprep.subr.mxu0 0.0
        %3243 = vmatpush1.msra.mxu0 0.0
        %3244 = vmatprep.subr.mxu0 0.0
        %3245 = vmatpush1.msra.mxu0 0.0
        %3246 = vmatprep.subr.mxu0 0.0
        %3247 = vmatpush1.msra.mxu0 0.0
        %3248 = vmatprep.subr.mxu0 0.0
        %3249 = vmatpush1.msra.mxu0 0.0
        %3250 = vmatprep.subr.mxu0 0.0
        %3251 = vmatpush1.msra.mxu0 0.0
        %3252 = vmatprep.subr.mxu0 0.0
        %3253 = vmatpush1.msra.mxu0 0.0
        %3254 = vmatprep.subr.mxu0 0.0
        %3255 = vmatpush1.msra.mxu0 0.0
        %3256 = vmatprep.subr.mxu0 0.0
        %3257 = vmatpush1.msra.mxu0 0.0
        %3258 = vmatprep.subr.mxu0 0.0
        %3259 = vmatpush1.msra.mxu0 0.0
        %3260 = vmatprep.subr.mxu0 0.0
        %3261 = vmatpush1.msra.mxu0 0.0
        %3262 = vmatprep.subr.mxu0 0.0
        %3263 = vmatpush1.msra.mxu0 0.0
        %3264 = vmatprep.subr.mxu0 0.0
        %3265 = vmatpush1.msra.mxu0 0.0
        %3266 = vmatprep.subr.mxu0 0.0
        %3267 = vmatpush1.msra.mxu0 0.0
        %3268 = vmatprep.subr.mxu0 0.0
        %3269 = vmatpush1.msra.mxu0 0.0
        %3270 = vmatprep.subr.mxu0 0.0
        %3271 = vmatpush1.msra.mxu0 0.0
        %3272 = vmatprep.subr.mxu0 0.0
        %3273 = vmatpush1.msra.mxu0 0.0
        %3274 = vmatprep.subr.mxu0 0.0
        %3275 = vmatpush1.msra.mxu0 0.0
        %3276 = vmatprep.subr.mxu0 0.0
        %3277 = vmatpush1.msra.mxu0 0.0
        %3278 = vmatprep.subr.mxu0 0.0
        %3279 = vmatpush1.msra.mxu0 0.0
        %3280 = vmatprep.subr.mxu0 0.0
        %3281 = vmatpush1.msra.mxu0 0.0
        %3282 = vmatprep.subr.mxu0 0.0
        %3283 = vmatpush1.msra.mxu0 0.0
        %3284 = vmatprep.subr.mxu0 0.0
        %3285 = vmatpush1.msra.mxu0 0.0
        %3286 = vmatprep.mubr.f32.mxu0 0.0
        %3287 = vmatmul.mubr.f32.gmra.mrb[0].mxu0 %v3218
        %v3288 = vpop.f32.mrb[0].mxu0
        %v3289 = vadd.f32 0.0, %v3288
        %v3290 = vpop.f32.mrb[0].mxu0
        %3291 = vdwg.mxu0
        %v3292 = vadd.f32 %v3201, %v3289
        %v3293 = vld [vmem:[%s849] sm:$0xff]
        %3294 = vrot.lane.b32.xlu0 %v3216, 127
        %v3295 = vpop.permute.xlu0 %3294
        %v3297 = vsel %vm273, %v3293, 0
        %v3299 = vsel %vm277, %v3295, 0
        %3301 = vmatprep.subr.mxu0 0.0
        %3302 = vmatpush1.msra.mxu0 %v3299
        %3303 = vmatprep.subr.mxu0 0.0
        %3304 = vmatpush1.msra.mxu0 0.0
        %3305 = vmatprep.subr.mxu0 0.0
        %3306 = vmatpush1.msra.mxu0 0.0
        %3307 = vmatprep.subr.mxu0 0.0
        %3308 = vmatpush1.msra.mxu0 0.0
        %3309 = vmatprep.subr.mxu0 0.0
        %3310 = vmatpush1.msra.mxu0 0.0
        %3311 = vmatprep.subr.mxu0 0.0
        %3312 = vmatpush1.msra.mxu0 0.0
        %3313 = vmatprep.subr.mxu0 0.0
        %3314 = vmatpush1.msra.mxu0 0.0
        %3315 = vmatprep.subr.mxu0 0.0
        %3316 = vmatpush1.msra.mxu0 0.0
        %3317 = vmatprep.subr.mxu0 0.0
        %3318 = vmatpush1.msra.mxu0 0.0
        %3319 = vmatprep.subr.mxu0 0.0
        %3320 = vmatpush1.msra.mxu0 0.0
        %3321 = vmatprep.subr.mxu0 0.0
        %3322 = vmatpush1.msra.mxu0 0.0
        %3323 = vmatprep.subr.mxu0 0.0
        %3324 = vmatpush1.msra.mxu0 0.0
        %3325 = vmatprep.subr.mxu0 0.0
        %3326 = vmatpush1.msra.mxu0 0.0
        %3327 = vmatprep.subr.mxu0 0.0
        %3328 = vmatpush1.msra.mxu0 0.0
        %3329 = vmatprep.subr.mxu0 0.0
        %3330 = vmatpush1.msra.mxu0 0.0
        %3331 = vmatprep.subr.mxu0 0.0
        %3332 = vmatpush1.msra.mxu0 0.0
        %3333 = vmatprep.subr.mxu0 0.0
        %3334 = vmatpush1.msra.mxu0 0.0
        %3335 = vmatprep.subr.mxu0 0.0
        %3336 = vmatpush1.msra.mxu0 0.0
        %3337 = vmatprep.subr.mxu0 0.0
        %3338 = vmatpush1.msra.mxu0 0.0
        %3339 = vmatprep.subr.mxu0 0.0
        %3340 = vmatpush1.msra.mxu0 0.0
        %3341 = vmatprep.subr.mxu0 0.0
        %3342 = vmatpush1.msra.mxu0 0.0
        %3343 = vmatprep.subr.mxu0 0.0
        %3344 = vmatpush1.msra.mxu0 0.0
        %3345 = vmatprep.subr.mxu0 0.0
        %3346 = vmatpush1.msra.mxu0 0.0
        %3347 = vmatprep.subr.mxu0 0.0
        %3348 = vmatpush1.msra.mxu0 0.0
        %3349 = vmatprep.subr.mxu0 0.0
        %3350 = vmatpush1.msra.mxu0 0.0
        %3351 = vmatprep.subr.mxu0 0.0
        %3352 = vmatpush1.msra.mxu0 0.0
        %3353 = vmatprep.subr.mxu0 0.0
        %3354 = vmatpush1.msra.mxu0 0.0
        %3355 = vmatprep.subr.mxu0 0.0
        %3356 = vmatpush1.msra.mxu0 0.0
        %3357 = vmatprep.subr.mxu0 0.0
        %3358 = vmatpush1.msra.mxu0 0.0
        %3359 = vmatprep.subr.mxu0 0.0
        %3360 = vmatpush1.msra.mxu0 0.0
        %3361 = vmatprep.subr.mxu0 0.0
        %3362 = vmatpush1.msra.mxu0 0.0
        %3363 = vmatprep.subr.mxu0 0.0
        %3364 = vmatpush1.msra.mxu0 0.0
        %3365 = vmatprep.mubr.f32.mxu0 0.0
        %3366 = vmatmul.mubr.f32.gmra.mrb[0].mxu0 %v3297
        %v3367 = vpop.f32.mrb[0].mxu0
        %v3368 = vadd.f32 0.0, %v3367
        %v3369 = vpop.f32.mrb[0].mxu0
        %3370 = vdwg.mxu0
        %v3371 = vadd.f32 %v3292, %v3368
        %v3372 = vld [vmem:[%s929] sm:$0xff]
        %3373 = vrot.lane.b32.xlu0 %v3216, 126
        %v3374 = vpop.permute.xlu0 %3373
        %v3376 = vsel %vm273, %v3372, 0
        %v3378 = vsel %vm277, %v3374, 0
        %3380 = vmatprep.subr.mxu0 0.0
        %3381 = vmatpush1.msra.mxu0 %v3378
        %3382 = vmatprep.subr.mxu0 0.0
        %3383 = vmatpush1.msra.mxu0 0.0
        %3384 = vmatprep.subr.mxu0 0.0
        %3385 = vmatpush1.msra.mxu0 0.0
        %3386 = vmatprep.subr.mxu0 0.0
        %3387 = vmatpush1.msra.mxu0 0.0
        %3388 = vmatprep.subr.mxu0 0.0
        %3389 = vmatpush1.msra.mxu0 0.0
        %3390 = vmatprep.subr.mxu0 0.0
        %3391 = vmatpush1.msra.mxu0 0.0
        %3392 = vmatprep.subr.mxu0 0.0
        %3393 = vmatpush1.msra.mxu0 0.0
        %3394 = vmatprep.subr.mxu0 0.0
        %3395 = vmatpush1.msra.mxu0 0.0
        %3396 = vmatprep.subr.mxu0 0.0
        %3397 = vmatpush1.msra.mxu0 0.0
        %3398 = vmatprep.subr.mxu0 0.0
        %3399 = vmatpush1.msra.mxu0 0.0
        %3400 = vmatprep.subr.mxu0 0.0
        %3401 = vmatpush1.msra.mxu0 0.0
        %3402 = vmatprep.subr.mxu0 0.0
        %3403 = vmatpush1.msra.mxu0 0.0
        %3404 = vmatprep.subr.mxu0 0.0
        %3405 = vmatpush1.msra.mxu0 0.0
        %3406 = vmatprep.subr.mxu0 0.0
        %3407 = vmatpush1.msra.mxu0 0.0
        %3408 = vmatprep.subr.mxu0 0.0
        %3409 = vmatpush1.msra.mxu0 0.0
        %3410 = vmatprep.subr.mxu0 0.0
        %3411 = vmatpush1.msra.mxu0 0.0
        %3412 = vmatprep.subr.mxu0 0.0
        %3413 = vmatpush1.msra.mxu0 0.0
        %3414 = vmatprep.subr.mxu0 0.0
        %3415 = vmatpush1.msra.mxu0 0.0
        %3416 = vmatprep.subr.mxu0 0.0
        %3417 = vmatpush1.msra.mxu0 0.0
        %3418 = vmatprep.subr.mxu0 0.0
        %3419 = vmatpush1.msra.mxu0 0.0
        %3420 = vmatprep.subr.mxu0 0.0
        %3421 = vmatpush1.msra.mxu0 0.0
        %3422 = vmatprep.subr.mxu0 0.0
        %3423 = vmatpush1.msra.mxu0 0.0
        %3424 = vmatprep.subr.mxu0 0.0
        %3425 = vmatpush1.msra.mxu0 0.0
        %3426 = vmatprep.subr.mxu0 0.0
        %3427 = vmatpush1.msra.mxu0 0.0
        %3428 = vmatprep.subr.mxu0 0.0
        %3429 = vmatpush1.msra.mxu0 0.0
        %3430 = vmatprep.subr.mxu0 0.0
        %3431 = vmatpush1.msra.mxu0 0.0
        %3432 = vmatprep.subr.mxu0 0.0
        %3433 = vmatpush1.msra.mxu0 0.0
        %3434 = vmatprep.subr.mxu0 0.0
        %3435 = vmatpush1.msra.mxu0 0.0
        %3436 = vmatprep.subr.mxu0 0.0
        %3437 = vmatpush1.msra.mxu0 0.0
        %3438 = vmatprep.subr.mxu0 0.0
        %3439 = vmatpush1.msra.mxu0 0.0
        %3440 = vmatprep.subr.mxu0 0.0
        %3441 = vmatpush1.msra.mxu0 0.0
        %3442 = vmatprep.subr.mxu0 0.0
        %3443 = vmatpush1.msra.mxu0 0.0
        %3444 = vmatprep.mubr.f32.mxu0 0.0
        %3445 = vmatmul.mubr.f32.gmra.mrb[0].mxu0 %v3376
        %v3446 = vpop.f32.mrb[0].mxu0
        %v3447 = vadd.f32 0.0, %v3446
        %v3448 = vpop.f32.mrb[0].mxu0
        %3449 = vdwg.mxu0
        %v3450 = vadd.f32 %v3371, %v3447
        %v3451 = vadd.f32 %v3450, %v1012
        %v3453 = vcombine.high %v3451, %v3451
        %v3455 = vunpack.c.l.s4 1966171168
        %v3456 = vunpack.c.0.s8 %v3455
        %v3457 = vlaneseq
        %v3458 = vshrl.u32 %v3457, 7
        %v3459 = vsub.s32 %v3456, %v3458
        %v3460 = vrot.slane %v3451, %v3459
        %v3462 = vunpack.c.l.s4 1966171168
        %v3463 = vunpack.c.0.s8 %v3462
        %v3464 = vlaneseq
        %v3465 = vshrl.u32 %v3464, 7
        %v3466 = vsub.s32 %v3463, %v3465
        %v3467 = vrot.slane %v3453, %v3466
        %v3468 = vcombine.high %v3460, %v3460
        %v3469 = vcombine.high %v3467, %v3467
        %v3471 = vunpack.c.l.s4 1966171168
        %v3472 = vunpack.c.0.s8 %v3471
        %v3473 = vlaneseq
        %v3474 = vshrl.u32 %v3473, 7
        %v3475 = vsub.s32 %v3472, %v3474
        %v3476 = vrot.slane %v3460, %v3475
        %v3478 = vunpack.c.l.s4 1966171168
        %v3479 = vunpack.c.0.s8 %v3478
        %v3480 = vlaneseq
        %v3481 = vshrl.u32 %v3480, 7
        %v3482 = vsub.s32 %v3479, %v3481
        %v3483 = vrot.slane %v3467, %v3482
        %v3485 = vunpack.c.l.s4 1966171168
        %v3486 = vunpack.c.0.s8 %v3485
        %v3487 = vlaneseq
        %v3488 = vshrl.u32 %v3487, 7
        %v3489 = vsub.s32 %v3486, %v3488
        %v3490 = vrot.slane %v3468, %v3489
        %v3492 = vunpack.c.l.s4 1966171168
        %v3493 = vunpack.c.0.s8 %v3492
        %v3494 = vlaneseq
        %v3495 = vshrl.u32 %v3494, 7
        %v3496 = vsub.s32 %v3493, %v3495
        %v3497 = vrot.slane %v3469, %v3496
        %v3498 = vcombine.high %v3476, %v3476
        %v3499 = vcombine.high %v3483, %v3483
        %v3500 = vcombine.high %v3490, %v3490
        %v3501 = vcombine.high %v3497, %v3497
        %3510 = vst.msk [vmem:[%s249 + $0x3] sm:$0x1] %vm1073, %v3476
        %3511 = vst.msk [vmem:[%s249 + $0xb] sm:$0x1] %vm1073, %v3490
        %3512 = vst.msk [vmem:[%s249 + $0x13] sm:$0x1] %vm1073, %v3498
        %3513 = vst.msk [vmem:[%s249 + $0x1b] sm:$0x1] %vm1073, %v3500
        %3514 = vst.msk [vmem:[%s249 + $0x23] sm:$0x1] %vm1073, %v3483
        %3515 = vst.msk [vmem:[%s249 + $0x2b] sm:$0x1] %vm1073, %v3497
        %3516 = vst.msk [vmem:[%s249 + $0x33] sm:$0x1] %vm1073, %v3499
        %3517 = vst.msk [vmem:[%s249 + $0x3b] sm:$0x1] %vm1073, %v3501
        %v3518 = vld [vmem:[%s229 + $0x4] sm:$0x1]
        %v3519 = vld [vmem:[%s229 + $0x14] sm:$0x1]
        %v3520 = vld [vmem:[%s229 + $0x24] sm:$0x1]
        %v3521 = vld [vmem:[%s229 + $0x34] sm:$0x1]
        %v3522 = vld [vmem:[%s1] sm:$0xff]
        %v3523 = vld [vmem:[%s256] sm:$0xff]
        %v3528 = vrot.slane %v3519, 7
        %v3529 = vsel %vm263, %v3528, %v3518
        %v3530 = vrot.slane %v3520, 6
        %v3531 = vsel %vm266, %v3530, %v3529
        %v3532 = vrot.slane %v3521, 5
        %v3533 = vsel %vm269, %v3532, %v3531
        %3534 = vrot.lane.b32.xlu0 %v3533, 127
        %v3535 = vpop.permute.xlu0 %3534
        %v3537 = vsel %vm273, %v3523, 0
        %v3539 = vsel %vm277, %v3535, 0
        %3541 = vmatprep.subr.mxu0 0.0
        %3542 = vmatpush1.msra.mxu0 %v3539
        %3543 = vmatprep.subr.mxu0 0.0
        %3544 = vmatpush1.msra.mxu0 0.0
        %3545 = vmatprep.subr.mxu0 0.0
        %3546 = vmatpush1.msra.mxu0 0.0
        %3547 = vmatprep.subr.mxu0 0.0
        %3548 = vmatpush1.msra.mxu0 0.0
        %3549 = vmatprep.subr.mxu0 0.0
        %3550 = vmatpush1.msra.mxu0 0.0
        %3551 = vmatprep.subr.mxu0 0.0
        %3552 = vmatpush1.msra.mxu0 0.0
        %3553 = vmatprep.subr.mxu0 0.0
        %3554 = vmatpush1.msra.mxu0 0.0
        %3555 = vmatprep.subr.mxu0 0.0
        %3556 = vmatpush1.msra.mxu0 0.0
        %3557 = vmatprep.subr.mxu0 0.0
        %3558 = vmatpush1.msra.mxu0 0.0
        %3559 = vmatprep.subr.mxu0 0.0
        %3560 = vmatpush1.msra.mxu0 0.0
        %3561 = vmatprep.subr.mxu0 0.0
        %3562 = vmatpush1.msra.mxu0 0.0
        %3563 = vmatprep.subr.mxu0 0.0
        %3564 = vmatpush1.msra.mxu0 0.0
        %3565 = vmatprep.subr.mxu0 0.0
        %3566 = vmatpush1.msra.mxu0 0.0
        %3567 = vmatprep.subr.mxu0 0.0
        %3568 = vmatpush1.msra.mxu0 0.0
        %3569 = vmatprep.subr.mxu0 0.0
        %3570 = vmatpush1.msra.mxu0 0.0
        %3571 = vmatprep.subr.mxu0 0.0
        %3572 = vmatpush1.msra.mxu0 0.0
        %3573 = vmatprep.subr.mxu0 0.0
        %3574 = vmatpush1.msra.mxu0 0.0
        %3575 = vmatprep.subr.mxu0 0.0
        %3576 = vmatpush1.msra.mxu0 0.0
        %3577 = vmatprep.subr.mxu0 0.0
        %3578 = vmatpush1.msra.mxu0 0.0
        %3579 = vmatprep.subr.mxu0 0.0
        %3580 = vmatpush1.msra.mxu0 0.0
        %3581 = vmatprep.subr.mxu0 0.0
        %3582 = vmatpush1.msra.mxu0 0.0
        %3583 = vmatprep.subr.mxu0 0.0
        %3584 = vmatpush1.msra.mxu0 0.0
        %3585 = vmatprep.subr.mxu0 0.0
        %3586 = vmatpush1.msra.mxu0 0.0
        %3587 = vmatprep.subr.mxu0 0.0
        %3588 = vmatpush1.msra.mxu0 0.0
        %3589 = vmatprep.subr.mxu0 0.0
        %3590 = vmatpush1.msra.mxu0 0.0
        %3591 = vmatprep.subr.mxu0 0.0
        %3592 = vmatpush1.msra.mxu0 0.0
        %3593 = vmatprep.subr.mxu0 0.0
        %3594 = vmatpush1.msra.mxu0 0.0
        %3595 = vmatprep.subr.mxu0 0.0
        %3596 = vmatpush1.msra.mxu0 0.0
        %3597 = vmatprep.subr.mxu0 0.0
        %3598 = vmatpush1.msra.mxu0 0.0
        %3599 = vmatprep.subr.mxu0 0.0
        %3600 = vmatpush1.msra.mxu0 0.0
        %3601 = vmatprep.subr.mxu0 0.0
        %3602 = vmatpush1.msra.mxu0 0.0
        %3603 = vmatprep.subr.mxu0 0.0
        %3604 = vmatpush1.msra.mxu0 0.0
        %3605 = vmatprep.mubr.f32.mxu0 0.0
        %3606 = vmatmul.mubr.f32.gmra.mrb[0].mxu0 %v3537
        %v3607 = vpop.f32.mrb[0].mxu0
        %v3608 = vadd.f32 0.0, %v3607
        %v3609 = vpop.f32.mrb[0].mxu0
        %3610 = vdwg.mxu0
        %v3612 = vsel %vm273, %v3522, 0
        %v3614 = vsel %vm277, %v3533, 0
        %3616 = vmatprep.subr.mxu0 0.0
        %3617 = vmatpush1.msra.mxu0 %v3614
        %3618 = vmatprep.subr.mxu0 0.0
        %3619 = vmatpush1.msra.mxu0 0.0
        %3620 = vmatprep.subr.mxu0 0.0
        %3621 = vmatpush1.msra.mxu0 0.0
        %3622 = vmatprep.subr.mxu0 0.0
        %3623 = vmatpush1.msra.mxu0 0.0
        %3624 = vmatprep.subr.mxu0 0.0
        %3625 = vmatpush1.msra.mxu0 0.0
        %3626 = vmatprep.subr.mxu0 0.0
        %3627 = vmatpush1.msra.mxu0 0.0
        %3628 = vmatprep.subr.mxu0 0.0
        %3629 = vmatpush1.msra.mxu0 0.0
        %3630 = vmatprep.subr.mxu0 0.0
        %3631 = vmatpush1.msra.mxu0 0.0
        %3632 = vmatprep.subr.mxu0 0.0
        %3633 = vmatpush1.msra.mxu0 0.0
        %3634 = vmatprep.subr.mxu0 0.0
        %3635 = vmatpush1.msra.mxu0 0.0
        %3636 = vmatprep.subr.mxu0 0.0
        %3637 = vmatpush1.msra.mxu0 0.0
        %3638 = vmatprep.subr.mxu0 0.0
        %3639 = vmatpush1.msra.mxu0 0.0
        %3640 = vmatprep.subr.mxu0 0.0
        %3641 = vmatpush1.msra.mxu0 0.0
        %3642 = vmatprep.subr.mxu0 0.0
        %3643 = vmatpush1.msra.mxu0 0.0
        %3644 = vmatprep.subr.mxu0 0.0
        %3645 = vmatpush1.msra.mxu0 0.0
        %3646 = vmatprep.subr.mxu0 0.0
        %3647 = vmatpush1.msra.mxu0 0.0
        %3648 = vmatprep.subr.mxu0 0.0
        %3649 = vmatpush1.msra.mxu0 0.0
        %3650 = vmatprep.subr.mxu0 0.0
        %3651 = vmatpush1.msra.mxu0 0.0
        %3652 = vmatprep.subr.mxu0 0.0
        %3653 = vmatpush1.msra.mxu0 0.0
        %3654 = vmatprep.subr.mxu0 0.0
        %3655 = vmatpush1.msra.mxu0 0.0
        %3656 = vmatprep.subr.mxu0 0.0
        %3657 = vmatpush1.msra.mxu0 0.0
        %3658 = vmatprep.subr.mxu0 0.0
        %3659 = vmatpush1.msra.mxu0 0.0
        %3660 = vmatprep.subr.mxu0 0.0
        %3661 = vmatpush1.msra.mxu0 0.0
        %3662 = vmatprep.subr.mxu0 0.0
        %3663 = vmatpush1.msra.mxu0 0.0
        %3664 = vmatprep.subr.mxu0 0.0
        %3665 = vmatpush1.msra.mxu0 0.0
        %3666 = vmatprep.subr.mxu0 0.0
        %3667 = vmatpush1.msra.mxu0 0.0
        %3668 = vmatprep.subr.mxu0 0.0
        %3669 = vmatpush1.msra.mxu0 0.0
        %3670 = vmatprep.subr.mxu0 0.0
        %3671 = vmatpush1.msra.mxu0 0.0
        %3672 = vmatprep.subr.mxu0 0.0
        %3673 = vmatpush1.msra.mxu0 0.0
        %3674 = vmatprep.subr.mxu0 0.0
        %3675 = vmatpush1.msra.mxu0 0.0
        %3676 = vmatprep.subr.mxu0 0.0
        %3677 = vmatpush1.msra.mxu0 0.0
        %3678 = vmatprep.subr.mxu0 0.0
        %3679 = vmatpush1.msra.mxu0 0.0
        %3680 = vmatprep.mubr.f32.mxu0 0.0
        %3681 = vmatmul.mubr.f32.gmra.mrb[0].mxu0 %v3612
        %v3682 = vpop.f32.mrb[0].mxu0
        %v3683 = vadd.f32 %v3608, %v3682
        %v3684 = vpop.f32.mrb[0].mxu0
        %3685 = vdwg.mxu0
        %v3686 = vld [vmem:[%s425] sm:$0xff]
        %3687 = vrot.lane.b32.xlu0 %v3533, 126
        %v3688 = vpop.permute.xlu0 %3687
        %v3690 = vsel %vm273, %v3686, 0
        %v3692 = vsel %vm277, %v3688, 0
        %3694 = vmatprep.subr.mxu0 0.0
        %3695 = vmatpush1.msra.mxu0 %v3692
        %3696 = vmatprep.subr.mxu0 0.0
        %3697 = vmatpush1.msra.mxu0 0.0
        %3698 = vmatprep.subr.mxu0 0.0
        %3699 = vmatpush1.msra.mxu0 0.0
        %3700 = vmatprep.subr.mxu0 0.0
        %3701 = vmatpush1.msra.mxu0 0.0
        %3702 = vmatprep.subr.mxu0 0.0
        %3703 = vmatpush1.msra.mxu0 0.0
        %3704 = vmatprep.subr.mxu0 0.0
        %3705 = vmatpush1.msra.mxu0 0.0
        %3706 = vmatprep.subr.mxu0 0.0
        %3707 = vmatpush1.msra.mxu0 0.0
        %3708 = vmatprep.subr.mxu0 0.0
        %3709 = vmatpush1.msra.mxu0 0.0
        %3710 = vmatprep.subr.mxu0 0.0
        %3711 = vmatpush1.msra.mxu0 0.0
        %3712 = vmatprep.subr.mxu0 0.0
        %3713 = vmatpush1.msra.mxu0 0.0
        %3714 = vmatprep.subr.mxu0 0.0
        %3715 = vmatpush1.msra.mxu0 0.0
        %3716 = vmatprep.subr.mxu0 0.0
        %3717 = vmatpush1.msra.mxu0 0.0
        %3718 = vmatprep.subr.mxu0 0.0
        %3719 = vmatpush1.msra.mxu0 0.0
        %3720 = vmatprep.subr.mxu0 0.0
        %3721 = vmatpush1.msra.mxu0 0.0
        %3722 = vmatprep.subr.mxu0 0.0
        %3723 = vmatpush1.msra.mxu0 0.0
        %3724 = vmatprep.subr.mxu0 0.0
        %3725 = vmatpush1.msra.mxu0 0.0
        %3726 = vmatprep.subr.mxu0 0.0
        %3727 = vmatpush1.msra.mxu0 0.0
        %3728 = vmatprep.subr.mxu0 0.0
        %3729 = vmatpush1.msra.mxu0 0.0
        %3730 = vmatprep.subr.mxu0 0.0
        %3731 = vmatpush1.msra.mxu0 0.0
        %3732 = vmatprep.subr.mxu0 0.0
        %3733 = vmatpush1.msra.mxu0 0.0
        %3734 = vmatprep.subr.mxu0 0.0
        %3735 = vmatpush1.msra.mxu0 0.0
        %3736 = vmatprep.subr.mxu0 0.0
        %3737 = vmatpush1.msra.mxu0 0.0
        %3738 = vmatprep.subr.mxu0 0.0
        %3739 = vmatpush1.msra.mxu0 0.0
        %3740 = vmatprep.subr.mxu0 0.0
        %3741 = vmatpush1.msra.mxu0 0.0
        %3742 = vmatprep.subr.mxu0 0.0
        %3743 = vmatpush1.msra.mxu0 0.0
        %3744 = vmatprep.subr.mxu0 0.0
        %3745 = vmatpush1.msra.mxu0 0.0
        %3746 = vmatprep.subr.mxu0 0.0
        %3747 = vmatpush1.msra.mxu0 0.0
        %3748 = vmatprep.subr.mxu0 0.0
        %3749 = vmatpush1.msra.mxu0 0.0
        %3750 = vmatprep.subr.mxu0 0.0
        %3751 = vmatpush1.msra.mxu0 0.0
        %3752 = vmatprep.subr.mxu0 0.0
        %3753 = vmatpush1.msra.mxu0 0.0
        %3754 = vmatprep.subr.mxu0 0.0
        %3755 = vmatpush1.msra.mxu0 0.0
        %3756 = vmatprep.subr.mxu0 0.0
        %3757 = vmatpush1.msra.mxu0 0.0
        %3758 = vmatprep.mubr.f32.mxu0 0.0
        %3759 = vmatmul.mubr.f32.gmra.mrb[0].mxu0 %v3690
        %v3760 = vpop.f32.mrb[0].mxu0
        %v3761 = vadd.f32 0.0, %v3760
        %v3762 = vpop.f32.mrb[0].mxu0
        %3763 = vdwg.mxu0
        %v3764 = vadd.f32 %v3683, %v3761
        %v3765 = vld [vmem:[%s229 + $0x5] sm:$0x1]
        %v3766 = vld [vmem:[%s229 + $0x15] sm:$0x1]
        %v3767 = vld [vmem:[%s229 + $0x25] sm:$0x1]
        %v3768 = vld [vmem:[%s229 + $0x35] sm:$0x1]
        %v3769 = vld [vmem:[%s509] sm:$0xff]
        %v3774 = vrot.slane %v3766, 7
        %v3775 = vsel %vm263, %v3774, %v3765
        %v3776 = vrot.slane %v3767, 6
        %v3777 = vsel %vm266, %v3776, %v3775
        %v3778 = vrot.slane %v3768, 5
        %v3779 = vsel %vm269, %v3778, %v3777
        %v3781 = vsel %vm273, %v3769, 0
        %v3783 = vsel %vm277, %v3779, 0
        %3785 = vmatprep.subr.mxu0 0.0
        %3786 = vmatpush1.msra.mxu0 %v3783
        %3787 = vmatprep.subr.mxu0 0.0
        %3788 = vmatpush1.msra.mxu0 0.0
        %3789 = vmatprep.subr.mxu0 0.0
        %3790 = vmatpush1.msra.mxu0 0.0
        %3791 = vmatprep.subr.mxu0 0.0
        %3792 = vmatpush1.msra.mxu0 0.0
        %3793 = vmatprep.subr.mxu0 0.0
        %3794 = vmatpush1.msra.mxu0 0.0
        %3795 = vmatprep.subr.mxu0 0.0
        %3796 = vmatpush1.msra.mxu0 0.0
        %3797 = vmatprep.subr.mxu0 0.0
        %3798 = vmatpush1.msra.mxu0 0.0
        %3799 = vmatprep.subr.mxu0 0.0
        %3800 = vmatpush1.msra.mxu0 0.0
        %3801 = vmatprep.subr.mxu0 0.0
        %3802 = vmatpush1.msra.mxu0 0.0
        %3803 = vmatprep.subr.mxu0 0.0
        %3804 = vmatpush1.msra.mxu0 0.0
        %3805 = vmatprep.subr.mxu0 0.0
        %3806 = vmatpush1.msra.mxu0 0.0
        %3807 = vmatprep.subr.mxu0 0.0
        %3808 = vmatpush1.msra.mxu0 0.0
        %3809 = vmatprep.subr.mxu0 0.0
        %3810 = vmatpush1.msra.mxu0 0.0
        %3811 = vmatprep.subr.mxu0 0.0
        %3812 = vmatpush1.msra.mxu0 0.0
        %3813 = vmatprep.subr.mxu0 0.0
        %3814 = vmatpush1.msra.mxu0 0.0
        %3815 = vmatprep.subr.mxu0 0.0
        %3816 = vmatpush1.msra.mxu0 0.0
        %3817 = vmatprep.subr.mxu0 0.0
        %3818 = vmatpush1.msra.mxu0 0.0
        %3819 = vmatprep.subr.mxu0 0.0
        %3820 = vmatpush1.msra.mxu0 0.0
        %3821 = vmatprep.subr.mxu0 0.0
        %3822 = vmatpush1.msra.mxu0 0.0
        %3823 = vmatprep.subr.mxu0 0.0
        %3824 = vmatpush1.msra.mxu0 0.0
        %3825 = vmatprep.subr.mxu0 0.0
        %3826 = vmatpush1.msra.mxu0 0.0
        %3827 = vmatprep.subr.mxu0 0.0
        %3828 = vmatpush1.msra.mxu0 0.0
        %3829 = vmatprep.subr.mxu0 0.0
        %3830 = vmatpush1.msra.mxu0 0.0
        %3831 = vmatprep.subr.mxu0 0.0
        %3832 = vmatpush1.msra.mxu0 0.0
        %3833 = vmatprep.subr.mxu0 0.0
        %3834 = vmatpush1.msra.mxu0 0.0
        %3835 = vmatprep.subr.mxu0 0.0
        %3836 = vmatpush1.msra.mxu0 0.0
        %3837 = vmatprep.subr.mxu0 0.0
        %3838 = vmatpush1.msra.mxu0 0.0
        %3839 = vmatprep.subr.mxu0 0.0
        %3840 = vmatpush1.msra.mxu0 0.0
        %3841 = vmatprep.subr.mxu0 0.0
        %3842 = vmatpush1.msra.mxu0 0.0
        %3843 = vmatprep.subr.mxu0 0.0
        %3844 = vmatpush1.msra.mxu0 0.0
        %3845 = vmatprep.subr.mxu0 0.0
        %3846 = vmatpush1.msra.mxu0 0.0
        %3847 = vmatprep.subr.mxu0 0.0
        %3848 = vmatpush1.msra.mxu0 0.0
        %3849 = vmatprep.mubr.f32.mxu0 0.0
        %3850 = vmatmul.mubr.f32.gmra.mrb[0].mxu0 %v3781
        %v3851 = vpop.f32.mrb[0].mxu0
        %v3852 = vadd.f32 0.0, %v3851
        %v3853 = vpop.f32.mrb[0].mxu0
        %3854 = vdwg.mxu0
        %v3855 = vadd.f32 %v3764, %v3852
        %v3856 = vld [vmem:[%s597] sm:$0xff]
        %3857 = vrot.lane.b32.xlu0 %v3779, 127
        %v3858 = vpop.permute.xlu0 %3857
        %v3860 = vsel %vm273, %v3856, 0
        %v3862 = vsel %vm277, %v3858, 0
        %3864 = vmatprep.subr.mxu0 0.0
        %3865 = vmatpush1.msra.mxu0 %v3862
        %3866 = vmatprep.subr.mxu0 0.0
        %3867 = vmatpush1.msra.mxu0 0.0
        %3868 = vmatprep.subr.mxu0 0.0
        %3869 = vmatpush1.msra.mxu0 0.0
        %3870 = vmatprep.subr.mxu0 0.0
        %3871 = vmatpush1.msra.mxu0 0.0
        %3872 = vmatprep.subr.mxu0 0.0
        %3873 = vmatpush1.msra.mxu0 0.0
        %3874 = vmatprep.subr.mxu0 0.0
        %3875 = vmatpush1.msra.mxu0 0.0
        %3876 = vmatprep.subr.mxu0 0.0
        %3877 = vmatpush1.msra.mxu0 0.0
        %3878 = vmatprep.subr.mxu0 0.0
        %3879 = vmatpush1.msra.mxu0 0.0
        %3880 = vmatprep.subr.mxu0 0.0
        %3881 = vmatpush1.msra.mxu0 0.0
        %3882 = vmatprep.subr.mxu0 0.0
        %3883 = vmatpush1.msra.mxu0 0.0
        %3884 = vmatprep.subr.mxu0 0.0
        %3885 = vmatpush1.msra.mxu0 0.0
        %3886 = vmatprep.subr.mxu0 0.0
        %3887 = vmatpush1.msra.mxu0 0.0
        %3888 = vmatprep.subr.mxu0 0.0
        %3889 = vmatpush1.msra.mxu0 0.0
        %3890 = vmatprep.subr.mxu0 0.0
        %3891 = vmatpush1.msra.mxu0 0.0
        %3892 = vmatprep.subr.mxu0 0.0
        %3893 = vmatpush1.msra.mxu0 0.0
        %3894 = vmatprep.subr.mxu0 0.0
        %3895 = vmatpush1.msra.mxu0 0.0
        %3896 = vmatprep.subr.mxu0 0.0
        %3897 = vmatpush1.msra.mxu0 0.0
        %3898 = vmatprep.subr.mxu0 0.0
        %3899 = vmatpush1.msra.mxu0 0.0
        %3900 = vmatprep.subr.mxu0 0.0
        %3901 = vmatpush1.msra.mxu0 0.0
        %3902 = vmatprep.subr.mxu0 0.0
        %3903 = vmatpush1.msra.mxu0 0.0
        %3904 = vmatprep.subr.mxu0 0.0
        %3905 = vmatpush1.msra.mxu0 0.0
        %3906 = vmatprep.subr.mxu0 0.0
        %3907 = vmatpush1.msra.mxu0 0.0
        %3908 = vmatprep.subr.mxu0 0.0
        %3909 = vmatpush1.msra.mxu0 0.0
        %3910 = vmatprep.subr.mxu0 0.0
        %3911 = vmatpush1.msra.mxu0 0.0
        %3912 = vmatprep.subr.mxu0 0.0
        %3913 = vmatpush1.msra.mxu0 0.0
        %3914 = vmatprep.subr.mxu0 0.0
        %3915 = vmatpush1.msra.mxu0 0.0
        %3916 = vmatprep.subr.mxu0 0.0
        %3917 = vmatpush1.msra.mxu0 0.0
        %3918 = vmatprep.subr.mxu0 0.0
        %3919 = vmatpush1.msra.mxu0 0.0
        %3920 = vmatprep.subr.mxu0 0.0
        %3921 = vmatpush1.msra.mxu0 0.0
        %3922 = vmatprep.subr.mxu0 0.0
        %3923 = vmatpush1.msra.mxu0 0.0
        %3924 = vmatprep.subr.mxu0 0.0
        %3925 = vmatpush1.msra.mxu0 0.0
        %3926 = vmatprep.subr.mxu0 0.0
        %3927 = vmatpush1.msra.mxu0 0.0
        %3928 = vmatprep.mubr.f32.mxu0 0.0
        %3929 = vmatmul.mubr.f32.gmra.mrb[0].mxu0 %v3860
        %v3930 = vpop.f32.mrb[0].mxu0
        %v3931 = vadd.f32 0.0, %v3930
        %v3932 = vpop.f32.mrb[0].mxu0
        %3933 = vdwg.mxu0
        %v3934 = vadd.f32 %v3855, %v3931
        %v3935 = vld [vmem:[%s677] sm:$0xff]
        %3936 = vrot.lane.b32.xlu0 %v3779, 126
        %v3937 = vpop.permute.xlu0 %3936
        %v3939 = vsel %vm273, %v3935, 0
        %v3941 = vsel %vm277, %v3937, 0
        %3943 = vmatprep.subr.mxu0 0.0
        %3944 = vmatpush1.msra.mxu0 %v3941
        %3945 = vmatprep.subr.mxu0 0.0
        %3946 = vmatpush1.msra.mxu0 0.0
        %3947 = vmatprep.subr.mxu0 0.0
        %3948 = vmatpush1.msra.mxu0 0.0
        %3949 = vmatprep.subr.mxu0 0.0
        %3950 = vmatpush1.msra.mxu0 0.0
        %3951 = vmatprep.subr.mxu0 0.0
        %3952 = vmatpush1.msra.mxu0 0.0
        %3953 = vmatprep.subr.mxu0 0.0
        %3954 = vmatpush1.msra.mxu0 0.0
        %3955 = vmatprep.subr.mxu0 0.0
        %3956 = vmatpush1.msra.mxu0 0.0
        %3957 = vmatprep.subr.mxu0 0.0
        %3958 = vmatpush1.msra.mxu0 0.0
        %3959 = vmatprep.subr.mxu0 0.0
        %3960 = vmatpush1.msra.mxu0 0.0
        %3961 = vmatprep.subr.mxu0 0.0
        %3962 = vmatpush1.msra.mxu0 0.0
        %3963 = vmatprep.subr.mxu0 0.0
        %3964 = vmatpush1.msra.mxu0 0.0
        %3965 = vmatprep.subr.mxu0 0.0
        %3966 = vmatpush1.msra.mxu0 0.0
        %3967 = vmatprep.subr.mxu0 0.0
        %3968 = vmatpush1.msra.mxu0 0.0
        %3969 = vmatprep.subr.mxu0 0.0
        %3970 = vmatpush1.msra.mxu0 0.0
        %3971 = vmatprep.subr.mxu0 0.0
        %3972 = vmatpush1.msra.mxu0 0.0
        %3973 = vmatprep.subr.mxu0 0.0
        %3974 = vmatpush1.msra.mxu0 0.0
        %3975 = vmatprep.subr.mxu0 0.0
        %3976 = vmatpush1.msra.mxu0 0.0
        %3977 = vmatprep.subr.mxu0 0.0
        %3978 = vmatpush1.msra.mxu0 0.0
        %3979 = vmatprep.subr.mxu0 0.0
        %3980 = vmatpush1.msra.mxu0 0.0
        %3981 = vmatprep.subr.mxu0 0.0
        %3982 = vmatpush1.msra.mxu0 0.0
        %3983 = vmatprep.subr.mxu0 0.0
        %3984 = vmatpush1.msra.mxu0 0.0
        %3985 = vmatprep.subr.mxu0 0.0
        %3986 = vmatpush1.msra.mxu0 0.0
        %3987 = vmatprep.subr.mxu0 0.0
        %3988 = vmatpush1.msra.mxu0 0.0
        %3989 = vmatprep.subr.mxu0 0.0
        %3990 = vmatpush1.msra.mxu0 0.0
        %3991 = vmatprep.subr.mxu0 0.0
        %3992 = vmatpush1.msra.mxu0 0.0
        %3993 = vmatprep.subr.mxu0 0.0
        %3994 = vmatpush1.msra.mxu0 0.0
        %3995 = vmatprep.subr.mxu0 0.0
        %3996 = vmatpush1.msra.mxu0 0.0
        %3997 = vmatprep.subr.mxu0 0.0
        %3998 = vmatpush1.msra.mxu0 0.0
        %3999 = vmatprep.subr.mxu0 0.0
        %4000 = vmatpush1.msra.mxu0 0.0
        %4001 = vmatprep.subr.mxu0 0.0
        %4002 = vmatpush1.msra.mxu0 0.0
        %4003 = vmatprep.subr.mxu0 0.0
        %4004 = vmatpush1.msra.mxu0 0.0
        %4005 = vmatprep.subr.mxu0 0.0
        %4006 = vmatpush1.msra.mxu0 0.0
        %4007 = vmatprep.mubr.f32.mxu0 0.0
        %4008 = vmatmul.mubr.f32.gmra.mrb[0].mxu0 %v3939
        %v4009 = vpop.f32.mrb[0].mxu0
        %v4010 = vadd.f32 0.0, %v4009
        %v4011 = vpop.f32.mrb[0].mxu0
        %4012 = vdwg.mxu0
        %v4013 = vadd.f32 %v3934, %v4010
        %v4014 = vld [vmem:[%s229 + $0x6] sm:$0x1]
        %v4015 = vld [vmem:[%s229 + $0x16] sm:$0x1]
        %v4016 = vld [vmem:[%s229 + $0x26] sm:$0x1]
        %v4017 = vld [vmem:[%s229 + $0x36] sm:$0x1]
        %v4018 = vld [vmem:[%s761] sm:$0xff]
        %v4023 = vrot.slane %v4015, 7
        %v4024 = vsel %vm263, %v4023, %v4014
        %v4025 = vrot.slane %v4016, 6
        %v4026 = vsel %vm266, %v4025, %v4024
        %v4027 = vrot.slane %v4017, 5
        %v4028 = vsel %vm269, %v4027, %v4026
        %v4030 = vsel %vm273, %v4018, 0
        %v4032 = vsel %vm277, %v4028, 0
        %4034 = vmatprep.subr.mxu0 0.0
        %4035 = vmatpush1.msra.mxu0 %v4032
        %4036 = vmatprep.subr.mxu0 0.0
        %4037 = vmatpush1.msra.mxu0 0.0
        %4038 = vmatprep.subr.mxu0 0.0
        %4039 = vmatpush1.msra.mxu0 0.0
        %4040 = vmatprep.subr.mxu0 0.0
        %4041 = vmatpush1.msra.mxu0 0.0
        %4042 = vmatprep.subr.mxu0 0.0
        %4043 = vmatpush1.msra.mxu0 0.0
        %4044 = vmatprep.subr.mxu0 0.0
        %4045 = vmatpush1.msra.mxu0 0.0
        %4046 = vmatprep.subr.mxu0 0.0
        %4047 = vmatpush1.msra.mxu0 0.0
        %4048 = vmatprep.subr.mxu0 0.0
        %4049 = vmatpush1.msra.mxu0 0.0
        %4050 = vmatprep.subr.mxu0 0.0
        %4051 = vmatpush1.msra.mxu0 0.0
        %4052 = vmatprep.subr.mxu0 0.0
        %4053 = vmatpush1.msra.mxu0 0.0
        %4054 = vmatprep.subr.mxu0 0.0
        %4055 = vmatpush1.msra.mxu0 0.0
        %4056 = vmatprep.subr.mxu0 0.0
        %4057 = vmatpush1.msra.mxu0 0.0
        %4058 = vmatprep.subr.mxu0 0.0
        %4059 = vmatpush1.msra.mxu0 0.0
        %4060 = vmatprep.subr.mxu0 0.0
        %4061 = vmatpush1.msra.mxu0 0.0
        %4062 = vmatprep.subr.mxu0 0.0
        %4063 = vmatpush1.msra.mxu0 0.0
        %4064 = vmatprep.subr.mxu0 0.0
        %4065 = vmatpush1.msra.mxu0 0.0
        %4066 = vmatprep.subr.mxu0 0.0
        %4067 = vmatpush1.msra.mxu0 0.0
        %4068 = vmatprep.subr.mxu0 0.0
        %4069 = vmatpush1.msra.mxu0 0.0
        %4070 = vmatprep.subr.mxu0 0.0
        %4071 = vmatpush1.msra.mxu0 0.0
        %4072 = vmatprep.subr.mxu0 0.0
        %4073 = vmatpush1.msra.mxu0 0.0
        %4074 = vmatprep.subr.mxu0 0.0
        %4075 = vmatpush1.msra.mxu0 0.0
        %4076 = vmatprep.subr.mxu0 0.0
        %4077 = vmatpush1.msra.mxu0 0.0
        %4078 = vmatprep.subr.mxu0 0.0
        %4079 = vmatpush1.msra.mxu0 0.0
        %4080 = vmatprep.subr.mxu0 0.0
        %4081 = vmatpush1.msra.mxu0 0.0
        %4082 = vmatprep.subr.mxu0 0.0
        %4083 = vmatpush1.msra.mxu0 0.0
        %4084 = vmatprep.subr.mxu0 0.0
        %4085 = vmatpush1.msra.mxu0 0.0
        %4086 = vmatprep.subr.mxu0 0.0
        %4087 = vmatpush1.msra.mxu0 0.0
        %4088 = vmatprep.subr.mxu0 0.0
        %4089 = vmatpush1.msra.mxu0 0.0
        %4090 = vmatprep.subr.mxu0 0.0
        %4091 = vmatpush1.msra.mxu0 0.0
        %4092 = vmatprep.subr.mxu0 0.0
        %4093 = vmatpush1.msra.mxu0 0.0
        %4094 = vmatprep.subr.mxu0 0.0
        %4095 = vmatpush1.msra.mxu0 0.0
        %4096 = vmatprep.subr.mxu0 0.0
        %4097 = vmatpush1.msra.mxu0 0.0
        %4098 = vmatprep.mubr.f32.mxu0 0.0
        %4099 = vmatmul.mubr.f32.gmra.mrb[0].mxu0 %v4030
        %v4100 = vpop.f32.mrb[0].mxu0
        %v4101 = vadd.f32 0.0, %v4100
        %v4102 = vpop.f32.mrb[0].mxu0
        %4103 = vdwg.mxu0
        %v4104 = vadd.f32 %v4013, %v4101
        %v4105 = vld [vmem:[%s849] sm:$0xff]
        %4106 = vrot.lane.b32.xlu0 %v4028, 127
        %v4107 = vpop.permute.xlu0 %4106
        %v4109 = vsel %vm273, %v4105, 0
        %v4111 = vsel %vm277, %v4107, 0
        %4113 = vmatprep.subr.mxu0 0.0
        %4114 = vmatpush1.msra.mxu0 %v4111
        %4115 = vmatprep.subr.mxu0 0.0
        %4116 = vmatpush1.msra.mxu0 0.0
        %4117 = vmatprep.subr.mxu0 0.0
        %4118 = vmatpush1.msra.mxu0 0.0
        %4119 = vmatprep.subr.mxu0 0.0
        %4120 = vmatpush1.msra.mxu0 0.0
        %4121 = vmatprep.subr.mxu0 0.0
        %4122 = vmatpush1.msra.mxu0 0.0
        %4123 = vmatprep.subr.mxu0 0.0
        %4124 = vmatpush1.msra.mxu0 0.0
        %4125 = vmatprep.subr.mxu0 0.0
        %4126 = vmatpush1.msra.mxu0 0.0
        %4127 = vmatprep.subr.mxu0 0.0
        %4128 = vmatpush1.msra.mxu0 0.0
        %4129 = vmatprep.subr.mxu0 0.0
        %4130 = vmatpush1.msra.mxu0 0.0
        %4131 = vmatprep.subr.mxu0 0.0
        %4132 = vmatpush1.msra.mxu0 0.0
        %4133 = vmatprep.subr.mxu0 0.0
        %4134 = vmatpush1.msra.mxu0 0.0
        %4135 = vmatprep.subr.mxu0 0.0
        %4136 = vmatpush1.msra.mxu0 0.0
        %4137 = vmatprep.subr.mxu0 0.0
        %4138 = vmatpush1.msra.mxu0 0.0
        %4139 = vmatprep.subr.mxu0 0.0
        %4140 = vmatpush1.msra.mxu0 0.0
        %4141 = vmatprep.subr.mxu0 0.0
        %4142 = vmatpush1.msra.mxu0 0.0
        %4143 = vmatprep.subr.mxu0 0.0
        %4144 = vmatpush1.msra.mxu0 0.0
        %4145 = vmatprep.subr.mxu0 0.0
        %4146 = vmatpush1.msra.mxu0 0.0
        %4147 = vmatprep.subr.mxu0 0.0
        %4148 = vmatpush1.msra.mxu0 0.0
        %4149 = vmatprep.subr.mxu0 0.0
        %4150 = vmatpush1.msra.mxu0 0.0
        %4151 = vmatprep.subr.mxu0 0.0
        %4152 = vmatpush1.msra.mxu0 0.0
        %4153 = vmatprep.subr.mxu0 0.0
        %4154 = vmatpush1.msra.mxu0 0.0
        %4155 = vmatprep.subr.mxu0 0.0
        %4156 = vmatpush1.msra.mxu0 0.0
        %4157 = vmatprep.subr.mxu0 0.0
        %4158 = vmatpush1.msra.mxu0 0.0
        %4159 = vmatprep.subr.mxu0 0.0
        %4160 = vmatpush1.msra.mxu0 0.0
        %4161 = vmatprep.subr.mxu0 0.0
        %4162 = vmatpush1.msra.mxu0 0.0
        %4163 = vmatprep.subr.mxu0 0.0
        %4164 = vmatpush1.msra.mxu0 0.0
        %4165 = vmatprep.subr.mxu0 0.0
        %4166 = vmatpush1.msra.mxu0 0.0
        %4167 = vmatprep.subr.mxu0 0.0
        %4168 = vmatpush1.msra.mxu0 0.0
        %4169 = vmatprep.subr.mxu0 0.0
        %4170 = vmatpush1.msra.mxu0 0.0
        %4171 = vmatprep.subr.mxu0 0.0
        %4172 = vmatpush1.msra.mxu0 0.0
        %4173 = vmatprep.subr.mxu0 0.0
        %4174 = vmatpush1.msra.mxu0 0.0
        %4175 = vmatprep.subr.mxu0 0.0
        %4176 = vmatpush1.msra.mxu0 0.0
        %4177 = vmatprep.mubr.f32.mxu0 0.0
        %4178 = vmatmul.mubr.f32.gmra.mrb[0].mxu0 %v4109
        %v4179 = vpop.f32.mrb[0].mxu0
        %v4180 = vadd.f32 0.0, %v4179
        %v4181 = vpop.f32.mrb[0].mxu0
        %4182 = vdwg.mxu0
        %v4183 = vadd.f32 %v4104, %v4180
        %v4184 = vld [vmem:[%s929] sm:$0xff]
        %4185 = vrot.lane.b32.xlu0 %v4028, 126
        %v4186 = vpop.permute.xlu0 %4185
        %v4188 = vsel %vm273, %v4184, 0
        %v4190 = vsel %vm277, %v4186, 0
        %4192 = vmatprep.subr.mxu0 0.0
        %4193 = vmatpush1.msra.mxu0 %v4190
        %4194 = vmatprep.subr.mxu0 0.0
        %4195 = vmatpush1.msra.mxu0 0.0
        %4196 = vmatprep.subr.mxu0 0.0
        %4197 = vmatpush1.msra.mxu0 0.0
        %4198 = vmatprep.subr.mxu0 0.0
        %4199 = vmatpush1.msra.mxu0 0.0
        %4200 = vmatprep.subr.mxu0 0.0
        %4201 = vmatpush1.msra.mxu0 0.0
        %4202 = vmatprep.subr.mxu0 0.0
        %4203 = vmatpush1.msra.mxu0 0.0
        %4204 = vmatprep.subr.mxu0 0.0
        %4205 = vmatpush1.msra.mxu0 0.0
        %4206 = vmatprep.subr.mxu0 0.0
        %4207 = vmatpush1.msra.mxu0 0.0
        %4208 = vmatprep.subr.mxu0 0.0
        %4209 = vmatpush1.msra.mxu0 0.0
        %4210 = vmatprep.subr.mxu0 0.0
        %4211 = vmatpush1.msra.mxu0 0.0
        %4212 = vmatprep.subr.mxu0 0.0
        %4213 = vmatpush1.msra.mxu0 0.0
        %4214 = vmatprep.subr.mxu0 0.0
        %4215 = vmatpush1.msra.mxu0 0.0
        %4216 = vmatprep.subr.mxu0 0.0
        %4217 = vmatpush1.msra.mxu0 0.0
        %4218 = vmatprep.subr.mxu0 0.0
        %4219 = vmatpush1.msra.mxu0 0.0
        %4220 = vmatprep.subr.mxu0 0.0
        %4221 = vmatpush1.msra.mxu0 0.0
        %4222 = vmatprep.subr.mxu0 0.0
        %4223 = vmatpush1.msra.mxu0 0.0
        %4224 = vmatprep.subr.mxu0 0.0
        %4225 = vmatpush1.msra.mxu0 0.0
        %4226 = vmatprep.subr.mxu0 0.0
        %4227 = vmatpush1.msra.mxu0 0.0
        %4228 = vmatprep.subr.mxu0 0.0
        %4229 = vmatpush1.msra.mxu0 0.0
        %4230 = vmatprep.subr.mxu0 0.0
        %4231 = vmatpush1.msra.mxu0 0.0
        %4232 = vmatprep.subr.mxu0 0.0
        %4233 = vmatpush1.msra.mxu0 0.0
        %4234 = vmatprep.subr.mxu0 0.0
        %4235 = vmatpush1.msra.mxu0 0.0
        %4236 = vmatprep.subr.mxu0 0.0
        %4237 = vmatpush1.msra.mxu0 0.0
        %4238 = vmatprep.subr.mxu0 0.0
        %4239 = vmatpush1.msra.mxu0 0.0
        %4240 = vmatprep.subr.mxu0 0.0
        %4241 = vmatpush1.msra.mxu0 0.0
        %4242 = vmatprep.subr.mxu0 0.0
        %4243 = vmatpush1.msra.mxu0 0.0
        %4244 = vmatprep.subr.mxu0 0.0
        %4245 = vmatpush1.msra.mxu0 0.0
        %4246 = vmatprep.subr.mxu0 0.0
        %4247 = vmatpush1.msra.mxu0 0.0
        %4248 = vmatprep.subr.mxu0 0.0
        %4249 = vmatpush1.msra.mxu0 0.0
        %4250 = vmatprep.subr.mxu0 0.0
        %4251 = vmatpush1.msra.mxu0 0.0
        %4252 = vmatprep.subr.mxu0 0.0
        %4253 = vmatpush1.msra.mxu0 0.0
        %4254 = vmatprep.subr.mxu0 0.0
        %4255 = vmatpush1.msra.mxu0 0.0
        %4256 = vmatprep.mubr.f32.mxu0 0.0
        %4257 = vmatmul.mubr.f32.gmra.mrb[0].mxu0 %v4188
        %v4258 = vpop.f32.mrb[0].mxu0
        %v4259 = vadd.f32 0.0, %v4258
        %v4260 = vpop.f32.mrb[0].mxu0
        %4261 = vdwg.mxu0
        %v4262 = vadd.f32 %v4183, %v4259
        %v4263 = vadd.f32 %v4262, %v1012
        %v4265 = vcombine.high %v4263, %v4263
        %v4267 = vunpack.c.l.s4 1966171168
        %v4268 = vunpack.c.0.s8 %v4267
        %v4269 = vlaneseq
        %v4270 = vshrl.u32 %v4269, 7
        %v4271 = vsub.s32 %v4268, %v4270
        %v4272 = vrot.slane %v4263, %v4271
        %v4274 = vunpack.c.l.s4 1966171168
        %v4275 = vunpack.c.0.s8 %v4274
        %v4276 = vlaneseq
        %v4277 = vshrl.u32 %v4276, 7
        %v4278 = vsub.s32 %v4275, %v4277
        %v4279 = vrot.slane %v4265, %v4278
        %v4280 = vcombine.high %v4272, %v4272
        %v4281 = vcombine.high %v4279, %v4279
        %v4283 = vunpack.c.l.s4 1966171168
        %v4284 = vunpack.c.0.s8 %v4283
        %v4285 = vlaneseq
        %v4286 = vshrl.u32 %v4285, 7
        %v4287 = vsub.s32 %v4284, %v4286
        %v4288 = vrot.slane %v4272, %v4287
        %v4290 = vunpack.c.l.s4 1966171168
        %v4291 = vunpack.c.0.s8 %v4290
        %v4292 = vlaneseq
        %v4293 = vshrl.u32 %v4292, 7
        %v4294 = vsub.s32 %v4291, %v4293
        %v4295 = vrot.slane %v4279, %v4294
        %v4297 = vunpack.c.l.s4 1966171168
        %v4298 = vunpack.c.0.s8 %v4297
        %v4299 = vlaneseq
        %v4300 = vshrl.u32 %v4299, 7
        %v4301 = vsub.s32 %v4298, %v4300
        %v4302 = vrot.slane %v4280, %v4301
        %v4304 = vunpack.c.l.s4 1966171168
        %v4305 = vunpack.c.0.s8 %v4304
        %v4306 = vlaneseq
        %v4307 = vshrl.u32 %v4306, 7
        %v4308 = vsub.s32 %v4305, %v4307
        %v4309 = vrot.slane %v4281, %v4308
        %v4310 = vcombine.high %v4288, %v4288
        %v4311 = vcombine.high %v4295, %v4295
        %v4312 = vcombine.high %v4302, %v4302
        %v4313 = vcombine.high %v4309, %v4309
        %4322 = vst.msk [vmem:[%s249 + $0x4] sm:$0x1] %vm1073, %v4288
        %4323 = vst.msk [vmem:[%s249 + $0xc] sm:$0x1] %vm1073, %v4302
        %4324 = vst.msk [vmem:[%s249 + $0x14] sm:$0x1] %vm1073, %v4310
        %4325 = vst.msk [vmem:[%s249 + $0x1c] sm:$0x1] %vm1073, %v4312
        %4326 = vst.msk [vmem:[%s249 + $0x24] sm:$0x1] %vm1073, %v4295
        %4327 = vst.msk [vmem:[%s249 + $0x2c] sm:$0x1] %vm1073, %v4309
        %4328 = vst.msk [vmem:[%s249 + $0x34] sm:$0x1] %vm1073, %v4311
        %4329 = vst.msk [vmem:[%s249 + $0x3c] sm:$0x1] %vm1073, %v4313
        %v4330 = vld [vmem:[%s229 + $0x5] sm:$0x1]
        %v4331 = vld [vmem:[%s229 + $0x15] sm:$0x1]
        %v4332 = vld [vmem:[%s229 + $0x25] sm:$0x1]
        %v4333 = vld [vmem:[%s229 + $0x35] sm:$0x1]
        %v4334 = vld [vmem:[%s1] sm:$0xff]
        %v4335 = vld [vmem:[%s256] sm:$0xff]
        %v4340 = vrot.slane %v4331, 7
        %v4341 = vsel %vm263, %v4340, %v4330
        %v4342 = vrot.slane %v4332, 6
        %v4343 = vsel %vm266, %v4342, %v4341
        %v4344 = vrot.slane %v4333, 5
        %v4345 = vsel %vm269, %v4344, %v4343
        %4346 = vrot.lane.b32.xlu0 %v4345, 127
        %v4347 = vpop.permute.xlu0 %4346
        %v4349 = vsel %vm273, %v4335, 0
        %v4351 = vsel %vm277, %v4347, 0
        %4353 = vmatprep.subr.mxu0 0.0
        %4354 = vmatpush1.msra.mxu0 %v4351
        %4355 = vmatprep.subr.mxu0 0.0
        %4356 = vmatpush1.msra.mxu0 0.0
        %4357 = vmatprep.subr.mxu0 0.0
        %4358 = vmatpush1.msra.mxu0 0.0
        %4359 = vmatprep.subr.mxu0 0.0
        %4360 = vmatpush1.msra.mxu0 0.0
        %4361 = vmatprep.subr.mxu0 0.0
        %4362 = vmatpush1.msra.mxu0 0.0
        %4363 = vmatprep.subr.mxu0 0.0
        %4364 = vmatpush1.msra.mxu0 0.0
        %4365 = vmatprep.subr.mxu0 0.0
        %4366 = vmatpush1.msra.mxu0 0.0
        %4367 = vmatprep.subr.mxu0 0.0
        %4368 = vmatpush1.msra.mxu0 0.0
        %4369 = vmatprep.subr.mxu0 0.0
        %4370 = vmatpush1.msra.mxu0 0.0
        %4371 = vmatprep.subr.mxu0 0.0
        %4372 = vmatpush1.msra.mxu0 0.0
        %4373 = vmatprep.subr.mxu0 0.0
        %4374 = vmatpush1.msra.mxu0 0.0
        %4375 = vmatprep.subr.mxu0 0.0
        %4376 = vmatpush1.msra.mxu0 0.0
        %4377 = vmatprep.subr.mxu0 0.0
        %4378 = vmatpush1.msra.mxu0 0.0
        %4379 = vmatprep.subr.mxu0 0.0
        %4380 = vmatpush1.msra.mxu0 0.0
        %4381 = vmatprep.subr.mxu0 0.0
        %4382 = vmatpush1.msra.mxu0 0.0
        %4383 = vmatprep.subr.mxu0 0.0
        %4384 = vmatpush1.msra.mxu0 0.0
        %4385 = vmatprep.subr.mxu0 0.0
        %4386 = vmatpush1.msra.mxu0 0.0
        %4387 = vmatprep.subr.mxu0 0.0
        %4388 = vmatpush1.msra.mxu0 0.0
        %4389 = vmatprep.subr.mxu0 0.0
        %4390 = vmatpush1.msra.mxu0 0.0
        %4391 = vmatprep.subr.mxu0 0.0
        %4392 = vmatpush1.msra.mxu0 0.0
        %4393 = vmatprep.subr.mxu0 0.0
        %4394 = vmatpush1.msra.mxu0 0.0
        %4395 = vmatprep.subr.mxu0 0.0
        %4396 = vmatpush1.msra.mxu0 0.0
        %4397 = vmatprep.subr.mxu0 0.0
        %4398 = vmatpush1.msra.mxu0 0.0
        %4399 = vmatprep.subr.mxu0 0.0
        %4400 = vmatpush1.msra.mxu0 0.0
        %4401 = vmatprep.subr.mxu0 0.0
        %4402 = vmatpush1.msra.mxu0 0.0
        %4403 = vmatprep.subr.mxu0 0.0
        %4404 = vmatpush1.msra.mxu0 0.0
        %4405 = vmatprep.subr.mxu0 0.0
        %4406 = vmatpush1.msra.mxu0 0.0
        %4407 = vmatprep.subr.mxu0 0.0
        %4408 = vmatpush1.msra.mxu0 0.0
        %4409 = vmatprep.subr.mxu0 0.0
        %4410 = vmatpush1.msra.mxu0 0.0
        %4411 = vmatprep.subr.mxu0 0.0
        %4412 = vmatpush1.msra.mxu0 0.0
        %4413 = vmatprep.subr.mxu0 0.0
        %4414 = vmatpush1.msra.mxu0 0.0
        %4415 = vmatprep.subr.mxu0 0.0
        %4416 = vmatpush1.msra.mxu0 0.0
        %4417 = vmatprep.mubr.f32.mxu0 0.0
        %4418 = vmatmul.mubr.f32.gmra.mrb[0].mxu0 %v4349
        %v4419 = vpop.f32.mrb[0].mxu0
        %v4420 = vadd.f32 0.0, %v4419
        %v4421 = vpop.f32.mrb[0].mxu0
        %4422 = vdwg.mxu0
        %v4424 = vsel %vm273, %v4334, 0
        %v4426 = vsel %vm277, %v4345, 0
        %4428 = vmatprep.subr.mxu0 0.0
        %4429 = vmatpush1.msra.mxu0 %v4426
        %4430 = vmatprep.subr.mxu0 0.0
        %4431 = vmatpush1.msra.mxu0 0.0
        %4432 = vmatprep.subr.mxu0 0.0
        %4433 = vmatpush1.msra.mxu0 0.0
        %4434 = vmatprep.subr.mxu0 0.0
        %4435 = vmatpush1.msra.mxu0 0.0
        %4436 = vmatprep.subr.mxu0 0.0
        %4437 = vmatpush1.msra.mxu0 0.0
        %4438 = vmatprep.subr.mxu0 0.0
        %4439 = vmatpush1.msra.mxu0 0.0
        %4440 = vmatprep.subr.mxu0 0.0
        %4441 = vmatpush1.msra.mxu0 0.0
        %4442 = vmatprep.subr.mxu0 0.0
        %4443 = vmatpush1.msra.mxu0 0.0
        %4444 = vmatprep.subr.mxu0 0.0
        %4445 = vmatpush1.msra.mxu0 0.0
        %4446 = vmatprep.subr.mxu0 0.0
        %4447 = vmatpush1.msra.mxu0 0.0
        %4448 = vmatprep.subr.mxu0 0.0
        %4449 = vmatpush1.msra.mxu0 0.0
        %4450 = vmatprep.subr.mxu0 0.0
        %4451 = vmatpush1.msra.mxu0 0.0
        %4452 = vmatprep.subr.mxu0 0.0
        %4453 = vmatpush1.msra.mxu0 0.0
        %4454 = vmatprep.subr.mxu0 0.0
        %4455 = vmatpush1.msra.mxu0 0.0
        %4456 = vmatprep.subr.mxu0 0.0
        %4457 = vmatpush1.msra.mxu0 0.0
        %4458 = vmatprep.subr.mxu0 0.0
        %4459 = vmatpush1.msra.mxu0 0.0
        %4460 = vmatprep.subr.mxu0 0.0
        %4461 = vmatpush1.msra.mxu0 0.0
        %4462 = vmatprep.subr.mxu0 0.0
        %4463 = vmatpush1.msra.mxu0 0.0
        %4464 = vmatprep.subr.mxu0 0.0
        %4465 = vmatpush1.msra.mxu0 0.0
        %4466 = vmatprep.subr.mxu0 0.0
        %4467 = vmatpush1.msra.mxu0 0.0
        %4468 = vmatprep.subr.mxu0 0.0
        %4469 = vmatpush1.msra.mxu0 0.0
        %4470 = vmatprep.subr.mxu0 0.0
        %4471 = vmatpush1.msra.mxu0 0.0
        %4472 = vmatprep.subr.mxu0 0.0
        %4473 = vmatpush1.msra.mxu0 0.0
        %4474 = vmatprep.subr.mxu0 0.0
        %4475 = vmatpush1.msra.mxu0 0.0
        %4476 = vmatprep.subr.mxu0 0.0
        %4477 = vmatpush1.msra.mxu0 0.0
        %4478 = vmatprep.subr.mxu0 0.0
        %4479 = vmatpush1.msra.mxu0 0.0
        %4480 = vmatprep.subr.mxu0 0.0
        %4481 = vmatpush1.msra.mxu0 0.0
        %4482 = vmatprep.subr.mxu0 0.0
        %4483 = vmatpush1.msra.mxu0 0.0
        %4484 = vmatprep.subr.mxu0 0.0
        %4485 = vmatpush1.msra.mxu0 0.0
        %4486 = vmatprep.subr.mxu0 0.0
        %4487 = vmatpush1.msra.mxu0 0.0
        %4488 = vmatprep.subr.mxu0 0.0
        %4489 = vmatpush1.msra.mxu0 0.0
        %4490 = vmatprep.subr.mxu0 0.0
        %4491 = vmatpush1.msra.mxu0 0.0
        %4492 = vmatprep.mubr.f32.mxu0 0.0
        %4493 = vmatmul.mubr.f32.gmra.mrb[0].mxu0 %v4424
        %v4494 = vpop.f32.mrb[0].mxu0
        %v4495 = vadd.f32 %v4420, %v4494
        %v4496 = vpop.f32.mrb[0].mxu0
        %4497 = vdwg.mxu0
        %v4498 = vld [vmem:[%s425] sm:$0xff]
        %4499 = vrot.lane.b32.xlu0 %v4345, 126
        %v4500 = vpop.permute.xlu0 %4499
        %v4502 = vsel %vm273, %v4498, 0
        %v4504 = vsel %vm277, %v4500, 0
        %4506 = vmatprep.subr.mxu0 0.0
        %4507 = vmatpush1.msra.mxu0 %v4504
        %4508 = vmatprep.subr.mxu0 0.0
        %4509 = vmatpush1.msra.mxu0 0.0
        %4510 = vmatprep.subr.mxu0 0.0
        %4511 = vmatpush1.msra.mxu0 0.0
        %4512 = vmatprep.subr.mxu0 0.0
        %4513 = vmatpush1.msra.mxu0 0.0
        %4514 = vmatprep.subr.mxu0 0.0
        %4515 = vmatpush1.msra.mxu0 0.0
        %4516 = vmatprep.subr.mxu0 0.0
        %4517 = vmatpush1.msra.mxu0 0.0
        %4518 = vmatprep.subr.mxu0 0.0
        %4519 = vmatpush1.msra.mxu0 0.0
        %4520 = vmatprep.subr.mxu0 0.0
        %4521 = vmatpush1.msra.mxu0 0.0
        %4522 = vmatprep.subr.mxu0 0.0
        %4523 = vmatpush1.msra.mxu0 0.0
        %4524 = vmatprep.subr.mxu0 0.0
        %4525 = vmatpush1.msra.mxu0 0.0
        %4526 = vmatprep.subr.mxu0 0.0
        %4527 = vmatpush1.msra.mxu0 0.0
        %4528 = vmatprep.subr.mxu0 0.0
        %4529 = vmatpush1.msra.mxu0 0.0
        %4530 = vmatprep.subr.mxu0 0.0
        %4531 = vmatpush1.msra.mxu0 0.0
        %4532 = vmatprep.subr.mxu0 0.0
        %4533 = vmatpush1.msra.mxu0 0.0
        %4534 = vmatprep.subr.mxu0 0.0
        %4535 = vmatpush1.msra.mxu0 0.0
        %4536 = vmatprep.subr.mxu0 0.0
        %4537 = vmatpush1.msra.mxu0 0.0
        %4538 = vmatprep.subr.mxu0 0.0
        %4539 = vmatpush1.msra.mxu0 0.0
        %4540 = vmatprep.subr.mxu0 0.0
        %4541 = vmatpush1.msra.mxu0 0.0
        %4542 = vmatprep.subr.mxu0 0.0
        %4543 = vmatpush1.msra.mxu0 0.0
        %4544 = vmatprep.subr.mxu0 0.0
        %4545 = vmatpush1.msra.mxu0 0.0
        %4546 = vmatprep.subr.mxu0 0.0
        %4547 = vmatpush1.msra.mxu0 0.0
        %4548 = vmatprep.subr.mxu0 0.0
        %4549 = vmatpush1.msra.mxu0 0.0
        %4550 = vmatprep.subr.mxu0 0.0
        %4551 = vmatpush1.msra.mxu0 0.0
        %4552 = vmatprep.subr.mxu0 0.0
        %4553 = vmatpush1.msra.mxu0 0.0
        %4554 = vmatprep.subr.mxu0 0.0
        %4555 = vmatpush1.msra.mxu0 0.0
        %4556 = vmatprep.subr.mxu0 0.0
        %4557 = vmatpush1.msra.mxu0 0.0
        %4558 = vmatprep.subr.mxu0 0.0
        %4559 = vmatpush1.msra.mxu0 0.0
        %4560 = vmatprep.subr.mxu0 0.0
        %4561 = vmatpush1.msra.mxu0 0.0
        %4562 = vmatprep.subr.mxu0 0.0
        %4563 = vmatpush1.msra.mxu0 0.0
        %4564 = vmatprep.subr.mxu0 0.0
        %4565 = vmatpush1.msra.mxu0 0.0
        %4566 = vmatprep.subr.mxu0 0.0
        %4567 = vmatpush1.msra.mxu0 0.0
        %4568 = vmatprep.subr.mxu0 0.0
        %4569 = vmatpush1.msra.mxu0 0.0
        %4570 = vmatprep.mubr.f32.mxu0 0.0
        %4571 = vmatmul.mubr.f32.gmra.mrb[0].mxu0 %v4502
        %v4572 = vpop.f32.mrb[0].mxu0
        %v4573 = vadd.f32 0.0, %v4572
        %v4574 = vpop.f32.mrb[0].mxu0
        %4575 = vdwg.mxu0
        %v4576 = vadd.f32 %v4495, %v4573
        %v4577 = vld [vmem:[%s229 + $0x6] sm:$0x1]
        %v4578 = vld [vmem:[%s229 + $0x16] sm:$0x1]
        %v4579 = vld [vmem:[%s229 + $0x26] sm:$0x1]
        %v4580 = vld [vmem:[%s229 + $0x36] sm:$0x1]
        %v4581 = vld [vmem:[%s509] sm:$0xff]
        %v4586 = vrot.slane %v4578, 7
        %v4587 = vsel %vm263, %v4586, %v4577
        %v4588 = vrot.slane %v4579, 6
        %v4589 = vsel %vm266, %v4588, %v4587
        %v4590 = vrot.slane %v4580, 5
        %v4591 = vsel %vm269, %v4590, %v4589
        %v4593 = vsel %vm273, %v4581, 0
        %v4595 = vsel %vm277, %v4591, 0
        %4597 = vmatprep.subr.mxu0 0.0
        %4598 = vmatpush1.msra.mxu0 %v4595
        %4599 = vmatprep.subr.mxu0 0.0
        %4600 = vmatpush1.msra.mxu0 0.0
        %4601 = vmatprep.subr.mxu0 0.0
        %4602 = vmatpush1.msra.mxu0 0.0
        %4603 = vmatprep.subr.mxu0 0.0
        %4604 = vmatpush1.msra.mxu0 0.0
        %4605 = vmatprep.subr.mxu0 0.0
        %4606 = vmatpush1.msra.mxu0 0.0
        %4607 = vmatprep.subr.mxu0 0.0
        %4608 = vmatpush1.msra.mxu0 0.0
        %4609 = vmatprep.subr.mxu0 0.0
        %4610 = vmatpush1.msra.mxu0 0.0
        %4611 = vmatprep.subr.mxu0 0.0
        %4612 = vmatpush1.msra.mxu0 0.0
        %4613 = vmatprep.subr.mxu0 0.0
        %4614 = vmatpush1.msra.mxu0 0.0
        %4615 = vmatprep.subr.mxu0 0.0
        %4616 = vmatpush1.msra.mxu0 0.0
        %4617 = vmatprep.subr.mxu0 0.0
        %4618 = vmatpush1.msra.mxu0 0.0
        %4619 = vmatprep.subr.mxu0 0.0
        %4620 = vmatpush1.msra.mxu0 0.0
        %4621 = vmatprep.subr.mxu0 0.0
        %4622 = vmatpush1.msra.mxu0 0.0
        %4623 = vmatprep.subr.mxu0 0.0
        %4624 = vmatpush1.msra.mxu0 0.0
        %4625 = vmatprep.subr.mxu0 0.0
        %4626 = vmatpush1.msra.mxu0 0.0
        %4627 = vmatprep.subr.mxu0 0.0
        %4628 = vmatpush1.msra.mxu0 0.0
        %4629 = vmatprep.subr.mxu0 0.0
        %4630 = vmatpush1.msra.mxu0 0.0
        %4631 = vmatprep.subr.mxu0 0.0
        %4632 = vmatpush1.msra.mxu0 0.0
        %4633 = vmatprep.subr.mxu0 0.0
        %4634 = vmatpush1.msra.mxu0 0.0
        %4635 = vmatprep.subr.mxu0 0.0
        %4636 = vmatpush1.msra.mxu0 0.0
        %4637 = vmatprep.subr.mxu0 0.0
        %4638 = vmatpush1.msra.mxu0 0.0
        %4639 = vmatprep.subr.mxu0 0.0
        %4640 = vmatpush1.msra.mxu0 0.0
        %4641 = vmatprep.subr.mxu0 0.0
        %4642 = vmatpush1.msra.mxu0 0.0
        %4643 = vmatprep.subr.mxu0 0.0
        %4644 = vmatpush1.msra.mxu0 0.0
        %4645 = vmatprep.subr.mxu0 0.0
        %4646 = vmatpush1.msra.mxu0 0.0
        %4647 = vmatprep.subr.mxu0 0.0
        %4648 = vmatpush1.msra.mxu0 0.0
        %4649 = vmatprep.subr.mxu0 0.0
        %4650 = vmatpush1.msra.mxu0 0.0
        %4651 = vmatprep.subr.mxu0 0.0
        %4652 = vmatpush1.msra.mxu0 0.0
        %4653 = vmatprep.subr.mxu0 0.0
        %4654 = vmatpush1.msra.mxu0 0.0
        %4655 = vmatprep.subr.mxu0 0.0
        %4656 = vmatpush1.msra.mxu0 0.0
        %4657 = vmatprep.subr.mxu0 0.0
        %4658 = vmatpush1.msra.mxu0 0.0
        %4659 = vmatprep.subr.mxu0 0.0
        %4660 = vmatpush1.msra.mxu0 0.0
        %4661 = vmatprep.mubr.f32.mxu0 0.0
        %4662 = vmatmul.mubr.f32.gmra.mrb[0].mxu0 %v4593
        %v4663 = vpop.f32.mrb[0].mxu0
        %v4664 = vadd.f32 0.0, %v4663
        %v4665 = vpop.f32.mrb[0].mxu0
        %4666 = vdwg.mxu0
        %v4667 = vadd.f32 %v4576, %v4664
        %v4668 = vld [vmem:[%s597] sm:$0xff]
        %4669 = vrot.lane.b32.xlu0 %v4591, 127
        %v4670 = vpop.permute.xlu0 %4669
        %v4672 = vsel %vm273, %v4668, 0
        %v4674 = vsel %vm277, %v4670, 0
        %4676 = vmatprep.subr.mxu0 0.0
        %4677 = vmatpush1.msra.mxu0 %v4674
        %4678 = vmatprep.subr.mxu0 0.0
        %4679 = vmatpush1.msra.mxu0 0.0
        %4680 = vmatprep.subr.mxu0 0.0
        %4681 = vmatpush1.msra.mxu0 0.0
        %4682 = vmatprep.subr.mxu0 0.0
        %4683 = vmatpush1.msra.mxu0 0.0
        %4684 = vmatprep.subr.mxu0 0.0
        %4685 = vmatpush1.msra.mxu0 0.0
        %4686 = vmatprep.subr.mxu0 0.0
        %4687 = vmatpush1.msra.mxu0 0.0
        %4688 = vmatprep.subr.mxu0 0.0
        %4689 = vmatpush1.msra.mxu0 0.0
        %4690 = vmatprep.subr.mxu0 0.0
        %4691 = vmatpush1.msra.mxu0 0.0
        %4692 = vmatprep.subr.mxu0 0.0
        %4693 = vmatpush1.msra.mxu0 0.0
        %4694 = vmatprep.subr.mxu0 0.0
        %4695 = vmatpush1.msra.mxu0 0.0
        %4696 = vmatprep.subr.mxu0 0.0
        %4697 = vmatpush1.msra.mxu0 0.0
        %4698 = vmatprep.subr.mxu0 0.0
        %4699 = vmatpush1.msra.mxu0 0.0
        %4700 = vmatprep.subr.mxu0 0.0
        %4701 = vmatpush1.msra.mxu0 0.0
        %4702 = vmatprep.subr.mxu0 0.0
        %4703 = vmatpush1.msra.mxu0 0.0
        %4704 = vmatprep.subr.mxu0 0.0
        %4705 = vmatpush1.msra.mxu0 0.0
        %4706 = vmatprep.subr.mxu0 0.0
        %4707 = vmatpush1.msra.mxu0 0.0
        %4708 = vmatprep.subr.mxu0 0.0
        %4709 = vmatpush1.msra.mxu0 0.0
        %4710 = vmatprep.subr.mxu0 0.0
        %4711 = vmatpush1.msra.mxu0 0.0
        %4712 = vmatprep.subr.mxu0 0.0
        %4713 = vmatpush1.msra.mxu0 0.0
        %4714 = vmatprep.subr.mxu0 0.0
        %4715 = vmatpush1.msra.mxu0 0.0
        %4716 = vmatprep.subr.mxu0 0.0
        %4717 = vmatpush1.msra.mxu0 0.0
        %4718 = vmatprep.subr.mxu0 0.0
        %4719 = vmatpush1.msra.mxu0 0.0
        %4720 = vmatprep.subr.mxu0 0.0
        %4721 = vmatpush1.msra.mxu0 0.0
        %4722 = vmatprep.subr.mxu0 0.0
        %4723 = vmatpush1.msra.mxu0 0.0
        %4724 = vmatprep.subr.mxu0 0.0
        %4725 = vmatpush1.msra.mxu0 0.0
        %4726 = vmatprep.subr.mxu0 0.0
        %4727 = vmatpush1.msra.mxu0 0.0
        %4728 = vmatprep.subr.mxu0 0.0
        %4729 = vmatpush1.msra.mxu0 0.0
        %4730 = vmatprep.subr.mxu0 0.0
        %4731 = vmatpush1.msra.mxu0 0.0
        %4732 = vmatprep.subr.mxu0 0.0
        %4733 = vmatpush1.msra.mxu0 0.0
        %4734 = vmatprep.subr.mxu0 0.0
        %4735 = vmatpush1.msra.mxu0 0.0
        %4736 = vmatprep.subr.mxu0 0.0
        %4737 = vmatpush1.msra.mxu0 0.0
        %4738 = vmatprep.subr.mxu0 0.0
        %4739 = vmatpush1.msra.mxu0 0.0
        %4740 = vmatprep.mubr.f32.mxu0 0.0
        %4741 = vmatmul.mubr.f32.gmra.mrb[0].mxu0 %v4672
        %v4742 = vpop.f32.mrb[0].mxu0
        %v4743 = vadd.f32 0.0, %v4742
        %v4744 = vpop.f32.mrb[0].mxu0
        %4745 = vdwg.mxu0
        %v4746 = vadd.f32 %v4667, %v4743
        %v4747 = vld [vmem:[%s677] sm:$0xff]
        %4748 = vrot.lane.b32.xlu0 %v4591, 126
        %v4749 = vpop.permute.xlu0 %4748
        %v4751 = vsel %vm273, %v4747, 0
        %v4753 = vsel %vm277, %v4749, 0
        %4755 = vmatprep.subr.mxu0 0.0
        %4756 = vmatpush1.msra.mxu0 %v4753
        %4757 = vmatprep.subr.mxu0 0.0
        %4758 = vmatpush1.msra.mxu0 0.0
        %4759 = vmatprep.subr.mxu0 0.0
        %4760 = vmatpush1.msra.mxu0 0.0
        %4761 = vmatprep.subr.mxu0 0.0
        %4762 = vmatpush1.msra.mxu0 0.0
        %4763 = vmatprep.subr.mxu0 0.0
        %4764 = vmatpush1.msra.mxu0 0.0
        %4765 = vmatprep.subr.mxu0 0.0
        %4766 = vmatpush1.msra.mxu0 0.0
        %4767 = vmatprep.subr.mxu0 0.0
        %4768 = vmatpush1.msra.mxu0 0.0
        %4769 = vmatprep.subr.mxu0 0.0
        %4770 = vmatpush1.msra.mxu0 0.0
        %4771 = vmatprep.subr.mxu0 0.0
        %4772 = vmatpush1.msra.mxu0 0.0
        %4773 = vmatprep.subr.mxu0 0.0
        %4774 = vmatpush1.msra.mxu0 0.0
        %4775 = vmatprep.subr.mxu0 0.0
        %4776 = vmatpush1.msra.mxu0 0.0
        %4777 = vmatprep.subr.mxu0 0.0
        %4778 = vmatpush1.msra.mxu0 0.0
        %4779 = vmatprep.subr.mxu0 0.0
        %4780 = vmatpush1.msra.mxu0 0.0
        %4781 = vmatprep.subr.mxu0 0.0
        %4782 = vmatpush1.msra.mxu0 0.0
        %4783 = vmatprep.subr.mxu0 0.0
        %4784 = vmatpush1.msra.mxu0 0.0
        %4785 = vmatprep.subr.mxu0 0.0
        %4786 = vmatpush1.msra.mxu0 0.0
        %4787 = vmatprep.subr.mxu0 0.0
        %4788 = vmatpush1.msra.mxu0 0.0
        %4789 = vmatprep.subr.mxu0 0.0
        %4790 = vmatpush1.msra.mxu0 0.0
        %4791 = vmatprep.subr.mxu0 0.0
        %4792 = vmatpush1.msra.mxu0 0.0
        %4793 = vmatprep.subr.mxu0 0.0
        %4794 = vmatpush1.msra.mxu0 0.0
        %4795 = vmatprep.subr.mxu0 0.0
        %4796 = vmatpush1.msra.mxu0 0.0
        %4797 = vmatprep.subr.mxu0 0.0
        %4798 = vmatpush1.msra.mxu0 0.0
        %4799 = vmatprep.subr.mxu0 0.0
        %4800 = vmatpush1.msra.mxu0 0.0
        %4801 = vmatprep.subr.mxu0 0.0
        %4802 = vmatpush1.msra.mxu0 0.0
        %4803 = vmatprep.subr.mxu0 0.0
        %4804 = vmatpush1.msra.mxu0 0.0
        %4805 = vmatprep.subr.mxu0 0.0
        %4806 = vmatpush1.msra.mxu0 0.0
        %4807 = vmatprep.subr.mxu0 0.0
        %4808 = vmatpush1.msra.mxu0 0.0
        %4809 = vmatprep.subr.mxu0 0.0
        %4810 = vmatpush1.msra.mxu0 0.0
        %4811 = vmatprep.subr.mxu0 0.0
        %4812 = vmatpush1.msra.mxu0 0.0
        %4813 = vmatprep.subr.mxu0 0.0
        %4814 = vmatpush1.msra.mxu0 0.0
        %4815 = vmatprep.subr.mxu0 0.0
        %4816 = vmatpush1.msra.mxu0 0.0
        %4817 = vmatprep.subr.mxu0 0.0
        %4818 = vmatpush1.msra.mxu0 0.0
        %4819 = vmatprep.mubr.f32.mxu0 0.0
        %4820 = vmatmul.mubr.f32.gmra.mrb[0].mxu0 %v4751
        %v4821 = vpop.f32.mrb[0].mxu0
        %v4822 = vadd.f32 0.0, %v4821
        %v4823 = vpop.f32.mrb[0].mxu0
        %4824 = vdwg.mxu0
        %v4825 = vadd.f32 %v4746, %v4822
        %v4826 = vld [vmem:[%s229 + $0x7] sm:$0x1]
        %v4827 = vld [vmem:[%s229 + $0x17] sm:$0x1]
        %v4828 = vld [vmem:[%s229 + $0x27] sm:$0x1]
        %v4829 = vld [vmem:[%s229 + $0x37] sm:$0x1]
        %v4830 = vld [vmem:[%s761] sm:$0xff]
        %v4835 = vrot.slane %v4827, 7
        %v4836 = vsel %vm263, %v4835, %v4826
        %v4837 = vrot.slane %v4828, 6
        %v4838 = vsel %vm266, %v4837, %v4836
        %v4839 = vrot.slane %v4829, 5
        %v4840 = vsel %vm269, %v4839, %v4838
        %v4842 = vsel %vm273, %v4830, 0
        %v4844 = vsel %vm277, %v4840, 0
        %4846 = vmatprep.subr.mxu0 0.0
        %4847 = vmatpush1.msra.mxu0 %v4844
        %4848 = vmatprep.subr.mxu0 0.0
        %4849 = vmatpush1.msra.mxu0 0.0
        %4850 = vmatprep.subr.mxu0 0.0
        %4851 = vmatpush1.msra.mxu0 0.0
        %4852 = vmatprep.subr.mxu0 0.0
        %4853 = vmatpush1.msra.mxu0 0.0
        %4854 = vmatprep.subr.mxu0 0.0
        %4855 = vmatpush1.msra.mxu0 0.0
        %4856 = vmatprep.subr.mxu0 0.0
        %4857 = vmatpush1.msra.mxu0 0.0
        %4858 = vmatprep.subr.mxu0 0.0
        %4859 = vmatpush1.msra.mxu0 0.0
        %4860 = vmatprep.subr.mxu0 0.0
        %4861 = vmatpush1.msra.mxu0 0.0
        %4862 = vmatprep.subr.mxu0 0.0
        %4863 = vmatpush1.msra.mxu0 0.0
        %4864 = vmatprep.subr.mxu0 0.0
        %4865 = vmatpush1.msra.mxu0 0.0
        %4866 = vmatprep.subr.mxu0 0.0
        %4867 = vmatpush1.msra.mxu0 0.0
        %4868 = vmatprep.subr.mxu0 0.0
        %4869 = vmatpush1.msra.mxu0 0.0
        %4870 = vmatprep.subr.mxu0 0.0
        %4871 = vmatpush1.msra.mxu0 0.0
        %4872 = vmatprep.subr.mxu0 0.0
        %4873 = vmatpush1.msra.mxu0 0.0
        %4874 = vmatprep.subr.mxu0 0.0
        %4875 = vmatpush1.msra.mxu0 0.0
        %4876 = vmatprep.subr.mxu0 0.0
        %4877 = vmatpush1.msra.mxu0 0.0
        %4878 = vmatprep.subr.mxu0 0.0
        %4879 = vmatpush1.msra.mxu0 0.0
        %4880 = vmatprep.subr.mxu0 0.0
        %4881 = vmatpush1.msra.mxu0 0.0
        %4882 = vmatprep.subr.mxu0 0.0
        %4883 = vmatpush1.msra.mxu0 0.0
        %4884 = vmatprep.subr.mxu0 0.0
        %4885 = vmatpush1.msra.mxu0 0.0
        %4886 = vmatprep.subr.mxu0 0.0
        %4887 = vmatpush1.msra.mxu0 0.0
        %4888 = vmatprep.subr.mxu0 0.0
        %4889 = vmatpush1.msra.mxu0 0.0
        %4890 = vmatprep.subr.mxu0 0.0
        %4891 = vmatpush1.msra.mxu0 0.0
        %4892 = vmatprep.subr.mxu0 0.0
        %4893 = vmatpush1.msra.mxu0 0.0
        %4894 = vmatprep.subr.mxu0 0.0
        %4895 = vmatpush1.msra.mxu0 0.0
        %4896 = vmatprep.subr.mxu0 0.0
        %4897 = vmatpush1.msra.mxu0 0.0
        %4898 = vmatprep.subr.mxu0 0.0
        %4899 = vmatpush1.msra.mxu0 0.0
        %4900 = vmatprep.subr.mxu0 0.0
        %4901 = vmatpush1.msra.mxu0 0.0
        %4902 = vmatprep.subr.mxu0 0.0
        %4903 = vmatpush1.msra.mxu0 0.0
        %4904 = vmatprep.subr.mxu0 0.0
        %4905 = vmatpush1.msra.mxu0 0.0
        %4906 = vmatprep.subr.mxu0 0.0
        %4907 = vmatpush1.msra.mxu0 0.0
        %4908 = vmatprep.subr.mxu0 0.0
        %4909 = vmatpush1.msra.mxu0 0.0
        %4910 = vmatprep.mubr.f32.mxu0 0.0
        %4911 = vmatmul.mubr.f32.gmra.mrb[0].mxu0 %v4842
        %v4912 = vpop.f32.mrb[0].mxu0
        %v4913 = vadd.f32 0.0, %v4912
        %v4914 = vpop.f32.mrb[0].mxu0
        %4915 = vdwg.mxu0
        %v4916 = vadd.f32 %v4825, %v4913
        %v4917 = vld [vmem:[%s849] sm:$0xff]
        %4918 = vrot.lane.b32.xlu0 %v4840, 127
        %v4919 = vpop.permute.xlu0 %4918
        %v4921 = vsel %vm273, %v4917, 0
        %v4923 = vsel %vm277, %v4919, 0
        %4925 = vmatprep.subr.mxu0 0.0
        %4926 = vmatpush1.msra.mxu0 %v4923
        %4927 = vmatprep.subr.mxu0 0.0
        %4928 = vmatpush1.msra.mxu0 0.0
        %4929 = vmatprep.subr.mxu0 0.0
        %4930 = vmatpush1.msra.mxu0 0.0
        %4931 = vmatprep.subr.mxu0 0.0
        %4932 = vmatpush1.msra.mxu0 0.0
        %4933 = vmatprep.subr.mxu0 0.0
        %4934 = vmatpush1.msra.mxu0 0.0
        %4935 = vmatprep.subr.mxu0 0.0
        %4936 = vmatpush1.msra.mxu0 0.0
        %4937 = vmatprep.subr.mxu0 0.0
        %4938 = vmatpush1.msra.mxu0 0.0
        %4939 = vmatprep.subr.mxu0 0.0
        %4940 = vmatpush1.msra.mxu0 0.0
        %4941 = vmatprep.subr.mxu0 0.0
        %4942 = vmatpush1.msra.mxu0 0.0
        %4943 = vmatprep.subr.mxu0 0.0
        %4944 = vmatpush1.msra.mxu0 0.0
        %4945 = vmatprep.subr.mxu0 0.0
        %4946 = vmatpush1.msra.mxu0 0.0
        %4947 = vmatprep.subr.mxu0 0.0
        %4948 = vmatpush1.msra.mxu0 0.0
        %4949 = vmatprep.subr.mxu0 0.0
        %4950 = vmatpush1.msra.mxu0 0.0
        %4951 = vmatprep.subr.mxu0 0.0
        %4952 = vmatpush1.msra.mxu0 0.0
        %4953 = vmatprep.subr.mxu0 0.0
        %4954 = vmatpush1.msra.mxu0 0.0
        %4955 = vmatprep.subr.mxu0 0.0
        %4956 = vmatpush1.msra.mxu0 0.0
        %4957 = vmatprep.subr.mxu0 0.0
        %4958 = vmatpush1.msra.mxu0 0.0
        %4959 = vmatprep.subr.mxu0 0.0
        %4960 = vmatpush1.msra.mxu0 0.0
        %4961 = vmatprep.subr.mxu0 0.0
        %4962 = vmatpush1.msra.mxu0 0.0
        %4963 = vmatprep.subr.mxu0 0.0
        %4964 = vmatpush1.msra.mxu0 0.0
        %4965 = vmatprep.subr.mxu0 0.0
        %4966 = vmatpush1.msra.mxu0 0.0
        %4967 = vmatprep.subr.mxu0 0.0
        %4968 = vmatpush1.msra.mxu0 0.0
        %4969 = vmatprep.subr.mxu0 0.0
        %4970 = vmatpush1.msra.mxu0 0.0
        %4971 = vmatprep.subr.mxu0 0.0
        %4972 = vmatpush1.msra.mxu0 0.0
        %4973 = vmatprep.subr.mxu0 0.0
        %4974 = vmatpush1.msra.mxu0 0.0
        %4975 = vmatprep.subr.mxu0 0.0
        %4976 = vmatpush1.msra.mxu0 0.0
        %4977 = vmatprep.subr.mxu0 0.0
        %4978 = vmatpush1.msra.mxu0 0.0
        %4979 = vmatprep.subr.mxu0 0.0
        %4980 = vmatpush1.msra.mxu0 0.0
        %4981 = vmatprep.subr.mxu0 0.0
        %4982 = vmatpush1.msra.mxu0 0.0
        %4983 = vmatprep.subr.mxu0 0.0
        %4984 = vmatpush1.msra.mxu0 0.0
        %4985 = vmatprep.subr.mxu0 0.0
        %4986 = vmatpush1.msra.mxu0 0.0
        %4987 = vmatprep.subr.mxu0 0.0
        %4988 = vmatpush1.msra.mxu0 0.0
        %4989 = vmatprep.mubr.f32.mxu0 0.0
        %4990 = vmatmul.mubr.f32.gmra.mrb[0].mxu0 %v4921
        %v4991 = vpop.f32.mrb[0].mxu0
        %v4992 = vadd.f32 0.0, %v4991
        %v4993 = vpop.f32.mrb[0].mxu0
        %4994 = vdwg.mxu0
        %v4995 = vadd.f32 %v4916, %v4992
        %v4996 = vld [vmem:[%s929] sm:$0xff]
        %4997 = vrot.lane.b32.xlu0 %v4840, 126
        %v4998 = vpop.permute.xlu0 %4997
        %v5000 = vsel %vm273, %v4996, 0
        %v5002 = vsel %vm277, %v4998, 0
        %5004 = vmatprep.subr.mxu0 0.0
        %5005 = vmatpush1.msra.mxu0 %v5002
        %5006 = vmatprep.subr.mxu0 0.0
        %5007 = vmatpush1.msra.mxu0 0.0
        %5008 = vmatprep.subr.mxu0 0.0
        %5009 = vmatpush1.msra.mxu0 0.0
        %5010 = vmatprep.subr.mxu0 0.0
        %5011 = vmatpush1.msra.mxu0 0.0
        %5012 = vmatprep.subr.mxu0 0.0
        %5013 = vmatpush1.msra.mxu0 0.0
        %5014 = vmatprep.subr.mxu0 0.0
        %5015 = vmatpush1.msra.mxu0 0.0
        %5016 = vmatprep.subr.mxu0 0.0
        %5017 = vmatpush1.msra.mxu0 0.0
        %5018 = vmatprep.subr.mxu0 0.0
        %5019 = vmatpush1.msra.mxu0 0.0
        %5020 = vmatprep.subr.mxu0 0.0
        %5021 = vmatpush1.msra.mxu0 0.0
        %5022 = vmatprep.subr.mxu0 0.0
        %5023 = vmatpush1.msra.mxu0 0.0
        %5024 = vmatprep.subr.mxu0 0.0
        %5025 = vmatpush1.msra.mxu0 0.0
        %5026 = vmatprep.subr.mxu0 0.0
        %5027 = vmatpush1.msra.mxu0 0.0
        %5028 = vmatprep.subr.mxu0 0.0
        %5029 = vmatpush1.msra.mxu0 0.0
        %5030 = vmatprep.subr.mxu0 0.0
        %5031 = vmatpush1.msra.mxu0 0.0
        %5032 = vmatprep.subr.mxu0 0.0
        %5033 = vmatpush1.msra.mxu0 0.0
        %5034 = vmatprep.subr.mxu0 0.0
        %5035 = vmatpush1.msra.mxu0 0.0
        %5036 = vmatprep.subr.mxu0 0.0
        %5037 = vmatpush1.msra.mxu0 0.0
        %5038 = vmatprep.subr.mxu0 0.0
        %5039 = vmatpush1.msra.mxu0 0.0
        %5040 = vmatprep.subr.mxu0 0.0
        %5041 = vmatpush1.msra.mxu0 0.0
        %5042 = vmatprep.subr.mxu0 0.0
        %5043 = vmatpush1.msra.mxu0 0.0
        %5044 = vmatprep.subr.mxu0 0.0
        %5045 = vmatpush1.msra.mxu0 0.0
        %5046 = vmatprep.subr.mxu0 0.0
        %5047 = vmatpush1.msra.mxu0 0.0
        %5048 = vmatprep.subr.mxu0 0.0
        %5049 = vmatpush1.msra.mxu0 0.0
        %5050 = vmatprep.subr.mxu0 0.0
        %5051 = vmatpush1.msra.mxu0 0.0
        %5052 = vmatprep.subr.mxu0 0.0
        %5053 = vmatpush1.msra.mxu0 0.0
        %5054 = vmatprep.subr.mxu0 0.0
        %5055 = vmatpush1.msra.mxu0 0.0
        %5056 = vmatprep.subr.mxu0 0.0
        %5057 = vmatpush1.msra.mxu0 0.0
        %5058 = vmatprep.subr.mxu0 0.0
        %5059 = vmatpush1.msra.mxu0 0.0
        %5060 = vmatprep.subr.mxu0 0.0
        %5061 = vmatpush1.msra.mxu0 0.0
        %5062 = vmatprep.subr.mxu0 0.0
        %5063 = vmatpush1.msra.mxu0 0.0
        %5064 = vmatprep.subr.mxu0 0.0
        %5065 = vmatpush1.msra.mxu0 0.0
        %5066 = vmatprep.subr.mxu0 0.0
        %5067 = vmatpush1.msra.mxu0 0.0
        %5068 = vmatprep.mubr.f32.mxu0 0.0
        %5069 = vmatmul.mubr.f32.gmra.mrb[0].mxu0 %v5000
        %v5070 = vpop.f32.mrb[0].mxu0
        %v5071 = vadd.f32 0.0, %v5070
        %v5072 = vpop.f32.mrb[0].mxu0
        %5073 = vdwg.mxu0
        %v5074 = vadd.f32 %v4995, %v5071
        %v5075 = vadd.f32 %v5074, %v1012
        %v5077 = vcombine.high %v5075, %v5075
        %v5079 = vunpack.c.l.s4 1966171168
        %v5080 = vunpack.c.0.s8 %v5079
        %v5081 = vlaneseq
        %v5082 = vshrl.u32 %v5081, 7
        %v5083 = vsub.s32 %v5080, %v5082
        %v5084 = vrot.slane %v5075, %v5083
        %v5086 = vunpack.c.l.s4 1966171168
        %v5087 = vunpack.c.0.s8 %v5086
        %v5088 = vlaneseq
        %v5089 = vshrl.u32 %v5088, 7
        %v5090 = vsub.s32 %v5087, %v5089
        %v5091 = vrot.slane %v5077, %v5090
        %v5092 = vcombine.high %v5084, %v5084
        %v5093 = vcombine.high %v5091, %v5091
        %v5095 = vunpack.c.l.s4 1966171168
        %v5096 = vunpack.c.0.s8 %v5095
        %v5097 = vlaneseq
        %v5098 = vshrl.u32 %v5097, 7
        %v5099 = vsub.s32 %v5096, %v5098
        %v5100 = vrot.slane %v5084, %v5099
        %v5102 = vunpack.c.l.s4 1966171168
        %v5103 = vunpack.c.0.s8 %v5102
        %v5104 = vlaneseq
        %v5105 = vshrl.u32 %v5104, 7
        %v5106 = vsub.s32 %v5103, %v5105
        %v5107 = vrot.slane %v5091, %v5106
        %v5109 = vunpack.c.l.s4 1966171168
        %v5110 = vunpack.c.0.s8 %v5109
        %v5111 = vlaneseq
        %v5112 = vshrl.u32 %v5111, 7
        %v5113 = vsub.s32 %v5110, %v5112
        %v5114 = vrot.slane %v5092, %v5113
        %v5116 = vunpack.c.l.s4 1966171168
        %v5117 = vunpack.c.0.s8 %v5116
        %v5118 = vlaneseq
        %v5119 = vshrl.u32 %v5118, 7
        %v5120 = vsub.s32 %v5117, %v5119
        %v5121 = vrot.slane %v5093, %v5120
        %v5122 = vcombine.high %v5100, %v5100
        %v5123 = vcombine.high %v5107, %v5107
        %v5124 = vcombine.high %v5114, %v5114
        %v5125 = vcombine.high %v5121, %v5121
        %5134 = vst.msk [vmem:[%s249 + $0x5] sm:$0x1] %vm1073, %v5100
        %5135 = vst.msk [vmem:[%s249 + $0xd] sm:$0x1] %vm1073, %v5114
        %5136 = vst.msk [vmem:[%s249 + $0x15] sm:$0x1] %vm1073, %v5122
        %5137 = vst.msk [vmem:[%s249 + $0x1d] sm:$0x1] %vm1073, %v5124
        %5138 = vst.msk [vmem:[%s249 + $0x25] sm:$0x1] %vm1073, %v5107
        %5139 = vst.msk [vmem:[%s249 + $0x2d] sm:$0x1] %vm1073, %v5121
        %5140 = vst.msk [vmem:[%s249 + $0x35] sm:$0x1] %vm1073, %v5123
        %5141 = vst.msk [vmem:[%s249 + $0x3d] sm:$0x1] %vm1073, %v5125
        %v5142 = vld [vmem:[%s229 + $0x6] sm:$0x1]
        %v5143 = vld [vmem:[%s229 + $0x16] sm:$0x1]
        %v5144 = vld [vmem:[%s229 + $0x26] sm:$0x1]
        %v5145 = vld [vmem:[%s229 + $0x36] sm:$0x1]
        %v5146 = vld [vmem:[%s1] sm:$0xff]
        %v5147 = vld [vmem:[%s256] sm:$0xff]
        %v5152 = vrot.slane %v5143, 7
        %v5153 = vsel %vm263, %v5152, %v5142
        %v5154 = vrot.slane %v5144, 6
        %v5155 = vsel %vm266, %v5154, %v5153
        %v5156 = vrot.slane %v5145, 5
        %v5157 = vsel %vm269, %v5156, %v5155
        %5158 = vrot.lane.b32.xlu0 %v5157, 127
        %v5159 = vpop.permute.xlu0 %5158
        %v5161 = vsel %vm273, %v5147, 0
        %v5163 = vsel %vm277, %v5159, 0
        %5165 = vmatprep.subr.mxu0 0.0
        %5166 = vmatpush1.msra.mxu0 %v5163
        %5167 = vmatprep.subr.mxu0 0.0
        %5168 = vmatpush1.msra.mxu0 0.0
        %5169 = vmatprep.subr.mxu0 0.0
        %5170 = vmatpush1.msra.mxu0 0.0
        %5171 = vmatprep.subr.mxu0 0.0
        %5172 = vmatpush1.msra.mxu0 0.0
        %5173 = vmatprep.subr.mxu0 0.0
        %5174 = vmatpush1.msra.mxu0 0.0
        %5175 = vmatprep.subr.mxu0 0.0
        %5176 = vmatpush1.msra.mxu0 0.0
        %5177 = vmatprep.subr.mxu0 0.0
        %5178 = vmatpush1.msra.mxu0 0.0
        %5179 = vmatprep.subr.mxu0 0.0
        %5180 = vmatpush1.msra.mxu0 0.0
        %5181 = vmatprep.subr.mxu0 0.0
        %5182 = vmatpush1.msra.mxu0 0.0
        %5183 = vmatprep.subr.mxu0 0.0
        %5184 = vmatpush1.msra.mxu0 0.0
        %5185 = vmatprep.subr.mxu0 0.0
        %5186 = vmatpush1.msra.mxu0 0.0
        %5187 = vmatprep.subr.mxu0 0.0
        %5188 = vmatpush1.msra.mxu0 0.0
        %5189 = vmatprep.subr.mxu0 0.0
        %5190 = vmatpush1.msra.mxu0 0.0
        %5191 = vmatprep.subr.mxu0 0.0
        %5192 = vmatpush1.msra.mxu0 0.0
        %5193 = vmatprep.subr.mxu0 0.0
        %5194 = vmatpush1.msra.mxu0 0.0
        %5195 = vmatprep.subr.mxu0 0.0
        %5196 = vmatpush1.msra.mxu0 0.0
        %5197 = vmatprep.subr.mxu0 0.0
        %5198 = vmatpush1.msra.mxu0 0.0
        %5199 = vmatprep.subr.mxu0 0.0
        %5200 = vmatpush1.msra.mxu0 0.0
        %5201 = vmatprep.subr.mxu0 0.0
        %5202 = vmatpush1.msra.mxu0 0.0
        %5203 = vmatprep.subr.mxu0 0.0
        %5204 = vmatpush1.msra.mxu0 0.0
        %5205 = vmatprep.subr.mxu0 0.0
        %5206 = vmatpush1.msra.mxu0 0.0
        %5207 = vmatprep.subr.mxu0 0.0
        %5208 = vmatpush1.msra.mxu0 0.0
        %5209 = vmatprep.subr.mxu0 0.0
        %5210 = vmatpush1.msra.mxu0 0.0
        %5211 = vmatprep.subr.mxu0 0.0
        %5212 = vmatpush1.msra.mxu0 0.0
        %5213 = vmatprep.subr.mxu0 0.0
        %5214 = vmatpush1.msra.mxu0 0.0
        %5215 = vmatprep.subr.mxu0 0.0
        %5216 = vmatpush1.msra.mxu0 0.0
        %5217 = vmatprep.subr.mxu0 0.0
        %5218 = vmatpush1.msra.mxu0 0.0
        %5219 = vmatprep.subr.mxu0 0.0
        %5220 = vmatpush1.msra.mxu0 0.0
        %5221 = vmatprep.subr.mxu0 0.0
        %5222 = vmatpush1.msra.mxu0 0.0
        %5223 = vmatprep.subr.mxu0 0.0
        %5224 = vmatpush1.msra.mxu0 0.0
        %5225 = vmatprep.subr.mxu0 0.0
        %5226 = vmatpush1.msra.mxu0 0.0
        %5227 = vmatprep.subr.mxu0 0.0
        %5228 = vmatpush1.msra.mxu0 0.0
        %5229 = vmatprep.mubr.f32.mxu0 0.0
        %5230 = vmatmul.mubr.f32.gmra.mrb[0].mxu0 %v5161
        %v5231 = vpop.f32.mrb[0].mxu0
        %v5232 = vadd.f32 0.0, %v5231
        %v5233 = vpop.f32.mrb[0].mxu0
        %5234 = vdwg.mxu0
        %v5236 = vsel %vm273, %v5146, 0
        %v5238 = vsel %vm277, %v5157, 0
        %5240 = vmatprep.subr.mxu0 0.0
        %5241 = vmatpush1.msra.mxu0 %v5238
        %5242 = vmatprep.subr.mxu0 0.0
        %5243 = vmatpush1.msra.mxu0 0.0
        %5244 = vmatprep.subr.mxu0 0.0
        %5245 = vmatpush1.msra.mxu0 0.0
        %5246 = vmatprep.subr.mxu0 0.0
        %5247 = vmatpush1.msra.mxu0 0.0
        %5248 = vmatprep.subr.mxu0 0.0
        %5249 = vmatpush1.msra.mxu0 0.0
        %5250 = vmatprep.subr.mxu0 0.0
        %5251 = vmatpush1.msra.mxu0 0.0
        %5252 = vmatprep.subr.mxu0 0.0
        %5253 = vmatpush1.msra.mxu0 0.0
        %5254 = vmatprep.subr.mxu0 0.0
        %5255 = vmatpush1.msra.mxu0 0.0
        %5256 = vmatprep.subr.mxu0 0.0
        %5257 = vmatpush1.msra.mxu0 0.0
        %5258 = vmatprep.subr.mxu0 0.0
        %5259 = vmatpush1.msra.mxu0 0.0
        %5260 = vmatprep.subr.mxu0 0.0
        %5261 = vmatpush1.msra.mxu0 0.0
        %5262 = vmatprep.subr.mxu0 0.0
        %5263 = vmatpush1.msra.mxu0 0.0
        %5264 = vmatprep.subr.mxu0 0.0
        %5265 = vmatpush1.msra.mxu0 0.0
        %5266 = vmatprep.subr.mxu0 0.0
        %5267 = vmatpush1.msra.mxu0 0.0
        %5268 = vmatprep.subr.mxu0 0.0
        %5269 = vmatpush1.msra.mxu0 0.0
        %5270 = vmatprep.subr.mxu0 0.0
        %5271 = vmatpush1.msra.mxu0 0.0
        %5272 = vmatprep.subr.mxu0 0.0
        %5273 = vmatpush1.msra.mxu0 0.0
        %5274 = vmatprep.subr.mxu0 0.0
        %5275 = vmatpush1.msra.mxu0 0.0
        %5276 = vmatprep.subr.mxu0 0.0
        %5277 = vmatpush1.msra.mxu0 0.0
        %5278 = vmatprep.subr.mxu0 0.0
        %5279 = vmatpush1.msra.mxu0 0.0
        %5280 = vmatprep.subr.mxu0 0.0
        %5281 = vmatpush1.msra.mxu0 0.0
        %5282 = vmatprep.subr.mxu0 0.0
        %5283 = vmatpush1.msra.mxu0 0.0
        %5284 = vmatprep.subr.mxu0 0.0
        %5285 = vmatpush1.msra.mxu0 0.0
        %5286 = vmatprep.subr.mxu0 0.0
        %5287 = vmatpush1.msra.mxu0 0.0
        %5288 = vmatprep.subr.mxu0 0.0
        %5289 = vmatpush1.msra.mxu0 0.0
        %5290 = vmatprep.subr.mxu0 0.0
        %5291 = vmatpush1.msra.mxu0 0.0
        %5292 = vmatprep.subr.mxu0 0.0
        %5293 = vmatpush1.msra.mxu0 0.0
        %5294 = vmatprep.subr.mxu0 0.0
        %5295 = vmatpush1.msra.mxu0 0.0
        %5296 = vmatprep.subr.mxu0 0.0
        %5297 = vmatpush1.msra.mxu0 0.0
        %5298 = vmatprep.subr.mxu0 0.0
        %5299 = vmatpush1.msra.mxu0 0.0
        %5300 = vmatprep.subr.mxu0 0.0
        %5301 = vmatpush1.msra.mxu0 0.0
        %5302 = vmatprep.subr.mxu0 0.0
        %5303 = vmatpush1.msra.mxu0 0.0
        %5304 = vmatprep.mubr.f32.mxu0 0.0
        %5305 = vmatmul.mubr.f32.gmra.mrb[0].mxu0 %v5236
        %v5306 = vpop.f32.mrb[0].mxu0
        %v5307 = vadd.f32 %v5232, %v5306
        %v5308 = vpop.f32.mrb[0].mxu0
        %5309 = vdwg.mxu0
        %v5310 = vld [vmem:[%s425] sm:$0xff]
        %5311 = vrot.lane.b32.xlu0 %v5157, 126
        %v5312 = vpop.permute.xlu0 %5311
        %v5314 = vsel %vm273, %v5310, 0
        %v5316 = vsel %vm277, %v5312, 0
        %5318 = vmatprep.subr.mxu0 0.0
        %5319 = vmatpush1.msra.mxu0 %v5316
        %5320 = vmatprep.subr.mxu0 0.0
        %5321 = vmatpush1.msra.mxu0 0.0
        %5322 = vmatprep.subr.mxu0 0.0
        %5323 = vmatpush1.msra.mxu0 0.0
        %5324 = vmatprep.subr.mxu0 0.0
        %5325 = vmatpush1.msra.mxu0 0.0
        %5326 = vmatprep.subr.mxu0 0.0
        %5327 = vmatpush1.msra.mxu0 0.0
        %5328 = vmatprep.subr.mxu0 0.0
        %5329 = vmatpush1.msra.mxu0 0.0
        %5330 = vmatprep.subr.mxu0 0.0
        %5331 = vmatpush1.msra.mxu0 0.0
        %5332 = vmatprep.subr.mxu0 0.0
        %5333 = vmatpush1.msra.mxu0 0.0
        %5334 = vmatprep.subr.mxu0 0.0
        %5335 = vmatpush1.msra.mxu0 0.0
        %5336 = vmatprep.subr.mxu0 0.0
        %5337 = vmatpush1.msra.mxu0 0.0
        %5338 = vmatprep.subr.mxu0 0.0
        %5339 = vmatpush1.msra.mxu0 0.0
        %5340 = vmatprep.subr.mxu0 0.0
        %5341 = vmatpush1.msra.mxu0 0.0
        %5342 = vmatprep.subr.mxu0 0.0
        %5343 = vmatpush1.msra.mxu0 0.0
        %5344 = vmatprep.subr.mxu0 0.0
        %5345 = vmatpush1.msra.mxu0 0.0
        %5346 = vmatprep.subr.mxu0 0.0
        %5347 = vmatpush1.msra.mxu0 0.0
        %5348 = vmatprep.subr.mxu0 0.0
        %5349 = vmatpush1.msra.mxu0 0.0
        %5350 = vmatprep.subr.mxu0 0.0
        %5351 = vmatpush1.msra.mxu0 0.0
        %5352 = vmatprep.subr.mxu0 0.0
        %5353 = vmatpush1.msra.mxu0 0.0
        %5354 = vmatprep.subr.mxu0 0.0
        %5355 = vmatpush1.msra.mxu0 0.0
        %5356 = vmatprep.subr.mxu0 0.0
        %5357 = vmatpush1.msra.mxu0 0.0
        %5358 = vmatprep.subr.mxu0 0.0
        %5359 = vmatpush1.msra.mxu0 0.0
        %5360 = vmatprep.subr.mxu0 0.0
        %5361 = vmatpush1.msra.mxu0 0.0
        %5362 = vmatprep.subr.mxu0 0.0
        %5363 = vmatpush1.msra.mxu0 0.0
        %5364 = vmatprep.subr.mxu0 0.0
        %5365 = vmatpush1.msra.mxu0 0.0
        %5366 = vmatprep.subr.mxu0 0.0
        %5367 = vmatpush1.msra.mxu0 0.0
        %5368 = vmatprep.subr.mxu0 0.0
        %5369 = vmatpush1.msra.mxu0 0.0
        %5370 = vmatprep.subr.mxu0 0.0
        %5371 = vmatpush1.msra.mxu0 0.0
        %5372 = vmatprep.subr.mxu0 0.0
        %5373 = vmatpush1.msra.mxu0 0.0
        %5374 = vmatprep.subr.mxu0 0.0
        %5375 = vmatpush1.msra.mxu0 0.0
        %5376 = vmatprep.subr.mxu0 0.0
        %5377 = vmatpush1.msra.mxu0 0.0
        %5378 = vmatprep.subr.mxu0 0.0
        %5379 = vmatpush1.msra.mxu0 0.0
        %5380 = vmatprep.subr.mxu0 0.0
        %5381 = vmatpush1.msra.mxu0 0.0
        %5382 = vmatprep.mubr.f32.mxu0 0.0
        %5383 = vmatmul.mubr.f32.gmra.mrb[0].mxu0 %v5314
        %v5384 = vpop.f32.mrb[0].mxu0
        %v5385 = vadd.f32 0.0, %v5384
        %v5386 = vpop.f32.mrb[0].mxu0
        %5387 = vdwg.mxu0
        %v5388 = vadd.f32 %v5307, %v5385
        %v5389 = vld [vmem:[%s229 + $0x7] sm:$0x1]
        %v5390 = vld [vmem:[%s229 + $0x17] sm:$0x1]
        %v5391 = vld [vmem:[%s229 + $0x27] sm:$0x1]
        %v5392 = vld [vmem:[%s229 + $0x37] sm:$0x1]
        %v5393 = vld [vmem:[%s509] sm:$0xff]
        %v5398 = vrot.slane %v5390, 7
        %v5399 = vsel %vm263, %v5398, %v5389
        %v5400 = vrot.slane %v5391, 6
        %v5401 = vsel %vm266, %v5400, %v5399
        %v5402 = vrot.slane %v5392, 5
        %v5403 = vsel %vm269, %v5402, %v5401
        %v5405 = vsel %vm273, %v5393, 0
        %v5407 = vsel %vm277, %v5403, 0
        %5409 = vmatprep.subr.mxu0 0.0
        %5410 = vmatpush1.msra.mxu0 %v5407
        %5411 = vmatprep.subr.mxu0 0.0
        %5412 = vmatpush1.msra.mxu0 0.0
        %5413 = vmatprep.subr.mxu0 0.0
        %5414 = vmatpush1.msra.mxu0 0.0
        %5415 = vmatprep.subr.mxu0 0.0
        %5416 = vmatpush1.msra.mxu0 0.0
        %5417 = vmatprep.subr.mxu0 0.0
        %5418 = vmatpush1.msra.mxu0 0.0
        %5419 = vmatprep.subr.mxu0 0.0
        %5420 = vmatpush1.msra.mxu0 0.0
        %5421 = vmatprep.subr.mxu0 0.0
        %5422 = vmatpush1.msra.mxu0 0.0
        %5423 = vmatprep.subr.mxu0 0.0
        %5424 = vmatpush1.msra.mxu0 0.0
        %5425 = vmatprep.subr.mxu0 0.0
        %5426 = vmatpush1.msra.mxu0 0.0
        %5427 = vmatprep.subr.mxu0 0.0
        %5428 = vmatpush1.msra.mxu0 0.0
        %5429 = vmatprep.subr.mxu0 0.0
        %5430 = vmatpush1.msra.mxu0 0.0
        %5431 = vmatprep.subr.mxu0 0.0
        %5432 = vmatpush1.msra.mxu0 0.0
        %5433 = vmatprep.subr.mxu0 0.0
        %5434 = vmatpush1.msra.mxu0 0.0
        %5435 = vmatprep.subr.mxu0 0.0
        %5436 = vmatpush1.msra.mxu0 0.0
        %5437 = vmatprep.subr.mxu0 0.0
        %5438 = vmatpush1.msra.mxu0 0.0
        %5439 = vmatprep.subr.mxu0 0.0
        %5440 = vmatpush1.msra.mxu0 0.0
        %5441 = vmatprep.subr.mxu0 0.0
        %5442 = vmatpush1.msra.mxu0 0.0
        %5443 = vmatprep.subr.mxu0 0.0
        %5444 = vmatpush1.msra.mxu0 0.0
        %5445 = vmatprep.subr.mxu0 0.0
        %5446 = vmatpush1.msra.mxu0 0.0
        %5447 = vmatprep.subr.mxu0 0.0
        %5448 = vmatpush1.msra.mxu0 0.0
        %5449 = vmatprep.subr.mxu0 0.0
        %5450 = vmatpush1.msra.mxu0 0.0
        %5451 = vmatprep.subr.mxu0 0.0
        %5452 = vmatpush1.msra.mxu0 0.0
        %5453 = vmatprep.subr.mxu0 0.0
        %5454 = vmatpush1.msra.mxu0 0.0
        %5455 = vmatprep.subr.mxu0 0.0
        %5456 = vmatpush1.msra.mxu0 0.0
        %5457 = vmatprep.subr.mxu0 0.0
        %5458 = vmatpush1.msra.mxu0 0.0
        %5459 = vmatprep.subr.mxu0 0.0
        %5460 = vmatpush1.msra.mxu0 0.0
        %5461 = vmatprep.subr.mxu0 0.0
        %5462 = vmatpush1.msra.mxu0 0.0
        %5463 = vmatprep.subr.mxu0 0.0
        %5464 = vmatpush1.msra.mxu0 0.0
        %5465 = vmatprep.subr.mxu0 0.0
        %5466 = vmatpush1.msra.mxu0 0.0
        %5467 = vmatprep.subr.mxu0 0.0
        %5468 = vmatpush1.msra.mxu0 0.0
        %5469 = vmatprep.subr.mxu0 0.0
        %5470 = vmatpush1.msra.mxu0 0.0
        %5471 = vmatprep.subr.mxu0 0.0
        %5472 = vmatpush1.msra.mxu0 0.0
        %5473 = vmatprep.mubr.f32.mxu0 0.0
        %5474 = vmatmul.mubr.f32.gmra.mrb[0].mxu0 %v5405
        %v5475 = vpop.f32.mrb[0].mxu0
        %v5476 = vadd.f32 0.0, %v5475
        %v5477 = vpop.f32.mrb[0].mxu0
        %5478 = vdwg.mxu0
        %v5479 = vadd.f32 %v5388, %v5476
        %v5480 = vld [vmem:[%s597] sm:$0xff]
        %5481 = vrot.lane.b32.xlu0 %v5403, 127
        %v5482 = vpop.permute.xlu0 %5481
        %v5484 = vsel %vm273, %v5480, 0
        %v5486 = vsel %vm277, %v5482, 0
        %5488 = vmatprep.subr.mxu0 0.0
        %5489 = vmatpush1.msra.mxu0 %v5486
        %5490 = vmatprep.subr.mxu0 0.0
        %5491 = vmatpush1.msra.mxu0 0.0
        %5492 = vmatprep.subr.mxu0 0.0
        %5493 = vmatpush1.msra.mxu0 0.0
        %5494 = vmatprep.subr.mxu0 0.0
        %5495 = vmatpush1.msra.mxu0 0.0
        %5496 = vmatprep.subr.mxu0 0.0
        %5497 = vmatpush1.msra.mxu0 0.0
        %5498 = vmatprep.subr.mxu0 0.0
        %5499 = vmatpush1.msra.mxu0 0.0
        %5500 = vmatprep.subr.mxu0 0.0
        %5501 = vmatpush1.msra.mxu0 0.0
        %5502 = vmatprep.subr.mxu0 0.0
        %5503 = vmatpush1.msra.mxu0 0.0
        %5504 = vmatprep.subr.mxu0 0.0
        %5505 = vmatpush1.msra.mxu0 0.0
        %5506 = vmatprep.subr.mxu0 0.0
        %5507 = vmatpush1.msra.mxu0 0.0
        %5508 = vmatprep.subr.mxu0 0.0
        %5509 = vmatpush1.msra.mxu0 0.0
        %5510 = vmatprep.subr.mxu0 0.0
        %5511 = vmatpush1.msra.mxu0 0.0
        %5512 = vmatprep.subr.mxu0 0.0
        %5513 = vmatpush1.msra.mxu0 0.0
        %5514 = vmatprep.subr.mxu0 0.0
        %5515 = vmatpush1.msra.mxu0 0.0
        %5516 = vmatprep.subr.mxu0 0.0
        %5517 = vmatpush1.msra.mxu0 0.0
        %5518 = vmatprep.subr.mxu0 0.0
        %5519 = vmatpush1.msra.mxu0 0.0
        %5520 = vmatprep.subr.mxu0 0.0
        %5521 = vmatpush1.msra.mxu0 0.0
        %5522 = vmatprep.subr.mxu0 0.0
        %5523 = vmatpush1.msra.mxu0 0.0
        %5524 = vmatprep.subr.mxu0 0.0
        %5525 = vmatpush1.msra.mxu0 0.0
        %5526 = vmatprep.subr.mxu0 0.0
        %5527 = vmatpush1.msra.mxu0 0.0
        %5528 = vmatprep.subr.mxu0 0.0
        %5529 = vmatpush1.msra.mxu0 0.0
        %5530 = vmatprep.subr.mxu0 0.0
        %5531 = vmatpush1.msra.mxu0 0.0
        %5532 = vmatprep.subr.mxu0 0.0
        %5533 = vmatpush1.msra.mxu0 0.0
        %5534 = vmatprep.subr.mxu0 0.0
        %5535 = vmatpush1.msra.mxu0 0.0
        %5536 = vmatprep.subr.mxu0 0.0
        %5537 = vmatpush1.msra.mxu0 0.0
        %5538 = vmatprep.subr.mxu0 0.0
        %5539 = vmatpush1.msra.mxu0 0.0
        %5540 = vmatprep.subr.mxu0 0.0
        %5541 = vmatpush1.msra.mxu0 0.0
        %5542 = vmatprep.subr.mxu0 0.0
        %5543 = vmatpush1.msra.mxu0 0.0
        %5544 = vmatprep.subr.mxu0 0.0
        %5545 = vmatpush1.msra.mxu0 0.0
        %5546 = vmatprep.subr.mxu0 0.0
        %5547 = vmatpush1.msra.mxu0 0.0
        %5548 = vmatprep.subr.mxu0 0.0
        %5549 = vmatpush1.msra.mxu0 0.0
        %5550 = vmatprep.subr.mxu0 0.0
        %5551 = vmatpush1.msra.mxu0 0.0
        %5552 = vmatprep.mubr.f32.mxu0 0.0
        %5553 = vmatmul.mubr.f32.gmra.mrb[0].mxu0 %v5484
        %v5554 = vpop.f32.mrb[0].mxu0
        %v5555 = vadd.f32 0.0, %v5554
        %v5556 = vpop.f32.mrb[0].mxu0
        %5557 = vdwg.mxu0
        %v5558 = vadd.f32 %v5479, %v5555
        %v5559 = vld [vmem:[%s677] sm:$0xff]
        %5560 = vrot.lane.b32.xlu0 %v5403, 126
        %v5561 = vpop.permute.xlu0 %5560
        %v5563 = vsel %vm273, %v5559, 0
        %v5565 = vsel %vm277, %v5561, 0
        %5567 = vmatprep.subr.mxu0 0.0
        %5568 = vmatpush1.msra.mxu0 %v5565
        %5569 = vmatprep.subr.mxu0 0.0
        %5570 = vmatpush1.msra.mxu0 0.0
        %5571 = vmatprep.subr.mxu0 0.0
        %5572 = vmatpush1.msra.mxu0 0.0
        %5573 = vmatprep.subr.mxu0 0.0
        %5574 = vmatpush1.msra.mxu0 0.0
        %5575 = vmatprep.subr.mxu0 0.0
        %5576 = vmatpush1.msra.mxu0 0.0
        %5577 = vmatprep.subr.mxu0 0.0
        %5578 = vmatpush1.msra.mxu0 0.0
        %5579 = vmatprep.subr.mxu0 0.0
        %5580 = vmatpush1.msra.mxu0 0.0
        %5581 = vmatprep.subr.mxu0 0.0
        %5582 = vmatpush1.msra.mxu0 0.0
        %5583 = vmatprep.subr.mxu0 0.0
        %5584 = vmatpush1.msra.mxu0 0.0
        %5585 = vmatprep.subr.mxu0 0.0
        %5586 = vmatpush1.msra.mxu0 0.0
        %5587 = vmatprep.subr.mxu0 0.0
        %5588 = vmatpush1.msra.mxu0 0.0
        %5589 = vmatprep.subr.mxu0 0.0
        %5590 = vmatpush1.msra.mxu0 0.0
        %5591 = vmatprep.subr.mxu0 0.0
        %5592 = vmatpush1.msra.mxu0 0.0
        %5593 = vmatprep.subr.mxu0 0.0
        %5594 = vmatpush1.msra.mxu0 0.0
        %5595 = vmatprep.subr.mxu0 0.0
        %5596 = vmatpush1.msra.mxu0 0.0
        %5597 = vmatprep.subr.mxu0 0.0
        %5598 = vmatpush1.msra.mxu0 0.0
        %5599 = vmatprep.subr.mxu0 0.0
        %5600 = vmatpush1.msra.mxu0 0.0
        %5601 = vmatprep.subr.mxu0 0.0
        %5602 = vmatpush1.msra.mxu0 0.0
        %5603 = vmatprep.subr.mxu0 0.0
        %5604 = vmatpush1.msra.mxu0 0.0
        %5605 = vmatprep.subr.mxu0 0.0
        %5606 = vmatpush1.msra.mxu0 0.0
        %5607 = vmatprep.subr.mxu0 0.0
        %5608 = vmatpush1.msra.mxu0 0.0
        %5609 = vmatprep.subr.mxu0 0.0
        %5610 = vmatpush1.msra.mxu0 0.0
        %5611 = vmatprep.subr.mxu0 0.0
        %5612 = vmatpush1.msra.mxu0 0.0
        %5613 = vmatprep.subr.mxu0 0.0
        %5614 = vmatpush1.msra.mxu0 0.0
        %5615 = vmatprep.subr.mxu0 0.0
        %5616 = vmatpush1.msra.mxu0 0.0
        %5617 = vmatprep.subr.mxu0 0.0
        %5618 = vmatpush1.msra.mxu0 0.0
        %5619 = vmatprep.subr.mxu0 0.0
        %5620 = vmatpush1.msra.mxu0 0.0
        %5621 = vmatprep.subr.mxu0 0.0
        %5622 = vmatpush1.msra.mxu0 0.0
        %5623 = vmatprep.subr.mxu0 0.0
        %5624 = vmatpush1.msra.mxu0 0.0
        %5625 = vmatprep.subr.mxu0 0.0
        %5626 = vmatpush1.msra.mxu0 0.0
        %5627 = vmatprep.subr.mxu0 0.0
        %5628 = vmatpush1.msra.mxu0 0.0
        %5629 = vmatprep.subr.mxu0 0.0
        %5630 = vmatpush1.msra.mxu0 0.0
        %5631 = vmatprep.mubr.f32.mxu0 0.0
        %5632 = vmatmul.mubr.f32.gmra.mrb[0].mxu0 %v5563
        %v5633 = vpop.f32.mrb[0].mxu0
        %v5634 = vadd.f32 0.0, %v5633
        %v5635 = vpop.f32.mrb[0].mxu0
        %5636 = vdwg.mxu0
        %v5637 = vadd.f32 %v5558, %v5634
        %v5638 = vld [vmem:[%s229 + $0x8] sm:$0x1]
        %v5639 = vld [vmem:[%s229 + $0x18] sm:$0x1]
        %v5640 = vld [vmem:[%s229 + $0x28] sm:$0x1]
        %v5641 = vld [vmem:[%s229 + $0x38] sm:$0x1]
        %v5642 = vld [vmem:[%s761] sm:$0xff]
        %v5647 = vrot.slane %v5639, 7
        %v5648 = vsel %vm263, %v5647, %v5638
        %v5649 = vrot.slane %v5640, 6
        %v5650 = vsel %vm266, %v5649, %v5648
        %v5651 = vrot.slane %v5641, 5
        %v5652 = vsel %vm269, %v5651, %v5650
        %v5654 = vsel %vm273, %v5642, 0
        %v5656 = vsel %vm277, %v5652, 0
        %5658 = vmatprep.subr.mxu0 0.0
        %5659 = vmatpush1.msra.mxu0 %v5656
        %5660 = vmatprep.subr.mxu0 0.0
        %5661 = vmatpush1.msra.mxu0 0.0
        %5662 = vmatprep.subr.mxu0 0.0
        %5663 = vmatpush1.msra.mxu0 0.0
        %5664 = vmatprep.subr.mxu0 0.0
        %5665 = vmatpush1.msra.mxu0 0.0
        %5666 = vmatprep.subr.mxu0 0.0
        %5667 = vmatpush1.msra.mxu0 0.0
        %5668 = vmatprep.subr.mxu0 0.0
        %5669 = vmatpush1.msra.mxu0 0.0
        %5670 = vmatprep.subr.mxu0 0.0
        %5671 = vmatpush1.msra.mxu0 0.0
        %5672 = vmatprep.subr.mxu0 0.0
        %5673 = vmatpush1.msra.mxu0 0.0
        %5674 = vmatprep.subr.mxu0 0.0
        %5675 = vmatpush1.msra.mxu0 0.0
        %5676 = vmatprep.subr.mxu0 0.0
        %5677 = vmatpush1.msra.mxu0 0.0
        %5678 = vmatprep.subr.mxu0 0.0
        %5679 = vmatpush1.msra.mxu0 0.0
        %5680 = vmatprep.subr.mxu0 0.0
        %5681 = vmatpush1.msra.mxu0 0.0
        %5682 = vmatprep.subr.mxu0 0.0
        %5683 = vmatpush1.msra.mxu0 0.0
        %5684 = vmatprep.subr.mxu0 0.0
        %5685 = vmatpush1.msra.mxu0 0.0
        %5686 = vmatprep.subr.mxu0 0.0
        %5687 = vmatpush1.msra.mxu0 0.0
        %5688 = vmatprep.subr.mxu0 0.0
        %5689 = vmatpush1.msra.mxu0 0.0
        %5690 = vmatprep.subr.mxu0 0.0
        %5691 = vmatpush1.msra.mxu0 0.0
        %5692 = vmatprep.subr.mxu0 0.0
        %5693 = vmatpush1.msra.mxu0 0.0
        %5694 = vmatprep.subr.mxu0 0.0
        %5695 = vmatpush1.msra.mxu0 0.0
        %5696 = vmatprep.subr.mxu0 0.0
        %5697 = vmatpush1.msra.mxu0 0.0
        %5698 = vmatprep.subr.mxu0 0.0
        %5699 = vmatpush1.msra.mxu0 0.0
        %5700 = vmatprep.subr.mxu0 0.0
        %5701 = vmatpush1.msra.mxu0 0.0
        %5702 = vmatprep.subr.mxu0 0.0
        %5703 = vmatpush1.msra.mxu0 0.0
        %5704 = vmatprep.subr.mxu0 0.0
        %5705 = vmatpush1.msra.mxu0 0.0
        %5706 = vmatprep.subr.mxu0 0.0
        %5707 = vmatpush1.msra.mxu0 0.0
        %5708 = vmatprep.subr.mxu0 0.0
        %5709 = vmatpush1.msra.mxu0 0.0
        %5710 = vmatprep.subr.mxu0 0.0
        %5711 = vmatpush1.msra.mxu0 0.0
        %5712 = vmatprep.subr.mxu0 0.0
        %5713 = vmatpush1.msra.mxu0 0.0
        %5714 = vmatprep.subr.mxu0 0.0
        %5715 = vmatpush1.msra.mxu0 0.0
        %5716 = vmatprep.subr.mxu0 0.0
        %5717 = vmatpush1.msra.mxu0 0.0
        %5718 = vmatprep.subr.mxu0 0.0
        %5719 = vmatpush1.msra.mxu0 0.0
        %5720 = vmatprep.subr.mxu0 0.0
        %5721 = vmatpush1.msra.mxu0 0.0
        %5722 = vmatprep.mubr.f32.mxu0 0.0
        %5723 = vmatmul.mubr.f32.gmra.mrb[0].mxu0 %v5654
        %v5724 = vpop.f32.mrb[0].mxu0
        %v5725 = vadd.f32 0.0, %v5724
        %v5726 = vpop.f32.mrb[0].mxu0
        %5727 = vdwg.mxu0
        %v5728 = vadd.f32 %v5637, %v5725
        %v5729 = vld [vmem:[%s849] sm:$0xff]
        %5730 = vrot.lane.b32.xlu0 %v5652, 127
        %v5731 = vpop.permute.xlu0 %5730
        %v5733 = vsel %vm273, %v5729, 0
        %v5735 = vsel %vm277, %v5731, 0
        %5737 = vmatprep.subr.mxu0 0.0
        %5738 = vmatpush1.msra.mxu0 %v5735
        %5739 = vmatprep.subr.mxu0 0.0
        %5740 = vmatpush1.msra.mxu0 0.0
        %5741 = vmatprep.subr.mxu0 0.0
        %5742 = vmatpush1.msra.mxu0 0.0
        %5743 = vmatprep.subr.mxu0 0.0
        %5744 = vmatpush1.msra.mxu0 0.0
        %5745 = vmatprep.subr.mxu0 0.0
        %5746 = vmatpush1.msra.mxu0 0.0
        %5747 = vmatprep.subr.mxu0 0.0
        %5748 = vmatpush1.msra.mxu0 0.0
        %5749 = vmatprep.subr.mxu0 0.0
        %5750 = vmatpush1.msra.mxu0 0.0
        %5751 = vmatprep.subr.mxu0 0.0
        %5752 = vmatpush1.msra.mxu0 0.0
        %5753 = vmatprep.subr.mxu0 0.0
        %5754 = vmatpush1.msra.mxu0 0.0
        %5755 = vmatprep.subr.mxu0 0.0
        %5756 = vmatpush1.msra.mxu0 0.0
        %5757 = vmatprep.subr.mxu0 0.0
        %5758 = vmatpush1.msra.mxu0 0.0
        %5759 = vmatprep.subr.mxu0 0.0
        %5760 = vmatpush1.msra.mxu0 0.0
        %5761 = vmatprep.subr.mxu0 0.0
        %5762 = vmatpush1.msra.mxu0 0.0
        %5763 = vmatprep.subr.mxu0 0.0
        %5764 = vmatpush1.msra.mxu0 0.0
        %5765 = vmatprep.subr.mxu0 0.0
        %5766 = vmatpush1.msra.mxu0 0.0
        %5767 = vmatprep.subr.mxu0 0.0
        %5768 = vmatpush1.msra.mxu0 0.0
        %5769 = vmatprep.subr.mxu0 0.0
        %5770 = vmatpush1.msra.mxu0 0.0
        %5771 = vmatprep.subr.mxu0 0.0
        %5772 = vmatpush1.msra.mxu0 0.0
        %5773 = vmatprep.subr.mxu0 0.0
        %5774 = vmatpush1.msra.mxu0 0.0
        %5775 = vmatprep.subr.mxu0 0.0
        %5776 = vmatpush1.msra.mxu0 0.0
        %5777 = vmatprep.subr.mxu0 0.0
        %5778 = vmatpush1.msra.mxu0 0.0
        %5779 = vmatprep.subr.mxu0 0.0
        %5780 = vmatpush1.msra.mxu0 0.0
        %5781 = vmatprep.subr.mxu0 0.0
        %5782 = vmatpush1.msra.mxu0 0.0
        %5783 = vmatprep.subr.mxu0 0.0
        %5784 = vmatpush1.msra.mxu0 0.0
        %5785 = vmatprep.subr.mxu0 0.0
        %5786 = vmatpush1.msra.mxu0 0.0
        %5787 = vmatprep.subr.mxu0 0.0
        %5788 = vmatpush1.msra.mxu0 0.0
        %5789 = vmatprep.subr.mxu0 0.0
        %5790 = vmatpush1.msra.mxu0 0.0
        %5791 = vmatprep.subr.mxu0 0.0
        %5792 = vmatpush1.msra.mxu0 0.0
        %5793 = vmatprep.subr.mxu0 0.0
        %5794 = vmatpush1.msra.mxu0 0.0
        %5795 = vmatprep.subr.mxu0 0.0
        %5796 = vmatpush1.msra.mxu0 0.0
        %5797 = vmatprep.subr.mxu0 0.0
        %5798 = vmatpush1.msra.mxu0 0.0
        %5799 = vmatprep.subr.mxu0 0.0
        %5800 = vmatpush1.msra.mxu0 0.0
        %5801 = vmatprep.mubr.f32.mxu0 0.0
        %5802 = vmatmul.mubr.f32.gmra.mrb[0].mxu0 %v5733
        %v5803 = vpop.f32.mrb[0].mxu0
        %v5804 = vadd.f32 0.0, %v5803
        %v5805 = vpop.f32.mrb[0].mxu0
        %5806 = vdwg.mxu0
        %v5807 = vadd.f32 %v5728, %v5804
        %v5808 = vld [vmem:[%s929] sm:$0xff]
        %5809 = vrot.lane.b32.xlu0 %v5652, 126
        %v5810 = vpop.permute.xlu0 %5809
        %v5812 = vsel %vm273, %v5808, 0
        %v5814 = vsel %vm277, %v5810, 0
        %5816 = vmatprep.subr.mxu0 0.0
        %5817 = vmatpush1.msra.mxu0 %v5814
        %5818 = vmatprep.subr.mxu0 0.0
        %5819 = vmatpush1.msra.mxu0 0.0
        %5820 = vmatprep.subr.mxu0 0.0
        %5821 = vmatpush1.msra.mxu0 0.0
        %5822 = vmatprep.subr.mxu0 0.0
        %5823 = vmatpush1.msra.mxu0 0.0
        %5824 = vmatprep.subr.mxu0 0.0
        %5825 = vmatpush1.msra.mxu0 0.0
        %5826 = vmatprep.subr.mxu0 0.0
        %5827 = vmatpush1.msra.mxu0 0.0
        %5828 = vmatprep.subr.mxu0 0.0
        %5829 = vmatpush1.msra.mxu0 0.0
        %5830 = vmatprep.subr.mxu0 0.0
        %5831 = vmatpush1.msra.mxu0 0.0
        %5832 = vmatprep.subr.mxu0 0.0
        %5833 = vmatpush1.msra.mxu0 0.0
        %5834 = vmatprep.subr.mxu0 0.0
        %5835 = vmatpush1.msra.mxu0 0.0
        %5836 = vmatprep.subr.mxu0 0.0
        %5837 = vmatpush1.msra.mxu0 0.0
        %5838 = vmatprep.subr.mxu0 0.0
        %5839 = vmatpush1.msra.mxu0 0.0
        %5840 = vmatprep.subr.mxu0 0.0
        %5841 = vmatpush1.msra.mxu0 0.0
        %5842 = vmatprep.subr.mxu0 0.0
        %5843 = vmatpush1.msra.mxu0 0.0
        %5844 = vmatprep.subr.mxu0 0.0
        %5845 = vmatpush1.msra.mxu0 0.0
        %5846 = vmatprep.subr.mxu0 0.0
        %5847 = vmatpush1.msra.mxu0 0.0
        %5848 = vmatprep.subr.mxu0 0.0
        %5849 = vmatpush1.msra.mxu0 0.0
        %5850 = vmatprep.subr.mxu0 0.0
        %5851 = vmatpush1.msra.mxu0 0.0
        %5852 = vmatprep.subr.mxu0 0.0
        %5853 = vmatpush1.msra.mxu0 0.0
        %5854 = vmatprep.subr.mxu0 0.0
        %5855 = vmatpush1.msra.mxu0 0.0
        %5856 = vmatprep.subr.mxu0 0.0
        %5857 = vmatpush1.msra.mxu0 0.0
        %5858 = vmatprep.subr.mxu0 0.0
        %5859 = vmatpush1.msra.mxu0 0.0
        %5860 = vmatprep.subr.mxu0 0.0
        %5861 = vmatpush1.msra.mxu0 0.0
        %5862 = vmatprep.subr.mxu0 0.0
        %5863 = vmatpush1.msra.mxu0 0.0
        %5864 = vmatprep.subr.mxu0 0.0
        %5865 = vmatpush1.msra.mxu0 0.0
        %5866 = vmatprep.subr.mxu0 0.0
        %5867 = vmatpush1.msra.mxu0 0.0
        %5868 = vmatprep.subr.mxu0 0.0
        %5869 = vmatpush1.msra.mxu0 0.0
        %5870 = vmatprep.subr.mxu0 0.0
        %5871 = vmatpush1.msra.mxu0 0.0
        %5872 = vmatprep.subr.mxu0 0.0
        %5873 = vmatpush1.msra.mxu0 0.0
        %5874 = vmatprep.subr.mxu0 0.0
        %5875 = vmatpush1.msra.mxu0 0.0
        %5876 = vmatprep.subr.mxu0 0.0
        %5877 = vmatpush1.msra.mxu0 0.0
        %5878 = vmatprep.subr.mxu0 0.0
        %5879 = vmatpush1.msra.mxu0 0.0
        %5880 = vmatprep.mubr.f32.mxu0 0.0
        %5881 = vmatmul.mubr.f32.gmra.mrb[0].mxu0 %v5812
        %v5882 = vpop.f32.mrb[0].mxu0
        %v5883 = vadd.f32 0.0, %v5882
        %v5884 = vpop.f32.mrb[0].mxu0
        %5885 = vdwg.mxu0
        %v5886 = vadd.f32 %v5807, %v5883
        %v5887 = vadd.f32 %v5886, %v1012
        %v5889 = vcombine.high %v5887, %v5887
        %v5891 = vunpack.c.l.s4 1966171168
        %v5892 = vunpack.c.0.s8 %v5891
        %v5893 = vlaneseq
        %v5894 = vshrl.u32 %v5893, 7
        %v5895 = vsub.s32 %v5892, %v5894
        %v5896 = vrot.slane %v5887, %v5895
        %v5898 = vunpack.c.l.s4 1966171168
        %v5899 = vunpack.c.0.s8 %v5898
        %v5900 = vlaneseq
        %v5901 = vshrl.u32 %v5900, 7
        %v5902 = vsub.s32 %v5899, %v5901
        %v5903 = vrot.slane %v5889, %v5902
        %v5904 = vcombine.high %v5896, %v5896
        %v5905 = vcombine.high %v5903, %v5903
        %v5907 = vunpack.c.l.s4 1966171168
        %v5908 = vunpack.c.0.s8 %v5907
        %v5909 = vlaneseq
        %v5910 = vshrl.u32 %v5909, 7
        %v5911 = vsub.s32 %v5908, %v5910
        %v5912 = vrot.slane %v5896, %v5911
        %v5914 = vunpack.c.l.s4 1966171168
        %v5915 = vunpack.c.0.s8 %v5914
        %v5916 = vlaneseq
        %v5917 = vshrl.u32 %v5916, 7
        %v5918 = vsub.s32 %v5915, %v5917
        %v5919 = vrot.slane %v5903, %v5918
        %v5921 = vunpack.c.l.s4 1966171168
        %v5922 = vunpack.c.0.s8 %v5921
        %v5923 = vlaneseq
        %v5924 = vshrl.u32 %v5923, 7
        %v5925 = vsub.s32 %v5922, %v5924
        %v5926 = vrot.slane %v5904, %v5925
        %v5928 = vunpack.c.l.s4 1966171168
        %v5929 = vunpack.c.0.s8 %v5928
        %v5930 = vlaneseq
        %v5931 = vshrl.u32 %v5930, 7
        %v5932 = vsub.s32 %v5929, %v5931
        %v5933 = vrot.slane %v5905, %v5932
        %v5934 = vcombine.high %v5912, %v5912
        %v5935 = vcombine.high %v5919, %v5919
        %v5936 = vcombine.high %v5926, %v5926
        %v5937 = vcombine.high %v5933, %v5933
        %5946 = vst.msk [vmem:[%s249 + $0x6] sm:$0x1] %vm1073, %v5912
        %5947 = vst.msk [vmem:[%s249 + $0xe] sm:$0x1] %vm1073, %v5926
        %5948 = vst.msk [vmem:[%s249 + $0x16] sm:$0x1] %vm1073, %v5934
        %5949 = vst.msk [vmem:[%s249 + $0x1e] sm:$0x1] %vm1073, %v5936
        %5950 = vst.msk [vmem:[%s249 + $0x26] sm:$0x1] %vm1073, %v5919
        %5951 = vst.msk [vmem:[%s249 + $0x2e] sm:$0x1] %vm1073, %v5933
        %5952 = vst.msk [vmem:[%s249 + $0x36] sm:$0x1] %vm1073, %v5935
        %5953 = vst.msk [vmem:[%s249 + $0x3e] sm:$0x1] %vm1073, %v5937
        %v5954 = vld [vmem:[%s229 + $0x7] sm:$0x1]
        %v5955 = vld [vmem:[%s229 + $0x17] sm:$0x1]
        %v5956 = vld [vmem:[%s229 + $0x27] sm:$0x1]
        %v5957 = vld [vmem:[%s229 + $0x37] sm:$0x1]
        %v5958 = vld [vmem:[%s1] sm:$0xff]
        %v5959 = vld [vmem:[%s256] sm:$0xff]
        %v5964 = vrot.slane %v5955, 7
        %v5965 = vsel %vm263, %v5964, %v5954
        %v5966 = vrot.slane %v5956, 6
        %v5967 = vsel %vm266, %v5966, %v5965
        %v5968 = vrot.slane %v5957, 5
        %v5969 = vsel %vm269, %v5968, %v5967
        %5970 = vrot.lane.b32.xlu0 %v5969, 127
        %v5971 = vpop.permute.xlu0 %5970
        %v5973 = vsel %vm273, %v5959, 0
        %v5975 = vsel %vm277, %v5971, 0
        %5977 = vmatprep.subr.mxu0 0.0
        %5978 = vmatpush1.msra.mxu0 %v5975
        %5979 = vmatprep.subr.mxu0 0.0
        %5980 = vmatpush1.msra.mxu0 0.0
        %5981 = vmatprep.subr.mxu0 0.0
        %5982 = vmatpush1.msra.mxu0 0.0
        %5983 = vmatprep.subr.mxu0 0.0
        %5984 = vmatpush1.msra.mxu0 0.0
        %5985 = vmatprep.subr.mxu0 0.0
        %5986 = vmatpush1.msra.mxu0 0.0
        %5987 = vmatprep.subr.mxu0 0.0
        %5988 = vmatpush1.msra.mxu0 0.0
        %5989 = vmatprep.subr.mxu0 0.0
        %5990 = vmatpush1.msra.mxu0 0.0
        %5991 = vmatprep.subr.mxu0 0.0
        %5992 = vmatpush1.msra.mxu0 0.0
        %5993 = vmatprep.subr.mxu0 0.0
        %5994 = vmatpush1.msra.mxu0 0.0
        %5995 = vmatprep.subr.mxu0 0.0
        %5996 = vmatpush1.msra.mxu0 0.0
        %5997 = vmatprep.subr.mxu0 0.0
        %5998 = vmatpush1.msra.mxu0 0.0
        %5999 = vmatprep.subr.mxu0 0.0
        %6000 = vmatpush1.msra.mxu0 0.0
        %6001 = vmatprep.subr.mxu0 0.0
        %6002 = vmatpush1.msra.mxu0 0.0
        %6003 = vmatprep.subr.mxu0 0.0
        %6004 = vmatpush1.msra.mxu0 0.0
        %6005 = vmatprep.subr.mxu0 0.0
        %6006 = vmatpush1.msra.mxu0 0.0
        %6007 = vmatprep.subr.mxu0 0.0
        %6008 = vmatpush1.msra.mxu0 0.0
        %6009 = vmatprep.subr.mxu0 0.0
        %6010 = vmatpush1.msra.mxu0 0.0
        %6011 = vmatprep.subr.mxu0 0.0
        %6012 = vmatpush1.msra.mxu0 0.0
        %6013 = vmatprep.subr.mxu0 0.0
        %6014 = vmatpush1.msra.mxu0 0.0
        %6015 = vmatprep.subr.mxu0 0.0
        %6016 = vmatpush1.msra.mxu0 0.0
        %6017 = vmatprep.subr.mxu0 0.0
        %6018 = vmatpush1.msra.mxu0 0.0
        %6019 = vmatprep.subr.mxu0 0.0
        %6020 = vmatpush1.msra.mxu0 0.0
        %6021 = vmatprep.subr.mxu0 0.0
        %6022 = vmatpush1.msra.mxu0 0.0
        %6023 = vmatprep.subr.mxu0 0.0
        %6024 = vmatpush1.msra.mxu0 0.0
        %6025 = vmatprep.subr.mxu0 0.0
        %6026 = vmatpush1.msra.mxu0 0.0
        %6027 = vmatprep.subr.mxu0 0.0
        %6028 = vmatpush1.msra.mxu0 0.0
        %6029 = vmatprep.subr.mxu0 0.0
        %6030 = vmatpush1.msra.mxu0 0.0
        %6031 = vmatprep.subr.mxu0 0.0
        %6032 = vmatpush1.msra.mxu0 0.0
        %6033 = vmatprep.subr.mxu0 0.0
        %6034 = vmatpush1.msra.mxu0 0.0
        %6035 = vmatprep.subr.mxu0 0.0
        %6036 = vmatpush1.msra.mxu0 0.0
        %6037 = vmatprep.subr.mxu0 0.0
        %6038 = vmatpush1.msra.mxu0 0.0
        %6039 = vmatprep.subr.mxu0 0.0
        %6040 = vmatpush1.msra.mxu0 0.0
        %6041 = vmatprep.mubr.f32.mxu0 0.0
        %6042 = vmatmul.mubr.f32.gmra.mrb[0].mxu0 %v5973
        %v6043 = vpop.f32.mrb[0].mxu0
        %v6044 = vadd.f32 0.0, %v6043
        %v6045 = vpop.f32.mrb[0].mxu0
        %6046 = vdwg.mxu0
        %v6048 = vsel %vm273, %v5958, 0
        %v6050 = vsel %vm277, %v5969, 0
        %6052 = vmatprep.subr.mxu0 0.0
        %6053 = vmatpush1.msra.mxu0 %v6050
        %6054 = vmatprep.subr.mxu0 0.0
        %6055 = vmatpush1.msra.mxu0 0.0
        %6056 = vmatprep.subr.mxu0 0.0
        %6057 = vmatpush1.msra.mxu0 0.0
        %6058 = vmatprep.subr.mxu0 0.0
        %6059 = vmatpush1.msra.mxu0 0.0
        %6060 = vmatprep.subr.mxu0 0.0
        %6061 = vmatpush1.msra.mxu0 0.0
        %6062 = vmatprep.subr.mxu0 0.0
        %6063 = vmatpush1.msra.mxu0 0.0
        %6064 = vmatprep.subr.mxu0 0.0
        %6065 = vmatpush1.msra.mxu0 0.0
        %6066 = vmatprep.subr.mxu0 0.0
        %6067 = vmatpush1.msra.mxu0 0.0
        %6068 = vmatprep.subr.mxu0 0.0
        %6069 = vmatpush1.msra.mxu0 0.0
        %6070 = vmatprep.subr.mxu0 0.0
        %6071 = vmatpush1.msra.mxu0 0.0
        %6072 = vmatprep.subr.mxu0 0.0
        %6073 = vmatpush1.msra.mxu0 0.0
        %6074 = vmatprep.subr.mxu0 0.0
        %6075 = vmatpush1.msra.mxu0 0.0
        %6076 = vmatprep.subr.mxu0 0.0
        %6077 = vmatpush1.msra.mxu0 0.0
        %6078 = vmatprep.subr.mxu0 0.0
        %6079 = vmatpush1.msra.mxu0 0.0
        %6080 = vmatprep.subr.mxu0 0.0
        %6081 = vmatpush1.msra.mxu0 0.0
        %6082 = vmatprep.subr.mxu0 0.0
        %6083 = vmatpush1.msra.mxu0 0.0
        %6084 = vmatprep.subr.mxu0 0.0
        %6085 = vmatpush1.msra.mxu0 0.0
        %6086 = vmatprep.subr.mxu0 0.0
        %6087 = vmatpush1.msra.mxu0 0.0
        %6088 = vmatprep.subr.mxu0 0.0
        %6089 = vmatpush1.msra.mxu0 0.0
        %6090 = vmatprep.subr.mxu0 0.0
        %6091 = vmatpush1.msra.mxu0 0.0
        %6092 = vmatprep.subr.mxu0 0.0
        %6093 = vmatpush1.msra.mxu0 0.0
        %6094 = vmatprep.subr.mxu0 0.0
        %6095 = vmatpush1.msra.mxu0 0.0
        %6096 = vmatprep.subr.mxu0 0.0
        %6097 = vmatpush1.msra.mxu0 0.0
        %6098 = vmatprep.subr.mxu0 0.0
        %6099 = vmatpush1.msra.mxu0 0.0
        %6100 = vmatprep.subr.mxu0 0.0
        %6101 = vmatpush1.msra.mxu0 0.0
        %6102 = vmatprep.subr.mxu0 0.0
        %6103 = vmatpush1.msra.mxu0 0.0
        %6104 = vmatprep.subr.mxu0 0.0
        %6105 = vmatpush1.msra.mxu0 0.0
        %6106 = vmatprep.subr.mxu0 0.0
        %6107 = vmatpush1.msra.mxu0 0.0
        %6108 = vmatprep.subr.mxu0 0.0
        %6109 = vmatpush1.msra.mxu0 0.0
        %6110 = vmatprep.subr.mxu0 0.0
        %6111 = vmatpush1.msra.mxu0 0.0
        %6112 = vmatprep.subr.mxu0 0.0
        %6113 = vmatpush1.msra.mxu0 0.0
        %6114 = vmatprep.subr.mxu0 0.0
        %6115 = vmatpush1.msra.mxu0 0.0
        %6116 = vmatprep.mubr.f32.mxu0 0.0
        %6117 = vmatmul.mubr.f32.gmra.mrb[0].mxu0 %v6048
        %v6118 = vpop.f32.mrb[0].mxu0
        %v6119 = vadd.f32 %v6044, %v6118
        %v6120 = vpop.f32.mrb[0].mxu0
        %6121 = vdwg.mxu0
        %v6122 = vld [vmem:[%s425] sm:$0xff]
        %6123 = vrot.lane.b32.xlu0 %v5969, 126
        %v6124 = vpop.permute.xlu0 %6123
        %v6126 = vsel %vm273, %v6122, 0
        %v6128 = vsel %vm277, %v6124, 0
        %6130 = vmatprep.subr.mxu0 0.0
        %6131 = vmatpush1.msra.mxu0 %v6128
        %6132 = vmatprep.subr.mxu0 0.0
        %6133 = vmatpush1.msra.mxu0 0.0
        %6134 = vmatprep.subr.mxu0 0.0
        %6135 = vmatpush1.msra.mxu0 0.0
        %6136 = vmatprep.subr.mxu0 0.0
        %6137 = vmatpush1.msra.mxu0 0.0
        %6138 = vmatprep.subr.mxu0 0.0
        %6139 = vmatpush1.msra.mxu0 0.0
        %6140 = vmatprep.subr.mxu0 0.0
        %6141 = vmatpush1.msra.mxu0 0.0
        %6142 = vmatprep.subr.mxu0 0.0
        %6143 = vmatpush1.msra.mxu0 0.0
        %6144 = vmatprep.subr.mxu0 0.0
        %6145 = vmatpush1.msra.mxu0 0.0
        %6146 = vmatprep.subr.mxu0 0.0
        %6147 = vmatpush1.msra.mxu0 0.0
        %6148 = vmatprep.subr.mxu0 0.0
        %6149 = vmatpush1.msra.mxu0 0.0
        %6150 = vmatprep.subr.mxu0 0.0
        %6151 = vmatpush1.msra.mxu0 0.0
        %6152 = vmatprep.subr.mxu0 0.0
        %6153 = vmatpush1.msra.mxu0 0.0
        %6154 = vmatprep.subr.mxu0 0.0
        %6155 = vmatpush1.msra.mxu0 0.0
        %6156 = vmatprep.subr.mxu0 0.0
        %6157 = vmatpush1.msra.mxu0 0.0
        %6158 = vmatprep.subr.mxu0 0.0
        %6159 = vmatpush1.msra.mxu0 0.0
        %6160 = vmatprep.subr.mxu0 0.0
        %6161 = vmatpush1.msra.mxu0 0.0
        %6162 = vmatprep.subr.mxu0 0.0
        %6163 = vmatpush1.msra.mxu0 0.0
        %6164 = vmatprep.subr.mxu0 0.0
        %6165 = vmatpush1.msra.mxu0 0.0
        %6166 = vmatprep.subr.mxu0 0.0
        %6167 = vmatpush1.msra.mxu0 0.0
        %6168 = vmatprep.subr.mxu0 0.0
        %6169 = vmatpush1.msra.mxu0 0.0
        %6170 = vmatprep.subr.mxu0 0.0
        %6171 = vmatpush1.msra.mxu0 0.0
        %6172 = vmatprep.subr.mxu0 0.0
        %6173 = vmatpush1.msra.mxu0 0.0
        %6174 = vmatprep.subr.mxu0 0.0
        %6175 = vmatpush1.msra.mxu0 0.0
        %6176 = vmatprep.subr.mxu0 0.0
        %6177 = vmatpush1.msra.mxu0 0.0
        %6178 = vmatprep.subr.mxu0 0.0
        %6179 = vmatpush1.msra.mxu0 0.0
        %6180 = vmatprep.subr.mxu0 0.0
        %6181 = vmatpush1.msra.mxu0 0.0
        %6182 = vmatprep.subr.mxu0 0.0
        %6183 = vmatpush1.msra.mxu0 0.0
        %6184 = vmatprep.subr.mxu0 0.0
        %6185 = vmatpush1.msra.mxu0 0.0
        %6186 = vmatprep.subr.mxu0 0.0
        %6187 = vmatpush1.msra.mxu0 0.0
        %6188 = vmatprep.subr.mxu0 0.0
        %6189 = vmatpush1.msra.mxu0 0.0
        %6190 = vmatprep.subr.mxu0 0.0
        %6191 = vmatpush1.msra.mxu0 0.0
        %6192 = vmatprep.subr.mxu0 0.0
        %6193 = vmatpush1.msra.mxu0 0.0
        %6194 = vmatprep.mubr.f32.mxu0 0.0
        %6195 = vmatmul.mubr.f32.gmra.mrb[0].mxu0 %v6126
        %v6196 = vpop.f32.mrb[0].mxu0
        %v6197 = vadd.f32 0.0, %v6196
        %v6198 = vpop.f32.mrb[0].mxu0
        %6199 = vdwg.mxu0
        %v6200 = vadd.f32 %v6119, %v6197
        %v6201 = vld [vmem:[%s229 + $0x8] sm:$0x1]
        %v6202 = vld [vmem:[%s229 + $0x18] sm:$0x1]
        %v6203 = vld [vmem:[%s229 + $0x28] sm:$0x1]
        %v6204 = vld [vmem:[%s229 + $0x38] sm:$0x1]
        %v6205 = vld [vmem:[%s509] sm:$0xff]
        %v6210 = vrot.slane %v6202, 7
        %v6211 = vsel %vm263, %v6210, %v6201
        %v6212 = vrot.slane %v6203, 6
        %v6213 = vsel %vm266, %v6212, %v6211
        %v6214 = vrot.slane %v6204, 5
        %v6215 = vsel %vm269, %v6214, %v6213
        %v6217 = vsel %vm273, %v6205, 0
        %v6219 = vsel %vm277, %v6215, 0
        %6221 = vmatprep.subr.mxu0 0.0
        %6222 = vmatpush1.msra.mxu0 %v6219
        %6223 = vmatprep.subr.mxu0 0.0
        %6224 = vmatpush1.msra.mxu0 0.0
        %6225 = vmatprep.subr.mxu0 0.0
        %6226 = vmatpush1.msra.mxu0 0.0
        %6227 = vmatprep.subr.mxu0 0.0
        %6228 = vmatpush1.msra.mxu0 0.0
        %6229 = vmatprep.subr.mxu0 0.0
        %6230 = vmatpush1.msra.mxu0 0.0
        %6231 = vmatprep.subr.mxu0 0.0
        %6232 = vmatpush1.msra.mxu0 0.0
        %6233 = vmatprep.subr.mxu0 0.0
        %6234 = vmatpush1.msra.mxu0 0.0
        %6235 = vmatprep.subr.mxu0 0.0
        %6236 = vmatpush1.msra.mxu0 0.0
        %6237 = vmatprep.subr.mxu0 0.0
        %6238 = vmatpush1.msra.mxu0 0.0
        %6239 = vmatprep.subr.mxu0 0.0
        %6240 = vmatpush1.msra.mxu0 0.0
        %6241 = vmatprep.subr.mxu0 0.0
        %6242 = vmatpush1.msra.mxu0 0.0
        %6243 = vmatprep.subr.mxu0 0.0
        %6244 = vmatpush1.msra.mxu0 0.0
        %6245 = vmatprep.subr.mxu0 0.0
        %6246 = vmatpush1.msra.mxu0 0.0
        %6247 = vmatprep.subr.mxu0 0.0
        %6248 = vmatpush1.msra.mxu0 0.0
        %6249 = vmatprep.subr.mxu0 0.0
        %6250 = vmatpush1.msra.mxu0 0.0
        %6251 = vmatprep.subr.mxu0 0.0
        %6252 = vmatpush1.msra.mxu0 0.0
        %6253 = vmatprep.subr.mxu0 0.0
        %6254 = vmatpush1.msra.mxu0 0.0
        %6255 = vmatprep.subr.mxu0 0.0
        %6256 = vmatpush1.msra.mxu0 0.0
        %6257 = vmatprep.subr.mxu0 0.0
        %6258 = vmatpush1.msra.mxu0 0.0
        %6259 = vmatprep.subr.mxu0 0.0
        %6260 = vmatpush1.msra.mxu0 0.0
        %6261 = vmatprep.subr.mxu0 0.0
        %6262 = vmatpush1.msra.mxu0 0.0
        %6263 = vmatprep.subr.mxu0 0.0
        %6264 = vmatpush1.msra.mxu0 0.0
        %6265 = vmatprep.subr.mxu0 0.0
        %6266 = vmatpush1.msra.mxu0 0.0
        %6267 = vmatprep.subr.mxu0 0.0
        %6268 = vmatpush1.msra.mxu0 0.0
        %6269 = vmatprep.subr.mxu0 0.0
        %6270 = vmatpush1.msra.mxu0 0.0
        %6271 = vmatprep.subr.mxu0 0.0
        %6272 = vmatpush1.msra.mxu0 0.0
        %6273 = vmatprep.subr.mxu0 0.0
        %6274 = vmatpush1.msra.mxu0 0.0
        %6275 = vmatprep.subr.mxu0 0.0
        %6276 = vmatpush1.msra.mxu0 0.0
        %6277 = vmatprep.subr.mxu0 0.0
        %6278 = vmatpush1.msra.mxu0 0.0
        %6279 = vmatprep.subr.mxu0 0.0
        %6280 = vmatpush1.msra.mxu0 0.0
        %6281 = vmatprep.subr.mxu0 0.0
        %6282 = vmatpush1.msra.mxu0 0.0
        %6283 = vmatprep.subr.mxu0 0.0
        %6284 = vmatpush1.msra.mxu0 0.0
        %6285 = vmatprep.mubr.f32.mxu0 0.0
        %6286 = vmatmul.mubr.f32.gmra.mrb[0].mxu0 %v6217
        %v6287 = vpop.f32.mrb[0].mxu0
        %v6288 = vadd.f32 0.0, %v6287
        %v6289 = vpop.f32.mrb[0].mxu0
        %6290 = vdwg.mxu0
        %v6291 = vadd.f32 %v6200, %v6288
        %v6292 = vld [vmem:[%s597] sm:$0xff]
        %6293 = vrot.lane.b32.xlu0 %v6215, 127
        %v6294 = vpop.permute.xlu0 %6293
        %v6296 = vsel %vm273, %v6292, 0
        %v6298 = vsel %vm277, %v6294, 0
        %6300 = vmatprep.subr.mxu0 0.0
        %6301 = vmatpush1.msra.mxu0 %v6298
        %6302 = vmatprep.subr.mxu0 0.0
        %6303 = vmatpush1.msra.mxu0 0.0
        %6304 = vmatprep.subr.mxu0 0.0
        %6305 = vmatpush1.msra.mxu0 0.0
        %6306 = vmatprep.subr.mxu0 0.0
        %6307 = vmatpush1.msra.mxu0 0.0
        %6308 = vmatprep.subr.mxu0 0.0
        %6309 = vmatpush1.msra.mxu0 0.0
        %6310 = vmatprep.subr.mxu0 0.0
        %6311 = vmatpush1.msra.mxu0 0.0
        %6312 = vmatprep.subr.mxu0 0.0
        %6313 = vmatpush1.msra.mxu0 0.0
        %6314 = vmatprep.subr.mxu0 0.0
        %6315 = vmatpush1.msra.mxu0 0.0
        %6316 = vmatprep.subr.mxu0 0.0
        %6317 = vmatpush1.msra.mxu0 0.0
        %6318 = vmatprep.subr.mxu0 0.0
        %6319 = vmatpush1.msra.mxu0 0.0
        %6320 = vmatprep.subr.mxu0 0.0
        %6321 = vmatpush1.msra.mxu0 0.0
        %6322 = vmatprep.subr.mxu0 0.0
        %6323 = vmatpush1.msra.mxu0 0.0
        %6324 = vmatprep.subr.mxu0 0.0
        %6325 = vmatpush1.msra.mxu0 0.0
        %6326 = vmatprep.subr.mxu0 0.0
        %6327 = vmatpush1.msra.mxu0 0.0
        %6328 = vmatprep.subr.mxu0 0.0
        %6329 = vmatpush1.msra.mxu0 0.0
        %6330 = vmatprep.subr.mxu0 0.0
        %6331 = vmatpush1.msra.mxu0 0.0
        %6332 = vmatprep.subr.mxu0 0.0
        %6333 = vmatpush1.msra.mxu0 0.0
        %6334 = vmatprep.subr.mxu0 0.0
        %6335 = vmatpush1.msra.mxu0 0.0
        %6336 = vmatprep.subr.mxu0 0.0
        %6337 = vmatpush1.msra.mxu0 0.0
        %6338 = vmatprep.subr.mxu0 0.0
        %6339 = vmatpush1.msra.mxu0 0.0
        %6340 = vmatprep.subr.mxu0 0.0
        %6341 = vmatpush1.msra.mxu0 0.0
        %6342 = vmatprep.subr.mxu0 0.0
        %6343 = vmatpush1.msra.mxu0 0.0
        %6344 = vmatprep.subr.mxu0 0.0
        %6345 = vmatpush1.msra.mxu0 0.0
        %6346 = vmatprep.subr.mxu0 0.0
        %6347 = vmatpush1.msra.mxu0 0.0
        %6348 = vmatprep.subr.mxu0 0.0
        %6349 = vmatpush1.msra.mxu0 0.0
        %6350 = vmatprep.subr.mxu0 0.0
        %6351 = vmatpush1.msra.mxu0 0.0
        %6352 = vmatprep.subr.mxu0 0.0
        %6353 = vmatpush1.msra.mxu0 0.0
        %6354 = vmatprep.subr.mxu0 0.0
        %6355 = vmatpush1.msra.mxu0 0.0
        %6356 = vmatprep.subr.mxu0 0.0
        %6357 = vmatpush1.msra.mxu0 0.0
        %6358 = vmatprep.subr.mxu0 0.0
        %6359 = vmatpush1.msra.mxu0 0.0
        %6360 = vmatprep.subr.mxu0 0.0
        %6361 = vmatpush1.msra.mxu0 0.0
        %6362 = vmatprep.subr.mxu0 0.0
        %6363 = vmatpush1.msra.mxu0 0.0
        %6364 = vmatprep.mubr.f32.mxu0 0.0
        %6365 = vmatmul.mubr.f32.gmra.mrb[0].mxu0 %v6296
        %v6366 = vpop.f32.mrb[0].mxu0
        %v6367 = vadd.f32 0.0, %v6366
        %v6368 = vpop.f32.mrb[0].mxu0
        %6369 = vdwg.mxu0
        %v6370 = vadd.f32 %v6291, %v6367
        %v6371 = vld [vmem:[%s677] sm:$0xff]
        %6372 = vrot.lane.b32.xlu0 %v6215, 126
        %v6373 = vpop.permute.xlu0 %6372
        %v6375 = vsel %vm273, %v6371, 0
        %v6377 = vsel %vm277, %v6373, 0
        %6379 = vmatprep.subr.mxu0 0.0
        %6380 = vmatpush1.msra.mxu0 %v6377
        %6381 = vmatprep.subr.mxu0 0.0
        %6382 = vmatpush1.msra.mxu0 0.0
        %6383 = vmatprep.subr.mxu0 0.0
        %6384 = vmatpush1.msra.mxu0 0.0
        %6385 = vmatprep.subr.mxu0 0.0
        %6386 = vmatpush1.msra.mxu0 0.0
        %6387 = vmatprep.subr.mxu0 0.0
        %6388 = vmatpush1.msra.mxu0 0.0
        %6389 = vmatprep.subr.mxu0 0.0
        %6390 = vmatpush1.msra.mxu0 0.0
        %6391 = vmatprep.subr.mxu0 0.0
        %6392 = vmatpush1.msra.mxu0 0.0
        %6393 = vmatprep.subr.mxu0 0.0
        %6394 = vmatpush1.msra.mxu0 0.0
        %6395 = vmatprep.subr.mxu0 0.0
        %6396 = vmatpush1.msra.mxu0 0.0
        %6397 = vmatprep.subr.mxu0 0.0
        %6398 = vmatpush1.msra.mxu0 0.0
        %6399 = vmatprep.subr.mxu0 0.0
        %6400 = vmatpush1.msra.mxu0 0.0
        %6401 = vmatprep.subr.mxu0 0.0
        %6402 = vmatpush1.msra.mxu0 0.0
        %6403 = vmatprep.subr.mxu0 0.0
        %6404 = vmatpush1.msra.mxu0 0.0
        %6405 = vmatprep.subr.mxu0 0.0
        %6406 = vmatpush1.msra.mxu0 0.0
        %6407 = vmatprep.subr.mxu0 0.0
        %6408 = vmatpush1.msra.mxu0 0.0
        %6409 = vmatprep.subr.mxu0 0.0
        %6410 = vmatpush1.msra.mxu0 0.0
        %6411 = vmatprep.subr.mxu0 0.0
        %6412 = vmatpush1.msra.mxu0 0.0
        %6413 = vmatprep.subr.mxu0 0.0
        %6414 = vmatpush1.msra.mxu0 0.0
        %6415 = vmatprep.subr.mxu0 0.0
        %6416 = vmatpush1.msra.mxu0 0.0
        %6417 = vmatprep.subr.mxu0 0.0
        %6418 = vmatpush1.msra.mxu0 0.0
        %6419 = vmatprep.subr.mxu0 0.0
        %6420 = vmatpush1.msra.mxu0 0.0
        %6421 = vmatprep.subr.mxu0 0.0
        %6422 = vmatpush1.msra.mxu0 0.0
        %6423 = vmatprep.subr.mxu0 0.0
        %6424 = vmatpush1.msra.mxu0 0.0
        %6425 = vmatprep.subr.mxu0 0.0
        %6426 = vmatpush1.msra.mxu0 0.0
        %6427 = vmatprep.subr.mxu0 0.0
        %6428 = vmatpush1.msra.mxu0 0.0
        %6429 = vmatprep.subr.mxu0 0.0
        %6430 = vmatpush1.msra.mxu0 0.0
        %6431 = vmatprep.subr.mxu0 0.0
        %6432 = vmatpush1.msra.mxu0 0.0
        %6433 = vmatprep.subr.mxu0 0.0
        %6434 = vmatpush1.msra.mxu0 0.0
        %6435 = vmatprep.subr.mxu0 0.0
        %6436 = vmatpush1.msra.mxu0 0.0
        %6437 = vmatprep.subr.mxu0 0.0
        %6438 = vmatpush1.msra.mxu0 0.0
        %6439 = vmatprep.subr.mxu0 0.0
        %6440 = vmatpush1.msra.mxu0 0.0
        %6441 = vmatprep.subr.mxu0 0.0
        %6442 = vmatpush1.msra.mxu0 0.0
        %6443 = vmatprep.mubr.f32.mxu0 0.0
        %6444 = vmatmul.mubr.f32.gmra.mrb[0].mxu0 %v6375
        %v6445 = vpop.f32.mrb[0].mxu0
        %v6446 = vadd.f32 0.0, %v6445
        %v6447 = vpop.f32.mrb[0].mxu0
        %6448 = vdwg.mxu0
        %v6449 = vadd.f32 %v6370, %v6446
        %v6450 = vld [vmem:[%s229 + $0x9] sm:$0x1]
        %v6451 = vld [vmem:[%s229 + $0x19] sm:$0x1]
        %v6452 = vld [vmem:[%s229 + $0x29] sm:$0x1]
        %v6453 = vld [vmem:[%s229 + $0x39] sm:$0x1]
        %v6454 = vld [vmem:[%s761] sm:$0xff]
        %v6459 = vrot.slane %v6451, 7
        %v6460 = vsel %vm263, %v6459, %v6450
        %v6461 = vrot.slane %v6452, 6
        %v6462 = vsel %vm266, %v6461, %v6460
        %v6463 = vrot.slane %v6453, 5
        %v6464 = vsel %vm269, %v6463, %v6462
        %v6466 = vsel %vm273, %v6454, 0
        %v6468 = vsel %vm277, %v6464, 0
        %6470 = vmatprep.subr.mxu0 0.0
        %6471 = vmatpush1.msra.mxu0 %v6468
        %6472 = vmatprep.subr.mxu0 0.0
        %6473 = vmatpush1.msra.mxu0 0.0
        %6474 = vmatprep.subr.mxu0 0.0
        %6475 = vmatpush1.msra.mxu0 0.0
        %6476 = vmatprep.subr.mxu0 0.0
        %6477 = vmatpush1.msra.mxu0 0.0
        %6478 = vmatprep.subr.mxu0 0.0
        %6479 = vmatpush1.msra.mxu0 0.0
        %6480 = vmatprep.subr.mxu0 0.0
        %6481 = vmatpush1.msra.mxu0 0.0
        %6482 = vmatprep.subr.mxu0 0.0
        %6483 = vmatpush1.msra.mxu0 0.0
        %6484 = vmatprep.subr.mxu0 0.0
        %6485 = vmatpush1.msra.mxu0 0.0
        %6486 = vmatprep.subr.mxu0 0.0
        %6487 = vmatpush1.msra.mxu0 0.0
        %6488 = vmatprep.subr.mxu0 0.0
        %6489 = vmatpush1.msra.mxu0 0.0
        %6490 = vmatprep.subr.mxu0 0.0
        %6491 = vmatpush1.msra.mxu0 0.0
        %6492 = vmatprep.subr.mxu0 0.0
        %6493 = vmatpush1.msra.mxu0 0.0
        %6494 = vmatprep.subr.mxu0 0.0
        %6495 = vmatpush1.msra.mxu0 0.0
        %6496 = vmatprep.subr.mxu0 0.0
        %6497 = vmatpush1.msra.mxu0 0.0
        %6498 = vmatprep.subr.mxu0 0.0
        %6499 = vmatpush1.msra.mxu0 0.0
        %6500 = vmatprep.subr.mxu0 0.0
        %6501 = vmatpush1.msra.mxu0 0.0
        %6502 = vmatprep.subr.mxu0 0.0
        %6503 = vmatpush1.msra.mxu0 0.0
        %6504 = vmatprep.subr.mxu0 0.0
        %6505 = vmatpush1.msra.mxu0 0.0
        %6506 = vmatprep.subr.mxu0 0.0
        %6507 = vmatpush1.msra.mxu0 0.0
        %6508 = vmatprep.subr.mxu0 0.0
        %6509 = vmatpush1.msra.mxu0 0.0
        %6510 = vmatprep.subr.mxu0 0.0
        %6511 = vmatpush1.msra.mxu0 0.0
        %6512 = vmatprep.subr.mxu0 0.0
        %6513 = vmatpush1.msra.mxu0 0.0
        %6514 = vmatprep.subr.mxu0 0.0
        %6515 = vmatpush1.msra.mxu0 0.0
        %6516 = vmatprep.subr.mxu0 0.0
        %6517 = vmatpush1.msra.mxu0 0.0
        %6518 = vmatprep.subr.mxu0 0.0
        %6519 = vmatpush1.msra.mxu0 0.0
        %6520 = vmatprep.subr.mxu0 0.0
        %6521 = vmatpush1.msra.mxu0 0.0
        %6522 = vmatprep.subr.mxu0 0.0
        %6523 = vmatpush1.msra.mxu0 0.0
        %6524 = vmatprep.subr.mxu0 0.0
        %6525 = vmatpush1.msra.mxu0 0.0
        %6526 = vmatprep.subr.mxu0 0.0
        %6527 = vmatpush1.msra.mxu0 0.0
        %6528 = vmatprep.subr.mxu0 0.0
        %6529 = vmatpush1.msra.mxu0 0.0
        %6530 = vmatprep.subr.mxu0 0.0
        %6531 = vmatpush1.msra.mxu0 0.0
        %6532 = vmatprep.subr.mxu0 0.0
        %6533 = vmatpush1.msra.mxu0 0.0
        %6534 = vmatprep.mubr.f32.mxu0 0.0
        %6535 = vmatmul.mubr.f32.gmra.mrb[0].mxu0 %v6466
        %v6536 = vpop.f32.mrb[0].mxu0
        %v6537 = vadd.f32 0.0, %v6536
        %v6538 = vpop.f32.mrb[0].mxu0
        %6539 = vdwg.mxu0
        %v6540 = vadd.f32 %v6449, %v6537
        %v6541 = vld [vmem:[%s849] sm:$0xff]
        %6542 = vrot.lane.b32.xlu0 %v6464, 127
        %v6543 = vpop.permute.xlu0 %6542
        %v6545 = vsel %vm273, %v6541, 0
        %v6547 = vsel %vm277, %v6543, 0
        %6549 = vmatprep.subr.mxu0 0.0
        %6550 = vmatpush1.msra.mxu0 %v6547
        %6551 = vmatprep.subr.mxu0 0.0
        %6552 = vmatpush1.msra.mxu0 0.0
        %6553 = vmatprep.subr.mxu0 0.0
        %6554 = vmatpush1.msra.mxu0 0.0
        %6555 = vmatprep.subr.mxu0 0.0
        %6556 = vmatpush1.msra.mxu0 0.0
        %6557 = vmatprep.subr.mxu0 0.0
        %6558 = vmatpush1.msra.mxu0 0.0
        %6559 = vmatprep.subr.mxu0 0.0
        %6560 = vmatpush1.msra.mxu0 0.0
        %6561 = vmatprep.subr.mxu0 0.0
        %6562 = vmatpush1.msra.mxu0 0.0
        %6563 = vmatprep.subr.mxu0 0.0
        %6564 = vmatpush1.msra.mxu0 0.0
        %6565 = vmatprep.subr.mxu0 0.0
        %6566 = vmatpush1.msra.mxu0 0.0
        %6567 = vmatprep.subr.mxu0 0.0
        %6568 = vmatpush1.msra.mxu0 0.0
        %6569 = vmatprep.subr.mxu0 0.0
        %6570 = vmatpush1.msra.mxu0 0.0
        %6571 = vmatprep.subr.mxu0 0.0
        %6572 = vmatpush1.msra.mxu0 0.0
        %6573 = vmatprep.subr.mxu0 0.0
        %6574 = vmatpush1.msra.mxu0 0.0
        %6575 = vmatprep.subr.mxu0 0.0
        %6576 = vmatpush1.msra.mxu0 0.0
        %6577 = vmatprep.subr.mxu0 0.0
        %6578 = vmatpush1.msra.mxu0 0.0
        %6579 = vmatprep.subr.mxu0 0.0
        %6580 = vmatpush1.msra.mxu0 0.0
        %6581 = vmatprep.subr.mxu0 0.0
        %6582 = vmatpush1.msra.mxu0 0.0
        %6583 = vmatprep.subr.mxu0 0.0
        %6584 = vmatpush1.msra.mxu0 0.0
        %6585 = vmatprep.subr.mxu0 0.0
        %6586 = vmatpush1.msra.mxu0 0.0
        %6587 = vmatprep.subr.mxu0 0.0
        %6588 = vmatpush1.msra.mxu0 0.0
        %6589 = vmatprep.subr.mxu0 0.0
        %6590 = vmatpush1.msra.mxu0 0.0
        %6591 = vmatprep.subr.mxu0 0.0
        %6592 = vmatpush1.msra.mxu0 0.0
        %6593 = vmatprep.subr.mxu0 0.0
        %6594 = vmatpush1.msra.mxu0 0.0
        %6595 = vmatprep.subr.mxu0 0.0
        %6596 = vmatpush1.msra.mxu0 0.0
        %6597 = vmatprep.subr.mxu0 0.0
        %6598 = vmatpush1.msra.mxu0 0.0
        %6599 = vmatprep.subr.mxu0 0.0
        %6600 = vmatpush1.msra.mxu0 0.0
        %6601 = vmatprep.subr.mxu0 0.0
        %6602 = vmatpush1.msra.mxu0 0.0
        %6603 = vmatprep.subr.mxu0 0.0
        %6604 = vmatpush1.msra.mxu0 0.0
        %6605 = vmatprep.subr.mxu0 0.0
        %6606 = vmatpush1.msra.mxu0 0.0
        %6607 = vmatprep.subr.mxu0 0.0
        %6608 = vmatpush1.msra.mxu0 0.0
        %6609 = vmatprep.subr.mxu0 0.0
        %6610 = vmatpush1.msra.mxu0 0.0
        %6611 = vmatprep.subr.mxu0 0.0
        %6612 = vmatpush1.msra.mxu0 0.0
        %6613 = vmatprep.mubr.f32.mxu0 0.0
        %6614 = vmatmul.mubr.f32.gmra.mrb[0].mxu0 %v6545
        %v6615 = vpop.f32.mrb[0].mxu0
        %v6616 = vadd.f32 0.0, %v6615
        %v6617 = vpop.f32.mrb[0].mxu0
        %6618 = vdwg.mxu0
        %v6619 = vadd.f32 %v6540, %v6616
        %v6620 = vld [vmem:[%s929] sm:$0xff]
        %6621 = vrot.lane.b32.xlu0 %v6464, 126
        %v6622 = vpop.permute.xlu0 %6621
        %v6624 = vsel %vm273, %v6620, 0
        %v6626 = vsel %vm277, %v6622, 0
        %6628 = vmatprep.subr.mxu0 0.0
        %6629 = vmatpush1.msra.mxu0 %v6626
        %6630 = vmatprep.subr.mxu0 0.0
        %6631 = vmatpush1.msra.mxu0 0.0
        %6632 = vmatprep.subr.mxu0 0.0
        %6633 = vmatpush1.msra.mxu0 0.0
        %6634 = vmatprep.subr.mxu0 0.0
        %6635 = vmatpush1.msra.mxu0 0.0
        %6636 = vmatprep.subr.mxu0 0.0
        %6637 = vmatpush1.msra.mxu0 0.0
        %6638 = vmatprep.subr.mxu0 0.0
        %6639 = vmatpush1.msra.mxu0 0.0
        %6640 = vmatprep.subr.mxu0 0.0
        %6641 = vmatpush1.msra.mxu0 0.0
        %6642 = vmatprep.subr.mxu0 0.0
        %6643 = vmatpush1.msra.mxu0 0.0
        %6644 = vmatprep.subr.mxu0 0.0
        %6645 = vmatpush1.msra.mxu0 0.0
        %6646 = vmatprep.subr.mxu0 0.0
        %6647 = vmatpush1.msra.mxu0 0.0
        %6648 = vmatprep.subr.mxu0 0.0
        %6649 = vmatpush1.msra.mxu0 0.0
        %6650 = vmatprep.subr.mxu0 0.0
        %6651 = vmatpush1.msra.mxu0 0.0
        %6652 = vmatprep.subr.mxu0 0.0
        %6653 = vmatpush1.msra.mxu0 0.0
        %6654 = vmatprep.subr.mxu0 0.0
        %6655 = vmatpush1.msra.mxu0 0.0
        %6656 = vmatprep.subr.mxu0 0.0
        %6657 = vmatpush1.msra.mxu0 0.0
        %6658 = vmatprep.subr.mxu0 0.0
        %6659 = vmatpush1.msra.mxu0 0.0
        %6660 = vmatprep.subr.mxu0 0.0
        %6661 = vmatpush1.msra.mxu0 0.0
        %6662 = vmatprep.subr.mxu0 0.0
        %6663 = vmatpush1.msra.mxu0 0.0
        %6664 = vmatprep.subr.mxu0 0.0
        %6665 = vmatpush1.msra.mxu0 0.0
        %6666 = vmatprep.subr.mxu0 0.0
        %6667 = vmatpush1.msra.mxu0 0.0
        %6668 = vmatprep.subr.mxu0 0.0
        %6669 = vmatpush1.msra.mxu0 0.0
        %6670 = vmatprep.subr.mxu0 0.0
        %6671 = vmatpush1.msra.mxu0 0.0
        %6672 = vmatprep.subr.mxu0 0.0
        %6673 = vmatpush1.msra.mxu0 0.0
        %6674 = vmatprep.subr.mxu0 0.0
        %6675 = vmatpush1.msra.mxu0 0.0
        %6676 = vmatprep.subr.mxu0 0.0
        %6677 = vmatpush1.msra.mxu0 0.0
        %6678 = vmatprep.subr.mxu0 0.0
        %6679 = vmatpush1.msra.mxu0 0.0
        %6680 = vmatprep.subr.mxu0 0.0
        %6681 = vmatpush1.msra.mxu0 0.0
        %6682 = vmatprep.subr.mxu0 0.0
        %6683 = vmatpush1.msra.mxu0 0.0
        %6684 = vmatprep.subr.mxu0 0.0
        %6685 = vmatpush1.msra.mxu0 0.0
        %6686 = vmatprep.subr.mxu0 0.0
        %6687 = vmatpush1.msra.mxu0 0.0
        %6688 = vmatprep.subr.mxu0 0.0
        %6689 = vmatpush1.msra.mxu0 0.0
        %6690 = vmatprep.subr.mxu0 0.0
        %6691 = vmatpush1.msra.mxu0 0.0
        %6692 = vmatprep.mubr.f32.mxu0 0.0
        %6693 = vmatmul.mubr.f32.gmra.mrb[0].mxu0 %v6624
        %v6694 = vpop.f32.mrb[0].mxu0
        %v6695 = vadd.f32 0.0, %v6694
        %v6696 = vpop.f32.mrb[0].mxu0
        %6697 = vdwg.mxu0
        %v6698 = vadd.f32 %v6619, %v6695
        %v6699 = vadd.f32 %v6698, %v1012
        %v6701 = vcombine.high %v6699, %v6699
        %v6703 = vunpack.c.l.s4 1966171168
        %v6704 = vunpack.c.0.s8 %v6703
        %v6705 = vlaneseq
        %v6706 = vshrl.u32 %v6705, 7
        %v6707 = vsub.s32 %v6704, %v6706
        %v6708 = vrot.slane %v6699, %v6707
        %v6710 = vunpack.c.l.s4 1966171168
        %v6711 = vunpack.c.0.s8 %v6710
        %v6712 = vlaneseq
        %v6713 = vshrl.u32 %v6712, 7
        %v6714 = vsub.s32 %v6711, %v6713
        %v6715 = vrot.slane %v6701, %v6714
        %v6716 = vcombine.high %v6708, %v6708
        %v6717 = vcombine.high %v6715, %v6715
        %v6719 = vunpack.c.l.s4 1966171168
        %v6720 = vunpack.c.0.s8 %v6719
        %v6721 = vlaneseq
        %v6722 = vshrl.u32 %v6721, 7
        %v6723 = vsub.s32 %v6720, %v6722
        %v6724 = vrot.slane %v6708, %v6723
        %v6726 = vunpack.c.l.s4 1966171168
        %v6727 = vunpack.c.0.s8 %v6726
        %v6728 = vlaneseq
        %v6729 = vshrl.u32 %v6728, 7
        %v6730 = vsub.s32 %v6727, %v6729
        %v6731 = vrot.slane %v6715, %v6730
        %v6733 = vunpack.c.l.s4 1966171168
        %v6734 = vunpack.c.0.s8 %v6733
        %v6735 = vlaneseq
        %v6736 = vshrl.u32 %v6735, 7
        %v6737 = vsub.s32 %v6734, %v6736
        %v6738 = vrot.slane %v6716, %v6737
        %v6740 = vunpack.c.l.s4 1966171168
        %v6741 = vunpack.c.0.s8 %v6740
        %v6742 = vlaneseq
        %v6743 = vshrl.u32 %v6742, 7
        %v6744 = vsub.s32 %v6741, %v6743
        %v6745 = vrot.slane %v6717, %v6744
        %v6746 = vcombine.high %v6724, %v6724
        %v6747 = vcombine.high %v6731, %v6731
        %v6748 = vcombine.high %v6738, %v6738
        %v6749 = vcombine.high %v6745, %v6745
        %6758 = vst.msk [vmem:[%s249 + $0x7] sm:$0x1] %vm1073, %v6724
        %6759 = vst.msk [vmem:[%s249 + $0xf] sm:$0x1] %vm1073, %v6738
        %6760 = vst.msk [vmem:[%s249 + $0x17] sm:$0x1] %vm1073, %v6746
        %6761 = vst.msk [vmem:[%s249 + $0x1f] sm:$0x1] %vm1073, %v6748
        %6762 = vst.msk [vmem:[%s249 + $0x27] sm:$0x1] %vm1073, %v6731
        %6763 = vst.msk [vmem:[%s249 + $0x2f] sm:$0x1] %vm1073, %v6745
        %6764 = vst.msk [vmem:[%s249 + $0x37] sm:$0x1] %vm1073, %v6747
        %6765 = vst.msk [vmem:[%s249 + $0x3f] sm:$0x1] %vm1073, %v6749
        %s6766 = sand.u32 %s109, 1
        %s6767 = scalar_lea.sflag [#allocation4], %s6766
        %s6768 = sand.u32 %s109, 1
        %s6769 = smul.addr %s6768, 64
        %s6770 = scalar_lea.vmem [#allocation3], %s6769
        // Predicated region
        $region71: #{upsample_conv_layer.1} parent=65 // pred_check
          %p6771 = pneg %p119
        $region72: #{upsample_conv_layer.1} parent=65 // pred_check_branch
          %6773 = sbr.rel (%p6771) target = $region74
        $region73: #{upsample_conv_layer.1} parent=65 // pred_region
          %s6775 = ssub.s32 1024, 1024
          %6776 = vsyncadd %s6767, %s6775
          %s6777 = smul.addr %s21, 32
          %s6778 = sadd.s32 %s22, %s6777
          %s6779 = smul.addr %s6778, 128
          %s6780 = scalar_lea.hbm %s3, %s6779
          %s6781 = sshll.u32 %s6770, 4
          %s6782 = int_to_ptr.vmem [resolvable:$true] %s6781
          %6787 = dma.vmem_to_hbm [thread:$0]  %s6782, 1024, %s6780, %s6767, 128, 512, 8
        $region74: #{upsample_conv_layer.1} parent=65 // pred_fallthru
          _
      $region66: #{upsample_conv_layer.1} parent=5 // pred_fallthru
        _
      %p6788 = scmp.le.s32.totalorder 2, %s12
      // Predicated region
      $region75: #{upsample_conv_layer.1} parent=5 // pred_check
        %p6789 = pneg %p6788
      $region76: #{upsample_conv_layer.1} parent=5 // pred_check_branch
        %6791 = sbr.rel (%p6789) target = $region78
      $region77: #{upsample_conv_layer.1} parent=5 // pred_region
        %s6792 = ssub.s32 %s12, 2
        // Predicated region
        $region79: #{upsample_conv_layer.1} parent=77 // pred_check
          %p6793 = pneg %p125
        $region80: #{upsample_conv_layer.1} parent=77 // pred_check_branch
          %6795 = sbr.rel (%p6793) target = $region82
        $region81: #{upsample_conv_layer.1} parent=77 // pred_region
          %s6796 = sand.u32 %s110, 1
          %s6797 = scalar_lea.sflag [#allocation4], %s6796
          %s6798 = sand.u32 %s110, 1
          %s6799 = smul.addr %s6798, 64
          %s6800 = scalar_lea.vmem [#allocation3], %s6799
          %6801 = dma.done %s6797, 1024
        $region82: #{upsample_conv_layer.1} parent=77 // pred_fallthru
          _
      $region78: #{upsample_conv_layer.1} parent=5 // pred_fallthru
        _
    $region6: #{upsample_conv_layer.1} parent=1 // loop_footer
      %s16 = sadd.s32 1, %s12
    $region7: #{upsample_conv_layer.1} parent=1 // loop_footer_branch
      %11 = sbr.rel target = $region3
    $region8: #{upsample_conv_layer.1} parent=1 // loop_exit
      _
    %6802 = vsyncpa [#allocation4], 1
    %s6803 = scalar_lea.sflag [#allocation4], 1
    %6804 = vsyncpa %s6803, 1

</llo_original>
